<compile_context>
chip_gen: v7x
topology: tpu7x:2x2x1
jax: 0.10.0
libtpu: 0.0.40
codegen_flags: <defaults>
</compile_context>

<pallas_src>
import functools

import jax
import jax.numpy as jnp
from jax.experimental import pallas as pl
from jax.experimental.pallas import tpu as pltpu


def _round_up(x, m):
    return (x + m - 1) // m * m


# ============================================================================
# Kernel 1: fused conv0 -> ReLU -> conv1 (+bias), one batch per grid step.
# ============================================================================
def _conv_stack_kernel(xc_ref, w0_ref, b0_ref, w1_ref, b1_ref, o_ref, h_ref,
                       *, n_rows_out, row_stride, ksize):
    # conv0: one matmul over the im2col'ed input rows (padded rows are zero).
    h = jnp.dot(xc_ref[...], w0_ref[...], preferred_element_type=jnp.float32)
    h_ref[...] = jnp.maximum(h + b0_ref[...], 0.0)          # f32 scratch

    # conv1 over the full conv0 grid: tap (ki, kj) is h shifted down by
    # ki*row_stride + kj rows.  Gather the 9 shifted windows (VMEM -> VMEM,
    # never HBM) and run a single K = 9*oc0 MXU matmul.
    taps = []
    for ki in range(ksize):
        for kj in range(ksize):
            off = ki * row_stride + kj
            taps.append(h_ref[pl.ds(off, n_rows_out), :].astype(jnp.bfloat16))
    lhs = jnp.concatenate(taps, axis=1)                      # (n_rows_out, 9*oc0)
    out = jnp.dot(lhs, w1_ref[...], preferred_element_type=jnp.float32)
    o_ref[...] = (out + b1_ref[...]).astype(o_ref.dtype)


def conv_stack(x_nhwc, w0c, b0, w1c, b1):
    """Fused conv0(3x3) -> ReLU -> conv1(3x3) on an NHWC bf16 input.

    Returns the conv1 output over the *full* conv0 grid, shape (B, M1p, oc1)
    with row r = i*Wo0 + j; rows with i or j >= Wo0-2 wrap across image rows
    and are garbage (cropped by the caller); rows >= Ho0*Wo0 are padding.
    """
    B, H, W, C = x_nhwc.shape
    ksize = 3
    Ho0, Wo0 = H - ksize + 1, W - ksize + 1
    M0 = Ho0 * Wo0                         # valid conv0 rows per batch
    M1p = _round_up(M0, 8)                 # conv1 full-grid rows (8-aligned)
    max_off = (ksize - 1) * Wo0 + (ksize - 1)
    M0p = _round_up(M1p + max_off, 8)      # conv0 rows incl. halo padding
    Kc0p, oc0 = w0c.shape
    Kc1, oc1 = w1c.shape
    Kc0 = ksize * ksize * C

    # conv0 im2col in XLA (tiny; fuses with the upstream transpose/cast/pad).
    pats = [x_nhwc[:, i:i + Ho0, j:j + Wo0, :]
            for i in range(ksize) for j in range(ksize)]
    cols = jnp.concatenate(pats, axis=-1).reshape(B, M0, Kc0)
    cols = jnp.pad(cols, ((0, 0), (0, M0p - M0), (0, Kc0p - Kc0)))

    cost = pl.CostEstimate(
        flops=2 * B * (M0p * Kc0p * oc0 + M1p * Kc1 * oc1),
        transcendentals=0,
        bytes_accessed=B * (M0p * Kc0p * 2 + M1p * oc1 * 4)
        + (Kc0p * oc0 + Kc1 * oc1) * 2,
    )
    kernel = functools.partial(_conv_stack_kernel, n_rows_out=M1p,
                               row_stride=Wo0, ksize=ksize)

    out = pl.pallas_call(
        kernel,
        out_shape=jax.ShapeDtypeStruct((B, M1p, oc1), jnp.float32),
        grid_spec=pltpu.PrefetchScalarGridSpec(
            num_scalar_prefetch=0,
            grid=(B,),
            in_specs=[
                pl.BlockSpec((None, M0p, Kc0p), lambda b: (b, 0, 0)),
                pl.BlockSpec((Kc0p, oc0), lambda b: (0, 0)),
                pl.BlockSpec((1, oc0), lambda b: (0, 0)),
                pl.BlockSpec((Kc1, oc1), lambda b: (0, 0)),
                pl.BlockSpec((1, oc1), lambda b: (0, 0)),
            ],
            out_specs=pl.BlockSpec((None, M1p, oc1), lambda b: (b, 0, 0)),
            scratch_shapes=[pltpu.VMEM((M0p, oc0), jnp.float32)],
        ),
        compiler_params=pltpu.CompilerParams(
            dimension_semantics=("parallel",),          # v7x: one batch per TC
            vmem_limit_bytes=32 * 1024 * 1024),
        cost_estimate=cost,
    )(cols, w0c, b0, w1c, b1)
    return out, (Ho0, Wo0)


# ============================================================================
# Kernel 2: fused l0 -> ReLU -> l1 -> ReLU -> l2, K-streamed int8 l0 weight.
# ============================================================================
def _fc_head_kernel(xf_ref, w0q_ref, s0_ref, b0_ref, w1_ref, b1_ref,
                    w2_ref, b2_ref, o_ref, acc_ref, *, batch):
    k = pl.program_id(0)

    @pl.when(k == 0)
    def _():
        acc_ref[...] = jnp.zeros_like(acc_ref)

    # Dequantize this K-chunk of the l0 weight on the VPU (int8 -> bf16 with
    # per-output-column scales); the MXU only ever sees bf16 operands.
    w_blk = (w0q_ref[...].astype(jnp.float32) * s0_ref[...]).astype(jnp.bfloat16)
    acc_ref[...] += jnp.dot(xf_ref[...], w_blk,
                            preferred_element_type=jnp.float32)

    @pl.when(k == pl.num_programs(0) - 1)
    def _():
        h0 = jnp.maximum(acc_ref[...] + b0_ref[...], 0.0).astype(jnp.bfloat16)
        h1 = jnp.dot(h0, w1_ref[...], preferred_element_type=jnp.float32)
        h1 = jnp.maximum(h1 + b1_ref[...], 0.0).astype(jnp.bfloat16)
        out = jnp.dot(h1, w2_ref[...], preferred_element_type=jnp.float32)
        out = out + b2_ref[...]
        o_ref[...] = out[:batch, :1].astype(o_ref.dtype)


def fc_head(feat, packed, tk0):
    """feat: (B, K0) f32 features (y ++ pooled).  Returns (B, 1) f32."""
    B, K0 = feat.shape
    w0q, s0 = packed["l0_wq"], packed["l0_s"]
    K0p, N0 = w0q.shape
    nk = K0p // tk0
    Mp = _round_up(B, 8)
    N2p = packed["l2_w"].shape[1]

    xf = jnp.pad(feat.astype(jnp.bfloat16), ((0, Mp - B), (0, K0p - K0)))

    cost = pl.CostEstimate(
        flops=2 * Mp * (K0p * N0 + N0 * N0 + N0 * N2p),
        transcendentals=0,
        bytes_accessed=Mp * K0p * 2 + K0p * N0 + N0 * 4
        + (N0 * N0 + N0 * N2p) * 2 + Mp * 4,
    )

    out = pl.pallas_call(
        functools.partial(_fc_head_kernel, batch=B),
        out_shape=jax.ShapeDtypeStruct((B, 1), jnp.float32),
        grid_spec=pltpu.PrefetchScalarGridSpec(
            num_scalar_prefetch=0,
            grid=(nk,),
            in_specs=[
                pl.BlockSpec((Mp, tk0), lambda k: (0, k)),
                pl.BlockSpec((tk0, N0), lambda k: (k, 0)),
                pl.BlockSpec((1, N0), lambda k: (0, 0)),
                pl.BlockSpec((1, N0), lambda k: (0, 0)),
                pl.BlockSpec((N0, N0), lambda k: (0, 0)),
                pl.BlockSpec((1, N0), lambda k: (0, 0)),
                pl.BlockSpec((N0, N2p), lambda k: (0, 0)),
                pl.BlockSpec((1, N2p), lambda k: (0, 0)),
            ],
            out_specs=pl.BlockSpec((B, 1), lambda k: (0, 0)),
            scratch_shapes=[pltpu.VMEM((Mp, N0), jnp.float32)],
        ),
        compiler_params=pltpu.CompilerParams(
            dimension_semantics=("arbitrary",),
            vmem_limit_bytes=32 * 1024 * 1024),
        cost_estimate=cost,
    )(xf, w0q, s0, packed["l0_b"], packed["l1_w"], packed["l1_b"],
      packed["l2_w"], packed["l2_b"])
    return out


# ============================================================================
# One-time weight packing (transpose / permute / pad / bf16 + int8 cast).
# ============================================================================
def pack_params(params, y_size):
    packed = {}

    # Conv weights: (OC, IC, KH, KW) -> (KH*KW*IC, OC), matching NHWC im2col.
    def conv_kn(w):
        OC, IC, KH, KW = w.shape
        return jnp.transpose(w, (2, 3, 1, 0)).reshape(KH * KW * IC, OC)

    w0_kn = conv_kn(params["c0_w"])                        # (9*C, 64)
    Kc0p = _round_up(w0_kn.shape[0], 128)
    packed["c0_w"] = (jnp.zeros((Kc0p, w0_kn.shape[1]), jnp.bfloat16)
                      .at[:w0_kn.shape[0]].set(w0_kn.astype(jnp.bfloat16)))
    packed["c0_b"] = params["c0_b"].astype(jnp.float32).reshape(1, -1)

    w1_kn = conv_kn(params["c1_w"])                        # (576, 32)
    packed["c1_w"] = w1_kn.astype(jnp.bfloat16)
    packed["c1_b"] = params["c1_b"].astype(jnp.float32).reshape(1, -1)

    oc1 = params["c1_w"].shape[0]

    # l0: permute pooled-feature rows from NCHW-flatten (c, I, J) order to
    # NHWC-flatten (I, J, c) order (so no runtime transpose is needed), then
    # int8-quantize with per-output-column scales (dominant HBM payload).
    w0 = params["l0_w"]                                    # (256, y_size + 256*oc1)
    n0 = w0.shape[0]
    w0_y = w0[:, :y_size]
    w0_h = (w0[:, y_size:].reshape(n0, oc1, 16, 16)
            .transpose(0, 2, 3, 1).reshape(n0, 16 * 16 * oc1))
    w0_kn = jnp.concatenate([w0_y, w0_h], axis=1).T        # (K0, 256)
    K0 = w0_kn.shape[0]

    nk = max(1, -(-_round_up(K0, 128) // 3072))            # ~3 K chunks
    tk0 = _round_up(-(-_round_up(K0, 128) // nk), 128)
    K0p = nk * tk0
    w0_pad = (jnp.zeros((K0p, n0), jnp.float32)
              .at[:K0].set(w0_kn.astype(jnp.float32)))
    s0 = jnp.maximum(jnp.max(jnp.abs(w0_pad), axis=0, keepdims=True),
                     1e-8) / 127.0
    packed["l0_wq"] = jnp.clip(jnp.round(w0_pad / s0), -127, 127).astype(jnp.int8)
    packed["l0_s"] = s0.astype(jnp.float32)
    packed["l0_b"] = params["l0_b"].astype(jnp.float32).reshape(1, -1)

    # l1 / l2: small, stay bf16 (l2 output padded to a 128-lane column block).
    packed["l1_w"] = params["l1_w"].T.astype(jnp.bfloat16)
    packed["l1_b"] = params["l1_b"].astype(jnp.float32).reshape(1, -1)
    w2_kn = params["l2_w"].T                               # (256, 1)
    N2p = 128
    packed["l2_w"] = (jnp.zeros((w2_kn.shape[0], N2p), jnp.bfloat16)
                      .at[:, :1].set(w2_kn.astype(jnp.bfloat16)))
    packed["l2_b"] = (jnp.zeros((1, N2p), jnp.float32)
                      .at[0, 0].set(params["l2_b"][0].astype(jnp.float32)))

    meta = {"y_size": int(y_size), "fc_tk": int(tk0)}
    return packed, meta


# ============================================================================
# GlobalDiscriminator forward (meta is static, bound via functools.partial).
# ============================================================================
def global_discriminator_forward(meta, packed, y, M):
    B = M.shape[0]
    oc1 = packed["c1_w"].shape[1]

    # Single NCHW -> NHWC transpose at the module boundary; bf16 activations.
    x = jnp.transpose(M, (0, 2, 3, 1)).astype(jnp.bfloat16)

    conv_full, (Ho0, Wo0) = conv_stack(x, packed["c0_w"], packed["c0_b"],
                                       packed["c1_w"], packed["c1_b"])
    Ho1, Wo1 = Ho0 - 2, Wo0 - 2
    # AdaptiveAvgPool2d(16) is an exact PxP mean when spatial % 16 == 0.
    # TODO(synk): general adaptive pooling (non-divisible sizes) not implemented.
    assert Ho1 % 16 == 0 and Wo1 % 16 == 0, "conv output spatial must be divisible by 16"
    ph, pw = Ho1 // 16, Wo1 // 16

    # Crop valid conv1 rows, 2x2 mean pool, NHWC flatten (l0 weight rows were
    # permuted at pack time to match), concat with y -- one small XLA fusion.
    # TODO(synk): this pool could be fused into the conv kernel epilogue
    # (strided row gather); kept in XLA for lowering robustness.
    h = conv_full[:, :Ho0 * Wo0, :].reshape(B, Ho0, Wo0, oc1)[:, :Ho1, :Wo1, :]
    h = h.reshape(B, 16, ph, 16, pw, oc1).mean(axis=(2, 4))
    h = h.reshape(B, 16 * 16 * oc1)
    feat = jnp.concatenate([y.astype(jnp.float32), h], axis=1)

    return fc_head(feat, packed, meta["fc_tk"])


# ============================================================================
# Deterministic parameter init (PyTorch-style shapes, uniform(+-1/sqrt(fan_in)))
# ============================================================================
def init_params(key, y_size, m_channels):
    def uni(k, shape, fan_in):
        bound = 1.0 / jnp.sqrt(jnp.float32(fan_in))
        return jax.random.uniform(k, shape, jnp.float32, -bound, bound)

    ks = jax.random.split(key, 10)
    feat = 32 * 16 * 16 + y_size
    return {
        "c0_w": uni(ks[0], (64, m_channels, 3, 3), m_channels * 9),
        "c0_b": uni(ks[1], (64,), m_channels * 9),
        "c1_w": uni(ks[2], (32, 64, 3, 3), 64 * 9),
        "c1_b": uni(ks[3], (32,), 64 * 9),
        "l0_w": uni(ks[4], (256, feat), feat),
        "l0_b": uni(ks[5], (256,), feat),
        "l1_w": uni(ks[6], (256, 256), 256),
        "l1_b": uni(ks[7], (256,), 256),
        "l2_w": uni(ks[8], (1, 256), 256),
        "l2_b": uni(ks[9], (1,), 256),
    }


if __name__ == "__main__":
    B, M_CHANNELS, SPATIAL, Y_SIZE = 2, 4, 36, 8  # conv out 32x32 -> pool 16x16

    root = jax.random.PRNGKey(0)
    k_p, k_y, k_m = jax.random.split(root, 3)

    params = init_params(k_p, Y_SIZE, M_CHANNELS)
    packed, meta = pack_params(params, Y_SIZE)    # one-time weight packing

    y = jax.random.normal(k_y, (B, Y_SIZE), jnp.float32)
    M = jax.random.normal(k_m, (B, M_CHANNELS, SPATIAL, SPATIAL), jnp.float32)

    forward = jax.jit(functools.partial(global_discriminator_forward, meta))
    out = jax.block_until_ready(forward(packed, y, M))
    assert out.shape == (B, 1), out.shape
    assert bool(jnp.all(jnp.isfinite(out)))
    print("KERNEL_OK")
</pallas_src>

<mosaic_0001>
module attributes {stable_mosaic.version = 11 : i64} {
  func.func @_conv_stack_kernel(%arg0: i32, %arg1: memref<1x1232x128xbf16, #tpu.memory_space<vmem>>, %arg2: memref<128x64xbf16, #tpu.memory_space<vmem>>, %arg3: memref<1x64xf32, #tpu.memory_space<vmem>>, %arg4: memref<576x32xbf16, #tpu.memory_space<vmem>>, %arg5: memref<1x32xf32, #tpu.memory_space<vmem>>, %arg6: memref<1x1160x32xf32, #tpu.memory_space<vmem>>, %arg7: memref<1232x64xf32, #tpu.memory_space<vmem>>) attributes {dimension_semantics = [#tpu.dimension_semantics<parallel>], iteration_bounds = array<i64: 2>, scalar_prefetch = 0 : i64, scratch_operands = 1 : i64, tpu.core_type = #tpu.core_type<tc>, window_params = [{transform_indices = @transform_0, window_bounds = array<i64: 1, 1232, 128>}, {pipeline_mode = #tpu.pipeline_mode<synchronous>, transform_indices = @transform_1, window_bounds = array<i64: 128, 64>}, {pipeline_mode = #tpu.pipeline_mode<synchronous>, transform_indices = @transform_2, window_bounds = array<i64: 1, 64>}, {pipeline_mode = #tpu.pipeline_mode<synchronous>, transform_indices = @transform_3, window_bounds = array<i64: 576, 32>}, {pipeline_mode = #tpu.pipeline_mode<synchronous>, transform_indices = @transform_4, window_bounds = array<i64: 1, 32>}, {transform_indices = @transform_5, window_bounds = array<i64: 1, 1160, 32>}]} {
    %c0 = arith.constant 0 : index
    %c0_0 = arith.constant 0 : index
    %c0_1 = arith.constant 0 : index
    %0 = vector.load %arg1[%c0, %c0_0, %c0_1] : memref<1x1232x128xbf16, #tpu.memory_space<vmem>>, vector<1x1232x128xbf16>
    %1 = vector.shape_cast %0 : vector<1x1232x128xbf16> to vector<1232x128xbf16>
    %c0_2 = arith.constant 0 : index
    %c0_3 = arith.constant 0 : index
    %2 = vector.load %arg2[%c0_2, %c0_3] : memref<128x64xbf16, #tpu.memory_space<vmem>>, vector<128x64xbf16>
    %cst = arith.constant dense<0.000000e+00> : vector<1232x64xf32>
    %3 = tpu.matmul %1, %2, %cst {dimension_numbers = #tpu.dot_dimension_numbers<[1], [0], [0], [1], [0, 0, 1, 1], [], []>} : vector<1232x128xbf16>, vector<128x64xbf16>, vector<1232x64xf32> -> vector<1232x64xf32>
    %c0_4 = arith.constant 0 : index
    %c0_5 = arith.constant 0 : index
    %4 = vector.load %arg3[%c0_4, %c0_5] : memref<1x64xf32, #tpu.memory_space<vmem>>, vector<1x64xf32>
    %5 = vector.broadcast %4 : vector<1x64xf32> to vector<1232x64xf32>
    %6 = arith.addf %3, %5 : vector<1232x64xf32>
    %cst_6 = arith.constant 0.000000e+00 : f32
    %7 = vector.broadcast %cst_6 : f32 to vector<1232x64xf32>
    %8 = arith.maximumf %6, %7 : vector<1232x64xf32>
    %c0_7 = arith.constant 0 : index
    %c0_8 = arith.constant 0 : index
    %9 = vector.load %arg7[%c0_7, %c0_8] : memref<1232x64xf32, #tpu.memory_space<vmem>>, vector<1232x64xf32>
    tpu.vector_store %arg7[%c0_7, %c0_8], %8 {strides = array<i32>} : memref<1232x64xf32, #tpu.memory_space<vmem>>, vector<1232x64xf32>,
    %c0_9 = arith.constant 0 : index
    %c0_10 = arith.constant 0 : index
    %10 = vector.load %arg7[%c0_9, %c0_10] : memref<1232x64xf32, #tpu.memory_space<vmem>>, vector<1160x64xf32>
    %11 = arith.truncf %10 : vector<1160x64xf32> to vector<1160x64xbf16>
    %c1 = arith.constant 1 : index
    %c0_11 = arith.constant 0 : index
    %12 = vector.load %arg7[%c1, %c0_11] : memref<1232x64xf32, #tpu.memory_space<vmem>>, vector<1160x64xf32>
    %13 = arith.truncf %12 : vector<1160x64xf32> to vector<1160x64xbf16>
    %c2 = arith.constant 2 : index
    %c0_12 = arith.constant 0 : index
    %14 = vector.load %arg7[%c2, %c0_12] : memref<1232x64xf32, #tpu.memory_space<vmem>>, vector<1160x64xf32>
    %15 = arith.truncf %14 : vector<1160x64xf32> to vector<1160x64xbf16>
    %c34 = arith.constant 34 : index
    %c0_13 = arith.constant 0 : index
    %16 = vector.load %arg7[%c34, %c0_13] : memref<1232x64xf32, #tpu.memory_space<vmem>>, vector<1160x64xf32>
    %17 = arith.truncf %16 : vector<1160x64xf32> to vector<1160x64xbf16>
    %c35 = arith.constant 35 : index
    %c0_14 = arith.constant 0 : index
    %18 = vector.load %arg7[%c35, %c0_14] : memref<1232x64xf32, #tpu.memory_space<vmem>>, vector<1160x64xf32>
    %19 = arith.truncf %18 : vector<1160x64xf32> to vector<1160x64xbf16>
    %c36 = arith.constant 36 : index
    %c0_15 = arith.constant 0 : index
    %20 = vector.load %arg7[%c36, %c0_15] : memref<1232x64xf32, #tpu.memory_space<vmem>>, vector<1160x64xf32>
    %21 = arith.truncf %20 : vector<1160x64xf32> to vector<1160x64xbf16>
    %c68 = arith.constant 68 : index
    %c0_16 = arith.constant 0 : index
    %22 = vector.load %arg7[%c68, %c0_16] : memref<1232x64xf32, #tpu.memory_space<vmem>>, vector<1160x64xf32>
    %23 = arith.truncf %22 : vector<1160x64xf32> to vector<1160x64xbf16>
    %c69 = arith.constant 69 : index
    %c0_17 = arith.constant 0 : index
    %24 = vector.load %arg7[%c69, %c0_17] : memref<1232x64xf32, #tpu.memory_space<vmem>>, vector<1160x64xf32>
    %25 = arith.truncf %24 : vector<1160x64xf32> to vector<1160x64xbf16>
    %c70 = arith.constant 70 : index
    %c0_18 = arith.constant 0 : index
    %26 = vector.load %arg7[%c70, %c0_18] : memref<1232x64xf32, #tpu.memory_space<vmem>>, vector<1160x64xf32>
    %27 = arith.truncf %26 : vector<1160x64xf32> to vector<1160x64xbf16>
    %28 = tpu.concatenate %11, %13, %15, %17, %19, %21, %23, %25, %27 in 1 : vector<1160x64xbf16>, vector<1160x64xbf16>, vector<1160x64xbf16>, vector<1160x64xbf16>, vector<1160x64xbf16>, vector<1160x64xbf16>, vector<1160x64xbf16>, vector<1160x64xbf16>, vector<1160x64xbf16> -> vector<1160x576xbf16>
    %c0_19 = arith.constant 0 : index
    %c0_20 = arith.constant 0 : index
    %29 = vector.load %arg4[%c0_19, %c0_20] : memref<576x32xbf16, #tpu.memory_space<vmem>>, vector<576x32xbf16>
    %cst_21 = arith.constant dense<0.000000e+00> : vector<1160x32xf32>
    %30 = tpu.matmul %28, %29, %cst_21 {dimension_numbers = #tpu.dot_dimension_numbers<[1], [0], [0], [1], [0, 0, 1, 1], [], []>} : vector<1160x576xbf16>, vector<576x32xbf16>, vector<1160x32xf32> -> vector<1160x32xf32>
    %c0_22 = arith.constant 0 : index
    %c0_23 = arith.constant 0 : index
    %31 = vector.load %arg5[%c0_22, %c0_23] : memref<1x32xf32, #tpu.memory_space<vmem>>, vector<1x32xf32>
    %32 = vector.broadcast %31 : vector<1x32xf32> to vector<1160x32xf32>
    %33 = arith.addf %30, %32 : vector<1160x32xf32>
    %c0_24 = arith.constant 0 : index
    %c0_25 = arith.constant 0 : index
    %c0_26 = arith.constant 0 : index
    %34 = vector.load %arg6[%c0_24, %c0_25, %c0_26] : memref<1x1160x32xf32, #tpu.memory_space<vmem>>, vector<1x1160x32xf32>
    %35 = vector.shape_cast %34 : vector<1x1160x32xf32> to vector<1160x32xf32>
    %36 = vector.shape_cast %33 : vector<1160x32xf32> to vector<1x1160x32xf32>
    tpu.vector_store %arg6[%c0_24, %c0_25, %c0_26], %36 {strides = array<i32>} : memref<1x1160x32xf32, #tpu.memory_space<vmem>>, vector<1x1160x32xf32>,
    return
  }
  func.func @transform_0(%arg0: i32) -> (i32, i32, i32) {
    %c0_i32 = arith.constant 0 : i32
    %c0_i32_0 = arith.constant 0 : i32
    %c0_i32_1 = arith.constant 0 : i32
    return %arg0, %c0_i32, %c0_i32_0 : i32, i32, i32
  }
  func.func @transform_1(%arg0: i32) -> (i32, i32) {
    %c0_i32 = arith.constant 0 : i32
    %c0_i32_0 = arith.constant 0 : i32
    %c0_i32_1 = arith.constant 0 : i32
    return %c0_i32, %c0_i32_0 : i32, i32
  }
  func.func @transform_2(%arg0: i32) -> (i32, i32) {
    %c0_i32 = arith.constant 0 : i32
    %c0_i32_0 = arith.constant 0 : i32
    %c0_i32_1 = arith.constant 0 : i32
    return %c0_i32, %c0_i32_0 : i32, i32
  }
  func.func @transform_3(%arg0: i32) -> (i32, i32) {
    %c0_i32 = arith.constant 0 : i32
    %c0_i32_0 = arith.constant 0 : i32
    %c0_i32_1 = arith.constant 0 : i32
    return %c0_i32, %c0_i32_0 : i32, i32
  }
  func.func @transform_4(%arg0: i32) -> (i32, i32) {
    %c0_i32 = arith.constant 0 : i32
    %c0_i32_0 = arith.constant 0 : i32
    %c0_i32_1 = arith.constant 0 : i32
    return %c0_i32, %c0_i32_0 : i32, i32
  }
  func.func @transform_5(%arg0: i32) -> (i32, i32, i32) {
    %c0_i32 = arith.constant 0 : i32
    %c0_i32_0 = arith.constant 0 : i32
    %c0_i32_1 = arith.constant 0 : i32
    return %arg0, %c0_i32, %c0_i32_0 : i32, i32, i32
  }
}

module attributes {stable_mosaic.version = 11 : i64} {
  func.func @_fc_head_kernel(%arg0: i32, %arg1: memref<8x2816xbf16, #tpu.memory_space<vmem>>, %arg2: memref<2816x256xi8, #tpu.memory_space<vmem>>, %arg3: memref<1x256xf32, #tpu.memory_space<vmem>>, %arg4: memref<1x256xf32, #tpu.memory_space<vmem>>, %arg5: memref<256x256xbf16, #tpu.memory_space<vmem>>, %arg6: memref<1x256xf32, #tpu.memory_space<vmem>>, %arg7: memref<256x128xbf16, #tpu.memory_space<vmem>>, %arg8: memref<1x128xf32, #tpu.memory_space<vmem>>, %arg9: memref<2x1xf32, #tpu.memory_space<vmem>>, %arg10: memref<8x256xf32, #tpu.memory_space<vmem>>) attributes {dimension_semantics = [#tpu.dimension_semantics<arbitrary>], iteration_bounds = array<i64: 3>, scalar_prefetch = 0 : i64, scratch_operands = 1 : i64, tpu.core_type = #tpu.core_type<tc>, window_params = [{transform_indices = @transform_0, window_bounds = array<i64: 8, 2816>}, {transform_indices = @transform_1, window_bounds = array<i64: 2816, 256>}, {pipeline_mode = #tpu.pipeline_mode<synchronous>, transform_indices = @transform_2, window_bounds = array<i64: 1, 256>}, {pipeline_mode = #tpu.pipeline_mode<synchronous>, transform_indices = @transform_3, window_bounds = array<i64: 1, 256>}, {pipeline_mode = #tpu.pipeline_mode<synchronous>, transform_indices = @transform_4, window_bounds = array<i64: 256, 256>}, {pipeline_mode = #tpu.pipeline_mode<synchronous>, transform_indices = @transform_5, window_bounds = array<i64: 1, 256>}, {pipeline_mode = #tpu.pipeline_mode<synchronous>, transform_indices = @transform_6, window_bounds = array<i64: 256, 128>}, {pipeline_mode = #tpu.pipeline_mode<synchronous>, transform_indices = @transform_7, window_bounds = array<i64: 1, 128>}, {pipeline_mode = #tpu.pipeline_mode<synchronous>, transform_indices = @transform_8, window_bounds = array<i64: 2, 1>}]} {
    %c0_i32 = arith.constant 0 : i32
    %0 = arith.cmpi eq, %arg0, %c0_i32 : i32
    %1 = arith.extui %0 : i1 to i32
    %c0_i32_0 = arith.constant 0 : i32
    %2 = arith.cmpi ne, %1, %c0_i32_0 : i32
    scf.if %2 {
      %cst_11 = arith.constant 0.000000e+00 : f32
      %17 = vector.broadcast %cst_11 : f32 to vector<8x256xf32>
      %c0_12 = arith.constant 0 : index
      %c0_13 = arith.constant 0 : index
      %18 = vector.load %arg10[%c0_12, %c0_13] : memref<8x256xf32, #tpu.memory_space<vmem>>, vector<8x256xf32>
      tpu.vector_store %arg10[%c0_12, %c0_13], %17 {strides = array<i32>} : memref<8x256xf32, #tpu.memory_space<vmem>>, vector<8x256xf32>,
    } else {
    }
    %c0 = arith.constant 0 : index
    %c0_1 = arith.constant 0 : index
    %3 = vector.load %arg2[%c0, %c0_1] : memref<2816x256xi8, #tpu.memory_space<vmem>>, vector<2816x256xi8>
    %4 = arith.sitofp %3 : vector<2816x256xi8> to vector<2816x256xf32>
    %c0_2 = arith.constant 0 : index
    %c0_3 = arith.constant 0 : index
    %5 = vector.load %arg3[%c0_2, %c0_3] : memref<1x256xf32, #tpu.memory_space<vmem>>, vector<1x256xf32>
    %6 = vector.broadcast %5 : vector<1x256xf32> to vector<2816x256xf32>
    %7 = arith.mulf %4, %6 : vector<2816x256xf32>
    %8 = arith.truncf %7 : vector<2816x256xf32> to vector<2816x256xbf16>
    %c0_4 = arith.constant 0 : index
    %c0_5 = arith.constant 0 : index
    %9 = vector.load %arg10[%c0_4, %c0_5] : memref<8x256xf32, #tpu.memory_space<vmem>>, vector<8x256xf32>
    %c0_6 = arith.constant 0 : index
    %c0_7 = arith.constant 0 : index
    %10 = vector.load %arg1[%c0_6, %c0_7] : memref<8x2816xbf16, #tpu.memory_space<vmem>>, vector<8x2816xbf16>
    %cst = arith.constant dense<0.000000e+00> : vector<8x256xf32>
    %11 = tpu.matmul %10, %8, %cst {dimension_numbers = #tpu.dot_dimension_numbers<[1], [0], [0], [1], [0, 0, 1, 1], [], []>} : vector<8x2816xbf16>, vector<2816x256xbf16>, vector<8x256xf32> -> vector<8x256xf32>
    %12 = arith.addf %9, %11 : vector<8x256xf32>
    %c0_8 = arith.constant 0 : index
    %c0_9 = arith.constant 0 : index
    %13 = vector.load %arg10[%c0_8, %c0_9] : memref<8x256xf32, #tpu.memory_space<vmem>>, vector<8x256xf32>
    tpu.vector_store %arg10[%c0_8, %c0_9], %12 {strides = array<i32>} : memref<8x256xf32, #tpu.memory_space<vmem>>, vector<8x256xf32>,
    %c2_i32 = arith.constant 2 : i32
    %14 = arith.cmpi eq, %arg0, %c2_i32 : i32
    %15 = arith.extui %14 : i1 to i32
    %c0_i32_10 = arith.constant 0 : i32
    %16 = arith.cmpi ne, %15, %c0_i32_10 : i32
    scf.if %16 {
      %c0_11 = arith.constant 0 : index
      %c0_12 = arith.constant 0 : index
      %17 = vector.load %arg10[%c0_11, %c0_12] : memref<8x256xf32, #tpu.memory_space<vmem>>, vector<8x256xf32>
      %c0_13 = arith.constant 0 : index
      %c0_14 = arith.constant 0 : index
      %18 = vector.load %arg4[%c0_13, %c0_14] : memref<1x256xf32, #tpu.memory_space<vmem>>, vector<1x256xf32>
      %19 = vector.broadcast %18 : vector<1x256xf32> to vector<8x256xf32>
      %20 = arith.addf %17, %19 : vector<8x256xf32>
      %cst_15 = arith.constant 0.000000e+00 : f32
      %21 = vector.broadcast %cst_15 : f32 to vector<8x256xf32>
      %22 = arith.maximumf %20, %21 : vector<8x256xf32>
      %23 = arith.truncf %22 : vector<8x256xf32> to vector<8x256xbf16>
      %c0_16 = arith.constant 0 : index
      %c0_17 = arith.constant 0 : index
      %24 = vector.load %arg5[%c0_16, %c0_17] : memref<256x256xbf16, #tpu.memory_space<vmem>>, vector<256x256xbf16>
      %cst_18 = arith.constant dense<0.000000e+00> : vector<8x256xf32>
      %25 = tpu.matmul %23, %24, %cst_18 {dimension_numbers = #tpu.dot_dimension_numbers<[1], [0], [0], [1], [0, 0, 1, 1], [], []>} : vector<8x256xbf16>, vector<256x256xbf16>, vector<8x256xf32> -> vector<8x256xf32>
      %c0_19 = arith.constant 0 : index
      %c0_20 = arith.constant 0 : index
      %26 = vector.load %arg6[%c0_19, %c0_20] : memref<1x256xf32, #tpu.memory_space<vmem>>, vector<1x256xf32>
      %27 = vector.broadcast %26 : vector<1x256xf32> to vector<8x256xf32>
      %28 = arith.addf %25, %27 : vector<8x256xf32>
      %cst_21 = arith.constant 0.000000e+00 : f32
      %29 = vector.broadcast %cst_21 : f32 to vector<8x256xf32>
      %30 = arith.maximumf %28, %29 : vector<8x256xf32>
      %31 = arith.truncf %30 : vector<8x256xf32> to vector<8x256xbf16>
      %c0_22 = arith.constant 0 : index
      %c0_23 = arith.constant 0 : index
      %32 = vector.load %arg7[%c0_22, %c0_23] : memref<256x128xbf16, #tpu.memory_space<vmem>>, vector<256x128xbf16>
      %cst_24 = arith.constant dense<0.000000e+00> : vector<8x128xf32>
      %33 = tpu.matmul %31, %32, %cst_24 {dimension_numbers = #tpu.dot_dimension_numbers<[1], [0], [0], [1], [0, 0, 1, 1], [], []>} : vector<8x256xbf16>, vector<256x128xbf16>, vector<8x128xf32> -> vector<8x128xf32>
      %c0_25 = arith.constant 0 : index
      %c0_26 = arith.constant 0 : index
      %34 = vector.load %arg8[%c0_25, %c0_26] : memref<1x128xf32, #tpu.memory_space<vmem>>, vector<1x128xf32>
      %35 = vector.broadcast %34 : vector<1x128xf32> to vector<8x128xf32>
      %36 = arith.addf %33, %35 : vector<8x128xf32>
      %37 = vector.extract_strided_slice %36 {offsets = [0, 0], sizes = [2, 1], strides = [1, 1]} : vector<8x128xf32> to vector<2x1xf32>
      %c0_27 = arith.constant 0 : index
      %c0_28 = arith.constant 0 : index
      %38 = vector.load %arg9[%c0_27, %c0_28] : memref<2x1xf32, #tpu.memory_space<vmem>>, vector<2x1xf32>
      tpu.vector_store %arg9[%c0_27, %c0_28], %37 {strides = array<i32>} : memref<2x1xf32, #tpu.memory_space<vmem>>, vector<2x1xf32>,
    } else {
    }
    return
  }
  func.func @transform_0(%arg0: i32) -> (i32, i32) {
    %c0_i32 = arith.constant 0 : i32
    %c0_i32_0 = arith.constant 0 : i32
    return %c0_i32, %arg0 : i32, i32
  }
  func.func @transform_1(%arg0: i32) -> (i32, i32) {
    %c0_i32 = arith.constant 0 : i32
    %c0_i32_0 = arith.constant 0 : i32
    return %arg0, %c0_i32 : i32, i32
  }
  func.func @transform_2(%arg0: i32) -> (i32, i32) {
    %c0_i32 = arith.constant 0 : i32
    %c0_i32_0 = arith.constant 0 : i32
    %c0_i32_1 = arith.constant 0 : i32
    return %c0_i32, %c0_i32_0 : i32, i32
  }
  func.func @transform_3(%arg0: i32) -> (i32, i32) {
    %c0_i32 = arith.constant 0 : i32
    %c0_i32_0 = arith.constant 0 : i32
    %c0_i32_1 = arith.constant 0 : i32
    return %c0_i32, %c0_i32_0 : i32, i32
  }
  func.func @transform_4(%arg0: i32) -> (i32, i32) {
    %c0_i32 = arith.constant 0 : i32
    %c0_i32_0 = arith.constant 0 : i32
    %c0_i32_1 = arith.constant 0 : i32
    return %c0_i32, %c0_i32_0 : i32, i32
  }
  func.func @transform_5(%arg0: i32) -> (i32, i32) {
    %c0_i32 = arith.constant 0 : i32
    %c0_i32_0 = arith.constant 0 : i32
    %c0_i32_1 = arith.constant 0 : i32
    return %c0_i32, %c0_i32_0 : i32, i32
  }
  func.func @transform_6(%arg0: i32) -> (i32, i32) {
    %c0_i32 = arith.constant 0 : i32
    %c0_i32_0 = arith.constant 0 : i32
    %c0_i32_1 = arith.constant 0 : i32
    return %c0_i32, %c0_i32_0 : i32, i32
  }
  func.func @transform_7(%arg0: i32) -> (i32, i32) {
    %c0_i32 = arith.constant 0 : i32
    %c0_i32_0 = arith.constant 0 : i32
    %c0_i32_1 = arith.constant 0 : i32
    return %c0_i32, %c0_i32_0 : i32, i32
  }
  func.func @transform_8(%arg0: i32) -> (i32, i32) {
    %c0_i32 = arith.constant 0 : i32
    %c0_i32_0 = arith.constant 0 : i32
    %c0_i32_1 = arith.constant 0 : i32
    return %c0_i32, %c0_i32_0 : i32, i32
  }
}

</mosaic_0001>

<llo_original>
// kernel: global_discriminator_forward.2
$region0: #{global_discriminator_forward.2}
  #allocation0 [shape = 'u32[]', space=smem, size = 0x4, offset = 0x4, fixed_abs, tag = 'smem constant byte address 0x4 - core index']
  #allocation1 [shape = 'u32[144,128]{1,0:T(1,128)}', space=vmem, size = 0x12000, scoped, tag = 'internal scratch']
  #allocation2 [shape = 'f32[1232,64]{1,0:T(8,128)}', space=vmem, size = 0x9a000, scoped, tag = 'scratch operand']
  %s0 = inlined_call_operand.vmem [shape: bf16[2,1232,128], index: 0, kind: input, shape index: {}]
  %s1 = inlined_call_operand.vmem [shape: bf16[128,64], index: 1, kind: input, shape index: {}]
  %s2 = inlined_call_operand.vmem [shape: f32[1,64], index: 2, kind: input, shape index: {}]
  %s3 = inlined_call_operand.vmem [shape: bf16[576,32], index: 3, kind: input, shape index: {}]
  %s4 = inlined_call_operand.vmem [shape: f32[1,32], index: 4, kind: input, shape index: {}]
  %s5 = inlined_call_operand.vmem [shape: f32[2,1160,32], index: 5, kind: output, shape index: {}]
  %s6 = sld [smem:[#allocation0]]
  $region53: #{global_discriminator_forward.2} parent=0
    _
  %s8 = ssub.s32 1, %s6
  %s9 = scalar_select 0, %s8, %s6
  loop: start=0, step=1, limit=4
  $region2: #{global_discriminator_forward.2} parent=0 // loop_pre_header
    _
  $region3: #{global_discriminator_forward.2} parent=0 // loop_header
    %s11 = sphi 0, %s15
    %p12 = scmp.ge.s32.totalorder %s11, 4
    %s21 = sphi 0, %s23
    %s24 = sphi 0, %s21
    %s25 = sphi 0, %s24
    %s41 = sphi 0, %s25
    %s45 = sphi 0, %s45
    %s47 = sphi 0, %s45
    %s48 = sphi 0, %s47
    %s62 = sphi 0, %s48
    %s66 = sphi 0, %s66
    %s68 = sphi 0, %s66
    %s69 = sphi 0, %s68
    %s83 = sphi 0, %s69
    %s87 = sphi 0, %s87
    %s89 = sphi 0, %s87
    %s90 = sphi 0, %s89
    %s104 = sphi 0, %s90
    %s108 = sphi 0, %s108
    %s110 = sphi 0, %s108
    %s111 = sphi 0, %s110
    %s125 = sphi 0, %s111
    %s131 = sphi 0, %s133
    %s134 = sphi 0, %s131
    %s135 = sphi 0, %s134
    %s151 = sphi 0, %s135
  $region4: #{global_discriminator_forward.2} parent=0 // loop_header_branch
    %14 = sbr.rel (%p12) target = $region8
  $region5: #{global_discriminator_forward.2} parent=0 // loop_body
    %s16 = ssub.s32 %s11, 1
    %s17 = ssub.s32 %s11, 2
    %s18 = sadd.s32 %s11, 1
    %s19 = ssub.s32 %s11, %s18
    %p20 = scmp.eq.s32.totalorder %s19, 0
    %s22 = sadd.s32 %s21, 1
    %s23 = scalar_select %p20, %s21, %s22
    %p26 = pneg %p20
    %p27 = scmp.eq.s32.totalorder %s11, 1
    %p28 = por %p26, %p27
    %p29 = scmp.ne.s32.totalorder %s21, %s24
    %p30 = scmp.eq.s32.totalorder %s11, 0
    %p31 = por %p29, %p30
    %p32 = scmp.ne.s32.totalorder %s21, %s24
    %p33 = scmp.eq.s32.totalorder %s16, 1
    %p34 = por %p32, %p33
    %p35 = scmp.ne.s32.totalorder %s24, %s25
    %p36 = scmp.eq.s32.totalorder %s16, 0
    %p37 = por %p35, %p36
    %p38 = scmp.ne.s32.totalorder %s24, %s25
    %p39 = scmp.eq.s32.totalorder %s17, 1
    %p40 = por %p38, %p39
    %p42 = scmp.ne.s32.totalorder %s25, %s41
    %p43 = scmp.eq.s32.totalorder %s17, 0
    %p44 = por %p42, %p43
    %s46 = sadd.s32 %s45, 1
    %p49 = scmp.eq.s32.totalorder %s11, 1
    %p50 = scmp.ne.s32.totalorder %s45, %s47
    %p51 = scmp.eq.s32.totalorder %s11, 0
    %p52 = por %p50, %p51
    %p53 = scmp.ne.s32.totalorder %s45, %s47
    %p54 = scmp.eq.s32.totalorder %s16, 1
    %p55 = por %p53, %p54
    %p56 = scmp.ne.s32.totalorder %s47, %s48
    %p57 = scmp.eq.s32.totalorder %s16, 0
    %p58 = por %p56, %p57
    %p59 = scmp.ne.s32.totalorder %s47, %s48
    %p60 = scmp.eq.s32.totalorder %s17, 1
    %p61 = por %p59, %p60
    %p63 = scmp.ne.s32.totalorder %s48, %s62
    %p64 = scmp.eq.s32.totalorder %s17, 0
    %p65 = por %p63, %p64
    %s67 = sadd.s32 %s66, 1
    %p70 = scmp.eq.s32.totalorder %s11, 1
    %p71 = scmp.ne.s32.totalorder %s66, %s68
    %p72 = scmp.eq.s32.totalorder %s11, 0
    %p73 = por %p71, %p72
    %p74 = scmp.ne.s32.totalorder %s66, %s68
    %p75 = scmp.eq.s32.totalorder %s16, 1
    %p76 = por %p74, %p75
    %p77 = scmp.ne.s32.totalorder %s68, %s69
    %p78 = scmp.eq.s32.totalorder %s16, 0
    %p79 = por %p77, %p78
    %p80 = scmp.ne.s32.totalorder %s68, %s69
    %p81 = scmp.eq.s32.totalorder %s17, 1
    %p82 = por %p80, %p81
    %p84 = scmp.ne.s32.totalorder %s69, %s83
    %p85 = scmp.eq.s32.totalorder %s17, 0
    %p86 = por %p84, %p85
    %s88 = sadd.s32 %s87, 1
    %p91 = scmp.eq.s32.totalorder %s11, 1
    %p92 = scmp.ne.s32.totalorder %s87, %s89
    %p93 = scmp.eq.s32.totalorder %s11, 0
    %p94 = por %p92, %p93
    %p95 = scmp.ne.s32.totalorder %s87, %s89
    %p96 = scmp.eq.s32.totalorder %s16, 1
    %p97 = por %p95, %p96
    %p98 = scmp.ne.s32.totalorder %s89, %s90
    %p99 = scmp.eq.s32.totalorder %s16, 0
    %p100 = por %p98, %p99
    %p101 = scmp.ne.s32.totalorder %s89, %s90
    %p102 = scmp.eq.s32.totalorder %s17, 1
    %p103 = por %p101, %p102
    %p105 = scmp.ne.s32.totalorder %s90, %s104
    %p106 = scmp.eq.s32.totalorder %s17, 0
    %p107 = por %p105, %p106
    %s109 = sadd.s32 %s108, 1
    %p112 = scmp.eq.s32.totalorder %s11, 1
    %p113 = scmp.ne.s32.totalorder %s108, %s110
    %p114 = scmp.eq.s32.totalorder %s11, 0
    %p115 = por %p113, %p114
    %p116 = scmp.ne.s32.totalorder %s108, %s110
    %p117 = scmp.eq.s32.totalorder %s16, 1
    %p118 = por %p116, %p117
    %p119 = scmp.ne.s32.totalorder %s110, %s111
    %p120 = scmp.eq.s32.totalorder %s16, 0
    %p121 = por %p119, %p120
    %p122 = scmp.ne.s32.totalorder %s110, %s111
    %p123 = scmp.eq.s32.totalorder %s17, 1
    %p124 = por %p122, %p123
    %p126 = scmp.ne.s32.totalorder %s111, %s125
    %p127 = scmp.eq.s32.totalorder %s17, 0
    %p128 = por %p126, %p127
    %s129 = ssub.s32 %s11, %s18
    %p130 = scmp.eq.s32.totalorder %s129, 0
    %s132 = sadd.s32 %s131, 1
    %s133 = scalar_select %p130, %s131, %s132
    %p136 = pneg %p130
    %p137 = scmp.eq.s32.totalorder %s11, 1
    %p138 = por %p136, %p137
    %p139 = scmp.ne.s32.totalorder %s131, %s134
    %p140 = scmp.eq.s32.totalorder %s11, 0
    %p141 = por %p139, %p140
    %p142 = scmp.ne.s32.totalorder %s131, %s134
    %p143 = scmp.eq.s32.totalorder %s16, 1
    %p144 = por %p142, %p143
    %p145 = scmp.ne.s32.totalorder %s134, %s135
    %p146 = scmp.eq.s32.totalorder %s16, 0
    %p147 = por %p145, %p146
    %p148 = scmp.ne.s32.totalorder %s134, %s135
    %p149 = scmp.eq.s32.totalorder %s17, 1
    %p150 = por %p148, %p149
    %p152 = scmp.ne.s32.totalorder %s135, %s151
    %p153 = scmp.eq.s32.totalorder %s17, 0
    %p154 = por %p152, %p153
    %p155 = scmp.le.s32.totalorder 1, %s11
    %p156 = scmp.lt.s32.totalorder %s11, 3
    %p157 = pnand %p155, %p156
    %p158 = pneg %p157
    // Predicated region
    $region9: #{global_discriminator_forward.2} parent=5 // pred_check
      _
    $region10: #{global_discriminator_forward.2} parent=5 // pred_check_branch
      %160 = sbr.rel (%p157) target = $region12
    $region11: #{global_discriminator_forward.2} parent=5 // pred_region
      %s161 = ssub.s32 %s11, 1
      // Predicated region
      $region13: #{global_discriminator_forward.2} parent=11 // pred_check
        %p162 = pneg %p58
      $region14: #{global_discriminator_forward.2} parent=11 // pred_check_branch
        %164 = sbr.rel (%p162) target = $region16
      $region15: #{global_discriminator_forward.2} parent=11 // pred_region
        _
      $region16: #{global_discriminator_forward.2} parent=11 // pred_fallthru
        _
      // Predicated region
      $region17: #{global_discriminator_forward.2} parent=11 // pred_check
        %p165 = pneg %p79
      $region18: #{global_discriminator_forward.2} parent=11 // pred_check_branch
        %167 = sbr.rel (%p165) target = $region20
      $region19: #{global_discriminator_forward.2} parent=11 // pred_region
        _
      $region20: #{global_discriminator_forward.2} parent=11 // pred_fallthru
        _
      // Predicated region
      $region21: #{global_discriminator_forward.2} parent=11 // pred_check
        %p168 = pneg %p100
      $region22: #{global_discriminator_forward.2} parent=11 // pred_check_branch
        %170 = sbr.rel (%p168) target = $region24
      $region23: #{global_discriminator_forward.2} parent=11 // pred_region
        _
      $region24: #{global_discriminator_forward.2} parent=11 // pred_fallthru
        _
      // Predicated region
      $region25: #{global_discriminator_forward.2} parent=11 // pred_check
        %p171 = pneg %p121
      $region26: #{global_discriminator_forward.2} parent=11 // pred_check_branch
        %173 = sbr.rel (%p171) target = $region28
      $region27: #{global_discriminator_forward.2} parent=11 // pred_region
        _
      $region28: #{global_discriminator_forward.2} parent=11 // pred_fallthru
        _
    $region12: #{global_discriminator_forward.2} parent=5 // pred_fallthru
      _
    %p174 = scmp.lt.s32.totalorder %s11, 2
    // Predicated region
    $region29: #{global_discriminator_forward.2} parent=5 // pred_check
      %p175 = pneg %p174
    $region30: #{global_discriminator_forward.2} parent=5 // pred_check_branch
      %177 = sbr.rel (%p175) target = $region32
    $region31: #{global_discriminator_forward.2} parent=5 // pred_region
      // Predicated region
      $region33: #{global_discriminator_forward.2} parent=31 // pred_check
        %p178 = pneg %p31
      $region34: #{global_discriminator_forward.2} parent=31 // pred_check_branch
        %180 = sbr.rel (%p178) target = $region36
      $region35: #{global_discriminator_forward.2} parent=31 // pred_region
        %p181 = scmp.lt.s32.totalorder %s11, 1
        %s182 = scalar_select %p181, %s11, 1
        %s183 = smul.addr %s182, 154
        %s184 = smul.addr %s183, 4
        %s185 = scalar_lea.vmem %s0, %s184
      $region36: #{global_discriminator_forward.2} parent=31 // pred_fallthru
        _
    $region32: #{global_discriminator_forward.2} parent=5 // pred_fallthru
      _
    %p186 = scmp.le.s32.totalorder 1, %s11
    %p187 = scmp.lt.s32.totalorder %s11, 3
    %p188 = pnand %p186, %p187
    %p189 = pneg %p188
    // Predicated region
    $region37: #{global_discriminator_forward.2} parent=5 // pred_check
      _
    $region38: #{global_discriminator_forward.2} parent=5 // pred_check_branch
      %191 = sbr.rel (%p188) target = $region40
    $region39: #{global_discriminator_forward.2} parent=5 // pred_region
      %s192 = ssub.s32 %s11, 1
      %p193 = scmp.lt.s32.totalorder %s16, 1
      %s194 = scalar_select %p193, %s16, 1
      %s195 = smul.addr %s194, 154
      %s196 = smul.addr %s195, 4
      %s197 = scalar_lea.vmem %s0, %s196
      %p198 = pneg %p37
      %p199 = pneg %p34
      %p200 = pneg %p58
      %p201 = pneg %p55
      %p202 = pneg %p79
      %p203 = pneg %p76
      %p204 = pneg %p100
      %p205 = pneg %p97
      %p206 = pneg %p121
      %p207 = pneg %p118
      %p208 = pneg %p147
      %p209 = pneg %p144
      %p210 = scmp.lt.s32.totalorder %s16, 1
      %s211 = scalar_select %p210, %s16, 1
      %s212 = smul.addr %s211, 145
      %s213 = smul.addr %s212, 8
      %s214 = scalar_lea.vmem %s5, %s213
      %p215 = scmp.lt.s32.totalorder %s16, 1
      %s216 = scalar_select %p215, %s16, 1
      %s217 = smul.addr %s216, 154
      %s218 = smul.addr %s217, 4
      %s219 = scalar_lea.vmem %s0, %s218
      %p220 = scmp.lt.s32.totalorder %s16, 1
      %s221 = scalar_select %p220, %s16, 1
      %s222 = smul.addr %s221, 145
      %s223 = smul.addr %s222, 8
      %s224 = scalar_lea.vmem %s5, %s223
      %v226 = vld [vmem:[%s219] sm:$0xf]
      %v227 = vld [vmem:[%s219 + $0x4] sm:$0xf]
      %v228 = vld [vmem:[%s219 + $0x8] sm:$0xf]
      %v229 = vld [vmem:[%s219 + $0xc] sm:$0xf]
      %v230 = vld [vmem:[%s219 + $0x10] sm:$0xf]
      %v231 = vld [vmem:[%s219 + $0x14] sm:$0xf]
      %v232 = vld [vmem:[%s219 + $0x18] sm:$0xf]
      %v233 = vld [vmem:[%s219 + $0x1c] sm:$0xf]
      %v234 = vld [vmem:[%s219 + $0x20] sm:$0xf]
      %v235 = vld [vmem:[%s219 + $0x24] sm:$0xf]
      %v236 = vld [vmem:[%s219 + $0x28] sm:$0xf]
      %v237 = vld [vmem:[%s219 + $0x2c] sm:$0xf]
      %v238 = vld [vmem:[%s219 + $0x30] sm:$0xf]
      %v239 = vld [vmem:[%s219 + $0x34] sm:$0xf]
      %v240 = vld [vmem:[%s219 + $0x38] sm:$0xf]
      %v241 = vld [vmem:[%s219 + $0x3c] sm:$0xf]
      %v242 = vld [vmem:[%s219 + $0x40] sm:$0xf]
      %v243 = vld [vmem:[%s219 + $0x44] sm:$0xf]
      %v244 = vld [vmem:[%s219 + $0x48] sm:$0xf]
      %v245 = vld [vmem:[%s219 + $0x4c] sm:$0xf]
      %v246 = vld [vmem:[%s219 + $0x50] sm:$0xf]
      %v247 = vld [vmem:[%s219 + $0x54] sm:$0xf]
      %v248 = vld [vmem:[%s219 + $0x58] sm:$0xf]
      %v249 = vld [vmem:[%s219 + $0x5c] sm:$0xf]
      %v250 = vld [vmem:[%s219 + $0x60] sm:$0xf]
      %v251 = vld [vmem:[%s219 + $0x64] sm:$0xf]
      %v252 = vld [vmem:[%s219 + $0x68] sm:$0xf]
      %v253 = vld [vmem:[%s219 + $0x6c] sm:$0xf]
      %v254 = vld [vmem:[%s219 + $0x70] sm:$0xf]
      %v255 = vld [vmem:[%s219 + $0x74] sm:$0xf]
      %v256 = vld [vmem:[%s219 + $0x78] sm:$0xf]
      %v257 = vld [vmem:[%s219 + $0x7c] sm:$0xf]
      %v258 = vld [vmem:[%s219 + $0x80] sm:$0xf]
      %v259 = vld [vmem:[%s219 + $0x84] sm:$0xf]
      %v260 = vld [vmem:[%s219 + $0x88] sm:$0xf]
      %v261 = vld [vmem:[%s219 + $0x8c] sm:$0xf]
      %v262 = vld [vmem:[%s219 + $0x90] sm:$0xf]
      %v263 = vld [vmem:[%s219 + $0x94] sm:$0xf]
      %v264 = vld [vmem:[%s219 + $0x98] sm:$0xf]
      %v265 = vld [vmem:[%s219 + $0x9c] sm:$0xf]
      %v266 = vld [vmem:[%s219 + $0xa0] sm:$0xf]
      %v267 = vld [vmem:[%s219 + $0xa4] sm:$0xf]
      %v268 = vld [vmem:[%s219 + $0xa8] sm:$0xf]
      %v269 = vld [vmem:[%s219 + $0xac] sm:$0xf]
      %v270 = vld [vmem:[%s219 + $0xb0] sm:$0xf]
      %v271 = vld [vmem:[%s219 + $0xb4] sm:$0xf]
      %v272 = vld [vmem:[%s219 + $0xb8] sm:$0xf]
      %v273 = vld [vmem:[%s219 + $0xbc] sm:$0xf]
      %v274 = vld [vmem:[%s219 + $0xc0] sm:$0xf]
      %v275 = vld [vmem:[%s219 + $0xc4] sm:$0xf]
      %v276 = vld [vmem:[%s219 + $0xc8] sm:$0xf]
      %v277 = vld [vmem:[%s219 + $0xcc] sm:$0xf]
      %v278 = vld [vmem:[%s219 + $0xd0] sm:$0xf]
      %v279 = vld [vmem:[%s219 + $0xd4] sm:$0xf]
      %v280 = vld [vmem:[%s219 + $0xd8] sm:$0xf]
      %v281 = vld [vmem:[%s219 + $0xdc] sm:$0xf]
      %v282 = vld [vmem:[%s219 + $0xe0] sm:$0xf]
      %v283 = vld [vmem:[%s219 + $0xe4] sm:$0xf]
      %v284 = vld [vmem:[%s219 + $0xe8] sm:$0xf]
      %v285 = vld [vmem:[%s219 + $0xec] sm:$0xf]
      %v286 = vld [vmem:[%s219 + $0xf0] sm:$0xf]
      %v287 = vld [vmem:[%s219 + $0xf4] sm:$0xf]
      %v288 = vld [vmem:[%s219 + $0xf8] sm:$0xf]
      %v289 = vld [vmem:[%s219 + $0xfc] sm:$0xf]
      %v290 = vld [vmem:[%s219 + $0x100] sm:$0xf]
      %v291 = vld [vmem:[%s219 + $0x104] sm:$0xf]
      %v292 = vld [vmem:[%s219 + $0x108] sm:$0xf]
      %v293 = vld [vmem:[%s219 + $0x10c] sm:$0xf]
      %v294 = vld [vmem:[%s219 + $0x110] sm:$0xf]
      %v295 = vld [vmem:[%s219 + $0x114] sm:$0xf]
      %v296 = vld [vmem:[%s219 + $0x118] sm:$0xf]
      %v297 = vld [vmem:[%s219 + $0x11c] sm:$0xf]
      %v298 = vld [vmem:[%s219 + $0x120] sm:$0xf]
      %v299 = vld [vmem:[%s219 + $0x124] sm:$0xf]
      %v300 = vld [vmem:[%s219 + $0x128] sm:$0xf]
      %v301 = vld [vmem:[%s219 + $0x12c] sm:$0xf]
      %v302 = vld [vmem:[%s219 + $0x130] sm:$0xf]
      %v303 = vld [vmem:[%s219 + $0x134] sm:$0xf]
      %v304 = vld [vmem:[%s219 + $0x138] sm:$0xf]
      %v305 = vld [vmem:[%s219 + $0x13c] sm:$0xf]
      %v306 = vld [vmem:[%s219 + $0x140] sm:$0xf]
      %v307 = vld [vmem:[%s219 + $0x144] sm:$0xf]
      %v308 = vld [vmem:[%s219 + $0x148] sm:$0xf]
      %v309 = vld [vmem:[%s219 + $0x14c] sm:$0xf]
      %v310 = vld [vmem:[%s219 + $0x150] sm:$0xf]
      %v311 = vld [vmem:[%s219 + $0x154] sm:$0xf]
      %v312 = vld [vmem:[%s219 + $0x158] sm:$0xf]
      %v313 = vld [vmem:[%s219 + $0x15c] sm:$0xf]
      %v314 = vld [vmem:[%s219 + $0x160] sm:$0xf]
      %v315 = vld [vmem:[%s219 + $0x164] sm:$0xf]
      %v316 = vld [vmem:[%s219 + $0x168] sm:$0xf]
      %v317 = vld [vmem:[%s219 + $0x16c] sm:$0xf]
      %v318 = vld [vmem:[%s219 + $0x170] sm:$0xf]
      %v319 = vld [vmem:[%s219 + $0x174] sm:$0xf]
      %v320 = vld [vmem:[%s219 + $0x178] sm:$0xf]
      %v321 = vld [vmem:[%s219 + $0x17c] sm:$0xf]
      %v322 = vld [vmem:[%s219 + $0x180] sm:$0xf]
      %v323 = vld [vmem:[%s219 + $0x184] sm:$0xf]
      %v324 = vld [vmem:[%s219 + $0x188] sm:$0xf]
      %v325 = vld [vmem:[%s219 + $0x18c] sm:$0xf]
      %v326 = vld [vmem:[%s219 + $0x190] sm:$0xf]
      %v327 = vld [vmem:[%s219 + $0x194] sm:$0xf]
      %v328 = vld [vmem:[%s219 + $0x198] sm:$0xf]
      %v329 = vld [vmem:[%s219 + $0x19c] sm:$0xf]
      %v330 = vld [vmem:[%s219 + $0x1a0] sm:$0xf]
      %v331 = vld [vmem:[%s219 + $0x1a4] sm:$0xf]
      %v332 = vld [vmem:[%s219 + $0x1a8] sm:$0xf]
      %v333 = vld [vmem:[%s219 + $0x1ac] sm:$0xf]
      %v334 = vld [vmem:[%s219 + $0x1b0] sm:$0xf]
      %v335 = vld [vmem:[%s219 + $0x1b4] sm:$0xf]
      %v336 = vld [vmem:[%s219 + $0x1b8] sm:$0xf]
      %v337 = vld [vmem:[%s219 + $0x1bc] sm:$0xf]
      %v338 = vld [vmem:[%s219 + $0x1c0] sm:$0xf]
      %v339 = vld [vmem:[%s219 + $0x1c4] sm:$0xf]
      %v340 = vld [vmem:[%s219 + $0x1c8] sm:$0xf]
      %v341 = vld [vmem:[%s219 + $0x1cc] sm:$0xf]
      %v342 = vld [vmem:[%s219 + $0x1d0] sm:$0xf]
      %v343 = vld [vmem:[%s219 + $0x1d4] sm:$0xf]
      %v344 = vld [vmem:[%s219 + $0x1d8] sm:$0xf]
      %v345 = vld [vmem:[%s219 + $0x1dc] sm:$0xf]
      %v346 = vld [vmem:[%s219 + $0x1e0] sm:$0xf]
      %v347 = vld [vmem:[%s219 + $0x1e4] sm:$0xf]
      %v348 = vld [vmem:[%s219 + $0x1e8] sm:$0xf]
      %v349 = vld [vmem:[%s219 + $0x1ec] sm:$0xf]
      %v350 = vld [vmem:[%s219 + $0x1f0] sm:$0xf]
      %v351 = vld [vmem:[%s219 + $0x1f4] sm:$0xf]
      %v352 = vld [vmem:[%s219 + $0x1f8] sm:$0xf]
      %v353 = vld [vmem:[%s219 + $0x1fc] sm:$0xf]
      %v354 = vld [vmem:[%s219 + $0x200] sm:$0xf]
      %v355 = vld [vmem:[%s219 + $0x204] sm:$0xf]
      %v356 = vld [vmem:[%s219 + $0x208] sm:$0xf]
      %v357 = vld [vmem:[%s219 + $0x20c] sm:$0xf]
      %v358 = vld [vmem:[%s219 + $0x210] sm:$0xf]
      %v359 = vld [vmem:[%s219 + $0x214] sm:$0xf]
      %v360 = vld [vmem:[%s219 + $0x218] sm:$0xf]
      %v361 = vld [vmem:[%s219 + $0x21c] sm:$0xf]
      %v362 = vld [vmem:[%s219 + $0x220] sm:$0xf]
      %v363 = vld [vmem:[%s219 + $0x224] sm:$0xf]
      %v364 = vld [vmem:[%s219 + $0x228] sm:$0xf]
      %v365 = vld [vmem:[%s219 + $0x22c] sm:$0xf]
      %v366 = vld [vmem:[%s219 + $0x230] sm:$0xf]
      %v367 = vld [vmem:[%s219 + $0x234] sm:$0xf]
      %v368 = vld [vmem:[%s219 + $0x238] sm:$0xf]
      %v369 = vld [vmem:[%s219 + $0x23c] sm:$0xf]
      %v370 = vld [vmem:[%s219 + $0x240] sm:$0xf]
      %v371 = vld [vmem:[%s219 + $0x244] sm:$0xf]
      %v372 = vld [vmem:[%s219 + $0x248] sm:$0xf]
      %v373 = vld [vmem:[%s219 + $0x24c] sm:$0xf]
      %v374 = vld [vmem:[%s219 + $0x250] sm:$0xf]
      %v375 = vld [vmem:[%s219 + $0x254] sm:$0xf]
      %v376 = vld [vmem:[%s219 + $0x258] sm:$0xf]
      %v377 = vld [vmem:[%s219 + $0x25c] sm:$0xf]
      %v378 = vld [vmem:[%s219 + $0x260] sm:$0xf]
      %v379 = vld [vmem:[%s219 + $0x264] sm:$0xf]
      %v380 = vld [vmem:[%s1] sm:$0xf]
      %v381 = vld [vmem:[%s1 + $0x4] sm:$0xf]
      %v382 = vld [vmem:[%s1 + $0x8] sm:$0xf]
      %v383 = vld [vmem:[%s1 + $0xc] sm:$0xf]
      %v384 = vld [vmem:[%s1 + $0x10] sm:$0xf]
      %v385 = vld [vmem:[%s1 + $0x14] sm:$0xf]
      %v386 = vld [vmem:[%s1 + $0x18] sm:$0xf]
      %v387 = vld [vmem:[%s1 + $0x1c] sm:$0xf]
      %v388 = vld [vmem:[%s1 + $0x20] sm:$0xf]
      %v389 = vld [vmem:[%s1 + $0x24] sm:$0xf]
      %v390 = vld [vmem:[%s1 + $0x28] sm:$0xf]
      %v391 = vld [vmem:[%s1 + $0x2c] sm:$0xf]
      %v392 = vld [vmem:[%s1 + $0x30] sm:$0xf]
      %v393 = vld [vmem:[%s1 + $0x34] sm:$0xf]
      %v394 = vld [vmem:[%s1 + $0x38] sm:$0xf]
      %v395 = vld [vmem:[%s1 + $0x3c] sm:$0xf]
      %v396 = vld [vmem:[%s2] sm:$0x1]
      %v398 = vlaneseq
      %v399 = vshrl.u32 %v398, 7
      %v400 = vsub.s32 0, %v399
      %v401 = vrot.slane %v396, %v400
      %v557 = vunpack.c.l.b16 %v226
      %v558 = vunpack.c.l.b16 %v227
      %v559 = vunpack.c.l.b16 %v228
      %v560 = vunpack.c.l.b16 %v229
      %v561 = vunpack.c.l.b16 %v230
      %v562 = vunpack.c.l.b16 %v231
      %v563 = vunpack.c.l.b16 %v232
      %v564 = vunpack.c.l.b16 %v233
      %v565 = vunpack.c.l.b16 %v234
      %v566 = vunpack.c.l.b16 %v235
      %v567 = vunpack.c.l.b16 %v236
      %v568 = vunpack.c.l.b16 %v237
      %v569 = vunpack.c.l.b16 %v238
      %v570 = vunpack.c.l.b16 %v239
      %v571 = vunpack.c.l.b16 %v240
      %v572 = vunpack.c.l.b16 %v241
      %v573 = vunpack.c.l.b16 %v242
      %v574 = vunpack.c.l.b16 %v243
      %v575 = vunpack.c.l.b16 %v244
      %v576 = vunpack.c.l.b16 %v245
      %v577 = vunpack.c.l.b16 %v246
      %v578 = vunpack.c.l.b16 %v247
      %v579 = vunpack.c.l.b16 %v248
      %v580 = vunpack.c.l.b16 %v249
      %v581 = vunpack.c.l.b16 %v250
      %v582 = vunpack.c.l.b16 %v251
      %v583 = vunpack.c.l.b16 %v252
      %v584 = vunpack.c.l.b16 %v253
      %v585 = vunpack.c.l.b16 %v254
      %v586 = vunpack.c.l.b16 %v255
      %v587 = vunpack.c.l.b16 %v256
      %v588 = vunpack.c.l.b16 %v257
      %v589 = vunpack.c.l.b16 %v258
      %v590 = vunpack.c.l.b16 %v259
      %v591 = vunpack.c.l.b16 %v260
      %v592 = vunpack.c.l.b16 %v261
      %v593 = vunpack.c.l.b16 %v262
      %v594 = vunpack.c.l.b16 %v263
      %v595 = vunpack.c.l.b16 %v264
      %v596 = vunpack.c.l.b16 %v265
      %v597 = vunpack.c.l.b16 %v266
      %v598 = vunpack.c.l.b16 %v267
      %v599 = vunpack.c.l.b16 %v268
      %v600 = vunpack.c.l.b16 %v269
      %v601 = vunpack.c.l.b16 %v270
      %v602 = vunpack.c.l.b16 %v271
      %v603 = vunpack.c.l.b16 %v272
      %v604 = vunpack.c.l.b16 %v273
      %v605 = vunpack.c.l.b16 %v274
      %v606 = vunpack.c.l.b16 %v275
      %v607 = vunpack.c.l.b16 %v276
      %v608 = vunpack.c.l.b16 %v277
      %v609 = vunpack.c.l.b16 %v278
      %v610 = vunpack.c.l.b16 %v279
      %v611 = vunpack.c.l.b16 %v280
      %v612 = vunpack.c.l.b16 %v281
      %v613 = vunpack.c.l.b16 %v282
      %v614 = vunpack.c.l.b16 %v283
      %v615 = vunpack.c.l.b16 %v284
      %v616 = vunpack.c.l.b16 %v285
      %v617 = vunpack.c.l.b16 %v286
      %v618 = vunpack.c.l.b16 %v287
      %v619 = vunpack.c.l.b16 %v288
      %v620 = vunpack.c.l.b16 %v289
      %v621 = vunpack.c.l.b16 %v290
      %v622 = vunpack.c.l.b16 %v291
      %v623 = vunpack.c.l.b16 %v292
      %v624 = vunpack.c.l.b16 %v293
      %v625 = vunpack.c.l.b16 %v294
      %v626 = vunpack.c.l.b16 %v295
      %v627 = vunpack.c.l.b16 %v296
      %v628 = vunpack.c.l.b16 %v297
      %v629 = vunpack.c.l.b16 %v298
      %v630 = vunpack.c.l.b16 %v299
      %v631 = vunpack.c.l.b16 %v300
      %v632 = vunpack.c.l.b16 %v301
      %v633 = vunpack.c.l.b16 %v302
      %v634 = vunpack.c.l.b16 %v303
      %v635 = vunpack.c.l.b16 %v304
      %v636 = vunpack.c.l.b16 %v305
      %v637 = vunpack.c.l.b16 %v306
      %v638 = vunpack.c.l.b16 %v307
      %v639 = vunpack.c.l.b16 %v308
      %v640 = vunpack.c.l.b16 %v309
      %v641 = vunpack.c.l.b16 %v310
      %v642 = vunpack.c.l.b16 %v311
      %v643 = vunpack.c.l.b16 %v312
      %v644 = vunpack.c.l.b16 %v313
      %v645 = vunpack.c.l.b16 %v314
      %v646 = vunpack.c.l.b16 %v315
      %v647 = vunpack.c.l.b16 %v316
      %v648 = vunpack.c.l.b16 %v317
      %v649 = vunpack.c.l.b16 %v318
      %v650 = vunpack.c.l.b16 %v319
      %v651 = vunpack.c.l.b16 %v320
      %v652 = vunpack.c.l.b16 %v321
      %v653 = vunpack.c.l.b16 %v322
      %v654 = vunpack.c.l.b16 %v323
      %v655 = vunpack.c.l.b16 %v324
      %v656 = vunpack.c.l.b16 %v325
      %v657 = vunpack.c.l.b16 %v326
      %v658 = vunpack.c.l.b16 %v327
      %v659 = vunpack.c.l.b16 %v328
      %v660 = vunpack.c.l.b16 %v329
      %v661 = vunpack.c.l.b16 %v330
      %v662 = vunpack.c.l.b16 %v331
      %v663 = vunpack.c.l.b16 %v332
      %v664 = vunpack.c.l.b16 %v333
      %v665 = vunpack.c.l.b16 %v334
      %v666 = vunpack.c.l.b16 %v335
      %v667 = vunpack.c.l.b16 %v336
      %v668 = vunpack.c.l.b16 %v337
      %v669 = vunpack.c.l.b16 %v338
      %v670 = vunpack.c.l.b16 %v339
      %v671 = vunpack.c.l.b16 %v340
      %v672 = vunpack.c.l.b16 %v341
      %v673 = vunpack.c.l.b16 %v342
      %v674 = vunpack.c.l.b16 %v343
      %v675 = vunpack.c.l.b16 %v344
      %v676 = vunpack.c.l.b16 %v345
      %v677 = vunpack.c.l.b16 %v346
      %v678 = vunpack.c.l.b16 %v347
      %v679 = vunpack.c.l.b16 %v348
      %v680 = vunpack.c.l.b16 %v349
      %v681 = vunpack.c.l.b16 %v350
      %v682 = vunpack.c.l.b16 %v351
      %v683 = vunpack.c.l.b16 %v352
      %v684 = vunpack.c.l.b16 %v353
      %v685 = vunpack.c.l.b16 %v354
      %v686 = vunpack.c.l.b16 %v355
      %v687 = vunpack.c.l.b16 %v356
      %v688 = vunpack.c.l.b16 %v357
      %v689 = vunpack.c.l.b16 %v358
      %v690 = vunpack.c.l.b16 %v359
      %v691 = vunpack.c.l.b16 %v360
      %v692 = vunpack.c.l.b16 %v361
      %v693 = vunpack.c.l.b16 %v362
      %v694 = vunpack.c.l.b16 %v363
      %v695 = vunpack.c.l.b16 %v364
      %v696 = vunpack.c.l.b16 %v365
      %v697 = vunpack.c.l.b16 %v366
      %v698 = vunpack.c.l.b16 %v367
      %v699 = vunpack.c.l.b16 %v368
      %v700 = vunpack.c.l.b16 %v369
      %v701 = vunpack.c.l.b16 %v370
      %v702 = vunpack.c.l.b16 %v371
      %v703 = vunpack.c.l.b16 %v372
      %v704 = vunpack.c.l.b16 %v373
      %v705 = vunpack.c.l.b16 %v374
      %v706 = vunpack.c.l.b16 %v375
      %v707 = vunpack.c.l.b16 %v376
      %v708 = vunpack.c.l.b16 %v377
      %v709 = vunpack.c.l.b16 %v378
      %v710 = vunpack.c.l.b16 %v379
      %v711 = vpack.c.b16 %v558, %v557
      %v712 = vpack.c.b16 %v560, %v559
      %v713 = vpack.c.b16 %v562, %v561
      %v714 = vpack.c.b16 %v564, %v563
      %v715 = vpack.c.b16 %v566, %v565
      %v716 = vpack.c.b16 %v568, %v567
      %v717 = vpack.c.b16 %v570, %v569
      %v718 = vpack.c.b16 %v572, %v571
      %v719 = vpack.c.b16 %v574, %v573
      %v720 = vpack.c.b16 %v576, %v575
      %v721 = vpack.c.b16 %v578, %v577
      %v722 = vpack.c.b16 %v580, %v579
      %v723 = vpack.c.b16 %v582, %v581
      %v724 = vpack.c.b16 %v584, %v583
      %v725 = vpack.c.b16 %v586, %v585
      %v726 = vpack.c.b16 %v588, %v587
      %v727 = vpack.c.b16 %v590, %v589
      %v728 = vpack.c.b16 %v592, %v591
      %v729 = vpack.c.b16 %v594, %v593
      %v730 = vpack.c.b16 %v596, %v595
      %v731 = vpack.c.b16 %v598, %v597
      %v732 = vpack.c.b16 %v600, %v599
      %v733 = vpack.c.b16 %v602, %v601
      %v734 = vpack.c.b16 %v604, %v603
      %v735 = vpack.c.b16 %v606, %v605
      %v736 = vpack.c.b16 %v608, %v607
      %v737 = vpack.c.b16 %v610, %v609
      %v738 = vpack.c.b16 %v612, %v611
      %v739 = vpack.c.b16 %v614, %v613
      %v740 = vpack.c.b16 %v616, %v615
      %v741 = vpack.c.b16 %v618, %v617
      %v742 = vpack.c.b16 %v620, %v619
      %v743 = vpack.c.b16 %v622, %v621
      %v744 = vpack.c.b16 %v624, %v623
      %v745 = vpack.c.b16 %v626, %v625
      %v746 = vpack.c.b16 %v628, %v627
      %v747 = vpack.c.b16 %v630, %v629
      %v748 = vpack.c.b16 %v632, %v631
      %v749 = vpack.c.b16 %v634, %v633
      %v750 = vpack.c.b16 %v636, %v635
      %v751 = vpack.c.b16 %v638, %v637
      %v752 = vpack.c.b16 %v640, %v639
      %v753 = vpack.c.b16 %v642, %v641
      %v754 = vpack.c.b16 %v644, %v643
      %v755 = vpack.c.b16 %v646, %v645
      %v756 = vpack.c.b16 %v648, %v647
      %v757 = vpack.c.b16 %v650, %v649
      %v758 = vpack.c.b16 %v652, %v651
      %v759 = vpack.c.b16 %v654, %v653
      %v760 = vpack.c.b16 %v656, %v655
      %v761 = vpack.c.b16 %v658, %v657
      %v762 = vpack.c.b16 %v660, %v659
      %v763 = vpack.c.b16 %v662, %v661
      %v764 = vpack.c.b16 %v664, %v663
      %v765 = vpack.c.b16 %v666, %v665
      %v766 = vpack.c.b16 %v668, %v667
      %v767 = vpack.c.b16 %v670, %v669
      %v768 = vpack.c.b16 %v672, %v671
      %v769 = vpack.c.b16 %v674, %v673
      %v770 = vpack.c.b16 %v676, %v675
      %v771 = vpack.c.b16 %v678, %v677
      %v772 = vpack.c.b16 %v680, %v679
      %v773 = vpack.c.b16 %v682, %v681
      %v774 = vpack.c.b16 %v684, %v683
      %v775 = vpack.c.b16 %v686, %v685
      %v776 = vpack.c.b16 %v688, %v687
      %v777 = vpack.c.b16 %v690, %v689
      %v778 = vpack.c.b16 %v692, %v691
      %v779 = vpack.c.b16 %v694, %v693
      %v780 = vpack.c.b16 %v696, %v695
      %v781 = vpack.c.b16 %v698, %v697
      %v782 = vpack.c.b16 %v700, %v699
      %v783 = vpack.c.b16 %v702, %v701
      %v784 = vpack.c.b16 %v704, %v703
      %v785 = vpack.c.b16 %v706, %v705
      %v786 = vpack.c.b16 %v708, %v707
      %v787 = vpack.c.b16 %v710, %v709
      %v881 = vunpack.c.l.b16 %v380
      %v882 = vunpack.c.l.b16 %v381
      %v883 = vunpack.c.l.b16 %v382
      %v884 = vunpack.c.l.b16 %v383
      %v885 = vunpack.c.l.b16 %v384
      %v886 = vunpack.c.l.b16 %v385
      %v887 = vunpack.c.l.b16 %v386
      %v888 = vunpack.c.l.b16 %v387
      %v889 = vunpack.c.l.b16 %v388
      %v890 = vunpack.c.l.b16 %v389
      %v891 = vunpack.c.l.b16 %v390
      %v892 = vunpack.c.l.b16 %v391
      %v893 = vunpack.c.l.b16 %v392
      %v894 = vunpack.c.l.b16 %v393
      %v895 = vunpack.c.l.b16 %v394
      %v896 = vunpack.c.l.b16 %v395
      %v897 = vpack.c.b16 %v882, %v881
      %v898 = vpack.c.b16 %v884, %v883
      %v899 = vpack.c.b16 %v886, %v885
      %v900 = vpack.c.b16 %v888, %v887
      %v901 = vpack.c.b16 %v890, %v889
      %v902 = vpack.c.b16 %v892, %v891
      %v903 = vpack.c.b16 %v894, %v893
      %v904 = vpack.c.b16 %v896, %v895
      %913 = vmatprep.subr.bf16.mxu0 0
      %914 = vmatpush1.bf16.msra.mxu0 %v897
      %915 = vmatprep.subr.bf16.mxu0 0
      %916 = vmatpush1.bf16.msra.mxu0 %v898
      %917 = vmatprep.subr.bf16.mxu0 0
      %918 = vmatpush1.bf16.msra.mxu0 %v899
      %919 = vmatprep.subr.bf16.mxu0 0
      %920 = vmatpush1.bf16.msra.mxu0 %v900
      %921 = vmatprep.subr.bf16.mxu0 0
      %922 = vmatpush1.bf16.msra.mxu0 %v901
      %923 = vmatprep.subr.bf16.mxu0 0
      %924 = vmatpush1.bf16.msra.mxu0 %v902
      %925 = vmatprep.subr.bf16.mxu0 0
      %926 = vmatpush1.bf16.msra.mxu0 %v903
      %927 = vmatprep.subr.bf16.mxu0 0
      %928 = vmatpush1.bf16.msra.mxu0 %v904
      %929 = vmatprep.subr.bf16.mxu0 0
      %930 = vmatpush1.bf16.msra.mxu0 0
      %931 = vmatprep.subr.bf16.mxu0 0
      %932 = vmatpush1.bf16.msra.mxu0 0
      %933 = vmatprep.subr.bf16.mxu0 0
      %934 = vmatpush1.bf16.msra.mxu0 0
      %935 = vmatprep.subr.bf16.mxu0 0
      %936 = vmatpush1.bf16.msra.mxu0 0
      %937 = vmatprep.subr.bf16.mxu0 0
      %938 = vmatpush1.bf16.msra.mxu0 0
      %939 = vmatprep.subr.bf16.mxu0 0
      %940 = vmatpush1.bf16.msra.mxu0 0
      %941 = vmatprep.subr.bf16.mxu0 0
      %942 = vmatpush1.bf16.msra.mxu0 0
      %943 = vmatprep.subr.bf16.mxu0 0
      %944 = vmatpush1.bf16.msra.mxu0 0
      %945 = vmatprep.mubr.bf16.mxu0 0
      %946 = vmatmul.mubr.bf16.gmra.mrb[0].mxu0 %v711
      %v947 = vpop.f32.mrb[0].mxu0
      %v948 = vadd.f32 %v401, %v947
      %v949 = vpop.f32.mrb[0].mxu0
      %v950 = vpop.f32.mrb[0].mxu0
      %v951 = vadd.f32 %v401, %v950
      %v952 = vpop.f32.mrb[0].mxu0
      %953 = vmatprep.mubr.bf16.mxu0 0
      %954 = vmatmul.mubr.bf16.gmra.mrb[0].mxu0 %v712
      %v955 = vpop.f32.mrb[0].mxu0
      %v956 = vadd.f32 %v401, %v955
      %v957 = vpop.f32.mrb[0].mxu0
      %v958 = vpop.f32.mrb[0].mxu0
      %v959 = vadd.f32 %v401, %v958
      %v960 = vpop.f32.mrb[0].mxu0
      %961 = vmatprep.mubr.bf16.mxu0 0
      %962 = vmatmul.mubr.bf16.gmra.mrb[0].mxu0 %v713
      %v963 = vpop.f32.mrb[0].mxu0
      %v964 = vadd.f32 %v401, %v963
      %v965 = vpop.f32.mrb[0].mxu0
      %v966 = vpop.f32.mrb[0].mxu0
      %v967 = vadd.f32 %v401, %v966
      %v968 = vpop.f32.mrb[0].mxu0
      %969 = vmatprep.mubr.bf16.mxu0 0
      %970 = vmatmul.mubr.bf16.gmra.mrb[0].mxu0 %v714
      %v971 = vpop.f32.mrb[0].mxu0
      %v972 = vadd.f32 %v401, %v971
      %v973 = vpop.f32.mrb[0].mxu0
      %v974 = vpop.f32.mrb[0].mxu0
      %v975 = vadd.f32 %v401, %v974
      %v976 = vpop.f32.mrb[0].mxu0
      %977 = vmatprep.mubr.bf16.mxu0 0
      %978 = vmatmul.mubr.bf16.gmra.mrb[0].mxu0 %v715
      %v979 = vpop.f32.mrb[0].mxu0
      %v980 = vadd.f32 %v401, %v979
      %v981 = vpop.f32.mrb[0].mxu0
      %v982 = vpop.f32.mrb[0].mxu0
      %v983 = vadd.f32 %v401, %v982
      %v984 = vpop.f32.mrb[0].mxu0
      %985 = vmatprep.mubr.bf16.mxu0 0
      %986 = vmatmul.mubr.bf16.gmra.mrb[0].mxu0 %v716
      %v987 = vpop.f32.mrb[0].mxu0
      %v988 = vadd.f32 %v401, %v987
      %v989 = vpop.f32.mrb[0].mxu0
      %v990 = vpop.f32.mrb[0].mxu0
      %v991 = vadd.f32 %v401, %v990
      %v992 = vpop.f32.mrb[0].mxu0
      %993 = vmatprep.mubr.bf16.mxu0 0
      %994 = vmatmul.mubr.bf16.gmra.mrb[0].mxu0 %v717
      %v995 = vpop.f32.mrb[0].mxu0
      %v996 = vadd.f32 %v401, %v995
      %v997 = vpop.f32.mrb[0].mxu0
      %v998 = vpop.f32.mrb[0].mxu0
      %v999 = vadd.f32 %v401, %v998
      %v1000 = vpop.f32.mrb[0].mxu0
      %1001 = vmatprep.mubr.bf16.mxu0 0
      %1002 = vmatmul.mubr.bf16.gmra.mrb[0].mxu0 %v718
      %v1003 = vpop.f32.mrb[0].mxu0
      %v1004 = vadd.f32 %v401, %v1003
      %v1005 = vpop.f32.mrb[0].mxu0
      %v1006 = vpop.f32.mrb[0].mxu0
      %v1007 = vadd.f32 %v401, %v1006
      %v1008 = vpop.f32.mrb[0].mxu0
      %1009 = vmatprep.mubr.bf16.mxu0 0
      %1010 = vmatmul.mubr.bf16.gmra.mrb[0].mxu0 %v719
      %v1011 = vpop.f32.mrb[0].mxu0
      %v1012 = vadd.f32 %v401, %v1011
      %v1013 = vpop.f32.mrb[0].mxu0
      %v1014 = vpop.f32.mrb[0].mxu0
      %v1015 = vadd.f32 %v401, %v1014
      %v1016 = vpop.f32.mrb[0].mxu0
      %1017 = vmatprep.mubr.bf16.mxu0 0
      %1018 = vmatmul.mubr.bf16.gmra.mrb[0].mxu0 %v720
      %v1019 = vpop.f32.mrb[0].mxu0
      %v1020 = vadd.f32 %v401, %v1019
      %v1021 = vpop.f32.mrb[0].mxu0
      %v1022 = vpop.f32.mrb[0].mxu0
      %v1023 = vadd.f32 %v401, %v1022
      %v1024 = vpop.f32.mrb[0].mxu0
      %1025 = vmatprep.mubr.bf16.mxu0 0
      %1026 = vmatmul.mubr.bf16.gmra.mrb[0].mxu0 %v721
      %v1027 = vpop.f32.mrb[0].mxu0
      %v1028 = vadd.f32 %v401, %v1027
      %v1029 = vpop.f32.mrb[0].mxu0
      %v1030 = vpop.f32.mrb[0].mxu0
      %v1031 = vadd.f32 %v401, %v1030
      %v1032 = vpop.f32.mrb[0].mxu0
      %1033 = vmatprep.mubr.bf16.mxu0 0
      %1034 = vmatmul.mubr.bf16.gmra.mrb[0].mxu0 %v722
      %v1035 = vpop.f32.mrb[0].mxu0
      %v1036 = vadd.f32 %v401, %v1035
      %v1037 = vpop.f32.mrb[0].mxu0
      %v1038 = vpop.f32.mrb[0].mxu0
      %v1039 = vadd.f32 %v401, %v1038
      %v1040 = vpop.f32.mrb[0].mxu0
      %1041 = vmatprep.mubr.bf16.mxu0 0
      %1042 = vmatmul.mubr.bf16.gmra.mrb[0].mxu0 %v723
      %v1043 = vpop.f32.mrb[0].mxu0
      %v1044 = vadd.f32 %v401, %v1043
      %v1045 = vpop.f32.mrb[0].mxu0
      %v1046 = vpop.f32.mrb[0].mxu0
      %v1047 = vadd.f32 %v401, %v1046
      %v1048 = vpop.f32.mrb[0].mxu0
      %1049 = vmatprep.mubr.bf16.mxu0 0
      %1050 = vmatmul.mubr.bf16.gmra.mrb[0].mxu0 %v724
      %v1051 = vpop.f32.mrb[0].mxu0
      %v1052 = vadd.f32 %v401, %v1051
      %v1053 = vpop.f32.mrb[0].mxu0
      %v1054 = vpop.f32.mrb[0].mxu0
      %v1055 = vadd.f32 %v401, %v1054
      %v1056 = vpop.f32.mrb[0].mxu0
      %1057 = vmatprep.mubr.bf16.mxu0 0
      %1058 = vmatmul.mubr.bf16.gmra.mrb[0].mxu0 %v725
      %v1059 = vpop.f32.mrb[0].mxu0
      %v1060 = vadd.f32 %v401, %v1059
      %v1061 = vpop.f32.mrb[0].mxu0
      %v1062 = vpop.f32.mrb[0].mxu0
      %v1063 = vadd.f32 %v401, %v1062
      %v1064 = vpop.f32.mrb[0].mxu0
      %1065 = vmatprep.mubr.bf16.mxu0 0
      %1066 = vmatmul.mubr.bf16.gmra.mrb[0].mxu0 %v726
      %v1067 = vpop.f32.mrb[0].mxu0
      %v1068 = vadd.f32 %v401, %v1067
      %v1069 = vpop.f32.mrb[0].mxu0
      %v1070 = vpop.f32.mrb[0].mxu0
      %v1071 = vadd.f32 %v401, %v1070
      %v1072 = vpop.f32.mrb[0].mxu0
      %1073 = vmatprep.mubr.bf16.mxu0 0
      %1074 = vmatmul.mubr.bf16.gmra.mrb[0].mxu0 %v727
      %v1075 = vpop.f32.mrb[0].mxu0
      %v1076 = vadd.f32 %v401, %v1075
      %v1077 = vpop.f32.mrb[0].mxu0
      %v1078 = vpop.f32.mrb[0].mxu0
      %v1079 = vadd.f32 %v401, %v1078
      %v1080 = vpop.f32.mrb[0].mxu0
      %1081 = vmatprep.mubr.bf16.mxu0 0
      %1082 = vmatmul.mubr.bf16.gmra.mrb[0].mxu0 %v728
      %v1083 = vpop.f32.mrb[0].mxu0
      %v1084 = vadd.f32 %v401, %v1083
      %v1085 = vpop.f32.mrb[0].mxu0
      %v1086 = vpop.f32.mrb[0].mxu0
      %v1087 = vadd.f32 %v401, %v1086
      %v1088 = vpop.f32.mrb[0].mxu0
      %1089 = vmatprep.mubr.bf16.mxu0 0
      %1090 = vmatmul.mubr.bf16.gmra.mrb[0].mxu0 %v729
      %v1091 = vpop.f32.mrb[0].mxu0
      %v1092 = vadd.f32 %v401, %v1091
      %v1093 = vpop.f32.mrb[0].mxu0
      %v1094 = vpop.f32.mrb[0].mxu0
      %v1095 = vadd.f32 %v401, %v1094
      %v1096 = vpop.f32.mrb[0].mxu0
      %1097 = vmatprep.mubr.bf16.mxu0 0
      %1098 = vmatmul.mubr.bf16.gmra.mrb[0].mxu0 %v730
      %v1099 = vpop.f32.mrb[0].mxu0
      %v1100 = vadd.f32 %v401, %v1099
      %v1101 = vpop.f32.mrb[0].mxu0
      %v1102 = vpop.f32.mrb[0].mxu0
      %v1103 = vadd.f32 %v401, %v1102
      %v1104 = vpop.f32.mrb[0].mxu0
      %1105 = vmatprep.mubr.bf16.mxu0 0
      %1106 = vmatmul.mubr.bf16.gmra.mrb[0].mxu0 %v731
      %v1107 = vpop.f32.mrb[0].mxu0
      %v1108 = vadd.f32 %v401, %v1107
      %v1109 = vpop.f32.mrb[0].mxu0
      %v1110 = vpop.f32.mrb[0].mxu0
      %v1111 = vadd.f32 %v401, %v1110
      %v1112 = vpop.f32.mrb[0].mxu0
      %1113 = vmatprep.mubr.bf16.mxu0 0
      %1114 = vmatmul.mubr.bf16.gmra.mrb[0].mxu0 %v732
      %v1115 = vpop.f32.mrb[0].mxu0
      %v1116 = vadd.f32 %v401, %v1115
      %v1117 = vpop.f32.mrb[0].mxu0
      %v1118 = vpop.f32.mrb[0].mxu0
      %v1119 = vadd.f32 %v401, %v1118
      %v1120 = vpop.f32.mrb[0].mxu0
      %1121 = vmatprep.mubr.bf16.mxu0 0
      %1122 = vmatmul.mubr.bf16.gmra.mrb[0].mxu0 %v733
      %v1123 = vpop.f32.mrb[0].mxu0
      %v1124 = vadd.f32 %v401, %v1123
      %v1125 = vpop.f32.mrb[0].mxu0
      %v1126 = vpop.f32.mrb[0].mxu0
      %v1127 = vadd.f32 %v401, %v1126
      %v1128 = vpop.f32.mrb[0].mxu0
      %1129 = vmatprep.mubr.bf16.mxu0 0
      %1130 = vmatmul.mubr.bf16.gmra.mrb[0].mxu0 %v734
      %v1131 = vpop.f32.mrb[0].mxu0
      %v1132 = vadd.f32 %v401, %v1131
      %v1133 = vpop.f32.mrb[0].mxu0
      %v1134 = vpop.f32.mrb[0].mxu0
      %v1135 = vadd.f32 %v401, %v1134
      %v1136 = vpop.f32.mrb[0].mxu0
      %1137 = vmatprep.mubr.bf16.mxu0 0
      %1138 = vmatmul.mubr.bf16.gmra.mrb[0].mxu0 %v735
      %v1139 = vpop.f32.mrb[0].mxu0
      %v1140 = vadd.f32 %v401, %v1139
      %v1141 = vpop.f32.mrb[0].mxu0
      %v1142 = vpop.f32.mrb[0].mxu0
      %v1143 = vadd.f32 %v401, %v1142
      %v1144 = vpop.f32.mrb[0].mxu0
      %1145 = vmatprep.mubr.bf16.mxu0 0
      %1146 = vmatmul.mubr.bf16.gmra.mrb[0].mxu0 %v736
      %v1147 = vpop.f32.mrb[0].mxu0
      %v1148 = vadd.f32 %v401, %v1147
      %v1149 = vpop.f32.mrb[0].mxu0
      %v1150 = vpop.f32.mrb[0].mxu0
      %v1151 = vadd.f32 %v401, %v1150
      %v1152 = vpop.f32.mrb[0].mxu0
      %1153 = vmatprep.mubr.bf16.mxu0 0
      %1154 = vmatmul.mubr.bf16.gmra.mrb[0].mxu0 %v737
      %v1155 = vpop.f32.mrb[0].mxu0
      %v1156 = vadd.f32 %v401, %v1155
      %v1157 = vpop.f32.mrb[0].mxu0
      %v1158 = vpop.f32.mrb[0].mxu0
      %v1159 = vadd.f32 %v401, %v1158
      %v1160 = vpop.f32.mrb[0].mxu0
      %1161 = vmatprep.mubr.bf16.mxu0 0
      %1162 = vmatmul.mubr.bf16.gmra.mrb[0].mxu0 %v738
      %v1163 = vpop.f32.mrb[0].mxu0
      %v1164 = vadd.f32 %v401, %v1163
      %v1165 = vpop.f32.mrb[0].mxu0
      %v1166 = vpop.f32.mrb[0].mxu0
      %v1167 = vadd.f32 %v401, %v1166
      %v1168 = vpop.f32.mrb[0].mxu0
      %1169 = vmatprep.mubr.bf16.mxu0 0
      %1170 = vmatmul.mubr.bf16.gmra.mrb[0].mxu0 %v739
      %v1171 = vpop.f32.mrb[0].mxu0
      %v1172 = vadd.f32 %v401, %v1171
      %v1173 = vpop.f32.mrb[0].mxu0
      %v1174 = vpop.f32.mrb[0].mxu0
      %v1175 = vadd.f32 %v401, %v1174
      %v1176 = vpop.f32.mrb[0].mxu0
      %1177 = vmatprep.mubr.bf16.mxu0 0
      %1178 = vmatmul.mubr.bf16.gmra.mrb[0].mxu0 %v740
      %v1179 = vpop.f32.mrb[0].mxu0
      %v1180 = vadd.f32 %v401, %v1179
      %v1181 = vpop.f32.mrb[0].mxu0
      %v1182 = vpop.f32.mrb[0].mxu0
      %v1183 = vadd.f32 %v401, %v1182
      %v1184 = vpop.f32.mrb[0].mxu0
      %1185 = vmatprep.mubr.bf16.mxu0 0
      %1186 = vmatmul.mubr.bf16.gmra.mrb[0].mxu0 %v741
      %v1187 = vpop.f32.mrb[0].mxu0
      %v1188 = vadd.f32 %v401, %v1187
      %v1189 = vpop.f32.mrb[0].mxu0
      %v1190 = vpop.f32.mrb[0].mxu0
      %v1191 = vadd.f32 %v401, %v1190
      %v1192 = vpop.f32.mrb[0].mxu0
      %1193 = vmatprep.mubr.bf16.mxu0 0
      %1194 = vmatmul.mubr.bf16.gmra.mrb[0].mxu0 %v742
      %v1195 = vpop.f32.mrb[0].mxu0
      %v1196 = vadd.f32 %v401, %v1195
      %v1197 = vpop.f32.mrb[0].mxu0
      %v1198 = vpop.f32.mrb[0].mxu0
      %v1199 = vadd.f32 %v401, %v1198
      %v1200 = vpop.f32.mrb[0].mxu0
      %1201 = vmatprep.mubr.bf16.mxu0 0
      %1202 = vmatmul.mubr.bf16.gmra.mrb[0].mxu0 %v743
      %v1203 = vpop.f32.mrb[0].mxu0
      %v1204 = vadd.f32 %v401, %v1203
      %v1205 = vpop.f32.mrb[0].mxu0
      %v1206 = vpop.f32.mrb[0].mxu0
      %v1207 = vadd.f32 %v401, %v1206
      %v1208 = vpop.f32.mrb[0].mxu0
      %1209 = vmatprep.mubr.bf16.mxu0 0
      %1210 = vmatmul.mubr.bf16.gmra.mrb[0].mxu0 %v744
      %v1211 = vpop.f32.mrb[0].mxu0
      %v1212 = vadd.f32 %v401, %v1211
      %v1213 = vpop.f32.mrb[0].mxu0
      %v1214 = vpop.f32.mrb[0].mxu0
      %v1215 = vadd.f32 %v401, %v1214
      %v1216 = vpop.f32.mrb[0].mxu0
      %1217 = vmatprep.mubr.bf16.mxu0 0
      %1218 = vmatmul.mubr.bf16.gmra.mrb[0].mxu0 %v745
      %v1219 = vpop.f32.mrb[0].mxu0
      %v1220 = vadd.f32 %v401, %v1219
      %v1221 = vpop.f32.mrb[0].mxu0
      %v1222 = vpop.f32.mrb[0].mxu0
      %v1223 = vadd.f32 %v401, %v1222
      %v1224 = vpop.f32.mrb[0].mxu0
      %1225 = vmatprep.mubr.bf16.mxu0 0
      %1226 = vmatmul.mubr.bf16.gmra.mrb[0].mxu0 %v746
      %v1227 = vpop.f32.mrb[0].mxu0
      %v1228 = vadd.f32 %v401, %v1227
      %v1229 = vpop.f32.mrb[0].mxu0
      %v1230 = vpop.f32.mrb[0].mxu0
      %v1231 = vadd.f32 %v401, %v1230
      %v1232 = vpop.f32.mrb[0].mxu0
      %1233 = vmatprep.mubr.bf16.mxu0 0
      %1234 = vmatmul.mubr.bf16.gmra.mrb[0].mxu0 %v747
      %v1235 = vpop.f32.mrb[0].mxu0
      %v1236 = vadd.f32 %v401, %v1235
      %v1237 = vpop.f32.mrb[0].mxu0
      %v1238 = vpop.f32.mrb[0].mxu0
      %v1239 = vadd.f32 %v401, %v1238
      %v1240 = vpop.f32.mrb[0].mxu0
      %1241 = vmatprep.mubr.bf16.mxu0 0
      %1242 = vmatmul.mubr.bf16.gmra.mrb[0].mxu0 %v748
      %v1243 = vpop.f32.mrb[0].mxu0
      %v1244 = vadd.f32 %v401, %v1243
      %v1245 = vpop.f32.mrb[0].mxu0
      %v1246 = vpop.f32.mrb[0].mxu0
      %v1247 = vadd.f32 %v401, %v1246
      %v1248 = vpop.f32.mrb[0].mxu0
      %1249 = vmatprep.mubr.bf16.mxu0 0
      %1250 = vmatmul.mubr.bf16.gmra.mrb[0].mxu0 %v749
      %v1251 = vpop.f32.mrb[0].mxu0
      %v1252 = vadd.f32 %v401, %v1251
      %v1253 = vpop.f32.mrb[0].mxu0
      %v1254 = vpop.f32.mrb[0].mxu0
      %v1255 = vadd.f32 %v401, %v1254
      %v1256 = vpop.f32.mrb[0].mxu0
      %1257 = vmatprep.mubr.bf16.mxu0 0
      %1258 = vmatmul.mubr.bf16.gmra.mrb[0].mxu0 %v750
      %v1259 = vpop.f32.mrb[0].mxu0
      %v1260 = vadd.f32 %v401, %v1259
      %v1261 = vpop.f32.mrb[0].mxu0
      %v1262 = vpop.f32.mrb[0].mxu0
      %v1263 = vadd.f32 %v401, %v1262
      %v1264 = vpop.f32.mrb[0].mxu0
      %1265 = vmatprep.mubr.bf16.mxu0 0
      %1266 = vmatmul.mubr.bf16.gmra.mrb[0].mxu0 %v751
      %v1267 = vpop.f32.mrb[0].mxu0
      %v1268 = vadd.f32 %v401, %v1267
      %v1269 = vpop.f32.mrb[0].mxu0
      %v1270 = vpop.f32.mrb[0].mxu0
      %v1271 = vadd.f32 %v401, %v1270
      %v1272 = vpop.f32.mrb[0].mxu0
      %1273 = vmatprep.mubr.bf16.mxu0 0
      %1274 = vmatmul.mubr.bf16.gmra.mrb[0].mxu0 %v752
      %v1275 = vpop.f32.mrb[0].mxu0
      %v1276 = vadd.f32 %v401, %v1275
      %v1277 = vpop.f32.mrb[0].mxu0
      %v1278 = vpop.f32.mrb[0].mxu0
      %v1279 = vadd.f32 %v401, %v1278
      %v1280 = vpop.f32.mrb[0].mxu0
      %1281 = vmatprep.mubr.bf16.mxu0 0
      %1282 = vmatmul.mubr.bf16.gmra.mrb[0].mxu0 %v753
      %v1283 = vpop.f32.mrb[0].mxu0
      %v1284 = vadd.f32 %v401, %v1283
      %v1285 = vpop.f32.mrb[0].mxu0
      %v1286 = vpop.f32.mrb[0].mxu0
      %v1287 = vadd.f32 %v401, %v1286
      %v1288 = vpop.f32.mrb[0].mxu0
      %1289 = vmatprep.mubr.bf16.mxu0 0
      %1290 = vmatmul.mubr.bf16.gmra.mrb[0].mxu0 %v754
      %v1291 = vpop.f32.mrb[0].mxu0
      %v1292 = vadd.f32 %v401, %v1291
      %v1293 = vpop.f32.mrb[0].mxu0
      %v1294 = vpop.f32.mrb[0].mxu0
      %v1295 = vadd.f32 %v401, %v1294
      %v1296 = vpop.f32.mrb[0].mxu0
      %1297 = vmatprep.mubr.bf16.mxu0 0
      %1298 = vmatmul.mubr.bf16.gmra.mrb[0].mxu0 %v755
      %v1299 = vpop.f32.mrb[0].mxu0
      %v1300 = vadd.f32 %v401, %v1299
      %v1301 = vpop.f32.mrb[0].mxu0
      %v1302 = vpop.f32.mrb[0].mxu0
      %v1303 = vadd.f32 %v401, %v1302
      %v1304 = vpop.f32.mrb[0].mxu0
      %1305 = vmatprep.mubr.bf16.mxu0 0
      %1306 = vmatmul.mubr.bf16.gmra.mrb[0].mxu0 %v756
      %v1307 = vpop.f32.mrb[0].mxu0
      %v1308 = vadd.f32 %v401, %v1307
      %v1309 = vpop.f32.mrb[0].mxu0
      %v1310 = vpop.f32.mrb[0].mxu0
      %v1311 = vadd.f32 %v401, %v1310
      %v1312 = vpop.f32.mrb[0].mxu0
      %1313 = vmatprep.mubr.bf16.mxu0 0
      %1314 = vmatmul.mubr.bf16.gmra.mrb[0].mxu0 %v757
      %v1315 = vpop.f32.mrb[0].mxu0
      %v1316 = vadd.f32 %v401, %v1315
      %v1317 = vpop.f32.mrb[0].mxu0
      %v1318 = vpop.f32.mrb[0].mxu0
      %v1319 = vadd.f32 %v401, %v1318
      %v1320 = vpop.f32.mrb[0].mxu0
      %1321 = vmatprep.mubr.bf16.mxu0 0
      %1322 = vmatmul.mubr.bf16.gmra.mrb[0].mxu0 %v758
      %v1323 = vpop.f32.mrb[0].mxu0
      %v1324 = vadd.f32 %v401, %v1323
      %v1325 = vpop.f32.mrb[0].mxu0
      %v1326 = vpop.f32.mrb[0].mxu0
      %v1327 = vadd.f32 %v401, %v1326
      %v1328 = vpop.f32.mrb[0].mxu0
      %1329 = vmatprep.mubr.bf16.mxu0 0
      %1330 = vmatmul.mubr.bf16.gmra.mrb[0].mxu0 %v759
      %v1331 = vpop.f32.mrb[0].mxu0
      %v1332 = vadd.f32 %v401, %v1331
      %v1333 = vpop.f32.mrb[0].mxu0
      %v1334 = vpop.f32.mrb[0].mxu0
      %v1335 = vadd.f32 %v401, %v1334
      %v1336 = vpop.f32.mrb[0].mxu0
      %1337 = vmatprep.mubr.bf16.mxu0 0
      %1338 = vmatmul.mubr.bf16.gmra.mrb[0].mxu0 %v760
      %v1339 = vpop.f32.mrb[0].mxu0
      %v1340 = vadd.f32 %v401, %v1339
      %v1341 = vpop.f32.mrb[0].mxu0
      %v1342 = vpop.f32.mrb[0].mxu0
      %v1343 = vadd.f32 %v401, %v1342
      %v1344 = vpop.f32.mrb[0].mxu0
      %1345 = vmatprep.mubr.bf16.mxu0 0
      %1346 = vmatmul.mubr.bf16.gmra.mrb[0].mxu0 %v761
      %v1347 = vpop.f32.mrb[0].mxu0
      %v1348 = vadd.f32 %v401, %v1347
      %v1349 = vpop.f32.mrb[0].mxu0
      %v1350 = vpop.f32.mrb[0].mxu0
      %v1351 = vadd.f32 %v401, %v1350
      %v1352 = vpop.f32.mrb[0].mxu0
      %1353 = vmatprep.mubr.bf16.mxu0 0
      %1354 = vmatmul.mubr.bf16.gmra.mrb[0].mxu0 %v762
      %v1355 = vpop.f32.mrb[0].mxu0
      %v1356 = vadd.f32 %v401, %v1355
      %v1357 = vpop.f32.mrb[0].mxu0
      %v1358 = vpop.f32.mrb[0].mxu0
      %v1359 = vadd.f32 %v401, %v1358
      %v1360 = vpop.f32.mrb[0].mxu0
      %1361 = vmatprep.mubr.bf16.mxu0 0
      %1362 = vmatmul.mubr.bf16.gmra.mrb[0].mxu0 %v763
      %v1363 = vpop.f32.mrb[0].mxu0
      %v1364 = vadd.f32 %v401, %v1363
      %v1365 = vpop.f32.mrb[0].mxu0
      %v1366 = vpop.f32.mrb[0].mxu0
      %v1367 = vadd.f32 %v401, %v1366
      %v1368 = vpop.f32.mrb[0].mxu0
      %1369 = vmatprep.mubr.bf16.mxu0 0
      %1370 = vmatmul.mubr.bf16.gmra.mrb[0].mxu0 %v764
      %v1371 = vpop.f32.mrb[0].mxu0
      %v1372 = vadd.f32 %v401, %v1371
      %v1373 = vpop.f32.mrb[0].mxu0
      %v1374 = vpop.f32.mrb[0].mxu0
      %v1375 = vadd.f32 %v401, %v1374
      %v1376 = vpop.f32.mrb[0].mxu0
      %1377 = vmatprep.mubr.bf16.mxu0 0
      %1378 = vmatmul.mubr.bf16.gmra.mrb[0].mxu0 %v765
      %v1379 = vpop.f32.mrb[0].mxu0
      %v1380 = vadd.f32 %v401, %v1379
      %v1381 = vpop.f32.mrb[0].mxu0
      %v1382 = vpop.f32.mrb[0].mxu0
      %v1383 = vadd.f32 %v401, %v1382
      %v1384 = vpop.f32.mrb[0].mxu0
      %1385 = vmatprep.mubr.bf16.mxu0 0
      %1386 = vmatmul.mubr.bf16.gmra.mrb[0].mxu0 %v766
      %v1387 = vpop.f32.mrb[0].mxu0
      %v1388 = vadd.f32 %v401, %v1387
      %v1389 = vpop.f32.mrb[0].mxu0
      %v1390 = vpop.f32.mrb[0].mxu0
      %v1391 = vadd.f32 %v401, %v1390
      %v1392 = vpop.f32.mrb[0].mxu0
      %1393 = vmatprep.mubr.bf16.mxu0 0
      %1394 = vmatmul.mubr.bf16.gmra.mrb[0].mxu0 %v767
      %v1395 = vpop.f32.mrb[0].mxu0
      %v1396 = vadd.f32 %v401, %v1395
      %v1397 = vpop.f32.mrb[0].mxu0
      %v1398 = vpop.f32.mrb[0].mxu0
      %v1399 = vadd.f32 %v401, %v1398
      %v1400 = vpop.f32.mrb[0].mxu0
      %1401 = vmatprep.mubr.bf16.mxu0 0
      %1402 = vmatmul.mubr.bf16.gmra.mrb[0].mxu0 %v768
      %v1403 = vpop.f32.mrb[0].mxu0
      %v1404 = vadd.f32 %v401, %v1403
      %v1405 = vpop.f32.mrb[0].mxu0
      %v1406 = vpop.f32.mrb[0].mxu0
      %v1407 = vadd.f32 %v401, %v1406
      %v1408 = vpop.f32.mrb[0].mxu0
      %1409 = vmatprep.mubr.bf16.mxu0 0
      %1410 = vmatmul.mubr.bf16.gmra.mrb[0].mxu0 %v769
      %v1411 = vpop.f32.mrb[0].mxu0
      %v1412 = vadd.f32 %v401, %v1411
      %v1413 = vpop.f32.mrb[0].mxu0
      %v1414 = vpop.f32.mrb[0].mxu0
      %v1415 = vadd.f32 %v401, %v1414
      %v1416 = vpop.f32.mrb[0].mxu0
      %1417 = vmatprep.mubr.bf16.mxu0 0
      %1418 = vmatmul.mubr.bf16.gmra.mrb[0].mxu0 %v770
      %v1419 = vpop.f32.mrb[0].mxu0
      %v1420 = vadd.f32 %v401, %v1419
      %v1421 = vpop.f32.mrb[0].mxu0
      %v1422 = vpop.f32.mrb[0].mxu0
      %v1423 = vadd.f32 %v401, %v1422
      %v1424 = vpop.f32.mrb[0].mxu0
      %1425 = vmatprep.mubr.bf16.mxu0 0
      %1426 = vmatmul.mubr.bf16.gmra.mrb[0].mxu0 %v771
      %v1427 = vpop.f32.mrb[0].mxu0
      %v1428 = vadd.f32 %v401, %v1427
      %v1429 = vpop.f32.mrb[0].mxu0
      %v1430 = vpop.f32.mrb[0].mxu0
      %v1431 = vadd.f32 %v401, %v1430
      %v1432 = vpop.f32.mrb[0].mxu0
      %1433 = vmatprep.mubr.bf16.mxu0 0
      %1434 = vmatmul.mubr.bf16.gmra.mrb[0].mxu0 %v772
      %v1435 = vpop.f32.mrb[0].mxu0
      %v1436 = vadd.f32 %v401, %v1435
      %v1437 = vpop.f32.mrb[0].mxu0
      %v1438 = vpop.f32.mrb[0].mxu0
      %v1439 = vadd.f32 %v401, %v1438
      %v1440 = vpop.f32.mrb[0].mxu0
      %1441 = vmatprep.mubr.bf16.mxu0 0
      %1442 = vmatmul.mubr.bf16.gmra.mrb[0].mxu0 %v773
      %v1443 = vpop.f32.mrb[0].mxu0
      %v1444 = vadd.f32 %v401, %v1443
      %v1445 = vpop.f32.mrb[0].mxu0
      %v1446 = vpop.f32.mrb[0].mxu0
      %v1447 = vadd.f32 %v401, %v1446
      %v1448 = vpop.f32.mrb[0].mxu0
      %1449 = vmatprep.mubr.bf16.mxu0 0
      %1450 = vmatmul.mubr.bf16.gmra.mrb[0].mxu0 %v774
      %v1451 = vpop.f32.mrb[0].mxu0
      %v1452 = vadd.f32 %v401, %v1451
      %v1453 = vpop.f32.mrb[0].mxu0
      %v1454 = vpop.f32.mrb[0].mxu0
      %v1455 = vadd.f32 %v401, %v1454
      %v1456 = vpop.f32.mrb[0].mxu0
      %1457 = vmatprep.mubr.bf16.mxu0 0
      %1458 = vmatmul.mubr.bf16.gmra.mrb[0].mxu0 %v775
      %v1459 = vpop.f32.mrb[0].mxu0
      %v1460 = vadd.f32 %v401, %v1459
      %v1461 = vpop.f32.mrb[0].mxu0
      %v1462 = vpop.f32.mrb[0].mxu0
      %v1463 = vadd.f32 %v401, %v1462
      %v1464 = vpop.f32.mrb[0].mxu0
      %1465 = vmatprep.mubr.bf16.mxu0 0
      %1466 = vmatmul.mubr.bf16.gmra.mrb[0].mxu0 %v776
      %v1467 = vpop.f32.mrb[0].mxu0
      %v1468 = vadd.f32 %v401, %v1467
      %v1469 = vpop.f32.mrb[0].mxu0
      %v1470 = vpop.f32.mrb[0].mxu0
      %v1471 = vadd.f32 %v401, %v1470
      %v1472 = vpop.f32.mrb[0].mxu0
      %1473 = vmatprep.mubr.bf16.mxu0 0
      %1474 = vmatmul.mubr.bf16.gmra.mrb[0].mxu0 %v777
      %v1475 = vpop.f32.mrb[0].mxu0
      %v1476 = vadd.f32 %v401, %v1475
      %v1477 = vpop.f32.mrb[0].mxu0
      %v1478 = vpop.f32.mrb[0].mxu0
      %v1479 = vadd.f32 %v401, %v1478
      %v1480 = vpop.f32.mrb[0].mxu0
      %1481 = vmatprep.mubr.bf16.mxu0 0
      %1482 = vmatmul.mubr.bf16.gmra.mrb[0].mxu0 %v778
      %v1483 = vpop.f32.mrb[0].mxu0
      %v1484 = vadd.f32 %v401, %v1483
      %v1485 = vpop.f32.mrb[0].mxu0
      %v1486 = vpop.f32.mrb[0].mxu0
      %v1487 = vadd.f32 %v401, %v1486
      %v1488 = vpop.f32.mrb[0].mxu0
      %1489 = vmatprep.mubr.bf16.mxu0 0
      %1490 = vmatmul.mubr.bf16.gmra.mrb[0].mxu0 %v779
      %v1491 = vpop.f32.mrb[0].mxu0
      %v1492 = vadd.f32 %v401, %v1491
      %v1493 = vpop.f32.mrb[0].mxu0
      %v1494 = vpop.f32.mrb[0].mxu0
      %v1495 = vadd.f32 %v401, %v1494
      %v1496 = vpop.f32.mrb[0].mxu0
      %1497 = vmatprep.mubr.bf16.mxu0 0
      %1498 = vmatmul.mubr.bf16.gmra.mrb[0].mxu0 %v780
      %v1499 = vpop.f32.mrb[0].mxu0
      %v1500 = vadd.f32 %v401, %v1499
      %v1501 = vpop.f32.mrb[0].mxu0
      %v1502 = vpop.f32.mrb[0].mxu0
      %v1503 = vadd.f32 %v401, %v1502
      %v1504 = vpop.f32.mrb[0].mxu0
      %1505 = vmatprep.mubr.bf16.mxu0 0
      %1506 = vmatmul.mubr.bf16.gmra.mrb[0].mxu0 %v781
      %v1507 = vpop.f32.mrb[0].mxu0
      %v1508 = vadd.f32 %v401, %v1507
      %v1509 = vpop.f32.mrb[0].mxu0
      %v1510 = vpop.f32.mrb[0].mxu0
      %v1511 = vadd.f32 %v401, %v1510
      %v1512 = vpop.f32.mrb[0].mxu0
      %1513 = vmatprep.mubr.bf16.mxu0 0
      %1514 = vmatmul.mubr.bf16.gmra.mrb[0].mxu0 %v782
      %v1515 = vpop.f32.mrb[0].mxu0
      %v1516 = vadd.f32 %v401, %v1515
      %v1517 = vpop.f32.mrb[0].mxu0
      %v1518 = vpop.f32.mrb[0].mxu0
      %v1519 = vadd.f32 %v401, %v1518
      %v1520 = vpop.f32.mrb[0].mxu0
      %1521 = vmatprep.mubr.bf16.mxu0 0
      %1522 = vmatmul.mubr.bf16.gmra.mrb[0].mxu0 %v783
      %v1523 = vpop.f32.mrb[0].mxu0
      %v1524 = vadd.f32 %v401, %v1523
      %v1525 = vpop.f32.mrb[0].mxu0
      %v1526 = vpop.f32.mrb[0].mxu0
      %v1527 = vadd.f32 %v401, %v1526
      %v1528 = vpop.f32.mrb[0].mxu0
      %1529 = vmatprep.mubr.bf16.mxu0 0
      %1530 = vmatmul.mubr.bf16.gmra.mrb[0].mxu0 %v784
      %v1531 = vpop.f32.mrb[0].mxu0
      %v1532 = vadd.f32 %v401, %v1531
      %v1533 = vpop.f32.mrb[0].mxu0
      %v1534 = vpop.f32.mrb[0].mxu0
      %v1535 = vadd.f32 %v401, %v1534
      %v1536 = vpop.f32.mrb[0].mxu0
      %1537 = vmatprep.mubr.bf16.mxu0 0
      %1538 = vmatmul.mubr.bf16.gmra.mrb[0].mxu0 %v785
      %v1539 = vpop.f32.mrb[0].mxu0
      %v1540 = vadd.f32 %v401, %v1539
      %v1541 = vpop.f32.mrb[0].mxu0
      %v1542 = vpop.f32.mrb[0].mxu0
      %v1543 = vadd.f32 %v401, %v1542
      %v1544 = vpop.f32.mrb[0].mxu0
      %1545 = vmatprep.mubr.bf16.mxu0 0
      %1546 = vmatmul.mubr.bf16.gmra.mrb[0].mxu0 %v786
      %v1547 = vpop.f32.mrb[0].mxu0
      %v1548 = vadd.f32 %v401, %v1547
      %v1549 = vpop.f32.mrb[0].mxu0
      %v1550 = vpop.f32.mrb[0].mxu0
      %v1551 = vadd.f32 %v401, %v1550
      %v1552 = vpop.f32.mrb[0].mxu0
      %1553 = vmatprep.mubr.bf16.mxu0 0
      %1554 = vmatmul.mubr.bf16.gmra.mrb[0].mxu0 %v787
      %v1555 = vpop.f32.mrb[0].mxu0
      %v1556 = vadd.f32 %v401, %v1555
      %v1557 = vpop.f32.mrb[0].mxu0
      %v1558 = vpop.f32.mrb[0].mxu0
      %v1559 = vadd.f32 %v401, %v1558
      %v1560 = vpop.f32.mrb[0].mxu0
      %1561 = vdwg.mxu0
      %v1562 = vmax.f32 %v948, 0.0
      %v1563 = vmax.f32 %v951, 0.0
      %v1564 = vmax.f32 %v956, 0.0
      %v1565 = vmax.f32 %v959, 0.0
      %v1566 = vmax.f32 %v964, 0.0
      %v1567 = vmax.f32 %v967, 0.0
      %v1568 = vmax.f32 %v972, 0.0
      %v1569 = vmax.f32 %v975, 0.0
      %v1570 = vmax.f32 %v980, 0.0
      %v1571 = vmax.f32 %v983, 0.0
      %v1572 = vmax.f32 %v988, 0.0
      %v1573 = vmax.f32 %v991, 0.0
      %v1574 = vmax.f32 %v996, 0.0
      %v1575 = vmax.f32 %v999, 0.0
      %v1576 = vmax.f32 %v1004, 0.0
      %v1577 = vmax.f32 %v1007, 0.0
      %v1578 = vmax.f32 %v1012, 0.0
      %v1579 = vmax.f32 %v1015, 0.0
      %v1580 = vmax.f32 %v1020, 0.0
      %v1581 = vmax.f32 %v1023, 0.0
      %v1582 = vmax.f32 %v1028, 0.0
      %v1583 = vmax.f32 %v1031, 0.0
      %v1584 = vmax.f32 %v1036, 0.0
      %v1585 = vmax.f32 %v1039, 0.0
      %v1586 = vmax.f32 %v1044, 0.0
      %v1587 = vmax.f32 %v1047, 0.0
      %v1588 = vmax.f32 %v1052, 0.0
      %v1589 = vmax.f32 %v1055, 0.0
      %v1590 = vmax.f32 %v1060, 0.0
      %v1591 = vmax.f32 %v1063, 0.0
      %v1592 = vmax.f32 %v1068, 0.0
      %v1593 = vmax.f32 %v1071, 0.0
      %v1594 = vmax.f32 %v1076, 0.0
      %v1595 = vmax.f32 %v1079, 0.0
      %v1596 = vmax.f32 %v1084, 0.0
      %v1597 = vmax.f32 %v1087, 0.0
      %v1598 = vmax.f32 %v1092, 0.0
      %v1599 = vmax.f32 %v1095, 0.0
      %v1600 = vmax.f32 %v1100, 0.0
      %v1601 = vmax.f32 %v1103, 0.0
      %v1602 = vmax.f32 %v1108, 0.0
      %v1603 = vmax.f32 %v1111, 0.0
      %v1604 = vmax.f32 %v1116, 0.0
      %v1605 = vmax.f32 %v1119, 0.0
      %v1606 = vmax.f32 %v1124, 0.0
      %v1607 = vmax.f32 %v1127, 0.0
      %v1608 = vmax.f32 %v1132, 0.0
      %v1609 = vmax.f32 %v1135, 0.0
      %v1610 = vmax.f32 %v1140, 0.0
      %v1611 = vmax.f32 %v1143, 0.0
      %v1612 = vmax.f32 %v1148, 0.0
      %v1613 = vmax.f32 %v1151, 0.0
      %v1614 = vmax.f32 %v1156, 0.0
      %v1615 = vmax.f32 %v1159, 0.0
      %v1616 = vmax.f32 %v1164, 0.0
      %v1617 = vmax.f32 %v1167, 0.0
      %v1618 = vmax.f32 %v1172, 0.0
      %v1619 = vmax.f32 %v1175, 0.0
      %v1620 = vmax.f32 %v1180, 0.0
      %v1621 = vmax.f32 %v1183, 0.0
      %v1622 = vmax.f32 %v1188, 0.0
      %v1623 = vmax.f32 %v1191, 0.0
      %v1624 = vmax.f32 %v1196, 0.0
      %v1625 = vmax.f32 %v1199, 0.0
      %v1626 = vmax.f32 %v1204, 0.0
      %v1627 = vmax.f32 %v1207, 0.0
      %v1628 = vmax.f32 %v1212, 0.0
      %v1629 = vmax.f32 %v1215, 0.0
      %v1630 = vmax.f32 %v1220, 0.0
      %v1631 = vmax.f32 %v1223, 0.0
      %v1632 = vmax.f32 %v1228, 0.0
      %v1633 = vmax.f32 %v1231, 0.0
      %v1634 = vmax.f32 %v1236, 0.0
      %v1635 = vmax.f32 %v1239, 0.0
      %v1636 = vmax.f32 %v1244, 0.0
      %v1637 = vmax.f32 %v1247, 0.0
      %v1638 = vmax.f32 %v1252, 0.0
      %v1639 = vmax.f32 %v1255, 0.0
      %v1640 = vmax.f32 %v1260, 0.0
      %v1641 = vmax.f32 %v1263, 0.0
      %v1642 = vmax.f32 %v1268, 0.0
      %v1643 = vmax.f32 %v1271, 0.0
      %v1644 = vmax.f32 %v1276, 0.0
      %v1645 = vmax.f32 %v1279, 0.0
      %v1646 = vmax.f32 %v1284, 0.0
      %v1647 = vmax.f32 %v1287, 0.0
      %v1648 = vmax.f32 %v1292, 0.0
      %v1649 = vmax.f32 %v1295, 0.0
      %v1650 = vmax.f32 %v1300, 0.0
      %v1651 = vmax.f32 %v1303, 0.0
      %v1652 = vmax.f32 %v1308, 0.0
      %v1653 = vmax.f32 %v1311, 0.0
      %v1654 = vmax.f32 %v1316, 0.0
      %v1655 = vmax.f32 %v1319, 0.0
      %v1656 = vmax.f32 %v1324, 0.0
      %v1657 = vmax.f32 %v1327, 0.0
      %v1658 = vmax.f32 %v1332, 0.0
      %v1659 = vmax.f32 %v1335, 0.0
      %v1660 = vmax.f32 %v1340, 0.0
      %v1661 = vmax.f32 %v1343, 0.0
      %v1662 = vmax.f32 %v1348, 0.0
      %v1663 = vmax.f32 %v1351, 0.0
      %v1664 = vmax.f32 %v1356, 0.0
      %v1665 = vmax.f32 %v1359, 0.0
      %v1666 = vmax.f32 %v1364, 0.0
      %v1667 = vmax.f32 %v1367, 0.0
      %v1668 = vmax.f32 %v1372, 0.0
      %v1669 = vmax.f32 %v1375, 0.0
      %v1670 = vmax.f32 %v1380, 0.0
      %v1671 = vmax.f32 %v1383, 0.0
      %v1672 = vmax.f32 %v1388, 0.0
      %v1673 = vmax.f32 %v1391, 0.0
      %v1674 = vmax.f32 %v1396, 0.0
      %v1675 = vmax.f32 %v1399, 0.0
      %v1676 = vmax.f32 %v1404, 0.0
      %v1677 = vmax.f32 %v1407, 0.0
      %v1678 = vmax.f32 %v1412, 0.0
      %v1679 = vmax.f32 %v1415, 0.0
      %v1680 = vmax.f32 %v1420, 0.0
      %v1681 = vmax.f32 %v1423, 0.0
      %v1682 = vmax.f32 %v1428, 0.0
      %v1683 = vmax.f32 %v1431, 0.0
      %v1684 = vmax.f32 %v1436, 0.0
      %v1685 = vmax.f32 %v1439, 0.0
      %v1686 = vmax.f32 %v1444, 0.0
      %v1687 = vmax.f32 %v1447, 0.0
      %v1688 = vmax.f32 %v1452, 0.0
      %v1689 = vmax.f32 %v1455, 0.0
      %v1690 = vmax.f32 %v1460, 0.0
      %v1691 = vmax.f32 %v1463, 0.0
      %v1692 = vmax.f32 %v1468, 0.0
      %v1693 = vmax.f32 %v1471, 0.0
      %v1694 = vmax.f32 %v1476, 0.0
      %v1695 = vmax.f32 %v1479, 0.0
      %v1696 = vmax.f32 %v1484, 0.0
      %v1697 = vmax.f32 %v1487, 0.0
      %v1698 = vmax.f32 %v1492, 0.0
      %v1699 = vmax.f32 %v1495, 0.0
      %v1700 = vmax.f32 %v1500, 0.0
      %v1701 = vmax.f32 %v1503, 0.0
      %v1702 = vmax.f32 %v1508, 0.0
      %v1703 = vmax.f32 %v1511, 0.0
      %v1704 = vmax.f32 %v1516, 0.0
      %v1705 = vmax.f32 %v1519, 0.0
      %v1706 = vmax.f32 %v1524, 0.0
      %v1707 = vmax.f32 %v1527, 0.0
      %v1708 = vmax.f32 %v1532, 0.0
      %v1709 = vmax.f32 %v1535, 0.0
      %v1710 = vmax.f32 %v1540, 0.0
      %v1711 = vmax.f32 %v1543, 0.0
      %v1712 = vmax.f32 %v1548, 0.0
      %v1713 = vmax.f32 %v1551, 0.0
      %v1714 = vmax.f32 %v1556, 0.0
      %v1715 = vmax.f32 %v1559, 0.0
      %vm1716 = vcmask 523264
      %1717 = vst.msk [vmem:[#allocation2] sm:$0xff] %vm1716, %v1562
      %1718 = vst.msk [vmem:[#allocation2 + $0x8] sm:$0xff] %vm1716, %v1563
      %1719 = vst.msk [vmem:[#allocation2 + $0x10] sm:$0xff] %vm1716, %v1564
      %1720 = vst.msk [vmem:[#allocation2 + $0x18] sm:$0xff] %vm1716, %v1565
      %1721 = vst.msk [vmem:[#allocation2 + $0x20] sm:$0xff] %vm1716, %v1566
      %1722 = vst.msk [vmem:[#allocation2 + $0x28] sm:$0xff] %vm1716, %v1567
      %1723 = vst.msk [vmem:[#allocation2 + $0x30] sm:$0xff] %vm1716, %v1568
      %1724 = vst.msk [vmem:[#allocation2 + $0x38] sm:$0xff] %vm1716, %v1569
      %1725 = vst.msk [vmem:[#allocation2 + $0x40] sm:$0xff] %vm1716, %v1570
      %1726 = vst.msk [vmem:[#allocation2 + $0x48] sm:$0xff] %vm1716, %v1571
      %1727 = vst.msk [vmem:[#allocation2 + $0x50] sm:$0xff] %vm1716, %v1572
      %1728 = vst.msk [vmem:[#allocation2 + $0x58] sm:$0xff] %vm1716, %v1573
      %1729 = vst.msk [vmem:[#allocation2 + $0x60] sm:$0xff] %vm1716, %v1574
      %1730 = vst.msk [vmem:[#allocation2 + $0x68] sm:$0xff] %vm1716, %v1575
      %1731 = vst.msk [vmem:[#allocation2 + $0x70] sm:$0xff] %vm1716, %v1576
      %1732 = vst.msk [vmem:[#allocation2 + $0x78] sm:$0xff] %vm1716, %v1577
      %1733 = vst.msk [vmem:[#allocation2 + $0x80] sm:$0xff] %vm1716, %v1578
      %1734 = vst.msk [vmem:[#allocation2 + $0x88] sm:$0xff] %vm1716, %v1579
      %1735 = vst.msk [vmem:[#allocation2 + $0x90] sm:$0xff] %vm1716, %v1580
      %1736 = vst.msk [vmem:[#allocation2 + $0x98] sm:$0xff] %vm1716, %v1581
      %1737 = vst.msk [vmem:[#allocation2 + $0xa0] sm:$0xff] %vm1716, %v1582
      %1738 = vst.msk [vmem:[#allocation2 + $0xa8] sm:$0xff] %vm1716, %v1583
      %1739 = vst.msk [vmem:[#allocation2 + $0xb0] sm:$0xff] %vm1716, %v1584
      %1740 = vst.msk [vmem:[#allocation2 + $0xb8] sm:$0xff] %vm1716, %v1585
      %1741 = vst.msk [vmem:[#allocation2 + $0xc0] sm:$0xff] %vm1716, %v1586
      %1742 = vst.msk [vmem:[#allocation2 + $0xc8] sm:$0xff] %vm1716, %v1587
      %1743 = vst.msk [vmem:[#allocation2 + $0xd0] sm:$0xff] %vm1716, %v1588
      %1744 = vst.msk [vmem:[#allocation2 + $0xd8] sm:$0xff] %vm1716, %v1589
      %1745 = vst.msk [vmem:[#allocation2 + $0xe0] sm:$0xff] %vm1716, %v1590
      %1746 = vst.msk [vmem:[#allocation2 + $0xe8] sm:$0xff] %vm1716, %v1591
      %1747 = vst.msk [vmem:[#allocation2 + $0xf0] sm:$0xff] %vm1716, %v1592
      %1748 = vst.msk [vmem:[#allocation2 + $0xf8] sm:$0xff] %vm1716, %v1593
      %1749 = vst.msk [vmem:[#allocation2 + $0x100] sm:$0xff] %vm1716, %v1594
      %1750 = vst.msk [vmem:[#allocation2 + $0x108] sm:$0xff] %vm1716, %v1595
      %1751 = vst.msk [vmem:[#allocation2 + $0x110] sm:$0xff] %vm1716, %v1596
      %1752 = vst.msk [vmem:[#allocation2 + $0x118] sm:$0xff] %vm1716, %v1597
      %1753 = vst.msk [vmem:[#allocation2 + $0x120] sm:$0xff] %vm1716, %v1598
      %1754 = vst.msk [vmem:[#allocation2 + $0x128] sm:$0xff] %vm1716, %v1599
      %1755 = vst.msk [vmem:[#allocation2 + $0x130] sm:$0xff] %vm1716, %v1600
      %1756 = vst.msk [vmem:[#allocation2 + $0x138] sm:$0xff] %vm1716, %v1601
      %1757 = vst.msk [vmem:[#allocation2 + $0x140] sm:$0xff] %vm1716, %v1602
      %1758 = vst.msk [vmem:[#allocation2 + $0x148] sm:$0xff] %vm1716, %v1603
      %1759 = vst.msk [vmem:[#allocation2 + $0x150] sm:$0xff] %vm1716, %v1604
      %1760 = vst.msk [vmem:[#allocation2 + $0x158] sm:$0xff] %vm1716, %v1605
      %1761 = vst.msk [vmem:[#allocation2 + $0x160] sm:$0xff] %vm1716, %v1606
      %1762 = vst.msk [vmem:[#allocation2 + $0x168] sm:$0xff] %vm1716, %v1607
      %1763 = vst.msk [vmem:[#allocation2 + $0x170] sm:$0xff] %vm1716, %v1608
      %1764 = vst.msk [vmem:[#allocation2 + $0x178] sm:$0xff] %vm1716, %v1609
      %1765 = vst.msk [vmem:[#allocation2 + $0x180] sm:$0xff] %vm1716, %v1610
      %1766 = vst.msk [vmem:[#allocation2 + $0x188] sm:$0xff] %vm1716, %v1611
      %1767 = vst.msk [vmem:[#allocation2 + $0x190] sm:$0xff] %vm1716, %v1612
      %1768 = vst.msk [vmem:[#allocation2 + $0x198] sm:$0xff] %vm1716, %v1613
      %1769 = vst.msk [vmem:[#allocation2 + $0x1a0] sm:$0xff] %vm1716, %v1614
      %1770 = vst.msk [vmem:[#allocation2 + $0x1a8] sm:$0xff] %vm1716, %v1615
      %1771 = vst.msk [vmem:[#allocation2 + $0x1b0] sm:$0xff] %vm1716, %v1616
      %1772 = vst.msk [vmem:[#allocation2 + $0x1b8] sm:$0xff] %vm1716, %v1617
      %1773 = vst.msk [vmem:[#allocation2 + $0x1c0] sm:$0xff] %vm1716, %v1618
      %1774 = vst.msk [vmem:[#allocation2 + $0x1c8] sm:$0xff] %vm1716, %v1619
      %1775 = vst.msk [vmem:[#allocation2 + $0x1d0] sm:$0xff] %vm1716, %v1620
      %1776 = vst.msk [vmem:[#allocation2 + $0x1d8] sm:$0xff] %vm1716, %v1621
      %1777 = vst.msk [vmem:[#allocation2 + $0x1e0] sm:$0xff] %vm1716, %v1622
      %1778 = vst.msk [vmem:[#allocation2 + $0x1e8] sm:$0xff] %vm1716, %v1623
      %1779 = vst.msk [vmem:[#allocation2 + $0x1f0] sm:$0xff] %vm1716, %v1624
      %1780 = vst.msk [vmem:[#allocation2 + $0x1f8] sm:$0xff] %vm1716, %v1625
      %1781 = vst.msk [vmem:[#allocation2 + $0x200] sm:$0xff] %vm1716, %v1626
      %1782 = vst.msk [vmem:[#allocation2 + $0x208] sm:$0xff] %vm1716, %v1627
      %1783 = vst.msk [vmem:[#allocation2 + $0x210] sm:$0xff] %vm1716, %v1628
      %1784 = vst.msk [vmem:[#allocation2 + $0x218] sm:$0xff] %vm1716, %v1629
      %1785 = vst.msk [vmem:[#allocation2 + $0x220] sm:$0xff] %vm1716, %v1630
      %1786 = vst.msk [vmem:[#allocation2 + $0x228] sm:$0xff] %vm1716, %v1631
      %1787 = vst.msk [vmem:[#allocation2 + $0x230] sm:$0xff] %vm1716, %v1632
      %1788 = vst.msk [vmem:[#allocation2 + $0x238] sm:$0xff] %vm1716, %v1633
      %1789 = vst.msk [vmem:[#allocation2 + $0x240] sm:$0xff] %vm1716, %v1634
      %1790 = vst.msk [vmem:[#allocation2 + $0x248] sm:$0xff] %vm1716, %v1635
      %1791 = vst.msk [vmem:[#allocation2 + $0x250] sm:$0xff] %vm1716, %v1636
      %1792 = vst.msk [vmem:[#allocation2 + $0x258] sm:$0xff] %vm1716, %v1637
      %1793 = vst.msk [vmem:[#allocation2 + $0x260] sm:$0xff] %vm1716, %v1638
      %1794 = vst.msk [vmem:[#allocation2 + $0x268] sm:$0xff] %vm1716, %v1639
      %1795 = vst.msk [vmem:[#allocation2 + $0x270] sm:$0xff] %vm1716, %v1640
      %1796 = vst.msk [vmem:[#allocation2 + $0x278] sm:$0xff] %vm1716, %v1641
      %1797 = vst.msk [vmem:[#allocation2 + $0x280] sm:$0xff] %vm1716, %v1642
      %1798 = vst.msk [vmem:[#allocation2 + $0x288] sm:$0xff] %vm1716, %v1643
      %1799 = vst.msk [vmem:[#allocation2 + $0x290] sm:$0xff] %vm1716, %v1644
      %1800 = vst.msk [vmem:[#allocation2 + $0x298] sm:$0xff] %vm1716, %v1645
      %1801 = vst.msk [vmem:[#allocation2 + $0x2a0] sm:$0xff] %vm1716, %v1646
      %1802 = vst.msk [vmem:[#allocation2 + $0x2a8] sm:$0xff] %vm1716, %v1647
      %1803 = vst.msk [vmem:[#allocation2 + $0x2b0] sm:$0xff] %vm1716, %v1648
      %1804 = vst.msk [vmem:[#allocation2 + $0x2b8] sm:$0xff] %vm1716, %v1649
      %1805 = vst.msk [vmem:[#allocation2 + $0x2c0] sm:$0xff] %vm1716, %v1650
      %1806 = vst.msk [vmem:[#allocation2 + $0x2c8] sm:$0xff] %vm1716, %v1651
      %1807 = vst.msk [vmem:[#allocation2 + $0x2d0] sm:$0xff] %vm1716, %v1652
      %1808 = vst.msk [vmem:[#allocation2 + $0x2d8] sm:$0xff] %vm1716, %v1653
      %1809 = vst.msk [vmem:[#allocation2 + $0x2e0] sm:$0xff] %vm1716, %v1654
      %1810 = vst.msk [vmem:[#allocation2 + $0x2e8] sm:$0xff] %vm1716, %v1655
      %1811 = vst.msk [vmem:[#allocation2 + $0x2f0] sm:$0xff] %vm1716, %v1656
      %1812 = vst.msk [vmem:[#allocation2 + $0x2f8] sm:$0xff] %vm1716, %v1657
      %1813 = vst.msk [vmem:[#allocation2 + $0x300] sm:$0xff] %vm1716, %v1658
      %1814 = vst.msk [vmem:[#allocation2 + $0x308] sm:$0xff] %vm1716, %v1659
      %1815 = vst.msk [vmem:[#allocation2 + $0x310] sm:$0xff] %vm1716, %v1660
      %1816 = vst.msk [vmem:[#allocation2 + $0x318] sm:$0xff] %vm1716, %v1661
      %1817 = vst.msk [vmem:[#allocation2 + $0x320] sm:$0xff] %vm1716, %v1662
      %1818 = vst.msk [vmem:[#allocation2 + $0x328] sm:$0xff] %vm1716, %v1663
      %1819 = vst.msk [vmem:[#allocation2 + $0x330] sm:$0xff] %vm1716, %v1664
      %1820 = vst.msk [vmem:[#allocation2 + $0x338] sm:$0xff] %vm1716, %v1665
      %1821 = vst.msk [vmem:[#allocation2 + $0x340] sm:$0xff] %vm1716, %v1666
      %1822 = vst.msk [vmem:[#allocation2 + $0x348] sm:$0xff] %vm1716, %v1667
      %1823 = vst.msk [vmem:[#allocation2 + $0x350] sm:$0xff] %vm1716, %v1668
      %1824 = vst.msk [vmem:[#allocation2 + $0x358] sm:$0xff] %vm1716, %v1669
      %1825 = vst.msk [vmem:[#allocation2 + $0x360] sm:$0xff] %vm1716, %v1670
      %1826 = vst.msk [vmem:[#allocation2 + $0x368] sm:$0xff] %vm1716, %v1671
      %1827 = vst.msk [vmem:[#allocation2 + $0x370] sm:$0xff] %vm1716, %v1672
      %1828 = vst.msk [vmem:[#allocation2 + $0x378] sm:$0xff] %vm1716, %v1673
      %1829 = vst.msk [vmem:[#allocation2 + $0x380] sm:$0xff] %vm1716, %v1674
      %1830 = vst.msk [vmem:[#allocation2 + $0x388] sm:$0xff] %vm1716, %v1675
      %1831 = vst.msk [vmem:[#allocation2 + $0x390] sm:$0xff] %vm1716, %v1676
      %1832 = vst.msk [vmem:[#allocation2 + $0x398] sm:$0xff] %vm1716, %v1677
      %1833 = vst.msk [vmem:[#allocation2 + $0x3a0] sm:$0xff] %vm1716, %v1678
      %1834 = vst.msk [vmem:[#allocation2 + $0x3a8] sm:$0xff] %vm1716, %v1679
      %1835 = vst.msk [vmem:[#allocation2 + $0x3b0] sm:$0xff] %vm1716, %v1680
      %1836 = vst.msk [vmem:[#allocation2 + $0x3b8] sm:$0xff] %vm1716, %v1681
      %1837 = vst.msk [vmem:[#allocation2 + $0x3c0] sm:$0xff] %vm1716, %v1682
      %1838 = vst.msk [vmem:[#allocation2 + $0x3c8] sm:$0xff] %vm1716, %v1683
      %1839 = vst.msk [vmem:[#allocation2 + $0x3d0] sm:$0xff] %vm1716, %v1684
      %1840 = vst.msk [vmem:[#allocation2 + $0x3d8] sm:$0xff] %vm1716, %v1685
      %1841 = vst.msk [vmem:[#allocation2 + $0x3e0] sm:$0xff] %vm1716, %v1686
      %1842 = vst.msk [vmem:[#allocation2 + $0x3e8] sm:$0xff] %vm1716, %v1687
      %1843 = vst.msk [vmem:[#allocation2 + $0x3f0] sm:$0xff] %vm1716, %v1688
      %1844 = vst.msk [vmem:[#allocation2 + $0x3f8] sm:$0xff] %vm1716, %v1689
      %1845 = vst.msk [vmem:[#allocation2 + $0x400] sm:$0xff] %vm1716, %v1690
      %1846 = vst.msk [vmem:[#allocation2 + $0x408] sm:$0xff] %vm1716, %v1691
      %1847 = vst.msk [vmem:[#allocation2 + $0x410] sm:$0xff] %vm1716, %v1692
      %1848 = vst.msk [vmem:[#allocation2 + $0x418] sm:$0xff] %vm1716, %v1693
      %1849 = vst.msk [vmem:[#allocation2 + $0x420] sm:$0xff] %vm1716, %v1694
      %1850 = vst.msk [vmem:[#allocation2 + $0x428] sm:$0xff] %vm1716, %v1695
      %1851 = vst.msk [vmem:[#allocation2 + $0x430] sm:$0xff] %vm1716, %v1696
      %1852 = vst.msk [vmem:[#allocation2 + $0x438] sm:$0xff] %vm1716, %v1697
      %1853 = vst.msk [vmem:[#allocation2 + $0x440] sm:$0xff] %vm1716, %v1698
      %1854 = vst.msk [vmem:[#allocation2 + $0x448] sm:$0xff] %vm1716, %v1699
      %1855 = vst.msk [vmem:[#allocation2 + $0x450] sm:$0xff] %vm1716, %v1700
      %1856 = vst.msk [vmem:[#allocation2 + $0x458] sm:$0xff] %vm1716, %v1701
      %1857 = vst.msk [vmem:[#allocation2 + $0x460] sm:$0xff] %vm1716, %v1702
      %1858 = vst.msk [vmem:[#allocation2 + $0x468] sm:$0xff] %vm1716, %v1703
      %1859 = vst.msk [vmem:[#allocation2 + $0x470] sm:$0xff] %vm1716, %v1704
      %1860 = vst.msk [vmem:[#allocation2 + $0x478] sm:$0xff] %vm1716, %v1705
      %1861 = vst.msk [vmem:[#allocation2 + $0x480] sm:$0xff] %vm1716, %v1706
      %1862 = vst.msk [vmem:[#allocation2 + $0x488] sm:$0xff] %vm1716, %v1707
      %1863 = vst.msk [vmem:[#allocation2 + $0x490] sm:$0xff] %vm1716, %v1708
      %1864 = vst.msk [vmem:[#allocation2 + $0x498] sm:$0xff] %vm1716, %v1709
      %1865 = vst.msk [vmem:[#allocation2 + $0x4a0] sm:$0xff] %vm1716, %v1710
      %1866 = vst.msk [vmem:[#allocation2 + $0x4a8] sm:$0xff] %vm1716, %v1711
      %1867 = vst.msk [vmem:[#allocation2 + $0x4b0] sm:$0xff] %vm1716, %v1712
      %1868 = vst.msk [vmem:[#allocation2 + $0x4b8] sm:$0xff] %vm1716, %v1713
      %1869 = vst.msk [vmem:[#allocation2 + $0x4c0] sm:$0xff] %vm1716, %v1714
      %1870 = vst.msk [vmem:[#allocation2 + $0x4c8] sm:$0xff] %vm1716, %v1715
      %v1871 = vld [vmem:[#allocation2] sm:$0xff]
      %v1872 = vld [vmem:[#allocation2 + $0x8] sm:$0xff]
      %v1873 = vld [vmem:[#allocation2 + $0x10] sm:$0xff]
      %v1874 = vld [vmem:[#allocation2 + $0x18] sm:$0xff]
      %v1875 = vld [vmem:[#allocation2 + $0x20] sm:$0xff]
      %v1876 = vld [vmem:[#allocation2 + $0x28] sm:$0xff]
      %v1877 = vld [vmem:[#allocation2 + $0x30] sm:$0xff]
      %v1878 = vld [vmem:[#allocation2 + $0x38] sm:$0xff]
      %v1879 = vld [vmem:[#allocation2 + $0x40] sm:$0xff]
      %v1880 = vld [vmem:[#allocation2 + $0x48] sm:$0xff]
      %v1881 = vld [vmem:[#allocation2 + $0x50] sm:$0xff]
      %v1882 = vld [vmem:[#allocation2 + $0x58] sm:$0xff]
      %v1883 = vld [vmem:[#allocation2 + $0x60] sm:$0xff]
      %v1884 = vld [vmem:[#allocation2 + $0x68] sm:$0xff]
      %v1885 = vld [vmem:[#allocation2 + $0x70] sm:$0xff]
      %v1886 = vld [vmem:[#allocation2 + $0x78] sm:$0xff]
      %v1887 = vld [vmem:[#allocation2 + $0x80] sm:$0xff]
      %v1888 = vld [vmem:[#allocation2 + $0x88] sm:$0xff]
      %v1889 = vld [vmem:[#allocation2 + $0x90] sm:$0xff]
      %v1890 = vld [vmem:[#allocation2 + $0x98] sm:$0xff]
      %v1891 = vld [vmem:[#allocation2 + $0xa0] sm:$0xff]
      %v1892 = vld [vmem:[#allocation2 + $0xa8] sm:$0xff]
      %v1893 = vld [vmem:[#allocation2 + $0xb0] sm:$0xff]
      %v1894 = vld [vmem:[#allocation2 + $0xb8] sm:$0xff]
      %v1895 = vld [vmem:[#allocation2 + $0xc0] sm:$0xff]
      %v1896 = vld [vmem:[#allocation2 + $0xc8] sm:$0xff]
      %v1897 = vld [vmem:[#allocation2 + $0xd0] sm:$0xff]
      %v1898 = vld [vmem:[#allocation2 + $0xd8] sm:$0xff]
      %v1899 = vld [vmem:[#allocation2 + $0xe0] sm:$0xff]
      %v1900 = vld [vmem:[#allocation2 + $0xe8] sm:$0xff]
      %v1901 = vld [vmem:[#allocation2 + $0xf0] sm:$0xff]
      %v1902 = vld [vmem:[#allocation2 + $0xf8] sm:$0xff]
      %v1903 = vld [vmem:[#allocation2 + $0x100] sm:$0xff]
      %v1904 = vld [vmem:[#allocation2 + $0x108] sm:$0xff]
      %v1905 = vld [vmem:[#allocation2 + $0x110] sm:$0xff]
      %v1906 = vld [vmem:[#allocation2 + $0x118] sm:$0xff]
      %v1907 = vld [vmem:[#allocation2 + $0x120] sm:$0xff]
      %v1908 = vld [vmem:[#allocation2 + $0x128] sm:$0xff]
      %v1909 = vld [vmem:[#allocation2 + $0x130] sm:$0xff]
      %v1910 = vld [vmem:[#allocation2 + $0x138] sm:$0xff]
      %v1911 = vld [vmem:[#allocation2 + $0x140] sm:$0xff]
      %v1912 = vld [vmem:[#allocation2 + $0x148] sm:$0xff]
      %v1913 = vld [vmem:[#allocation2 + $0x150] sm:$0xff]
      %v1914 = vld [vmem:[#allocation2 + $0x158] sm:$0xff]
      %v1915 = vld [vmem:[#allocation2 + $0x160] sm:$0xff]
      %v1916 = vld [vmem:[#allocation2 + $0x168] sm:$0xff]
      %v1917 = vld [vmem:[#allocation2 + $0x170] sm:$0xff]
      %v1918 = vld [vmem:[#allocation2 + $0x178] sm:$0xff]
      %v1919 = vld [vmem:[#allocation2 + $0x180] sm:$0xff]
      %v1920 = vld [vmem:[#allocation2 + $0x188] sm:$0xff]
      %v1921 = vld [vmem:[#allocation2 + $0x190] sm:$0xff]
      %v1922 = vld [vmem:[#allocation2 + $0x198] sm:$0xff]
      %v1923 = vld [vmem:[#allocation2 + $0x1a0] sm:$0xff]
      %v1924 = vld [vmem:[#allocation2 + $0x1a8] sm:$0xff]
      %v1925 = vld [vmem:[#allocation2 + $0x1b0] sm:$0xff]
      %v1926 = vld [vmem:[#allocation2 + $0x1b8] sm:$0xff]
      %v1927 = vld [vmem:[#allocation2 + $0x1c0] sm:$0xff]
      %v1928 = vld [vmem:[#allocation2 + $0x1c8] sm:$0xff]
      %v1929 = vld [vmem:[#allocation2 + $0x1d0] sm:$0xff]
      %v1930 = vld [vmem:[#allocation2 + $0x1d8] sm:$0xff]
      %v1931 = vld [vmem:[#allocation2 + $0x1e0] sm:$0xff]
      %v1932 = vld [vmem:[#allocation2 + $0x1e8] sm:$0xff]
      %v1933 = vld [vmem:[#allocation2 + $0x1f0] sm:$0xff]
      %v1934 = vld [vmem:[#allocation2 + $0x1f8] sm:$0xff]
      %v1935 = vld [vmem:[#allocation2 + $0x200] sm:$0xff]
      %v1936 = vld [vmem:[#allocation2 + $0x208] sm:$0xff]
      %v1937 = vld [vmem:[#allocation2 + $0x210] sm:$0xff]
      %v1938 = vld [vmem:[#allocation2 + $0x218] sm:$0xff]
      %v1939 = vld [vmem:[#allocation2 + $0x220] sm:$0xff]
      %v1940 = vld [vmem:[#allocation2 + $0x228] sm:$0xff]
      %v1941 = vld [vmem:[#allocation2 + $0x230] sm:$0xff]
      %v1942 = vld [vmem:[#allocation2 + $0x238] sm:$0xff]
      %v1943 = vld [vmem:[#allocation2 + $0x240] sm:$0xff]
      %v1944 = vld [vmem:[#allocation2 + $0x248] sm:$0xff]
      %v1945 = vld [vmem:[#allocation2 + $0x250] sm:$0xff]
      %v1946 = vld [vmem:[#allocation2 + $0x258] sm:$0xff]
      %v1947 = vld [vmem:[#allocation2 + $0x260] sm:$0xff]
      %v1948 = vld [vmem:[#allocation2 + $0x268] sm:$0xff]
      %v1949 = vld [vmem:[#allocation2 + $0x270] sm:$0xff]
      %v1950 = vld [vmem:[#allocation2 + $0x278] sm:$0xff]
      %v1951 = vld [vmem:[#allocation2 + $0x280] sm:$0xff]
      %v1952 = vld [vmem:[#allocation2 + $0x288] sm:$0xff]
      %v1953 = vld [vmem:[#allocation2 + $0x290] sm:$0xff]
      %v1954 = vld [vmem:[#allocation2 + $0x298] sm:$0xff]
      %v1955 = vld [vmem:[#allocation2 + $0x2a0] sm:$0xff]
      %v1956 = vld [vmem:[#allocation2 + $0x2a8] sm:$0xff]
      %v1957 = vld [vmem:[#allocation2 + $0x2b0] sm:$0xff]
      %v1958 = vld [vmem:[#allocation2 + $0x2b8] sm:$0xff]
      %v1959 = vld [vmem:[#allocation2 + $0x2c0] sm:$0xff]
      %v1960 = vld [vmem:[#allocation2 + $0x2c8] sm:$0xff]
      %v1961 = vld [vmem:[#allocation2 + $0x2d0] sm:$0xff]
      %v1962 = vld [vmem:[#allocation2 + $0x2d8] sm:$0xff]
      %v1963 = vld [vmem:[#allocation2 + $0x2e0] sm:$0xff]
      %v1964 = vld [vmem:[#allocation2 + $0x2e8] sm:$0xff]
      %v1965 = vld [vmem:[#allocation2 + $0x2f0] sm:$0xff]
      %v1966 = vld [vmem:[#allocation2 + $0x2f8] sm:$0xff]
      %v1967 = vld [vmem:[#allocation2 + $0x300] sm:$0xff]
      %v1968 = vld [vmem:[#allocation2 + $0x308] sm:$0xff]
      %v1969 = vld [vmem:[#allocation2 + $0x310] sm:$0xff]
      %v1970 = vld [vmem:[#allocation2 + $0x318] sm:$0xff]
      %v1971 = vld [vmem:[#allocation2 + $0x320] sm:$0xff]
      %v1972 = vld [vmem:[#allocation2 + $0x328] sm:$0xff]
      %v1973 = vld [vmem:[#allocation2 + $0x330] sm:$0xff]
      %v1974 = vld [vmem:[#allocation2 + $0x338] sm:$0xff]
      %v1975 = vld [vmem:[#allocation2 + $0x340] sm:$0xff]
      %v1976 = vld [vmem:[#allocation2 + $0x348] sm:$0xff]
      %v1977 = vld [vmem:[#allocation2 + $0x350] sm:$0xff]
      %v1978 = vld [vmem:[#allocation2 + $0x358] sm:$0xff]
      %v1979 = vld [vmem:[#allocation2 + $0x360] sm:$0xff]
      %v1980 = vld [vmem:[#allocation2 + $0x368] sm:$0xff]
      %v1981 = vld [vmem:[#allocation2 + $0x370] sm:$0xff]
      %v1982 = vld [vmem:[#allocation2 + $0x378] sm:$0xff]
      %v1983 = vld [vmem:[#allocation2 + $0x380] sm:$0xff]
      %v1984 = vld [vmem:[#allocation2 + $0x388] sm:$0xff]
      %v1985 = vld [vmem:[#allocation2 + $0x390] sm:$0xff]
      %v1986 = vld [vmem:[#allocation2 + $0x398] sm:$0xff]
      %v1987 = vld [vmem:[#allocation2 + $0x3a0] sm:$0xff]
      %v1988 = vld [vmem:[#allocation2 + $0x3a8] sm:$0xff]
      %v1989 = vld [vmem:[#allocation2 + $0x3b0] sm:$0xff]
      %v1990 = vld [vmem:[#allocation2 + $0x3b8] sm:$0xff]
      %v1991 = vld [vmem:[#allocation2 + $0x3c0] sm:$0xff]
      %v1992 = vld [vmem:[#allocation2 + $0x3c8] sm:$0xff]
      %v1993 = vld [vmem:[#allocation2 + $0x3d0] sm:$0xff]
      %v1994 = vld [vmem:[#allocation2 + $0x3d8] sm:$0xff]
      %v1995 = vld [vmem:[#allocation2 + $0x3e0] sm:$0xff]
      %v1996 = vld [vmem:[#allocation2 + $0x3e8] sm:$0xff]
      %v1997 = vld [vmem:[#allocation2 + $0x3f0] sm:$0xff]
      %v1998 = vld [vmem:[#allocation2 + $0x3f8] sm:$0xff]
      %v1999 = vld [vmem:[#allocation2 + $0x400] sm:$0xff]
      %v2000 = vld [vmem:[#allocation2 + $0x408] sm:$0xff]
      %v2001 = vld [vmem:[#allocation2 + $0x410] sm:$0xff]
      %v2002 = vld [vmem:[#allocation2 + $0x418] sm:$0xff]
      %v2003 = vld [vmem:[#allocation2 + $0x420] sm:$0xff]
      %v2004 = vld [vmem:[#allocation2 + $0x428] sm:$0xff]
      %v2005 = vld [vmem:[#allocation2 + $0x430] sm:$0xff]
      %v2006 = vld [vmem:[#allocation2 + $0x438] sm:$0xff]
      %v2007 = vld [vmem:[#allocation2 + $0x440] sm:$0xff]
      %v2008 = vld [vmem:[#allocation2 + $0x448] sm:$0xff]
      %v2009 = vld [vmem:[#allocation2 + $0x450] sm:$0xff]
      %v2010 = vld [vmem:[#allocation2 + $0x458] sm:$0xff]
      %v2011 = vld [vmem:[#allocation2 + $0x460] sm:$0xff]
      %v2012 = vld [vmem:[#allocation2 + $0x468] sm:$0xff]
      %v2013 = vld [vmem:[#allocation2 + $0x470] sm:$0xff]
      %v2014 = vld [vmem:[#allocation2 + $0x478] sm:$0xff]
      %v2015 = vld [vmem:[#allocation2 + $0x480] sm:$0xff]
      %v2016 = vpack.c.bf16 %v1872, %v1871
      %v2017 = vpack.c.bf16 %v1874, %v1873
      %v2018 = vpack.c.bf16 %v1876, %v1875
      %v2019 = vpack.c.bf16 %v1878, %v1877
      %v2020 = vpack.c.bf16 %v1880, %v1879
      %v2021 = vpack.c.bf16 %v1882, %v1881
      %v2022 = vpack.c.bf16 %v1884, %v1883
      %v2023 = vpack.c.bf16 %v1886, %v1885
      %v2024 = vpack.c.bf16 %v1888, %v1887
      %v2025 = vpack.c.bf16 %v1890, %v1889
      %v2026 = vpack.c.bf16 %v1892, %v1891
      %v2027 = vpack.c.bf16 %v1894, %v1893
      %v2028 = vpack.c.bf16 %v1896, %v1895
      %v2029 = vpack.c.bf16 %v1898, %v1897
      %v2030 = vpack.c.bf16 %v1900, %v1899
      %v2031 = vpack.c.bf16 %v1902, %v1901
      %v2032 = vpack.c.bf16 %v1904, %v1903
      %v2033 = vpack.c.bf16 %v1906, %v1905
      %v2034 = vpack.c.bf16 %v1908, %v1907
      %v2035 = vpack.c.bf16 %v1910, %v1909
      %v2036 = vpack.c.bf16 %v1912, %v1911
      %v2037 = vpack.c.bf16 %v1914, %v1913
      %v2038 = vpack.c.bf16 %v1916, %v1915
      %v2039 = vpack.c.bf16 %v1918, %v1917
      %v2040 = vpack.c.bf16 %v1920, %v1919
      %v2041 = vpack.c.bf16 %v1922, %v1921
      %v2042 = vpack.c.bf16 %v1924, %v1923
      %v2043 = vpack.c.bf16 %v1926, %v1925
      %v2044 = vpack.c.bf16 %v1928, %v1927
      %v2045 = vpack.c.bf16 %v1930, %v1929
      %v2046 = vpack.c.bf16 %v1932, %v1931
      %v2047 = vpack.c.bf16 %v1934, %v1933
      %v2048 = vpack.c.bf16 %v1936, %v1935
      %v2049 = vpack.c.bf16 %v1938, %v1937
      %v2050 = vpack.c.bf16 %v1940, %v1939
      %v2051 = vpack.c.bf16 %v1942, %v1941
      %v2052 = vpack.c.bf16 %v1944, %v1943
      %v2053 = vpack.c.bf16 %v1946, %v1945
      %v2054 = vpack.c.bf16 %v1948, %v1947
      %v2055 = vpack.c.bf16 %v1950, %v1949
      %v2056 = vpack.c.bf16 %v1952, %v1951
      %v2057 = vpack.c.bf16 %v1954, %v1953
      %v2058 = vpack.c.bf16 %v1956, %v1955
      %v2059 = vpack.c.bf16 %v1958, %v1957
      %v2060 = vpack.c.bf16 %v1960, %v1959
      %v2061 = vpack.c.bf16 %v1962, %v1961
      %v2062 = vpack.c.bf16 %v1964, %v1963
      %v2063 = vpack.c.bf16 %v1966, %v1965
      %v2064 = vpack.c.bf16 %v1968, %v1967
      %v2065 = vpack.c.bf16 %v1970, %v1969
      %v2066 = vpack.c.bf16 %v1972, %v1971
      %v2067 = vpack.c.bf16 %v1974, %v1973
      %v2068 = vpack.c.bf16 %v1976, %v1975
      %v2069 = vpack.c.bf16 %v1978, %v1977
      %v2070 = vpack.c.bf16 %v1980, %v1979
      %v2071 = vpack.c.bf16 %v1982, %v1981
      %v2072 = vpack.c.bf16 %v1984, %v1983
      %v2073 = vpack.c.bf16 %v1986, %v1985
      %v2074 = vpack.c.bf16 %v1988, %v1987
      %v2075 = vpack.c.bf16 %v1990, %v1989
      %v2076 = vpack.c.bf16 %v1992, %v1991
      %v2077 = vpack.c.bf16 %v1994, %v1993
      %v2078 = vpack.c.bf16 %v1996, %v1995
      %v2079 = vpack.c.bf16 %v1998, %v1997
      %v2080 = vpack.c.bf16 %v2000, %v1999
      %v2081 = vpack.c.bf16 %v2002, %v2001
      %v2082 = vpack.c.bf16 %v2004, %v2003
      %v2083 = vpack.c.bf16 %v2006, %v2005
      %v2084 = vpack.c.bf16 %v2008, %v2007
      %v2085 = vpack.c.bf16 %v2010, %v2009
      %v2086 = vpack.c.bf16 %v2012, %v2011
      %v2087 = vpack.c.bf16 %v2014, %v2013
      %v2088 = vpack.c.bf16 %v2015, %v2015
      %v2089 = vld [vmem:[#allocation2 + $0x1] sm:$0xff]
      %v2090 = vld [vmem:[#allocation2 + $0x9] sm:$0xff]
      %v2091 = vld [vmem:[#allocation2 + $0x11] sm:$0xff]
      %v2092 = vld [vmem:[#allocation2 + $0x19] sm:$0xff]
      %v2093 = vld [vmem:[#allocation2 + $0x21] sm:$0xff]
      %v2094 = vld [vmem:[#allocation2 + $0x29] sm:$0xff]
      %v2095 = vld [vmem:[#allocation2 + $0x31] sm:$0xff]
      %v2096 = vld [vmem:[#allocation2 + $0x39] sm:$0xff]
      %v2097 = vld [vmem:[#allocation2 + $0x41] sm:$0xff]
      %v2098 = vld [vmem:[#allocation2 + $0x49] sm:$0xff]
      %v2099 = vld [vmem:[#allocation2 + $0x51] sm:$0xff]
      %v2100 = vld [vmem:[#allocation2 + $0x59] sm:$0xff]
      %v2101 = vld [vmem:[#allocation2 + $0x61] sm:$0xff]
      %v2102 = vld [vmem:[#allocation2 + $0x69] sm:$0xff]
      %v2103 = vld [vmem:[#allocation2 + $0x71] sm:$0xff]
      %v2104 = vld [vmem:[#allocation2 + $0x79] sm:$0xff]
      %v2105 = vld [vmem:[#allocation2 + $0x81] sm:$0xff]
      %v2106 = vld [vmem:[#allocation2 + $0x89] sm:$0xff]
      %v2107 = vld [vmem:[#allocation2 + $0x91] sm:$0xff]
      %v2108 = vld [vmem:[#allocation2 + $0x99] sm:$0xff]
      %v2109 = vld [vmem:[#allocation2 + $0xa1] sm:$0xff]
      %v2110 = vld [vmem:[#allocation2 + $0xa9] sm:$0xff]
      %v2111 = vld [vmem:[#allocation2 + $0xb1] sm:$0xff]
      %v2112 = vld [vmem:[#allocation2 + $0xb9] sm:$0xff]
      %v2113 = vld [vmem:[#allocation2 + $0xc1] sm:$0xff]
      %v2114 = vld [vmem:[#allocation2 + $0xc9] sm:$0xff]
      %v2115 = vld [vmem:[#allocation2 + $0xd1] sm:$0xff]
      %v2116 = vld [vmem:[#allocation2 + $0xd9] sm:$0xff]
      %v2117 = vld [vmem:[#allocation2 + $0xe1] sm:$0xff]
      %v2118 = vld [vmem:[#allocation2 + $0xe9] sm:$0xff]
      %v2119 = vld [vmem:[#allocation2 + $0xf1] sm:$0xff]
      %v2120 = vld [vmem:[#allocation2 + $0xf9] sm:$0xff]
      %v2121 = vld [vmem:[#allocation2 + $0x101] sm:$0xff]
      %v2122 = vld [vmem:[#allocation2 + $0x109] sm:$0xff]
      %v2123 = vld [vmem:[#allocation2 + $0x111] sm:$0xff]
      %v2124 = vld [vmem:[#allocation2 + $0x119] sm:$0xff]
      %v2125 = vld [vmem:[#allocation2 + $0x121] sm:$0xff]
      %v2126 = vld [vmem:[#allocation2 + $0x129] sm:$0xff]
      %v2127 = vld [vmem:[#allocation2 + $0x131] sm:$0xff]
      %v2128 = vld [vmem:[#allocation2 + $0x139] sm:$0xff]
      %v2129 = vld [vmem:[#allocation2 + $0x141] sm:$0xff]
      %v2130 = vld [vmem:[#allocation2 + $0x149] sm:$0xff]
      %v2131 = vld [vmem:[#allocation2 + $0x151] sm:$0xff]
      %v2132 = vld [vmem:[#allocation2 + $0x159] sm:$0xff]
      %v2133 = vld [vmem:[#allocation2 + $0x161] sm:$0xff]
      %v2134 = vld [vmem:[#allocation2 + $0x169] sm:$0xff]
      %v2135 = vld [vmem:[#allocation2 + $0x171] sm:$0xff]
      %v2136 = vld [vmem:[#allocation2 + $0x179] sm:$0xff]
      %v2137 = vld [vmem:[#allocation2 + $0x181] sm:$0xff]
      %v2138 = vld [vmem:[#allocation2 + $0x189] sm:$0xff]
      %v2139 = vld [vmem:[#allocation2 + $0x191] sm:$0xff]
      %v2140 = vld [vmem:[#allocation2 + $0x199] sm:$0xff]
      %v2141 = vld [vmem:[#allocation2 + $0x1a1] sm:$0xff]
      %v2142 = vld [vmem:[#allocation2 + $0x1a9] sm:$0xff]
      %v2143 = vld [vmem:[#allocation2 + $0x1b1] sm:$0xff]
      %v2144 = vld [vmem:[#allocation2 + $0x1b9] sm:$0xff]
      %v2145 = vld [vmem:[#allocation2 + $0x1c1] sm:$0xff]
      %v2146 = vld [vmem:[#allocation2 + $0x1c9] sm:$0xff]
      %v2147 = vld [vmem:[#allocation2 + $0x1d1] sm:$0xff]
      %v2148 = vld [vmem:[#allocation2 + $0x1d9] sm:$0xff]
      %v2149 = vld [vmem:[#allocation2 + $0x1e1] sm:$0xff]
      %v2150 = vld [vmem:[#allocation2 + $0x1e9] sm:$0xff]
      %v2151 = vld [vmem:[#allocation2 + $0x1f1] sm:$0xff]
      %v2152 = vld [vmem:[#allocation2 + $0x1f9] sm:$0xff]
      %v2153 = vld [vmem:[#allocation2 + $0x201] sm:$0xff]
      %v2154 = vld [vmem:[#allocation2 + $0x209] sm:$0xff]
      %v2155 = vld [vmem:[#allocation2 + $0x211] sm:$0xff]
      %v2156 = vld [vmem:[#allocation2 + $0x219] sm:$0xff]
      %v2157 = vld [vmem:[#allocation2 + $0x221] sm:$0xff]
      %v2158 = vld [vmem:[#allocation2 + $0x229] sm:$0xff]
      %v2159 = vld [vmem:[#allocation2 + $0x231] sm:$0xff]
      %v2160 = vld [vmem:[#allocation2 + $0x239] sm:$0xff]
      %v2161 = vld [vmem:[#allocation2 + $0x241] sm:$0xff]
      %v2162 = vld [vmem:[#allocation2 + $0x249] sm:$0xff]
      %v2163 = vld [vmem:[#allocation2 + $0x251] sm:$0xff]
      %v2164 = vld [vmem:[#allocation2 + $0x259] sm:$0xff]
      %v2165 = vld [vmem:[#allocation2 + $0x261] sm:$0xff]
      %v2166 = vld [vmem:[#allocation2 + $0x269] sm:$0xff]
      %v2167 = vld [vmem:[#allocation2 + $0x271] sm:$0xff]
      %v2168 = vld [vmem:[#allocation2 + $0x279] sm:$0xff]
      %v2169 = vld [vmem:[#allocation2 + $0x281] sm:$0xff]
      %v2170 = vld [vmem:[#allocation2 + $0x289] sm:$0xff]
      %v2171 = vld [vmem:[#allocation2 + $0x291] sm:$0xff]
      %v2172 = vld [vmem:[#allocation2 + $0x299] sm:$0xff]
      %v2173 = vld [vmem:[#allocation2 + $0x2a1] sm:$0xff]
      %v2174 = vld [vmem:[#allocation2 + $0x2a9] sm:$0xff]
      %v2175 = vld [vmem:[#allocation2 + $0x2b1] sm:$0xff]
      %v2176 = vld [vmem:[#allocation2 + $0x2b9] sm:$0xff]
      %v2177 = vld [vmem:[#allocation2 + $0x2c1] sm:$0xff]
      %v2178 = vld [vmem:[#allocation2 + $0x2c9] sm:$0xff]
      %v2179 = vld [vmem:[#allocation2 + $0x2d1] sm:$0xff]
      %v2180 = vld [vmem:[#allocation2 + $0x2d9] sm:$0xff]
      %v2181 = vld [vmem:[#allocation2 + $0x2e1] sm:$0xff]
      %v2182 = vld [vmem:[#allocation2 + $0x2e9] sm:$0xff]
      %v2183 = vld [vmem:[#allocation2 + $0x2f1] sm:$0xff]
      %v2184 = vld [vmem:[#allocation2 + $0x2f9] sm:$0xff]
      %v2185 = vld [vmem:[#allocation2 + $0x301] sm:$0xff]
      %v2186 = vld [vmem:[#allocation2 + $0x309] sm:$0xff]
      %v2187 = vld [vmem:[#allocation2 + $0x311] sm:$0xff]
      %v2188 = vld [vmem:[#allocation2 + $0x319] sm:$0xff]
      %v2189 = vld [vmem:[#allocation2 + $0x321] sm:$0xff]
      %v2190 = vld [vmem:[#allocation2 + $0x329] sm:$0xff]
      %v2191 = vld [vmem:[#allocation2 + $0x331] sm:$0xff]
      %v2192 = vld [vmem:[#allocation2 + $0x339] sm:$0xff]
      %v2193 = vld [vmem:[#allocation2 + $0x341] sm:$0xff]
      %v2194 = vld [vmem:[#allocation2 + $0x349] sm:$0xff]
      %v2195 = vld [vmem:[#allocation2 + $0x351] sm:$0xff]
      %v2196 = vld [vmem:[#allocation2 + $0x359] sm:$0xff]
      %v2197 = vld [vmem:[#allocation2 + $0x361] sm:$0xff]
      %v2198 = vld [vmem:[#allocation2 + $0x369] sm:$0xff]
      %v2199 = vld [vmem:[#allocation2 + $0x371] sm:$0xff]
      %v2200 = vld [vmem:[#allocation2 + $0x379] sm:$0xff]
      %v2201 = vld [vmem:[#allocation2 + $0x381] sm:$0xff]
      %v2202 = vld [vmem:[#allocation2 + $0x389] sm:$0xff]
      %v2203 = vld [vmem:[#allocation2 + $0x391] sm:$0xff]
      %v2204 = vld [vmem:[#allocation2 + $0x399] sm:$0xff]
      %v2205 = vld [vmem:[#allocation2 + $0x3a1] sm:$0xff]
      %v2206 = vld [vmem:[#allocation2 + $0x3a9] sm:$0xff]
      %v2207 = vld [vmem:[#allocation2 + $0x3b1] sm:$0xff]
      %v2208 = vld [vmem:[#allocation2 + $0x3b9] sm:$0xff]
      %v2209 = vld [vmem:[#allocation2 + $0x3c1] sm:$0xff]
      %v2210 = vld [vmem:[#allocation2 + $0x3c9] sm:$0xff]
      %v2211 = vld [vmem:[#allocation2 + $0x3d1] sm:$0xff]
      %v2212 = vld [vmem:[#allocation2 + $0x3d9] sm:$0xff]
      %v2213 = vld [vmem:[#allocation2 + $0x3e1] sm:$0xff]
      %v2214 = vld [vmem:[#allocation2 + $0x3e9] sm:$0xff]
      %v2215 = vld [vmem:[#allocation2 + $0x3f1] sm:$0xff]
      %v2216 = vld [vmem:[#allocation2 + $0x3f9] sm:$0xff]
      %v2217 = vld [vmem:[#allocation2 + $0x401] sm:$0xff]
      %v2218 = vld [vmem:[#allocation2 + $0x409] sm:$0xff]
      %v2219 = vld [vmem:[#allocation2 + $0x411] sm:$0xff]
      %v2220 = vld [vmem:[#allocation2 + $0x419] sm:$0xff]
      %v2221 = vld [vmem:[#allocation2 + $0x421] sm:$0xff]
      %v2222 = vld [vmem:[#allocation2 + $0x429] sm:$0xff]
      %v2223 = vld [vmem:[#allocation2 + $0x431] sm:$0xff]
      %v2224 = vld [vmem:[#allocation2 + $0x439] sm:$0xff]
      %v2225 = vld [vmem:[#allocation2 + $0x441] sm:$0xff]
      %v2226 = vld [vmem:[#allocation2 + $0x449] sm:$0xff]
      %v2227 = vld [vmem:[#allocation2 + $0x451] sm:$0xff]
      %v2228 = vld [vmem:[#allocation2 + $0x459] sm:$0xff]
      %v2229 = vld [vmem:[#allocation2 + $0x461] sm:$0xff]
      %v2230 = vld [vmem:[#allocation2 + $0x469] sm:$0xff]
      %v2231 = vld [vmem:[#allocation2 + $0x471] sm:$0xff]
      %v2232 = vld [vmem:[#allocation2 + $0x479] sm:$0xff]
      %v2233 = vld [vmem:[#allocation2 + $0x481] sm:$0xff]
      %v2234 = vpack.c.bf16 %v2090, %v2089
      %v2235 = vpack.c.bf16 %v2092, %v2091
      %v2236 = vpack.c.bf16 %v2094, %v2093
      %v2237 = vpack.c.bf16 %v2096, %v2095
      %v2238 = vpack.c.bf16 %v2098, %v2097
      %v2239 = vpack.c.bf16 %v2100, %v2099
      %v2240 = vpack.c.bf16 %v2102, %v2101
      %v2241 = vpack.c.bf16 %v2104, %v2103
      %v2242 = vpack.c.bf16 %v2106, %v2105
      %v2243 = vpack.c.bf16 %v2108, %v2107
      %v2244 = vpack.c.bf16 %v2110, %v2109
      %v2245 = vpack.c.bf16 %v2112, %v2111
      %v2246 = vpack.c.bf16 %v2114, %v2113
      %v2247 = vpack.c.bf16 %v2116, %v2115
      %v2248 = vpack.c.bf16 %v2118, %v2117
      %v2249 = vpack.c.bf16 %v2120, %v2119
      %v2250 = vpack.c.bf16 %v2122, %v2121
      %v2251 = vpack.c.bf16 %v2124, %v2123
      %v2252 = vpack.c.bf16 %v2126, %v2125
      %v2253 = vpack.c.bf16 %v2128, %v2127
      %v2254 = vpack.c.bf16 %v2130, %v2129
      %v2255 = vpack.c.bf16 %v2132, %v2131
      %v2256 = vpack.c.bf16 %v2134, %v2133
      %v2257 = vpack.c.bf16 %v2136, %v2135
      %v2258 = vpack.c.bf16 %v2138, %v2137
      %v2259 = vpack.c.bf16 %v2140, %v2139
      %v2260 = vpack.c.bf16 %v2142, %v2141
      %v2261 = vpack.c.bf16 %v2144, %v2143
      %v2262 = vpack.c.bf16 %v2146, %v2145
      %v2263 = vpack.c.bf16 %v2148, %v2147
      %v2264 = vpack.c.bf16 %v2150, %v2149
      %v2265 = vpack.c.bf16 %v2152, %v2151
      %v2266 = vpack.c.bf16 %v2154, %v2153
      %v2267 = vpack.c.bf16 %v2156, %v2155
      %v2268 = vpack.c.bf16 %v2158, %v2157
      %v2269 = vpack.c.bf16 %v2160, %v2159
      %v2270 = vpack.c.bf16 %v2162, %v2161
      %v2271 = vpack.c.bf16 %v2164, %v2163
      %v2272 = vpack.c.bf16 %v2166, %v2165
      %v2273 = vpack.c.bf16 %v2168, %v2167
      %v2274 = vpack.c.bf16 %v2170, %v2169
      %v2275 = vpack.c.bf16 %v2172, %v2171
      %v2276 = vpack.c.bf16 %v2174, %v2173
      %v2277 = vpack.c.bf16 %v2176, %v2175
      %v2278 = vpack.c.bf16 %v2178, %v2177
      %v2279 = vpack.c.bf16 %v2180, %v2179
      %v2280 = vpack.c.bf16 %v2182, %v2181
      %v2281 = vpack.c.bf16 %v2184, %v2183
      %v2282 = vpack.c.bf16 %v2186, %v2185
      %v2283 = vpack.c.bf16 %v2188, %v2187
      %v2284 = vpack.c.bf16 %v2190, %v2189
      %v2285 = vpack.c.bf16 %v2192, %v2191
      %v2286 = vpack.c.bf16 %v2194, %v2193
      %v2287 = vpack.c.bf16 %v2196, %v2195
      %v2288 = vpack.c.bf16 %v2198, %v2197
      %v2289 = vpack.c.bf16 %v2200, %v2199
      %v2290 = vpack.c.bf16 %v2202, %v2201
      %v2291 = vpack.c.bf16 %v2204, %v2203
      %v2292 = vpack.c.bf16 %v2206, %v2205
      %v2293 = vpack.c.bf16 %v2208, %v2207
      %v2294 = vpack.c.bf16 %v2210, %v2209
      %v2295 = vpack.c.bf16 %v2212, %v2211
      %v2296 = vpack.c.bf16 %v2214, %v2213
      %v2297 = vpack.c.bf16 %v2216, %v2215
      %v2298 = vpack.c.bf16 %v2218, %v2217
      %v2299 = vpack.c.bf16 %v2220, %v2219
      %v2300 = vpack.c.bf16 %v2222, %v2221
      %v2301 = vpack.c.bf16 %v2224, %v2223
      %v2302 = vpack.c.bf16 %v2226, %v2225
      %v2303 = vpack.c.bf16 %v2228, %v2227
      %v2304 = vpack.c.bf16 %v2230, %v2229
      %v2305 = vpack.c.bf16 %v2232, %v2231
      %v2306 = vpack.c.bf16 %v2233, %v2233
      %v2307 = vld [vmem:[#allocation2 + $0x2] sm:$0xff]
      %v2308 = vld [vmem:[#allocation2 + $0xa] sm:$0xff]
      %v2309 = vld [vmem:[#allocation2 + $0x12] sm:$0xff]
      %v2310 = vld [vmem:[#allocation2 + $0x1a] sm:$0xff]
      %v2311 = vld [vmem:[#allocation2 + $0x22] sm:$0xff]
      %v2312 = vld [vmem:[#allocation2 + $0x2a] sm:$0xff]
      %v2313 = vld [vmem:[#allocation2 + $0x32] sm:$0xff]
      %v2314 = vld [vmem:[#allocation2 + $0x3a] sm:$0xff]
      %v2315 = vld [vmem:[#allocation2 + $0x42] sm:$0xff]
      %v2316 = vld [vmem:[#allocation2 + $0x4a] sm:$0xff]
      %v2317 = vld [vmem:[#allocation2 + $0x52] sm:$0xff]
      %v2318 = vld [vmem:[#allocation2 + $0x5a] sm:$0xff]
      %v2319 = vld [vmem:[#allocation2 + $0x62] sm:$0xff]
      %v2320 = vld [vmem:[#allocation2 + $0x6a] sm:$0xff]
      %v2321 = vld [vmem:[#allocation2 + $0x72] sm:$0xff]
      %v2322 = vld [vmem:[#allocation2 + $0x7a] sm:$0xff]
      %v2323 = vld [vmem:[#allocation2 + $0x82] sm:$0xff]
      %v2324 = vld [vmem:[#allocation2 + $0x8a] sm:$0xff]
      %v2325 = vld [vmem:[#allocation2 + $0x92] sm:$0xff]
      %v2326 = vld [vmem:[#allocation2 + $0x9a] sm:$0xff]
      %v2327 = vld [vmem:[#allocation2 + $0xa2] sm:$0xff]
      %v2328 = vld [vmem:[#allocation2 + $0xaa] sm:$0xff]
      %v2329 = vld [vmem:[#allocation2 + $0xb2] sm:$0xff]
      %v2330 = vld [vmem:[#allocation2 + $0xba] sm:$0xff]
      %v2331 = vld [vmem:[#allocation2 + $0xc2] sm:$0xff]
      %v2332 = vld [vmem:[#allocation2 + $0xca] sm:$0xff]
      %v2333 = vld [vmem:[#allocation2 + $0xd2] sm:$0xff]
      %v2334 = vld [vmem:[#allocation2 + $0xda] sm:$0xff]
      %v2335 = vld [vmem:[#allocation2 + $0xe2] sm:$0xff]
      %v2336 = vld [vmem:[#allocation2 + $0xea] sm:$0xff]
      %v2337 = vld [vmem:[#allocation2 + $0xf2] sm:$0xff]
      %v2338 = vld [vmem:[#allocation2 + $0xfa] sm:$0xff]
      %v2339 = vld [vmem:[#allocation2 + $0x102] sm:$0xff]
      %v2340 = vld [vmem:[#allocation2 + $0x10a] sm:$0xff]
      %v2341 = vld [vmem:[#allocation2 + $0x112] sm:$0xff]
      %v2342 = vld [vmem:[#allocation2 + $0x11a] sm:$0xff]
      %v2343 = vld [vmem:[#allocation2 + $0x122] sm:$0xff]
      %v2344 = vld [vmem:[#allocation2 + $0x12a] sm:$0xff]
      %v2345 = vld [vmem:[#allocation2 + $0x132] sm:$0xff]
      %v2346 = vld [vmem:[#allocation2 + $0x13a] sm:$0xff]
      %v2347 = vld [vmem:[#allocation2 + $0x142] sm:$0xff]
      %v2348 = vld [vmem:[#allocation2 + $0x14a] sm:$0xff]
      %v2349 = vld [vmem:[#allocation2 + $0x152] sm:$0xff]
      %v2350 = vld [vmem:[#allocation2 + $0x15a] sm:$0xff]
      %v2351 = vld [vmem:[#allocation2 + $0x162] sm:$0xff]
      %v2352 = vld [vmem:[#allocation2 + $0x16a] sm:$0xff]
      %v2353 = vld [vmem:[#allocation2 + $0x172] sm:$0xff]
      %v2354 = vld [vmem:[#allocation2 + $0x17a] sm:$0xff]
      %v2355 = vld [vmem:[#allocation2 + $0x182] sm:$0xff]
      %v2356 = vld [vmem:[#allocation2 + $0x18a] sm:$0xff]
      %v2357 = vld [vmem:[#allocation2 + $0x192] sm:$0xff]
      %v2358 = vld [vmem:[#allocation2 + $0x19a] sm:$0xff]
      %v2359 = vld [vmem:[#allocation2 + $0x1a2] sm:$0xff]
      %v2360 = vld [vmem:[#allocation2 + $0x1aa] sm:$0xff]
      %v2361 = vld [vmem:[#allocation2 + $0x1b2] sm:$0xff]
      %v2362 = vld [vmem:[#allocation2 + $0x1ba] sm:$0xff]
      %v2363 = vld [vmem:[#allocation2 + $0x1c2] sm:$0xff]
      %v2364 = vld [vmem:[#allocation2 + $0x1ca] sm:$0xff]
      %v2365 = vld [vmem:[#allocation2 + $0x1d2] sm:$0xff]
      %v2366 = vld [vmem:[#allocation2 + $0x1da] sm:$0xff]
      %v2367 = vld [vmem:[#allocation2 + $0x1e2] sm:$0xff]
      %v2368 = vld [vmem:[#allocation2 + $0x1ea] sm:$0xff]
      %v2369 = vld [vmem:[#allocation2 + $0x1f2] sm:$0xff]
      %v2370 = vld [vmem:[#allocation2 + $0x1fa] sm:$0xff]
      %v2371 = vld [vmem:[#allocation2 + $0x202] sm:$0xff]
      %v2372 = vld [vmem:[#allocation2 + $0x20a] sm:$0xff]
      %v2373 = vld [vmem:[#allocation2 + $0x212] sm:$0xff]
      %v2374 = vld [vmem:[#allocation2 + $0x21a] sm:$0xff]
      %v2375 = vld [vmem:[#allocation2 + $0x222] sm:$0xff]
      %v2376 = vld [vmem:[#allocation2 + $0x22a] sm:$0xff]
      %v2377 = vld [vmem:[#allocation2 + $0x232] sm:$0xff]
      %v2378 = vld [vmem:[#allocation2 + $0x23a] sm:$0xff]
      %v2379 = vld [vmem:[#allocation2 + $0x242] sm:$0xff]
      %v2380 = vld [vmem:[#allocation2 + $0x24a] sm:$0xff]
      %v2381 = vld [vmem:[#allocation2 + $0x252] sm:$0xff]
      %v2382 = vld [vmem:[#allocation2 + $0x25a] sm:$0xff]
      %v2383 = vld [vmem:[#allocation2 + $0x262] sm:$0xff]
      %v2384 = vld [vmem:[#allocation2 + $0x26a] sm:$0xff]
      %v2385 = vld [vmem:[#allocation2 + $0x272] sm:$0xff]
      %v2386 = vld [vmem:[#allocation2 + $0x27a] sm:$0xff]
      %v2387 = vld [vmem:[#allocation2 + $0x282] sm:$0xff]
      %v2388 = vld [vmem:[#allocation2 + $0x28a] sm:$0xff]
      %v2389 = vld [vmem:[#allocation2 + $0x292] sm:$0xff]
      %v2390 = vld [vmem:[#allocation2 + $0x29a] sm:$0xff]
      %v2391 = vld [vmem:[#allocation2 + $0x2a2] sm:$0xff]
      %v2392 = vld [vmem:[#allocation2 + $0x2aa] sm:$0xff]
      %v2393 = vld [vmem:[#allocation2 + $0x2b2] sm:$0xff]
      %v2394 = vld [vmem:[#allocation2 + $0x2ba] sm:$0xff]
      %v2395 = vld [vmem:[#allocation2 + $0x2c2] sm:$0xff]
      %v2396 = vld [vmem:[#allocation2 + $0x2ca] sm:$0xff]
      %v2397 = vld [vmem:[#allocation2 + $0x2d2] sm:$0xff]
      %v2398 = vld [vmem:[#allocation2 + $0x2da] sm:$0xff]
      %v2399 = vld [vmem:[#allocation2 + $0x2e2] sm:$0xff]
      %v2400 = vld [vmem:[#allocation2 + $0x2ea] sm:$0xff]
      %v2401 = vld [vmem:[#allocation2 + $0x2f2] sm:$0xff]
      %v2402 = vld [vmem:[#allocation2 + $0x2fa] sm:$0xff]
      %v2403 = vld [vmem:[#allocation2 + $0x302] sm:$0xff]
      %v2404 = vld [vmem:[#allocation2 + $0x30a] sm:$0xff]
      %v2405 = vld [vmem:[#allocation2 + $0x312] sm:$0xff]
      %v2406 = vld [vmem:[#allocation2 + $0x31a] sm:$0xff]
      %v2407 = vld [vmem:[#allocation2 + $0x322] sm:$0xff]
      %v2408 = vld [vmem:[#allocation2 + $0x32a] sm:$0xff]
      %v2409 = vld [vmem:[#allocation2 + $0x332] sm:$0xff]
      %v2410 = vld [vmem:[#allocation2 + $0x33a] sm:$0xff]
      %v2411 = vld [vmem:[#allocation2 + $0x342] sm:$0xff]
      %v2412 = vld [vmem:[#allocation2 + $0x34a] sm:$0xff]
      %v2413 = vld [vmem:[#allocation2 + $0x352] sm:$0xff]
      %v2414 = vld [vmem:[#allocation2 + $0x35a] sm:$0xff]
      %v2415 = vld [vmem:[#allocation2 + $0x362] sm:$0xff]
      %v2416 = vld [vmem:[#allocation2 + $0x36a] sm:$0xff]
      %v2417 = vld [vmem:[#allocation2 + $0x372] sm:$0xff]
      %v2418 = vld [vmem:[#allocation2 + $0x37a] sm:$0xff]
      %v2419 = vld [vmem:[#allocation2 + $0x382] sm:$0xff]
      %v2420 = vld [vmem:[#allocation2 + $0x38a] sm:$0xff]
      %v2421 = vld [vmem:[#allocation2 + $0x392] sm:$0xff]
      %v2422 = vld [vmem:[#allocation2 + $0x39a] sm:$0xff]
      %v2423 = vld [vmem:[#allocation2 + $0x3a2] sm:$0xff]
      %v2424 = vld [vmem:[#allocation2 + $0x3aa] sm:$0xff]
      %v2425 = vld [vmem:[#allocation2 + $0x3b2] sm:$0xff]
      %v2426 = vld [vmem:[#allocation2 + $0x3ba] sm:$0xff]
      %v2427 = vld [vmem:[#allocation2 + $0x3c2] sm:$0xff]
      %v2428 = vld [vmem:[#allocation2 + $0x3ca] sm:$0xff]
      %v2429 = vld [vmem:[#allocation2 + $0x3d2] sm:$0xff]
      %v2430 = vld [vmem:[#allocation2 + $0x3da] sm:$0xff]
      %v2431 = vld [vmem:[#allocation2 + $0x3e2] sm:$0xff]
      %v2432 = vld [vmem:[#allocation2 + $0x3ea] sm:$0xff]
      %v2433 = vld [vmem:[#allocation2 + $0x3f2] sm:$0xff]
      %v2434 = vld [vmem:[#allocation2 + $0x3fa] sm:$0xff]
      %v2435 = vld [vmem:[#allocation2 + $0x402] sm:$0xff]
      %v2436 = vld [vmem:[#allocation2 + $0x40a] sm:$0xff]
      %v2437 = vld [vmem:[#allocation2 + $0x412] sm:$0xff]
      %v2438 = vld [vmem:[#allocation2 + $0x41a] sm:$0xff]
      %v2439 = vld [vmem:[#allocation2 + $0x422] sm:$0xff]
      %v2440 = vld [vmem:[#allocation2 + $0x42a] sm:$0xff]
      %v2441 = vld [vmem:[#allocation2 + $0x432] sm:$0xff]
      %v2442 = vld [vmem:[#allocation2 + $0x43a] sm:$0xff]
      %v2443 = vld [vmem:[#allocation2 + $0x442] sm:$0xff]
      %v2444 = vld [vmem:[#allocation2 + $0x44a] sm:$0xff]
      %v2445 = vld [vmem:[#allocation2 + $0x452] sm:$0xff]
      %v2446 = vld [vmem:[#allocation2 + $0x45a] sm:$0xff]
      %v2447 = vld [vmem:[#allocation2 + $0x462] sm:$0xff]
      %v2448 = vld [vmem:[#allocation2 + $0x46a] sm:$0xff]
      %v2449 = vld [vmem:[#allocation2 + $0x472] sm:$0xff]
      %v2450 = vld [vmem:[#allocation2 + $0x47a] sm:$0xff]
      %v2451 = vld [vmem:[#allocation2 + $0x482] sm:$0xff]
      %v2452 = vpack.c.bf16 %v2308, %v2307
      %v2453 = vpack.c.bf16 %v2310, %v2309
      %v2454 = vpack.c.bf16 %v2312, %v2311
      %v2455 = vpack.c.bf16 %v2314, %v2313
      %v2456 = vpack.c.bf16 %v2316, %v2315
      %v2457 = vpack.c.bf16 %v2318, %v2317
      %v2458 = vpack.c.bf16 %v2320, %v2319
      %v2459 = vpack.c.bf16 %v2322, %v2321
      %v2460 = vpack.c.bf16 %v2324, %v2323
      %v2461 = vpack.c.bf16 %v2326, %v2325
      %v2462 = vpack.c.bf16 %v2328, %v2327
      %v2463 = vpack.c.bf16 %v2330, %v2329
      %v2464 = vpack.c.bf16 %v2332, %v2331
      %v2465 = vpack.c.bf16 %v2334, %v2333
      %v2466 = vpack.c.bf16 %v2336, %v2335
      %v2467 = vpack.c.bf16 %v2338, %v2337
      %v2468 = vpack.c.bf16 %v2340, %v2339
      %v2469 = vpack.c.bf16 %v2342, %v2341
      %v2470 = vpack.c.bf16 %v2344, %v2343
      %v2471 = vpack.c.bf16 %v2346, %v2345
      %v2472 = vpack.c.bf16 %v2348, %v2347
      %v2473 = vpack.c.bf16 %v2350, %v2349
      %v2474 = vpack.c.bf16 %v2352, %v2351
      %v2475 = vpack.c.bf16 %v2354, %v2353
      %v2476 = vpack.c.bf16 %v2356, %v2355
      %v2477 = vpack.c.bf16 %v2358, %v2357
      %v2478 = vpack.c.bf16 %v2360, %v2359
      %v2479 = vpack.c.bf16 %v2362, %v2361
      %v2480 = vpack.c.bf16 %v2364, %v2363
      %v2481 = vpack.c.bf16 %v2366, %v2365
      %v2482 = vpack.c.bf16 %v2368, %v2367
      %v2483 = vpack.c.bf16 %v2370, %v2369
      %v2484 = vpack.c.bf16 %v2372, %v2371
      %v2485 = vpack.c.bf16 %v2374, %v2373
      %v2486 = vpack.c.bf16 %v2376, %v2375
      %v2487 = vpack.c.bf16 %v2378, %v2377
      %v2488 = vpack.c.bf16 %v2380, %v2379
      %v2489 = vpack.c.bf16 %v2382, %v2381
      %v2490 = vpack.c.bf16 %v2384, %v2383
      %v2491 = vpack.c.bf16 %v2386, %v2385
      %v2492 = vpack.c.bf16 %v2388, %v2387
      %v2493 = vpack.c.bf16 %v2390, %v2389
      %v2494 = vpack.c.bf16 %v2392, %v2391
      %v2495 = vpack.c.bf16 %v2394, %v2393
      %v2496 = vpack.c.bf16 %v2396, %v2395
      %v2497 = vpack.c.bf16 %v2398, %v2397
      %v2498 = vpack.c.bf16 %v2400, %v2399
      %v2499 = vpack.c.bf16 %v2402, %v2401
      %v2500 = vpack.c.bf16 %v2404, %v2403
      %v2501 = vpack.c.bf16 %v2406, %v2405
      %v2502 = vpack.c.bf16 %v2408, %v2407
      %v2503 = vpack.c.bf16 %v2410, %v2409
      %v2504 = vpack.c.bf16 %v2412, %v2411
      %v2505 = vpack.c.bf16 %v2414, %v2413
      %v2506 = vpack.c.bf16 %v2416, %v2415
      %v2507 = vpack.c.bf16 %v2418, %v2417
      %v2508 = vpack.c.bf16 %v2420, %v2419
      %v2509 = vpack.c.bf16 %v2422, %v2421
      %v2510 = vpack.c.bf16 %v2424, %v2423
      %v2511 = vpack.c.bf16 %v2426, %v2425
      %v2512 = vpack.c.bf16 %v2428, %v2427
      %v2513 = vpack.c.bf16 %v2430, %v2429
      %v2514 = vpack.c.bf16 %v2432, %v2431
      %v2515 = vpack.c.bf16 %v2434, %v2433
      %v2516 = vpack.c.bf16 %v2436, %v2435
      %v2517 = vpack.c.bf16 %v2438, %v2437
      %v2518 = vpack.c.bf16 %v2440, %v2439
      %v2519 = vpack.c.bf16 %v2442, %v2441
      %v2520 = vpack.c.bf16 %v2444, %v2443
      %v2521 = vpack.c.bf16 %v2446, %v2445
      %v2522 = vpack.c.bf16 %v2448, %v2447
      %v2523 = vpack.c.bf16 %v2450, %v2449
      %v2524 = vpack.c.bf16 %v2451, %v2451
      %v2525 = vld [vmem:[#allocation2 + $0x48a] sm:$0xff]
      %v2526 = vld [vmem:[#allocation2 + $0x492] sm:$0xff]
      %v2527 = vld [vmem:[#allocation2 + $0x49a] sm:$0xff]
      %v2528 = vld [vmem:[#allocation2 + $0x4a2] sm:$0xff]
      %v2529 = vpack.c.bf16 %v2525, %v2451
      %v2530 = vpack.c.bf16 %v2527, %v2526
      %v2531 = vpack.c.bf16 %v2528, %v2528
      %v2532 = vld [vmem:[#allocation2 + $0x23] sm:$0xff]
      %v2533 = vld [vmem:[#allocation2 + $0x2b] sm:$0xff]
      %v2534 = vld [vmem:[#allocation2 + $0x33] sm:$0xff]
      %v2535 = vld [vmem:[#allocation2 + $0x3b] sm:$0xff]
      %v2536 = vld [vmem:[#allocation2 + $0x43] sm:$0xff]
      %v2537 = vld [vmem:[#allocation2 + $0x4b] sm:$0xff]
      %v2538 = vld [vmem:[#allocation2 + $0x53] sm:$0xff]
      %v2539 = vld [vmem:[#allocation2 + $0x5b] sm:$0xff]
      %v2540 = vld [vmem:[#allocation2 + $0x63] sm:$0xff]
      %v2541 = vld [vmem:[#allocation2 + $0x6b] sm:$0xff]
      %v2542 = vld [vmem:[#allocation2 + $0x73] sm:$0xff]
      %v2543 = vld [vmem:[#allocation2 + $0x7b] sm:$0xff]
      %v2544 = vld [vmem:[#allocation2 + $0x83] sm:$0xff]
      %v2545 = vld [vmem:[#allocation2 + $0x8b] sm:$0xff]
      %v2546 = vld [vmem:[#allocation2 + $0x93] sm:$0xff]
      %v2547 = vld [vmem:[#allocation2 + $0x9b] sm:$0xff]
      %v2548 = vld [vmem:[#allocation2 + $0xa3] sm:$0xff]
      %v2549 = vld [vmem:[#allocation2 + $0xab] sm:$0xff]
      %v2550 = vld [vmem:[#allocation2 + $0xb3] sm:$0xff]
      %v2551 = vld [vmem:[#allocation2 + $0xbb] sm:$0xff]
      %v2552 = vld [vmem:[#allocation2 + $0xc3] sm:$0xff]
      %v2553 = vld [vmem:[#allocation2 + $0xcb] sm:$0xff]
      %v2554 = vld [vmem:[#allocation2 + $0xd3] sm:$0xff]
      %v2555 = vld [vmem:[#allocation2 + $0xdb] sm:$0xff]
      %v2556 = vld [vmem:[#allocation2 + $0xe3] sm:$0xff]
      %v2557 = vld [vmem:[#allocation2 + $0xeb] sm:$0xff]
      %v2558 = vld [vmem:[#allocation2 + $0xf3] sm:$0xff]
      %v2559 = vld [vmem:[#allocation2 + $0xfb] sm:$0xff]
      %v2560 = vld [vmem:[#allocation2 + $0x103] sm:$0xff]
      %v2561 = vld [vmem:[#allocation2 + $0x10b] sm:$0xff]
      %v2562 = vld [vmem:[#allocation2 + $0x113] sm:$0xff]
      %v2563 = vld [vmem:[#allocation2 + $0x11b] sm:$0xff]
      %v2564 = vld [vmem:[#allocation2 + $0x123] sm:$0xff]
      %v2565 = vld [vmem:[#allocation2 + $0x12b] sm:$0xff]
      %v2566 = vld [vmem:[#allocation2 + $0x133] sm:$0xff]
      %v2567 = vld [vmem:[#allocation2 + $0x13b] sm:$0xff]
      %v2568 = vld [vmem:[#allocation2 + $0x143] sm:$0xff]
      %v2569 = vld [vmem:[#allocation2 + $0x14b] sm:$0xff]
      %v2570 = vld [vmem:[#allocation2 + $0x153] sm:$0xff]
      %v2571 = vld [vmem:[#allocation2 + $0x15b] sm:$0xff]
      %v2572 = vld [vmem:[#allocation2 + $0x163] sm:$0xff]
      %v2573 = vld [vmem:[#allocation2 + $0x16b] sm:$0xff]
      %v2574 = vld [vmem:[#allocation2 + $0x173] sm:$0xff]
      %v2575 = vld [vmem:[#allocation2 + $0x17b] sm:$0xff]
      %v2576 = vld [vmem:[#allocation2 + $0x183] sm:$0xff]
      %v2577 = vld [vmem:[#allocation2 + $0x18b] sm:$0xff]
      %v2578 = vld [vmem:[#allocation2 + $0x193] sm:$0xff]
      %v2579 = vld [vmem:[#allocation2 + $0x19b] sm:$0xff]
      %v2580 = vld [vmem:[#allocation2 + $0x1a3] sm:$0xff]
      %v2581 = vld [vmem:[#allocation2 + $0x1ab] sm:$0xff]
      %v2582 = vld [vmem:[#allocation2 + $0x1b3] sm:$0xff]
      %v2583 = vld [vmem:[#allocation2 + $0x1bb] sm:$0xff]
      %v2584 = vld [vmem:[#allocation2 + $0x1c3] sm:$0xff]
      %v2585 = vld [vmem:[#allocation2 + $0x1cb] sm:$0xff]
      %v2586 = vld [vmem:[#allocation2 + $0x1d3] sm:$0xff]
      %v2587 = vld [vmem:[#allocation2 + $0x1db] sm:$0xff]
      %v2588 = vld [vmem:[#allocation2 + $0x1e3] sm:$0xff]
      %v2589 = vld [vmem:[#allocation2 + $0x1eb] sm:$0xff]
      %v2590 = vld [vmem:[#allocation2 + $0x1f3] sm:$0xff]
      %v2591 = vld [vmem:[#allocation2 + $0x1fb] sm:$0xff]
      %v2592 = vld [vmem:[#allocation2 + $0x203] sm:$0xff]
      %v2593 = vld [vmem:[#allocation2 + $0x20b] sm:$0xff]
      %v2594 = vld [vmem:[#allocation2 + $0x213] sm:$0xff]
      %v2595 = vld [vmem:[#allocation2 + $0x21b] sm:$0xff]
      %v2596 = vld [vmem:[#allocation2 + $0x223] sm:$0xff]
      %v2597 = vld [vmem:[#allocation2 + $0x22b] sm:$0xff]
      %v2598 = vld [vmem:[#allocation2 + $0x233] sm:$0xff]
      %v2599 = vld [vmem:[#allocation2 + $0x23b] sm:$0xff]
      %v2600 = vld [vmem:[#allocation2 + $0x243] sm:$0xff]
      %v2601 = vld [vmem:[#allocation2 + $0x24b] sm:$0xff]
      %v2602 = vld [vmem:[#allocation2 + $0x253] sm:$0xff]
      %v2603 = vld [vmem:[#allocation2 + $0x25b] sm:$0xff]
      %v2604 = vld [vmem:[#allocation2 + $0x263] sm:$0xff]
      %v2605 = vld [vmem:[#allocation2 + $0x26b] sm:$0xff]
      %v2606 = vld [vmem:[#allocation2 + $0x273] sm:$0xff]
      %v2607 = vld [vmem:[#allocation2 + $0x27b] sm:$0xff]
      %v2608 = vld [vmem:[#allocation2 + $0x283] sm:$0xff]
      %v2609 = vld [vmem:[#allocation2 + $0x28b] sm:$0xff]
      %v2610 = vld [vmem:[#allocation2 + $0x293] sm:$0xff]
      %v2611 = vld [vmem:[#allocation2 + $0x29b] sm:$0xff]
      %v2612 = vld [vmem:[#allocation2 + $0x2a3] sm:$0xff]
      %v2613 = vld [vmem:[#allocation2 + $0x2ab] sm:$0xff]
      %v2614 = vld [vmem:[#allocation2 + $0x2b3] sm:$0xff]
      %v2615 = vld [vmem:[#allocation2 + $0x2bb] sm:$0xff]
      %v2616 = vld [vmem:[#allocation2 + $0x2c3] sm:$0xff]
      %v2617 = vld [vmem:[#allocation2 + $0x2cb] sm:$0xff]
      %v2618 = vld [vmem:[#allocation2 + $0x2d3] sm:$0xff]
      %v2619 = vld [vmem:[#allocation2 + $0x2db] sm:$0xff]
      %v2620 = vld [vmem:[#allocation2 + $0x2e3] sm:$0xff]
      %v2621 = vld [vmem:[#allocation2 + $0x2eb] sm:$0xff]
      %v2622 = vld [vmem:[#allocation2 + $0x2f3] sm:$0xff]
      %v2623 = vld [vmem:[#allocation2 + $0x2fb] sm:$0xff]
      %v2624 = vld [vmem:[#allocation2 + $0x303] sm:$0xff]
      %v2625 = vld [vmem:[#allocation2 + $0x30b] sm:$0xff]
      %v2626 = vld [vmem:[#allocation2 + $0x313] sm:$0xff]
      %v2627 = vld [vmem:[#allocation2 + $0x31b] sm:$0xff]
      %v2628 = vld [vmem:[#allocation2 + $0x323] sm:$0xff]
      %v2629 = vld [vmem:[#allocation2 + $0x32b] sm:$0xff]
      %v2630 = vld [vmem:[#allocation2 + $0x333] sm:$0xff]
      %v2631 = vld [vmem:[#allocation2 + $0x33b] sm:$0xff]
      %v2632 = vld [vmem:[#allocation2 + $0x343] sm:$0xff]
      %v2633 = vld [vmem:[#allocation2 + $0x34b] sm:$0xff]
      %v2634 = vld [vmem:[#allocation2 + $0x353] sm:$0xff]
      %v2635 = vld [vmem:[#allocation2 + $0x35b] sm:$0xff]
      %v2636 = vld [vmem:[#allocation2 + $0x363] sm:$0xff]
      %v2637 = vld [vmem:[#allocation2 + $0x36b] sm:$0xff]
      %v2638 = vld [vmem:[#allocation2 + $0x373] sm:$0xff]
      %v2639 = vld [vmem:[#allocation2 + $0x37b] sm:$0xff]
      %v2640 = vld [vmem:[#allocation2 + $0x383] sm:$0xff]
      %v2641 = vld [vmem:[#allocation2 + $0x38b] sm:$0xff]
      %v2642 = vld [vmem:[#allocation2 + $0x393] sm:$0xff]
      %v2643 = vld [vmem:[#allocation2 + $0x39b] sm:$0xff]
      %v2644 = vld [vmem:[#allocation2 + $0x3a3] sm:$0xff]
      %v2645 = vld [vmem:[#allocation2 + $0x3ab] sm:$0xff]
      %v2646 = vld [vmem:[#allocation2 + $0x3b3] sm:$0xff]
      %v2647 = vld [vmem:[#allocation2 + $0x3bb] sm:$0xff]
      %v2648 = vld [vmem:[#allocation2 + $0x3c3] sm:$0xff]
      %v2649 = vld [vmem:[#allocation2 + $0x3cb] sm:$0xff]
      %v2650 = vld [vmem:[#allocation2 + $0x3d3] sm:$0xff]
      %v2651 = vld [vmem:[#allocation2 + $0x3db] sm:$0xff]
      %v2652 = vld [vmem:[#allocation2 + $0x3e3] sm:$0xff]
      %v2653 = vld [vmem:[#allocation2 + $0x3eb] sm:$0xff]
      %v2654 = vld [vmem:[#allocation2 + $0x3f3] sm:$0xff]
      %v2655 = vld [vmem:[#allocation2 + $0x3fb] sm:$0xff]
      %v2656 = vld [vmem:[#allocation2 + $0x403] sm:$0xff]
      %v2657 = vld [vmem:[#allocation2 + $0x40b] sm:$0xff]
      %v2658 = vld [vmem:[#allocation2 + $0x413] sm:$0xff]
      %v2659 = vld [vmem:[#allocation2 + $0x41b] sm:$0xff]
      %v2660 = vld [vmem:[#allocation2 + $0x423] sm:$0xff]
      %v2661 = vld [vmem:[#allocation2 + $0x42b] sm:$0xff]
      %v2662 = vld [vmem:[#allocation2 + $0x433] sm:$0xff]
      %v2663 = vld [vmem:[#allocation2 + $0x43b] sm:$0xff]
      %v2664 = vld [vmem:[#allocation2 + $0x443] sm:$0xff]
      %v2665 = vld [vmem:[#allocation2 + $0x44b] sm:$0xff]
      %v2666 = vld [vmem:[#allocation2 + $0x453] sm:$0xff]
      %v2667 = vld [vmem:[#allocation2 + $0x45b] sm:$0xff]
      %v2668 = vld [vmem:[#allocation2 + $0x463] sm:$0xff]
      %v2669 = vld [vmem:[#allocation2 + $0x46b] sm:$0xff]
      %v2670 = vld [vmem:[#allocation2 + $0x473] sm:$0xff]
      %v2671 = vld [vmem:[#allocation2 + $0x47b] sm:$0xff]
      %v2672 = vld [vmem:[#allocation2 + $0x483] sm:$0xff]
      %v2673 = vld [vmem:[#allocation2 + $0x48b] sm:$0xff]
      %v2674 = vld [vmem:[#allocation2 + $0x493] sm:$0xff]
      %v2675 = vld [vmem:[#allocation2 + $0x49b] sm:$0xff]
      %v2676 = vld [vmem:[#allocation2 + $0x4a3] sm:$0xff]
      %v2677 = vpack.c.bf16 %v2533, %v2532
      %v2678 = vpack.c.bf16 %v2535, %v2534
      %v2679 = vpack.c.bf16 %v2537, %v2536
      %v2680 = vpack.c.bf16 %v2539, %v2538
      %v2681 = vpack.c.bf16 %v2541, %v2540
      %v2682 = vpack.c.bf16 %v2543, %v2542
      %v2683 = vpack.c.bf16 %v2545, %v2544
      %v2684 = vpack.c.bf16 %v2547, %v2546
      %v2685 = vpack.c.bf16 %v2549, %v2548
      %v2686 = vpack.c.bf16 %v2551, %v2550
      %v2687 = vpack.c.bf16 %v2553, %v2552
      %v2688 = vpack.c.bf16 %v2555, %v2554
      %v2689 = vpack.c.bf16 %v2557, %v2556
      %v2690 = vpack.c.bf16 %v2559, %v2558
      %v2691 = vpack.c.bf16 %v2561, %v2560
      %v2692 = vpack.c.bf16 %v2563, %v2562
      %v2693 = vpack.c.bf16 %v2565, %v2564
      %v2694 = vpack.c.bf16 %v2567, %v2566
      %v2695 = vpack.c.bf16 %v2569, %v2568
      %v2696 = vpack.c.bf16 %v2571, %v2570
      %v2697 = vpack.c.bf16 %v2573, %v2572
      %v2698 = vpack.c.bf16 %v2575, %v2574
      %v2699 = vpack.c.bf16 %v2577, %v2576
      %v2700 = vpack.c.bf16 %v2579, %v2578
      %v2701 = vpack.c.bf16 %v2581, %v2580
      %v2702 = vpack.c.bf16 %v2583, %v2582
      %v2703 = vpack.c.bf16 %v2585, %v2584
      %v2704 = vpack.c.bf16 %v2587, %v2586
      %v2705 = vpack.c.bf16 %v2589, %v2588
      %v2706 = vpack.c.bf16 %v2591, %v2590
      %v2707 = vpack.c.bf16 %v2593, %v2592
      %v2708 = vpack.c.bf16 %v2595, %v2594
      %v2709 = vpack.c.bf16 %v2597, %v2596
      %v2710 = vpack.c.bf16 %v2599, %v2598
      %v2711 = vpack.c.bf16 %v2601, %v2600
      %v2712 = vpack.c.bf16 %v2603, %v2602
      %v2713 = vpack.c.bf16 %v2605, %v2604
      %v2714 = vpack.c.bf16 %v2607, %v2606
      %v2715 = vpack.c.bf16 %v2609, %v2608
      %v2716 = vpack.c.bf16 %v2611, %v2610
      %v2717 = vpack.c.bf16 %v2613, %v2612
      %v2718 = vpack.c.bf16 %v2615, %v2614
      %v2719 = vpack.c.bf16 %v2617, %v2616
      %v2720 = vpack.c.bf16 %v2619, %v2618
      %v2721 = vpack.c.bf16 %v2621, %v2620
      %v2722 = vpack.c.bf16 %v2623, %v2622
      %v2723 = vpack.c.bf16 %v2625, %v2624
      %v2724 = vpack.c.bf16 %v2627, %v2626
      %v2725 = vpack.c.bf16 %v2629, %v2628
      %v2726 = vpack.c.bf16 %v2631, %v2630
      %v2727 = vpack.c.bf16 %v2633, %v2632
      %v2728 = vpack.c.bf16 %v2635, %v2634
      %v2729 = vpack.c.bf16 %v2637, %v2636
      %v2730 = vpack.c.bf16 %v2639, %v2638
      %v2731 = vpack.c.bf16 %v2641, %v2640
      %v2732 = vpack.c.bf16 %v2643, %v2642
      %v2733 = vpack.c.bf16 %v2645, %v2644
      %v2734 = vpack.c.bf16 %v2647, %v2646
      %v2735 = vpack.c.bf16 %v2649, %v2648
      %v2736 = vpack.c.bf16 %v2651, %v2650
      %v2737 = vpack.c.bf16 %v2653, %v2652
      %v2738 = vpack.c.bf16 %v2655, %v2654
      %v2739 = vpack.c.bf16 %v2657, %v2656
      %v2740 = vpack.c.bf16 %v2659, %v2658
      %v2741 = vpack.c.bf16 %v2661, %v2660
      %v2742 = vpack.c.bf16 %v2663, %v2662
      %v2743 = vpack.c.bf16 %v2665, %v2664
      %v2744 = vpack.c.bf16 %v2667, %v2666
      %v2745 = vpack.c.bf16 %v2669, %v2668
      %v2746 = vpack.c.bf16 %v2671, %v2670
      %v2747 = vpack.c.bf16 %v2673, %v2672
      %v2748 = vpack.c.bf16 %v2675, %v2674
      %v2749 = vpack.c.bf16 %v2676, %v2676
      %v2750 = vld [vmem:[#allocation2 + $0x24] sm:$0xff]
      %v2751 = vld [vmem:[#allocation2 + $0x2c] sm:$0xff]
      %v2752 = vld [vmem:[#allocation2 + $0x34] sm:$0xff]
      %v2753 = vld [vmem:[#allocation2 + $0x3c] sm:$0xff]
      %v2754 = vld [vmem:[#allocation2 + $0x44] sm:$0xff]
      %v2755 = vld [vmem:[#allocation2 + $0x4c] sm:$0xff]
      %v2756 = vld [vmem:[#allocation2 + $0x54] sm:$0xff]
      %v2757 = vld [vmem:[#allocation2 + $0x5c] sm:$0xff]
      %v2758 = vld [vmem:[#allocation2 + $0x64] sm:$0xff]
      %v2759 = vld [vmem:[#allocation2 + $0x6c] sm:$0xff]
      %v2760 = vld [vmem:[#allocation2 + $0x74] sm:$0xff]
      %v2761 = vld [vmem:[#allocation2 + $0x7c] sm:$0xff]
      %v2762 = vld [vmem:[#allocation2 + $0x84] sm:$0xff]
      %v2763 = vld [vmem:[#allocation2 + $0x8c] sm:$0xff]
      %v2764 = vld [vmem:[#allocation2 + $0x94] sm:$0xff]
      %v2765 = vld [vmem:[#allocation2 + $0x9c] sm:$0xff]
      %v2766 = vld [vmem:[#allocation2 + $0xa4] sm:$0xff]
      %v2767 = vld [vmem:[#allocation2 + $0xac] sm:$0xff]
      %v2768 = vld [vmem:[#allocation2 + $0xb4] sm:$0xff]
      %v2769 = vld [vmem:[#allocation2 + $0xbc] sm:$0xff]
      %v2770 = vld [vmem:[#allocation2 + $0xc4] sm:$0xff]
      %v2771 = vld [vmem:[#allocation2 + $0xcc] sm:$0xff]
      %v2772 = vld [vmem:[#allocation2 + $0xd4] sm:$0xff]
      %v2773 = vld [vmem:[#allocation2 + $0xdc] sm:$0xff]
      %v2774 = vld [vmem:[#allocation2 + $0xe4] sm:$0xff]
      %v2775 = vld [vmem:[#allocation2 + $0xec] sm:$0xff]
      %v2776 = vld [vmem:[#allocation2 + $0xf4] sm:$0xff]
      %v2777 = vld [vmem:[#allocation2 + $0xfc] sm:$0xff]
      %v2778 = vld [vmem:[#allocation2 + $0x104] sm:$0xff]
      %v2779 = vld [vmem:[#allocation2 + $0x10c] sm:$0xff]
      %v2780 = vld [vmem:[#allocation2 + $0x114] sm:$0xff]
      %v2781 = vld [vmem:[#allocation2 + $0x11c] sm:$0xff]
      %v2782 = vld [vmem:[#allocation2 + $0x124] sm:$0xff]
      %v2783 = vld [vmem:[#allocation2 + $0x12c] sm:$0xff]
      %v2784 = vld [vmem:[#allocation2 + $0x134] sm:$0xff]
      %v2785 = vld [vmem:[#allocation2 + $0x13c] sm:$0xff]
      %v2786 = vld [vmem:[#allocation2 + $0x144] sm:$0xff]
      %v2787 = vld [vmem:[#allocation2 + $0x14c] sm:$0xff]
      %v2788 = vld [vmem:[#allocation2 + $0x154] sm:$0xff]
      %v2789 = vld [vmem:[#allocation2 + $0x15c] sm:$0xff]
      %v2790 = vld [vmem:[#allocation2 + $0x164] sm:$0xff]
      %v2791 = vld [vmem:[#allocation2 + $0x16c] sm:$0xff]
      %v2792 = vld [vmem:[#allocation2 + $0x174] sm:$0xff]
      %v2793 = vld [vmem:[#allocation2 + $0x17c] sm:$0xff]
      %v2794 = vld [vmem:[#allocation2 + $0x184] sm:$0xff]
      %v2795 = vld [vmem:[#allocation2 + $0x18c] sm:$0xff]
      %v2796 = vld [vmem:[#allocation2 + $0x194] sm:$0xff]
      %v2797 = vld [vmem:[#allocation2 + $0x19c] sm:$0xff]
      %v2798 = vld [vmem:[#allocation2 + $0x1a4] sm:$0xff]
      %v2799 = vld [vmem:[#allocation2 + $0x1ac] sm:$0xff]
      %v2800 = vld [vmem:[#allocation2 + $0x1b4] sm:$0xff]
      %v2801 = vld [vmem:[#allocation2 + $0x1bc] sm:$0xff]
      %v2802 = vld [vmem:[#allocation2 + $0x1c4] sm:$0xff]
      %v2803 = vld [vmem:[#allocation2 + $0x1cc] sm:$0xff]
      %v2804 = vld [vmem:[#allocation2 + $0x1d4] sm:$0xff]
      %v2805 = vld [vmem:[#allocation2 + $0x1dc] sm:$0xff]
      %v2806 = vld [vmem:[#allocation2 + $0x1e4] sm:$0xff]
      %v2807 = vld [vmem:[#allocation2 + $0x1ec] sm:$0xff]
      %v2808 = vld [vmem:[#allocation2 + $0x1f4] sm:$0xff]
      %v2809 = vld [vmem:[#allocation2 + $0x1fc] sm:$0xff]
      %v2810 = vld [vmem:[#allocation2 + $0x204] sm:$0xff]
      %v2811 = vld [vmem:[#allocation2 + $0x20c] sm:$0xff]
      %v2812 = vld [vmem:[#allocation2 + $0x214] sm:$0xff]
      %v2813 = vld [vmem:[#allocation2 + $0x21c] sm:$0xff]
      %v2814 = vld [vmem:[#allocation2 + $0x224] sm:$0xff]
      %v2815 = vld [vmem:[#allocation2 + $0x22c] sm:$0xff]
      %v2816 = vld [vmem:[#allocation2 + $0x234] sm:$0xff]
      %v2817 = vld [vmem:[#allocation2 + $0x23c] sm:$0xff]
      %v2818 = vld [vmem:[#allocation2 + $0x244] sm:$0xff]
      %v2819 = vld [vmem:[#allocation2 + $0x24c] sm:$0xff]
      %v2820 = vld [vmem:[#allocation2 + $0x254] sm:$0xff]
      %v2821 = vld [vmem:[#allocation2 + $0x25c] sm:$0xff]
      %v2822 = vld [vmem:[#allocation2 + $0x264] sm:$0xff]
      %v2823 = vld [vmem:[#allocation2 + $0x26c] sm:$0xff]
      %v2824 = vld [vmem:[#allocation2 + $0x274] sm:$0xff]
      %v2825 = vld [vmem:[#allocation2 + $0x27c] sm:$0xff]
      %v2826 = vld [vmem:[#allocation2 + $0x284] sm:$0xff]
      %v2827 = vld [vmem:[#allocation2 + $0x28c] sm:$0xff]
      %v2828 = vld [vmem:[#allocation2 + $0x294] sm:$0xff]
      %v2829 = vld [vmem:[#allocation2 + $0x29c] sm:$0xff]
      %v2830 = vld [vmem:[#allocation2 + $0x2a4] sm:$0xff]
      %v2831 = vld [vmem:[#allocation2 + $0x2ac] sm:$0xff]
      %v2832 = vld [vmem:[#allocation2 + $0x2b4] sm:$0xff]
      %v2833 = vld [vmem:[#allocation2 + $0x2bc] sm:$0xff]
      %v2834 = vld [vmem:[#allocation2 + $0x2c4] sm:$0xff]
      %v2835 = vld [vmem:[#allocation2 + $0x2cc] sm:$0xff]
      %v2836 = vld [vmem:[#allocation2 + $0x2d4] sm:$0xff]
      %v2837 = vld [vmem:[#allocation2 + $0x2dc] sm:$0xff]
      %v2838 = vld [vmem:[#allocation2 + $0x2e4] sm:$0xff]
      %v2839 = vld [vmem:[#allocation2 + $0x2ec] sm:$0xff]
      %v2840 = vld [vmem:[#allocation2 + $0x2f4] sm:$0xff]
      %v2841 = vld [vmem:[#allocation2 + $0x2fc] sm:$0xff]
      %v2842 = vld [vmem:[#allocation2 + $0x304] sm:$0xff]
      %v2843 = vld [vmem:[#allocation2 + $0x30c] sm:$0xff]
      %v2844 = vld [vmem:[#allocation2 + $0x314] sm:$0xff]
      %v2845 = vld [vmem:[#allocation2 + $0x31c] sm:$0xff]
      %v2846 = vld [vmem:[#allocation2 + $0x324] sm:$0xff]
      %v2847 = vld [vmem:[#allocation2 + $0x32c] sm:$0xff]
      %v2848 = vld [vmem:[#allocation2 + $0x334] sm:$0xff]
      %v2849 = vld [vmem:[#allocation2 + $0x33c] sm:$0xff]
      %v2850 = vld [vmem:[#allocation2 + $0x344] sm:$0xff]
      %v2851 = vld [vmem:[#allocation2 + $0x34c] sm:$0xff]
      %v2852 = vld [vmem:[#allocation2 + $0x354] sm:$0xff]
      %v2853 = vld [vmem:[#allocation2 + $0x35c] sm:$0xff]
      %v2854 = vld [vmem:[#allocation2 + $0x364] sm:$0xff]
      %v2855 = vld [vmem:[#allocation2 + $0x36c] sm:$0xff]
      %v2856 = vld [vmem:[#allocation2 + $0x374] sm:$0xff]
      %v2857 = vld [vmem:[#allocation2 + $0x37c] sm:$0xff]
      %v2858 = vld [vmem:[#allocation2 + $0x384] sm:$0xff]
      %v2859 = vld [vmem:[#allocation2 + $0x38c] sm:$0xff]
      %v2860 = vld [vmem:[#allocation2 + $0x394] sm:$0xff]
      %v2861 = vld [vmem:[#allocation2 + $0x39c] sm:$0xff]
      %v2862 = vld [vmem:[#allocation2 + $0x3a4] sm:$0xff]
      %v2863 = vld [vmem:[#allocation2 + $0x3ac] sm:$0xff]
      %v2864 = vld [vmem:[#allocation2 + $0x3b4] sm:$0xff]
      %v2865 = vld [vmem:[#allocation2 + $0x3bc] sm:$0xff]
      %v2866 = vld [vmem:[#allocation2 + $0x3c4] sm:$0xff]
      %v2867 = vld [vmem:[#allocation2 + $0x3cc] sm:$0xff]
      %v2868 = vld [vmem:[#allocation2 + $0x3d4] sm:$0xff]
      %v2869 = vld [vmem:[#allocation2 + $0x3dc] sm:$0xff]
      %v2870 = vld [vmem:[#allocation2 + $0x3e4] sm:$0xff]
      %v2871 = vld [vmem:[#allocation2 + $0x3ec] sm:$0xff]
      %v2872 = vld [vmem:[#allocation2 + $0x3f4] sm:$0xff]
      %v2873 = vld [vmem:[#allocation2 + $0x3fc] sm:$0xff]
      %v2874 = vld [vmem:[#allocation2 + $0x404] sm:$0xff]
      %v2875 = vld [vmem:[#allocation2 + $0x40c] sm:$0xff]
      %v2876 = vld [vmem:[#allocation2 + $0x414] sm:$0xff]
      %v2877 = vld [vmem:[#allocation2 + $0x41c] sm:$0xff]
      %v2878 = vld [vmem:[#allocation2 + $0x424] sm:$0xff]
      %v2879 = vld [vmem:[#allocation2 + $0x42c] sm:$0xff]
      %v2880 = vld [vmem:[#allocation2 + $0x434] sm:$0xff]
      %v2881 = vld [vmem:[#allocation2 + $0x43c] sm:$0xff]
      %v2882 = vld [vmem:[#allocation2 + $0x444] sm:$0xff]
      %v2883 = vld [vmem:[#allocation2 + $0x44c] sm:$0xff]
      %v2884 = vld [vmem:[#allocation2 + $0x454] sm:$0xff]
      %v2885 = vld [vmem:[#allocation2 + $0x45c] sm:$0xff]
      %v2886 = vld [vmem:[#allocation2 + $0x464] sm:$0xff]
      %v2887 = vld [vmem:[#allocation2 + $0x46c] sm:$0xff]
      %v2888 = vld [vmem:[#allocation2 + $0x474] sm:$0xff]
      %v2889 = vld [vmem:[#allocation2 + $0x47c] sm:$0xff]
      %v2890 = vld [vmem:[#allocation2 + $0x484] sm:$0xff]
      %v2891 = vld [vmem:[#allocation2 + $0x48c] sm:$0xff]
      %v2892 = vld [vmem:[#allocation2 + $0x494] sm:$0xff]
      %v2893 = vld [vmem:[#allocation2 + $0x49c] sm:$0xff]
      %v2894 = vld [vmem:[#allocation2 + $0x4a4] sm:$0xff]
      %v2895 = vpack.c.bf16 %v2751, %v2750
      %v2896 = vpack.c.bf16 %v2753, %v2752
      %v2897 = vpack.c.bf16 %v2755, %v2754
      %v2898 = vpack.c.bf16 %v2757, %v2756
      %v2899 = vpack.c.bf16 %v2759, %v2758
      %v2900 = vpack.c.bf16 %v2761, %v2760
      %v2901 = vpack.c.bf16 %v2763, %v2762
      %v2902 = vpack.c.bf16 %v2765, %v2764
      %v2903 = vpack.c.bf16 %v2767, %v2766
      %v2904 = vpack.c.bf16 %v2769, %v2768
      %v2905 = vpack.c.bf16 %v2771, %v2770
      %v2906 = vpack.c.bf16 %v2773, %v2772
      %v2907 = vpack.c.bf16 %v2775, %v2774
      %v2908 = vpack.c.bf16 %v2777, %v2776
      %v2909 = vpack.c.bf16 %v2779, %v2778
      %v2910 = vpack.c.bf16 %v2781, %v2780
      %v2911 = vpack.c.bf16 %v2783, %v2782
      %v2912 = vpack.c.bf16 %v2785, %v2784
      %v2913 = vpack.c.bf16 %v2787, %v2786
      %v2914 = vpack.c.bf16 %v2789, %v2788
      %v2915 = vpack.c.bf16 %v2791, %v2790
      %v2916 = vpack.c.bf16 %v2793, %v2792
      %v2917 = vpack.c.bf16 %v2795, %v2794
      %v2918 = vpack.c.bf16 %v2797, %v2796
      %v2919 = vpack.c.bf16 %v2799, %v2798
      %v2920 = vpack.c.bf16 %v2801, %v2800
      %v2921 = vpack.c.bf16 %v2803, %v2802
      %v2922 = vpack.c.bf16 %v2805, %v2804
      %v2923 = vpack.c.bf16 %v2807, %v2806
      %v2924 = vpack.c.bf16 %v2809, %v2808
      %v2925 = vpack.c.bf16 %v2811, %v2810
      %v2926 = vpack.c.bf16 %v2813, %v2812
      %v2927 = vpack.c.bf16 %v2815, %v2814
      %v2928 = vpack.c.bf16 %v2817, %v2816
      %v2929 = vpack.c.bf16 %v2819, %v2818
      %v2930 = vpack.c.bf16 %v2821, %v2820
      %v2931 = vpack.c.bf16 %v2823, %v2822
      %v2932 = vpack.c.bf16 %v2825, %v2824
      %v2933 = vpack.c.bf16 %v2827, %v2826
      %v2934 = vpack.c.bf16 %v2829, %v2828
      %v2935 = vpack.c.bf16 %v2831, %v2830
      %v2936 = vpack.c.bf16 %v2833, %v2832
      %v2937 = vpack.c.bf16 %v2835, %v2834
      %v2938 = vpack.c.bf16 %v2837, %v2836
      %v2939 = vpack.c.bf16 %v2839, %v2838
      %v2940 = vpack.c.bf16 %v2841, %v2840
      %v2941 = vpack.c.bf16 %v2843, %v2842
      %v2942 = vpack.c.bf16 %v2845, %v2844
      %v2943 = vpack.c.bf16 %v2847, %v2846
      %v2944 = vpack.c.bf16 %v2849, %v2848
      %v2945 = vpack.c.bf16 %v2851, %v2850
      %v2946 = vpack.c.bf16 %v2853, %v2852
      %v2947 = vpack.c.bf16 %v2855, %v2854
      %v2948 = vpack.c.bf16 %v2857, %v2856
      %v2949 = vpack.c.bf16 %v2859, %v2858
      %v2950 = vpack.c.bf16 %v2861, %v2860
      %v2951 = vpack.c.bf16 %v2863, %v2862
      %v2952 = vpack.c.bf16 %v2865, %v2864
      %v2953 = vpack.c.bf16 %v2867, %v2866
      %v2954 = vpack.c.bf16 %v2869, %v2868
      %v2955 = vpack.c.bf16 %v2871, %v2870
      %v2956 = vpack.c.bf16 %v2873, %v2872
      %v2957 = vpack.c.bf16 %v2875, %v2874
      %v2958 = vpack.c.bf16 %v2877, %v2876
      %v2959 = vpack.c.bf16 %v2879, %v2878
      %v2960 = vpack.c.bf16 %v2881, %v2880
      %v2961 = vpack.c.bf16 %v2883, %v2882
      %v2962 = vpack.c.bf16 %v2885, %v2884
      %v2963 = vpack.c.bf16 %v2887, %v2886
      %v2964 = vpack.c.bf16 %v2889, %v2888
      %v2965 = vpack.c.bf16 %v2891, %v2890
      %v2966 = vpack.c.bf16 %v2893, %v2892
      %v2967 = vpack.c.bf16 %v2894, %v2894
      %v2968 = vld [vmem:[#allocation2 + $0x4ac] sm:$0xff]
      %v2969 = vld [vmem:[#allocation2 + $0x4b4] sm:$0xff]
      %v2970 = vld [vmem:[#allocation2 + $0x4bc] sm:$0xff]
      %v2971 = vld [vmem:[#allocation2 + $0x4c4] sm:$0xff]
      %v2972 = vpack.c.bf16 %v2968, %v2894
      %v2973 = vpack.c.bf16 %v2970, %v2969
      %v2974 = vpack.c.bf16 %v2971, %v2971
      %v2975 = vld [vmem:[#allocation2 + $0x45] sm:$0xff]
      %v2976 = vld [vmem:[#allocation2 + $0x4d] sm:$0xff]
      %v2977 = vld [vmem:[#allocation2 + $0x55] sm:$0xff]
      %v2978 = vld [vmem:[#allocation2 + $0x5d] sm:$0xff]
      %v2979 = vld [vmem:[#allocation2 + $0x65] sm:$0xff]
      %v2980 = vld [vmem:[#allocation2 + $0x6d] sm:$0xff]
      %v2981 = vld [vmem:[#allocation2 + $0x75] sm:$0xff]
      %v2982 = vld [vmem:[#allocation2 + $0x7d] sm:$0xff]
      %v2983 = vld [vmem:[#allocation2 + $0x85] sm:$0xff]
      %v2984 = vld [vmem:[#allocation2 + $0x8d] sm:$0xff]
      %v2985 = vld [vmem:[#allocation2 + $0x95] sm:$0xff]
      %v2986 = vld [vmem:[#allocation2 + $0x9d] sm:$0xff]
      %v2987 = vld [vmem:[#allocation2 + $0xa5] sm:$0xff]
      %v2988 = vld [vmem:[#allocation2 + $0xad] sm:$0xff]
      %v2989 = vld [vmem:[#allocation2 + $0xb5] sm:$0xff]
      %v2990 = vld [vmem:[#allocation2 + $0xbd] sm:$0xff]
      %v2991 = vld [vmem:[#allocation2 + $0xc5] sm:$0xff]
      %v2992 = vld [vmem:[#allocation2 + $0xcd] sm:$0xff]
      %v2993 = vld [vmem:[#allocation2 + $0xd5] sm:$0xff]
      %v2994 = vld [vmem:[#allocation2 + $0xdd] sm:$0xff]
      %v2995 = vld [vmem:[#allocation2 + $0xe5] sm:$0xff]
      %v2996 = vld [vmem:[#allocation2 + $0xed] sm:$0xff]
      %v2997 = vld [vmem:[#allocation2 + $0xf5] sm:$0xff]
      %v2998 = vld [vmem:[#allocation2 + $0xfd] sm:$0xff]
      %v2999 = vld [vmem:[#allocation2 + $0x105] sm:$0xff]
      %v3000 = vld [vmem:[#allocation2 + $0x10d] sm:$0xff]
      %v3001 = vld [vmem:[#allocation2 + $0x115] sm:$0xff]
      %v3002 = vld [vmem:[#allocation2 + $0x11d] sm:$0xff]
      %v3003 = vld [vmem:[#allocation2 + $0x125] sm:$0xff]
      %v3004 = vld [vmem:[#allocation2 + $0x12d] sm:$0xff]
      %v3005 = vld [vmem:[#allocation2 + $0x135] sm:$0xff]
      %v3006 = vld [vmem:[#allocation2 + $0x13d] sm:$0xff]
      %v3007 = vld [vmem:[#allocation2 + $0x145] sm:$0xff]
      %v3008 = vld [vmem:[#allocation2 + $0x14d] sm:$0xff]
      %v3009 = vld [vmem:[#allocation2 + $0x155] sm:$0xff]
      %v3010 = vld [vmem:[#allocation2 + $0x15d] sm:$0xff]
      %v3011 = vld [vmem:[#allocation2 + $0x165] sm:$0xff]
      %v3012 = vld [vmem:[#allocation2 + $0x16d] sm:$0xff]
      %v3013 = vld [vmem:[#allocation2 + $0x175] sm:$0xff]
      %v3014 = vld [vmem:[#allocation2 + $0x17d] sm:$0xff]
      %v3015 = vld [vmem:[#allocation2 + $0x185] sm:$0xff]
      %v3016 = vld [vmem:[#allocation2 + $0x18d] sm:$0xff]
      %v3017 = vld [vmem:[#allocation2 + $0x195] sm:$0xff]
      %v3018 = vld [vmem:[#allocation2 + $0x19d] sm:$0xff]
      %v3019 = vld [vmem:[#allocation2 + $0x1a5] sm:$0xff]
      %v3020 = vld [vmem:[#allocation2 + $0x1ad] sm:$0xff]
      %v3021 = vld [vmem:[#allocation2 + $0x1b5] sm:$0xff]
      %v3022 = vld [vmem:[#allocation2 + $0x1bd] sm:$0xff]
      %v3023 = vld [vmem:[#allocation2 + $0x1c5] sm:$0xff]
      %v3024 = vld [vmem:[#allocation2 + $0x1cd] sm:$0xff]
      %v3025 = vld [vmem:[#allocation2 + $0x1d5] sm:$0xff]
      %v3026 = vld [vmem:[#allocation2 + $0x1dd] sm:$0xff]
      %v3027 = vld [vmem:[#allocation2 + $0x1e5] sm:$0xff]
      %v3028 = vld [vmem:[#allocation2 + $0x1ed] sm:$0xff]
      %v3029 = vld [vmem:[#allocation2 + $0x1f5] sm:$0xff]
      %v3030 = vld [vmem:[#allocation2 + $0x1fd] sm:$0xff]
      %v3031 = vld [vmem:[#allocation2 + $0x205] sm:$0xff]
      %v3032 = vld [vmem:[#allocation2 + $0x20d] sm:$0xff]
      %v3033 = vld [vmem:[#allocation2 + $0x215] sm:$0xff]
      %v3034 = vld [vmem:[#allocation2 + $0x21d] sm:$0xff]
      %v3035 = vld [vmem:[#allocation2 + $0x225] sm:$0xff]
      %v3036 = vld [vmem:[#allocation2 + $0x22d] sm:$0xff]
      %v3037 = vld [vmem:[#allocation2 + $0x235] sm:$0xff]
      %v3038 = vld [vmem:[#allocation2 + $0x23d] sm:$0xff]
      %v3039 = vld [vmem:[#allocation2 + $0x245] sm:$0xff]
      %v3040 = vld [vmem:[#allocation2 + $0x24d] sm:$0xff]
      %v3041 = vld [vmem:[#allocation2 + $0x255] sm:$0xff]
      %v3042 = vld [vmem:[#allocation2 + $0x25d] sm:$0xff]
      %v3043 = vld [vmem:[#allocation2 + $0x265] sm:$0xff]
      %v3044 = vld [vmem:[#allocation2 + $0x26d] sm:$0xff]
      %v3045 = vld [vmem:[#allocation2 + $0x275] sm:$0xff]
      %v3046 = vld [vmem:[#allocation2 + $0x27d] sm:$0xff]
      %v3047 = vld [vmem:[#allocation2 + $0x285] sm:$0xff]
      %v3048 = vld [vmem:[#allocation2 + $0x28d] sm:$0xff]
      %v3049 = vld [vmem:[#allocation2 + $0x295] sm:$0xff]
      %v3050 = vld [vmem:[#allocation2 + $0x29d] sm:$0xff]
      %v3051 = vld [vmem:[#allocation2 + $0x2a5] sm:$0xff]
      %v3052 = vld [vmem:[#allocation2 + $0x2ad] sm:$0xff]
      %v3053 = vld [vmem:[#allocation2 + $0x2b5] sm:$0xff]
      %v3054 = vld [vmem:[#allocation2 + $0x2bd] sm:$0xff]
      %v3055 = vld [vmem:[#allocation2 + $0x2c5] sm:$0xff]
      %v3056 = vld [vmem:[#allocation2 + $0x2cd] sm:$0xff]
      %v3057 = vld [vmem:[#allocation2 + $0x2d5] sm:$0xff]
      %v3058 = vld [vmem:[#allocation2 + $0x2dd] sm:$0xff]
      %v3059 = vld [vmem:[#allocation2 + $0x2e5] sm:$0xff]
      %v3060 = vld [vmem:[#allocation2 + $0x2ed] sm:$0xff]
      %v3061 = vld [vmem:[#allocation2 + $0x2f5] sm:$0xff]
      %v3062 = vld [vmem:[#allocation2 + $0x2fd] sm:$0xff]
      %v3063 = vld [vmem:[#allocation2 + $0x305] sm:$0xff]
      %v3064 = vld [vmem:[#allocation2 + $0x30d] sm:$0xff]
      %v3065 = vld [vmem:[#allocation2 + $0x315] sm:$0xff]
      %v3066 = vld [vmem:[#allocation2 + $0x31d] sm:$0xff]
      %v3067 = vld [vmem:[#allocation2 + $0x325] sm:$0xff]
      %v3068 = vld [vmem:[#allocation2 + $0x32d] sm:$0xff]
      %v3069 = vld [vmem:[#allocation2 + $0x335] sm:$0xff]
      %v3070 = vld [vmem:[#allocation2 + $0x33d] sm:$0xff]
      %v3071 = vld [vmem:[#allocation2 + $0x345] sm:$0xff]
      %v3072 = vld [vmem:[#allocation2 + $0x34d] sm:$0xff]
      %v3073 = vld [vmem:[#allocation2 + $0x355] sm:$0xff]
      %v3074 = vld [vmem:[#allocation2 + $0x35d] sm:$0xff]
      %v3075 = vld [vmem:[#allocation2 + $0x365] sm:$0xff]
      %v3076 = vld [vmem:[#allocation2 + $0x36d] sm:$0xff]
      %v3077 = vld [vmem:[#allocation2 + $0x375] sm:$0xff]
      %v3078 = vld [vmem:[#allocation2 + $0x37d] sm:$0xff]
      %v3079 = vld [vmem:[#allocation2 + $0x385] sm:$0xff]
      %v3080 = vld [vmem:[#allocation2 + $0x38d] sm:$0xff]
      %v3081 = vld [vmem:[#allocation2 + $0x395] sm:$0xff]
      %v3082 = vld [vmem:[#allocation2 + $0x39d] sm:$0xff]
      %v3083 = vld [vmem:[#allocation2 + $0x3a5] sm:$0xff]
      %v3084 = vld [vmem:[#allocation2 + $0x3ad] sm:$0xff]
      %v3085 = vld [vmem:[#allocation2 + $0x3b5] sm:$0xff]
      %v3086 = vld [vmem:[#allocation2 + $0x3bd] sm:$0xff]
      %v3087 = vld [vmem:[#allocation2 + $0x3c5] sm:$0xff]
      %v3088 = vld [vmem:[#allocation2 + $0x3cd] sm:$0xff]
      %v3089 = vld [vmem:[#allocation2 + $0x3d5] sm:$0xff]
      %v3090 = vld [vmem:[#allocation2 + $0x3dd] sm:$0xff]
      %v3091 = vld [vmem:[#allocation2 + $0x3e5] sm:$0xff]
      %v3092 = vld [vmem:[#allocation2 + $0x3ed] sm:$0xff]
      %v3093 = vld [vmem:[#allocation2 + $0x3f5] sm:$0xff]
      %v3094 = vld [vmem:[#allocation2 + $0x3fd] sm:$0xff]
      %v3095 = vld [vmem:[#allocation2 + $0x405] sm:$0xff]
      %v3096 = vld [vmem:[#allocation2 + $0x40d] sm:$0xff]
      %v3097 = vld [vmem:[#allocation2 + $0x415] sm:$0xff]
      %v3098 = vld [vmem:[#allocation2 + $0x41d] sm:$0xff]
      %v3099 = vld [vmem:[#allocation2 + $0x425] sm:$0xff]
      %v3100 = vld [vmem:[#allocation2 + $0x42d] sm:$0xff]
      %v3101 = vld [vmem:[#allocation2 + $0x435] sm:$0xff]
      %v3102 = vld [vmem:[#allocation2 + $0x43d] sm:$0xff]
      %v3103 = vld [vmem:[#allocation2 + $0x445] sm:$0xff]
      %v3104 = vld [vmem:[#allocation2 + $0x44d] sm:$0xff]
      %v3105 = vld [vmem:[#allocation2 + $0x455] sm:$0xff]
      %v3106 = vld [vmem:[#allocation2 + $0x45d] sm:$0xff]
      %v3107 = vld [vmem:[#allocation2 + $0x465] sm:$0xff]
      %v3108 = vld [vmem:[#allocation2 + $0x46d] sm:$0xff]
      %v3109 = vld [vmem:[#allocation2 + $0x475] sm:$0xff]
      %v3110 = vld [vmem:[#allocation2 + $0x47d] sm:$0xff]
      %v3111 = vld [vmem:[#allocation2 + $0x485] sm:$0xff]
      %v3112 = vld [vmem:[#allocation2 + $0x48d] sm:$0xff]
      %v3113 = vld [vmem:[#allocation2 + $0x495] sm:$0xff]
      %v3114 = vld [vmem:[#allocation2 + $0x49d] sm:$0xff]
      %v3115 = vld [vmem:[#allocation2 + $0x4a5] sm:$0xff]
      %v3116 = vld [vmem:[#allocation2 + $0x4ad] sm:$0xff]
      %v3117 = vld [vmem:[#allocation2 + $0x4b5] sm:$0xff]
      %v3118 = vld [vmem:[#allocation2 + $0x4bd] sm:$0xff]
      %v3119 = vld [vmem:[#allocation2 + $0x4c5] sm:$0xff]
      %v3120 = vpack.c.bf16 %v2976, %v2975
      %v3121 = vpack.c.bf16 %v2978, %v2977
      %v3122 = vpack.c.bf16 %v2980, %v2979
      %v3123 = vpack.c.bf16 %v2982, %v2981
      %v3124 = vpack.c.bf16 %v2984, %v2983
      %v3125 = vpack.c.bf16 %v2986, %v2985
      %v3126 = vpack.c.bf16 %v2988, %v2987
      %v3127 = vpack.c.bf16 %v2990, %v2989
      %v3128 = vpack.c.bf16 %v2992, %v2991
      %v3129 = vpack.c.bf16 %v2994, %v2993
      %v3130 = vpack.c.bf16 %v2996, %v2995
      %v3131 = vpack.c.bf16 %v2998, %v2997
      %v3132 = vpack.c.bf16 %v3000, %v2999
      %v3133 = vpack.c.bf16 %v3002, %v3001
      %v3134 = vpack.c.bf16 %v3004, %v3003
      %v3135 = vpack.c.bf16 %v3006, %v3005
      %v3136 = vpack.c.bf16 %v3008, %v3007
      %v3137 = vpack.c.bf16 %v3010, %v3009
      %v3138 = vpack.c.bf16 %v3012, %v3011
      %v3139 = vpack.c.bf16 %v3014, %v3013
      %v3140 = vpack.c.bf16 %v3016, %v3015
      %v3141 = vpack.c.bf16 %v3018, %v3017
      %v3142 = vpack.c.bf16 %v3020, %v3019
      %v3143 = vpack.c.bf16 %v3022, %v3021
      %v3144 = vpack.c.bf16 %v3024, %v3023
      %v3145 = vpack.c.bf16 %v3026, %v3025
      %v3146 = vpack.c.bf16 %v3028, %v3027
      %v3147 = vpack.c.bf16 %v3030, %v3029
      %v3148 = vpack.c.bf16 %v3032, %v3031
      %v3149 = vpack.c.bf16 %v3034, %v3033
      %v3150 = vpack.c.bf16 %v3036, %v3035
      %v3151 = vpack.c.bf16 %v3038, %v3037
      %v3152 = vpack.c.bf16 %v3040, %v3039
      %v3153 = vpack.c.bf16 %v3042, %v3041
      %v3154 = vpack.c.bf16 %v3044, %v3043
      %v3155 = vpack.c.bf16 %v3046, %v3045
      %v3156 = vpack.c.bf16 %v3048, %v3047
      %v3157 = vpack.c.bf16 %v3050, %v3049
      %v3158 = vpack.c.bf16 %v3052, %v3051
      %v3159 = vpack.c.bf16 %v3054, %v3053
      %v3160 = vpack.c.bf16 %v3056, %v3055
      %v3161 = vpack.c.bf16 %v3058, %v3057
      %v3162 = vpack.c.bf16 %v3060, %v3059
      %v3163 = vpack.c.bf16 %v3062, %v3061
      %v3164 = vpack.c.bf16 %v3064, %v3063
      %v3165 = vpack.c.bf16 %v3066, %v3065
      %v3166 = vpack.c.bf16 %v3068, %v3067
      %v3167 = vpack.c.bf16 %v3070, %v3069
      %v3168 = vpack.c.bf16 %v3072, %v3071
      %v3169 = vpack.c.bf16 %v3074, %v3073
      %v3170 = vpack.c.bf16 %v3076, %v3075
      %v3171 = vpack.c.bf16 %v3078, %v3077
      %v3172 = vpack.c.bf16 %v3080, %v3079
      %v3173 = vpack.c.bf16 %v3082, %v3081
      %v3174 = vpack.c.bf16 %v3084, %v3083
      %v3175 = vpack.c.bf16 %v3086, %v3085
      %v3176 = vpack.c.bf16 %v3088, %v3087
      %v3177 = vpack.c.bf16 %v3090, %v3089
      %v3178 = vpack.c.bf16 %v3092, %v3091
      %v3179 = vpack.c.bf16 %v3094, %v3093
      %v3180 = vpack.c.bf16 %v3096, %v3095
      %v3181 = vpack.c.bf16 %v3098, %v3097
      %v3182 = vpack.c.bf16 %v3100, %v3099
      %v3183 = vpack.c.bf16 %v3102, %v3101
      %v3184 = vpack.c.bf16 %v3104, %v3103
      %v3185 = vpack.c.bf16 %v3106, %v3105
      %v3186 = vpack.c.bf16 %v3108, %v3107
      %v3187 = vpack.c.bf16 %v3110, %v3109
      %v3188 = vpack.c.bf16 %v3112, %v3111
      %v3189 = vpack.c.bf16 %v3114, %v3113
      %v3190 = vpack.c.bf16 %v3116, %v3115
      %v3191 = vpack.c.bf16 %v3118, %v3117
      %v3192 = vpack.c.bf16 %v3119, %v3119
      %v3193 = vld [vmem:[#allocation2 + $0x46] sm:$0xff]
      %v3194 = vld [vmem:[#allocation2 + $0x4e] sm:$0xff]
      %v3195 = vld [vmem:[#allocation2 + $0x56] sm:$0xff]
      %v3196 = vld [vmem:[#allocation2 + $0x5e] sm:$0xff]
      %v3197 = vld [vmem:[#allocation2 + $0x66] sm:$0xff]
      %v3198 = vld [vmem:[#allocation2 + $0x6e] sm:$0xff]
      %v3199 = vld [vmem:[#allocation2 + $0x76] sm:$0xff]
      %v3200 = vld [vmem:[#allocation2 + $0x7e] sm:$0xff]
      %v3201 = vld [vmem:[#allocation2 + $0x86] sm:$0xff]
      %v3202 = vld [vmem:[#allocation2 + $0x8e] sm:$0xff]
      %v3203 = vld [vmem:[#allocation2 + $0x96] sm:$0xff]
      %v3204 = vld [vmem:[#allocation2 + $0x9e] sm:$0xff]
      %v3205 = vld [vmem:[#allocation2 + $0xa6] sm:$0xff]
      %v3206 = vld [vmem:[#allocation2 + $0xae] sm:$0xff]
      %v3207 = vld [vmem:[#allocation2 + $0xb6] sm:$0xff]
      %v3208 = vld [vmem:[#allocation2 + $0xbe] sm:$0xff]
      %v3209 = vld [vmem:[#allocation2 + $0xc6] sm:$0xff]
      %v3210 = vld [vmem:[#allocation2 + $0xce] sm:$0xff]
      %v3211 = vld [vmem:[#allocation2 + $0xd6] sm:$0xff]
      %v3212 = vld [vmem:[#allocation2 + $0xde] sm:$0xff]
      %v3213 = vld [vmem:[#allocation2 + $0xe6] sm:$0xff]
      %v3214 = vld [vmem:[#allocation2 + $0xee] sm:$0xff]
      %v3215 = vld [vmem:[#allocation2 + $0xf6] sm:$0xff]
      %v3216 = vld [vmem:[#allocation2 + $0xfe] sm:$0xff]
      %v3217 = vld [vmem:[#allocation2 + $0x106] sm:$0xff]
      %v3218 = vld [vmem:[#allocation2 + $0x10e] sm:$0xff]
      %v3219 = vld [vmem:[#allocation2 + $0x116] sm:$0xff]
      %v3220 = vld [vmem:[#allocation2 + $0x11e] sm:$0xff]
      %v3221 = vld [vmem:[#allocation2 + $0x126] sm:$0xff]
      %v3222 = vld [vmem:[#allocation2 + $0x12e] sm:$0xff]
      %v3223 = vld [vmem:[#allocation2 + $0x136] sm:$0xff]
      %v3224 = vld [vmem:[#allocation2 + $0x13e] sm:$0xff]
      %v3225 = vld [vmem:[#allocation2 + $0x146] sm:$0xff]
      %v3226 = vld [vmem:[#allocation2 + $0x14e] sm:$0xff]
      %v3227 = vld [vmem:[#allocation2 + $0x156] sm:$0xff]
      %v3228 = vld [vmem:[#allocation2 + $0x15e] sm:$0xff]
      %v3229 = vld [vmem:[#allocation2 + $0x166] sm:$0xff]
      %v3230 = vld [vmem:[#allocation2 + $0x16e] sm:$0xff]
      %v3231 = vld [vmem:[#allocation2 + $0x176] sm:$0xff]
      %v3232 = vld [vmem:[#allocation2 + $0x17e] sm:$0xff]
      %v3233 = vld [vmem:[#allocation2 + $0x186] sm:$0xff]
      %v3234 = vld [vmem:[#allocation2 + $0x18e] sm:$0xff]
      %v3235 = vld [vmem:[#allocation2 + $0x196] sm:$0xff]
      %v3236 = vld [vmem:[#allocation2 + $0x19e] sm:$0xff]
      %v3237 = vld [vmem:[#allocation2 + $0x1a6] sm:$0xff]
      %v3238 = vld [vmem:[#allocation2 + $0x1ae] sm:$0xff]
      %v3239 = vld [vmem:[#allocation2 + $0x1b6] sm:$0xff]
      %v3240 = vld [vmem:[#allocation2 + $0x1be] sm:$0xff]
      %v3241 = vld [vmem:[#allocation2 + $0x1c6] sm:$0xff]
      %v3242 = vld [vmem:[#allocation2 + $0x1ce] sm:$0xff]
      %v3243 = vld [vmem:[#allocation2 + $0x1d6] sm:$0xff]
      %v3244 = vld [vmem:[#allocation2 + $0x1de] sm:$0xff]
      %v3245 = vld [vmem:[#allocation2 + $0x1e6] sm:$0xff]
      %v3246 = vld [vmem:[#allocation2 + $0x1ee] sm:$0xff]
      %v3247 = vld [vmem:[#allocation2 + $0x1f6] sm:$0xff]
      %v3248 = vld [vmem:[#allocation2 + $0x1fe] sm:$0xff]
      %v3249 = vld [vmem:[#allocation2 + $0x206] sm:$0xff]
      %v3250 = vld [vmem:[#allocation2 + $0x20e] sm:$0xff]
      %v3251 = vld [vmem:[#allocation2 + $0x216] sm:$0xff]
      %v3252 = vld [vmem:[#allocation2 + $0x21e] sm:$0xff]
      %v3253 = vld [vmem:[#allocation2 + $0x226] sm:$0xff]
      %v3254 = vld [vmem:[#allocation2 + $0x22e] sm:$0xff]
      %v3255 = vld [vmem:[#allocation2 + $0x236] sm:$0xff]
      %v3256 = vld [vmem:[#allocation2 + $0x23e] sm:$0xff]
      %v3257 = vld [vmem:[#allocation2 + $0x246] sm:$0xff]
      %v3258 = vld [vmem:[#allocation2 + $0x24e] sm:$0xff]
      %v3259 = vld [vmem:[#allocation2 + $0x256] sm:$0xff]
      %v3260 = vld [vmem:[#allocation2 + $0x25e] sm:$0xff]
      %v3261 = vld [vmem:[#allocation2 + $0x266] sm:$0xff]
      %v3262 = vld [vmem:[#allocation2 + $0x26e] sm:$0xff]
      %v3263 = vld [vmem:[#allocation2 + $0x276] sm:$0xff]
      %v3264 = vld [vmem:[#allocation2 + $0x27e] sm:$0xff]
      %v3265 = vld [vmem:[#allocation2 + $0x286] sm:$0xff]
      %v3266 = vld [vmem:[#allocation2 + $0x28e] sm:$0xff]
      %v3267 = vld [vmem:[#allocation2 + $0x296] sm:$0xff]
      %v3268 = vld [vmem:[#allocation2 + $0x29e] sm:$0xff]
      %v3269 = vld [vmem:[#allocation2 + $0x2a6] sm:$0xff]
      %v3270 = vld [vmem:[#allocation2 + $0x2ae] sm:$0xff]
      %v3271 = vld [vmem:[#allocation2 + $0x2b6] sm:$0xff]
      %v3272 = vld [vmem:[#allocation2 + $0x2be] sm:$0xff]
      %v3273 = vld [vmem:[#allocation2 + $0x2c6] sm:$0xff]
      %v3274 = vld [vmem:[#allocation2 + $0x2ce] sm:$0xff]
      %v3275 = vld [vmem:[#allocation2 + $0x2d6] sm:$0xff]
      %v3276 = vld [vmem:[#allocation2 + $0x2de] sm:$0xff]
      %v3277 = vld [vmem:[#allocation2 + $0x2e6] sm:$0xff]
      %v3278 = vld [vmem:[#allocation2 + $0x2ee] sm:$0xff]
      %v3279 = vld [vmem:[#allocation2 + $0x2f6] sm:$0xff]
      %v3280 = vld [vmem:[#allocation2 + $0x2fe] sm:$0xff]
      %v3281 = vld [vmem:[#allocation2 + $0x306] sm:$0xff]
      %v3282 = vld [vmem:[#allocation2 + $0x30e] sm:$0xff]
      %v3283 = vld [vmem:[#allocation2 + $0x316] sm:$0xff]
      %v3284 = vld [vmem:[#allocation2 + $0x31e] sm:$0xff]
      %v3285 = vld [vmem:[#allocation2 + $0x326] sm:$0xff]
      %v3286 = vld [vmem:[#allocation2 + $0x32e] sm:$0xff]
      %v3287 = vld [vmem:[#allocation2 + $0x336] sm:$0xff]
      %v3288 = vld [vmem:[#allocation2 + $0x33e] sm:$0xff]
      %v3289 = vld [vmem:[#allocation2 + $0x346] sm:$0xff]
      %v3290 = vld [vmem:[#allocation2 + $0x34e] sm:$0xff]
      %v3291 = vld [vmem:[#allocation2 + $0x356] sm:$0xff]
      %v3292 = vld [vmem:[#allocation2 + $0x35e] sm:$0xff]
      %v3293 = vld [vmem:[#allocation2 + $0x366] sm:$0xff]
      %v3294 = vld [vmem:[#allocation2 + $0x36e] sm:$0xff]
      %v3295 = vld [vmem:[#allocation2 + $0x376] sm:$0xff]
      %v3296 = vld [vmem:[#allocation2 + $0x37e] sm:$0xff]
      %v3297 = vld [vmem:[#allocation2 + $0x386] sm:$0xff]
      %v3298 = vld [vmem:[#allocation2 + $0x38e] sm:$0xff]
      %v3299 = vld [vmem:[#allocation2 + $0x396] sm:$0xff]
      %v3300 = vld [vmem:[#allocation2 + $0x39e] sm:$0xff]
      %v3301 = vld [vmem:[#allocation2 + $0x3a6] sm:$0xff]
      %v3302 = vld [vmem:[#allocation2 + $0x3ae] sm:$0xff]
      %v3303 = vld [vmem:[#allocation2 + $0x3b6] sm:$0xff]
      %v3304 = vld [vmem:[#allocation2 + $0x3be] sm:$0xff]
      %v3305 = vld [vmem:[#allocation2 + $0x3c6] sm:$0xff]
      %v3306 = vld [vmem:[#allocation2 + $0x3ce] sm:$0xff]
      %v3307 = vld [vmem:[#allocation2 + $0x3d6] sm:$0xff]
      %v3308 = vld [vmem:[#allocation2 + $0x3de] sm:$0xff]
      %v3309 = vld [vmem:[#allocation2 + $0x3e6] sm:$0xff]
      %v3310 = vld [vmem:[#allocation2 + $0x3ee] sm:$0xff]
      %v3311 = vld [vmem:[#allocation2 + $0x3f6] sm:$0xff]
      %v3312 = vld [vmem:[#allocation2 + $0x3fe] sm:$0xff]
      %v3313 = vld [vmem:[#allocation2 + $0x406] sm:$0xff]
      %v3314 = vld [vmem:[#allocation2 + $0x40e] sm:$0xff]
      %v3315 = vld [vmem:[#allocation2 + $0x416] sm:$0xff]
      %v3316 = vld [vmem:[#allocation2 + $0x41e] sm:$0xff]
      %v3317 = vld [vmem:[#allocation2 + $0x426] sm:$0xff]
      %v3318 = vld [vmem:[#allocation2 + $0x42e] sm:$0xff]
      %v3319 = vld [vmem:[#allocation2 + $0x436] sm:$0xff]
      %v3320 = vld [vmem:[#allocation2 + $0x43e] sm:$0xff]
      %v3321 = vld [vmem:[#allocation2 + $0x446] sm:$0xff]
      %v3322 = vld [vmem:[#allocation2 + $0x44e] sm:$0xff]
      %v3323 = vld [vmem:[#allocation2 + $0x456] sm:$0xff]
      %v3324 = vld [vmem:[#allocation2 + $0x45e] sm:$0xff]
      %v3325 = vld [vmem:[#allocation2 + $0x466] sm:$0xff]
      %v3326 = vld [vmem:[#allocation2 + $0x46e] sm:$0xff]
      %v3327 = vld [vmem:[#allocation2 + $0x476] sm:$0xff]
      %v3328 = vld [vmem:[#allocation2 + $0x47e] sm:$0xff]
      %v3329 = vld [vmem:[#allocation2 + $0x486] sm:$0xff]
      %v3330 = vld [vmem:[#allocation2 + $0x48e] sm:$0xff]
      %v3331 = vld [vmem:[#allocation2 + $0x496] sm:$0xff]
      %v3332 = vld [vmem:[#allocation2 + $0x49e] sm:$0xff]
      %v3333 = vld [vmem:[#allocation2 + $0x4a6] sm:$0xff]
      %v3334 = vld [vmem:[#allocation2 + $0x4ae] sm:$0xff]
      %v3335 = vld [vmem:[#allocation2 + $0x4b6] sm:$0xff]
      %v3336 = vld [vmem:[#allocation2 + $0x4be] sm:$0xff]
      %v3337 = vld [vmem:[#allocation2 + $0x4c6] sm:$0xff]
      %v3338 = vpack.c.bf16 %v3194, %v3193
      %v3339 = vpack.c.bf16 %v3196, %v3195
      %v3340 = vpack.c.bf16 %v3198, %v3197
      %v3341 = vpack.c.bf16 %v3200, %v3199
      %v3342 = vpack.c.bf16 %v3202, %v3201
      %v3343 = vpack.c.bf16 %v3204, %v3203
      %v3344 = vpack.c.bf16 %v3206, %v3205
      %v3345 = vpack.c.bf16 %v3208, %v3207
      %v3346 = vpack.c.bf16 %v3210, %v3209
      %v3347 = vpack.c.bf16 %v3212, %v3211
      %v3348 = vpack.c.bf16 %v3214, %v3213
      %v3349 = vpack.c.bf16 %v3216, %v3215
      %v3350 = vpack.c.bf16 %v3218, %v3217
      %v3351 = vpack.c.bf16 %v3220, %v3219
      %v3352 = vpack.c.bf16 %v3222, %v3221
      %v3353 = vpack.c.bf16 %v3224, %v3223
      %v3354 = vpack.c.bf16 %v3226, %v3225
      %v3355 = vpack.c.bf16 %v3228, %v3227
      %v3356 = vpack.c.bf16 %v3230, %v3229
      %v3357 = vpack.c.bf16 %v3232, %v3231
      %v3358 = vpack.c.bf16 %v3234, %v3233
      %v3359 = vpack.c.bf16 %v3236, %v3235
      %v3360 = vpack.c.bf16 %v3238, %v3237
      %v3361 = vpack.c.bf16 %v3240, %v3239
      %v3362 = vpack.c.bf16 %v3242, %v3241
      %v3363 = vpack.c.bf16 %v3244, %v3243
      %v3364 = vpack.c.bf16 %v3246, %v3245
      %v3365 = vpack.c.bf16 %v3248, %v3247
      %v3366 = vpack.c.bf16 %v3250, %v3249
      %v3367 = vpack.c.bf16 %v3252, %v3251
      %v3368 = vpack.c.bf16 %v3254, %v3253
      %v3369 = vpack.c.bf16 %v3256, %v3255
      %v3370 = vpack.c.bf16 %v3258, %v3257
      %v3371 = vpack.c.bf16 %v3260, %v3259
      %v3372 = vpack.c.bf16 %v3262, %v3261
      %v3373 = vpack.c.bf16 %v3264, %v3263
      %v3374 = vpack.c.bf16 %v3266, %v3265
      %v3375 = vpack.c.bf16 %v3268, %v3267
      %v3376 = vpack.c.bf16 %v3270, %v3269
      %v3377 = vpack.c.bf16 %v3272, %v3271
      %v3378 = vpack.c.bf16 %v3274, %v3273
      %v3379 = vpack.c.bf16 %v3276, %v3275
      %v3380 = vpack.c.bf16 %v3278, %v3277
      %v3381 = vpack.c.bf16 %v3280, %v3279
      %v3382 = vpack.c.bf16 %v3282, %v3281
      %v3383 = vpack.c.bf16 %v3284, %v3283
      %v3384 = vpack.c.bf16 %v3286, %v3285
      %v3385 = vpack.c.bf16 %v3288, %v3287
      %v3386 = vpack.c.bf16 %v3290, %v3289
      %v3387 = vpack.c.bf16 %v3292, %v3291
      %v3388 = vpack.c.bf16 %v3294, %v3293
      %v3389 = vpack.c.bf16 %v3296, %v3295
      %v3390 = vpack.c.bf16 %v3298, %v3297
      %v3391 = vpack.c.bf16 %v3300, %v3299
      %v3392 = vpack.c.bf16 %v3302, %v3301
      %v3393 = vpack.c.bf16 %v3304, %v3303
      %v3394 = vpack.c.bf16 %v3306, %v3305
      %v3395 = vpack.c.bf16 %v3308, %v3307
      %v3396 = vpack.c.bf16 %v3310, %v3309
      %v3397 = vpack.c.bf16 %v3312, %v3311
      %v3398 = vpack.c.bf16 %v3314, %v3313
      %v3399 = vpack.c.bf16 %v3316, %v3315
      %v3400 = vpack.c.bf16 %v3318, %v3317
      %v3401 = vpack.c.bf16 %v3320, %v3319
      %v3402 = vpack.c.bf16 %v3322, %v3321
      %v3403 = vpack.c.bf16 %v3324, %v3323
      %v3404 = vpack.c.bf16 %v3326, %v3325
      %v3405 = vpack.c.bf16 %v3328, %v3327
      %v3406 = vpack.c.bf16 %v3330, %v3329
      %v3407 = vpack.c.bf16 %v3332, %v3331
      %v3408 = vpack.c.bf16 %v3334, %v3333
      %v3409 = vpack.c.bf16 %v3336, %v3335
      %v3410 = vpack.c.bf16 %v3337, %v3337
      %3484 = vrot.lane.b32.xlu0 %v2234, 64
      %v3485 = vpop.permute.xlu0 %3484
      %3486 = vrot.lane.b32.xlu0 %v2235, 64
      %v3487 = vpop.permute.xlu0 %3486
      %3488 = vrot.lane.b32.xlu0 %v2236, 64
      %v3489 = vpop.permute.xlu0 %3488
      %3490 = vrot.lane.b32.xlu0 %v2237, 64
      %v3491 = vpop.permute.xlu0 %3490
      %3492 = vrot.lane.b32.xlu0 %v2238, 64
      %v3493 = vpop.permute.xlu0 %3492
      %3494 = vrot.lane.b32.xlu0 %v2239, 64
      %v3495 = vpop.permute.xlu0 %3494
      %3496 = vrot.lane.b32.xlu0 %v2240, 64
      %v3497 = vpop.permute.xlu0 %3496
      %3498 = vrot.lane.b32.xlu0 %v2241, 64
      %v3499 = vpop.permute.xlu0 %3498
      %3500 = vrot.lane.b32.xlu0 %v2242, 64
      %v3501 = vpop.permute.xlu0 %3500
      %3502 = vrot.lane.b32.xlu0 %v2243, 64
      %v3503 = vpop.permute.xlu0 %3502
      %3504 = vrot.lane.b32.xlu0 %v2244, 64
      %v3505 = vpop.permute.xlu0 %3504
      %3506 = vrot.lane.b32.xlu0 %v2245, 64
      %v3507 = vpop.permute.xlu0 %3506
      %3508 = vrot.lane.b32.xlu0 %v2246, 64
      %v3509 = vpop.permute.xlu0 %3508
      %3510 = vrot.lane.b32.xlu0 %v2247, 64
      %v3511 = vpop.permute.xlu0 %3510
      %3512 = vrot.lane.b32.xlu0 %v2248, 64
      %v3513 = vpop.permute.xlu0 %3512
      %3514 = vrot.lane.b32.xlu0 %v2249, 64
      %v3515 = vpop.permute.xlu0 %3514
      %3516 = vrot.lane.b32.xlu0 %v2250, 64
      %v3517 = vpop.permute.xlu0 %3516
      %3518 = vrot.lane.b32.xlu0 %v2251, 64
      %v3519 = vpop.permute.xlu0 %3518
      %3520 = vrot.lane.b32.xlu0 %v2252, 64
      %v3521 = vpop.permute.xlu0 %3520
      %3522 = vrot.lane.b32.xlu0 %v2253, 64
      %v3523 = vpop.permute.xlu0 %3522
      %3524 = vrot.lane.b32.xlu0 %v2254, 64
      %v3525 = vpop.permute.xlu0 %3524
      %3526 = vrot.lane.b32.xlu0 %v2255, 64
      %v3527 = vpop.permute.xlu0 %3526
      %3528 = vrot.lane.b32.xlu0 %v2256, 64
      %v3529 = vpop.permute.xlu0 %3528
      %3530 = vrot.lane.b32.xlu0 %v2257, 64
      %v3531 = vpop.permute.xlu0 %3530
      %3532 = vrot.lane.b32.xlu0 %v2258, 64
      %v3533 = vpop.permute.xlu0 %3532
      %3534 = vrot.lane.b32.xlu0 %v2259, 64
      %v3535 = vpop.permute.xlu0 %3534
      %3536 = vrot.lane.b32.xlu0 %v2260, 64
      %v3537 = vpop.permute.xlu0 %3536
      %3538 = vrot.lane.b32.xlu0 %v2261, 64
      %v3539 = vpop.permute.xlu0 %3538
      %3540 = vrot.lane.b32.xlu0 %v2262, 64
      %v3541 = vpop.permute.xlu0 %3540
      %3542 = vrot.lane.b32.xlu0 %v2263, 64
      %v3543 = vpop.permute.xlu0 %3542
      %3544 = vrot.lane.b32.xlu0 %v2264, 64
      %v3545 = vpop.permute.xlu0 %3544
      %3546 = vrot.lane.b32.xlu0 %v2265, 64
      %v3547 = vpop.permute.xlu0 %3546
      %3548 = vrot.lane.b32.xlu0 %v2266, 64
      %v3549 = vpop.permute.xlu0 %3548
      %3550 = vrot.lane.b32.xlu0 %v2267, 64
      %v3551 = vpop.permute.xlu0 %3550
      %3552 = vrot.lane.b32.xlu0 %v2268, 64
      %v3553 = vpop.permute.xlu0 %3552
      %3554 = vrot.lane.b32.xlu0 %v2269, 64
      %v3555 = vpop.permute.xlu0 %3554
      %3556 = vrot.lane.b32.xlu0 %v2270, 64
      %v3557 = vpop.permute.xlu0 %3556
      %3558 = vrot.lane.b32.xlu0 %v2271, 64
      %v3559 = vpop.permute.xlu0 %3558
      %3560 = vrot.lane.b32.xlu0 %v2272, 64
      %v3561 = vpop.permute.xlu0 %3560
      %3562 = vrot.lane.b32.xlu0 %v2273, 64
      %v3563 = vpop.permute.xlu0 %3562
      %3564 = vrot.lane.b32.xlu0 %v2274, 64
      %v3565 = vpop.permute.xlu0 %3564
      %3566 = vrot.lane.b32.xlu0 %v2275, 64
      %v3567 = vpop.permute.xlu0 %3566
      %3568 = vrot.lane.b32.xlu0 %v2276, 64
      %v3569 = vpop.permute.xlu0 %3568
      %3570 = vrot.lane.b32.xlu0 %v2277, 64
      %v3571 = vpop.permute.xlu0 %3570
      %3572 = vrot.lane.b32.xlu0 %v2278, 64
      %v3573 = vpop.permute.xlu0 %3572
      %3574 = vrot.lane.b32.xlu0 %v2279, 64
      %v3575 = vpop.permute.xlu0 %3574
      %3576 = vrot.lane.b32.xlu0 %v2280, 64
      %v3577 = vpop.permute.xlu0 %3576
      %3578 = vrot.lane.b32.xlu0 %v2281, 64
      %v3579 = vpop.permute.xlu0 %3578
      %3580 = vrot.lane.b32.xlu0 %v2282, 64
      %v3581 = vpop.permute.xlu0 %3580
      %3582 = vrot.lane.b32.xlu0 %v2283, 64
      %v3583 = vpop.permute.xlu0 %3582
      %3584 = vrot.lane.b32.xlu0 %v2284, 64
      %v3585 = vpop.permute.xlu0 %3584
      %3586 = vrot.lane.b32.xlu0 %v2285, 64
      %v3587 = vpop.permute.xlu0 %3586
      %3588 = vrot.lane.b32.xlu0 %v2286, 64
      %v3589 = vpop.permute.xlu0 %3588
      %3590 = vrot.lane.b32.xlu0 %v2287, 64
      %v3591 = vpop.permute.xlu0 %3590
      %3592 = vrot.lane.b32.xlu0 %v2288, 64
      %v3593 = vpop.permute.xlu0 %3592
      %3594 = vrot.lane.b32.xlu0 %v2289, 64
      %v3595 = vpop.permute.xlu0 %3594
      %3596 = vrot.lane.b32.xlu0 %v2290, 64
      %v3597 = vpop.permute.xlu0 %3596
      %3598 = vrot.lane.b32.xlu0 %v2291, 64
      %v3599 = vpop.permute.xlu0 %3598
      %3600 = vrot.lane.b32.xlu0 %v2292, 64
      %v3601 = vpop.permute.xlu0 %3600
      %3602 = vrot.lane.b32.xlu0 %v2293, 64
      %v3603 = vpop.permute.xlu0 %3602
      %3604 = vrot.lane.b32.xlu0 %v2294, 64
      %v3605 = vpop.permute.xlu0 %3604
      %3606 = vrot.lane.b32.xlu0 %v2295, 64
      %v3607 = vpop.permute.xlu0 %3606
      %3608 = vrot.lane.b32.xlu0 %v2296, 64
      %v3609 = vpop.permute.xlu0 %3608
      %3610 = vrot.lane.b32.xlu0 %v2297, 64
      %v3611 = vpop.permute.xlu0 %3610
      %3612 = vrot.lane.b32.xlu0 %v2298, 64
      %v3613 = vpop.permute.xlu0 %3612
      %3614 = vrot.lane.b32.xlu0 %v2299, 64
      %v3615 = vpop.permute.xlu0 %3614
      %3616 = vrot.lane.b32.xlu0 %v2300, 64
      %v3617 = vpop.permute.xlu0 %3616
      %3618 = vrot.lane.b32.xlu0 %v2301, 64
      %v3619 = vpop.permute.xlu0 %3618
      %3620 = vrot.lane.b32.xlu0 %v2302, 64
      %v3621 = vpop.permute.xlu0 %3620
      %3622 = vrot.lane.b32.xlu0 %v2303, 64
      %v3623 = vpop.permute.xlu0 %3622
      %3624 = vrot.lane.b32.xlu0 %v2304, 64
      %v3625 = vpop.permute.xlu0 %3624
      %3626 = vrot.lane.b32.xlu0 %v2305, 64
      %v3627 = vpop.permute.xlu0 %3626
      %3628 = vrot.lane.b32.xlu0 %v2306, 64
      %v3629 = vpop.permute.xlu0 %3628
      %3703 = vrot.lane.b32.xlu0 %v2454, 64
      %v3704 = vpop.permute.xlu0 %3703
      %3705 = vrot.lane.b32.xlu0 %v2455, 64
      %v3706 = vpop.permute.xlu0 %3705
      %3707 = vrot.lane.b32.xlu0 %v2456, 64
      %v3708 = vpop.permute.xlu0 %3707
      %3709 = vrot.lane.b32.xlu0 %v2457, 64
      %v3710 = vpop.permute.xlu0 %3709
      %3711 = vrot.lane.b32.xlu0 %v2458, 64
      %v3712 = vpop.permute.xlu0 %3711
      %3713 = vrot.lane.b32.xlu0 %v2459, 64
      %v3714 = vpop.permute.xlu0 %3713
      %3715 = vrot.lane.b32.xlu0 %v2460, 64
      %v3716 = vpop.permute.xlu0 %3715
      %3717 = vrot.lane.b32.xlu0 %v2461, 64
      %v3718 = vpop.permute.xlu0 %3717
      %3719 = vrot.lane.b32.xlu0 %v2462, 64
      %v3720 = vpop.permute.xlu0 %3719
      %3721 = vrot.lane.b32.xlu0 %v2463, 64
      %v3722 = vpop.permute.xlu0 %3721
      %3723 = vrot.lane.b32.xlu0 %v2464, 64
      %v3724 = vpop.permute.xlu0 %3723
      %3725 = vrot.lane.b32.xlu0 %v2465, 64
      %v3726 = vpop.permute.xlu0 %3725
      %3727 = vrot.lane.b32.xlu0 %v2466, 64
      %v3728 = vpop.permute.xlu0 %3727
      %3729 = vrot.lane.b32.xlu0 %v2467, 64
      %v3730 = vpop.permute.xlu0 %3729
      %3731 = vrot.lane.b32.xlu0 %v2468, 64
      %v3732 = vpop.permute.xlu0 %3731
      %3733 = vrot.lane.b32.xlu0 %v2469, 64
      %v3734 = vpop.permute.xlu0 %3733
      %3735 = vrot.lane.b32.xlu0 %v2470, 64
      %v3736 = vpop.permute.xlu0 %3735
      %3737 = vrot.lane.b32.xlu0 %v2471, 64
      %v3738 = vpop.permute.xlu0 %3737
      %3739 = vrot.lane.b32.xlu0 %v2472, 64
      %v3740 = vpop.permute.xlu0 %3739
      %3741 = vrot.lane.b32.xlu0 %v2473, 64
      %v3742 = vpop.permute.xlu0 %3741
      %3743 = vrot.lane.b32.xlu0 %v2474, 64
      %v3744 = vpop.permute.xlu0 %3743
      %3745 = vrot.lane.b32.xlu0 %v2475, 64
      %v3746 = vpop.permute.xlu0 %3745
      %3747 = vrot.lane.b32.xlu0 %v2476, 64
      %v3748 = vpop.permute.xlu0 %3747
      %3749 = vrot.lane.b32.xlu0 %v2477, 64
      %v3750 = vpop.permute.xlu0 %3749
      %3751 = vrot.lane.b32.xlu0 %v2478, 64
      %v3752 = vpop.permute.xlu0 %3751
      %3753 = vrot.lane.b32.xlu0 %v2479, 64
      %v3754 = vpop.permute.xlu0 %3753
      %3755 = vrot.lane.b32.xlu0 %v2480, 64
      %v3756 = vpop.permute.xlu0 %3755
      %3757 = vrot.lane.b32.xlu0 %v2481, 64
      %v3758 = vpop.permute.xlu0 %3757
      %3759 = vrot.lane.b32.xlu0 %v2482, 64
      %v3760 = vpop.permute.xlu0 %3759
      %3761 = vrot.lane.b32.xlu0 %v2483, 64
      %v3762 = vpop.permute.xlu0 %3761
      %3763 = vrot.lane.b32.xlu0 %v2484, 64
      %v3764 = vpop.permute.xlu0 %3763
      %3765 = vrot.lane.b32.xlu0 %v2485, 64
      %v3766 = vpop.permute.xlu0 %3765
      %3767 = vrot.lane.b32.xlu0 %v2486, 64
      %v3768 = vpop.permute.xlu0 %3767
      %3769 = vrot.lane.b32.xlu0 %v2487, 64
      %v3770 = vpop.permute.xlu0 %3769
      %3771 = vrot.lane.b32.xlu0 %v2488, 64
      %v3772 = vpop.permute.xlu0 %3771
      %3773 = vrot.lane.b32.xlu0 %v2489, 64
      %v3774 = vpop.permute.xlu0 %3773
      %3775 = vrot.lane.b32.xlu0 %v2490, 64
      %v3776 = vpop.permute.xlu0 %3775
      %3777 = vrot.lane.b32.xlu0 %v2491, 64
      %v3778 = vpop.permute.xlu0 %3777
      %3779 = vrot.lane.b32.xlu0 %v2492, 64
      %v3780 = vpop.permute.xlu0 %3779
      %3781 = vrot.lane.b32.xlu0 %v2493, 64
      %v3782 = vpop.permute.xlu0 %3781
      %3783 = vrot.lane.b32.xlu0 %v2494, 64
      %v3784 = vpop.permute.xlu0 %3783
      %3785 = vrot.lane.b32.xlu0 %v2495, 64
      %v3786 = vpop.permute.xlu0 %3785
      %3787 = vrot.lane.b32.xlu0 %v2496, 64
      %v3788 = vpop.permute.xlu0 %3787
      %3789 = vrot.lane.b32.xlu0 %v2497, 64
      %v3790 = vpop.permute.xlu0 %3789
      %3791 = vrot.lane.b32.xlu0 %v2498, 64
      %v3792 = vpop.permute.xlu0 %3791
      %3793 = vrot.lane.b32.xlu0 %v2499, 64
      %v3794 = vpop.permute.xlu0 %3793
      %3795 = vrot.lane.b32.xlu0 %v2500, 64
      %v3796 = vpop.permute.xlu0 %3795
      %3797 = vrot.lane.b32.xlu0 %v2501, 64
      %v3798 = vpop.permute.xlu0 %3797
      %3799 = vrot.lane.b32.xlu0 %v2502, 64
      %v3800 = vpop.permute.xlu0 %3799
      %3801 = vrot.lane.b32.xlu0 %v2503, 64
      %v3802 = vpop.permute.xlu0 %3801
      %3803 = vrot.lane.b32.xlu0 %v2504, 64
      %v3804 = vpop.permute.xlu0 %3803
      %3805 = vrot.lane.b32.xlu0 %v2505, 64
      %v3806 = vpop.permute.xlu0 %3805
      %3807 = vrot.lane.b32.xlu0 %v2506, 64
      %v3808 = vpop.permute.xlu0 %3807
      %3809 = vrot.lane.b32.xlu0 %v2507, 64
      %v3810 = vpop.permute.xlu0 %3809
      %3811 = vrot.lane.b32.xlu0 %v2508, 64
      %v3812 = vpop.permute.xlu0 %3811
      %3813 = vrot.lane.b32.xlu0 %v2509, 64
      %v3814 = vpop.permute.xlu0 %3813
      %3815 = vrot.lane.b32.xlu0 %v2510, 64
      %v3816 = vpop.permute.xlu0 %3815
      %3817 = vrot.lane.b32.xlu0 %v2511, 64
      %v3818 = vpop.permute.xlu0 %3817
      %3819 = vrot.lane.b32.xlu0 %v2512, 64
      %v3820 = vpop.permute.xlu0 %3819
      %3821 = vrot.lane.b32.xlu0 %v2513, 64
      %v3822 = vpop.permute.xlu0 %3821
      %3823 = vrot.lane.b32.xlu0 %v2514, 64
      %v3824 = vpop.permute.xlu0 %3823
      %3825 = vrot.lane.b32.xlu0 %v2515, 64
      %v3826 = vpop.permute.xlu0 %3825
      %3827 = vrot.lane.b32.xlu0 %v2516, 64
      %v3828 = vpop.permute.xlu0 %3827
      %3829 = vrot.lane.b32.xlu0 %v2517, 64
      %v3830 = vpop.permute.xlu0 %3829
      %3831 = vrot.lane.b32.xlu0 %v2518, 64
      %v3832 = vpop.permute.xlu0 %3831
      %3833 = vrot.lane.b32.xlu0 %v2519, 64
      %v3834 = vpop.permute.xlu0 %3833
      %3835 = vrot.lane.b32.xlu0 %v2520, 64
      %v3836 = vpop.permute.xlu0 %3835
      %3837 = vrot.lane.b32.xlu0 %v2521, 64
      %v3838 = vpop.permute.xlu0 %3837
      %3839 = vrot.lane.b32.xlu0 %v2522, 64
      %v3840 = vpop.permute.xlu0 %3839
      %3841 = vrot.lane.b32.xlu0 %v2523, 64
      %v3842 = vpop.permute.xlu0 %3841
      %3843 = vrot.lane.b32.xlu0 %v2529, 64
      %v3844 = vpop.permute.xlu0 %3843
      %3845 = vrot.lane.b32.xlu0 %v2530, 64
      %v3846 = vpop.permute.xlu0 %3845
      %3847 = vrot.lane.b32.xlu0 %v2531, 64
      %v3848 = vpop.permute.xlu0 %3847
      %3922 = vrot.lane.b32.xlu0 %v2895, 64
      %v3923 = vpop.permute.xlu0 %3922
      %3924 = vrot.lane.b32.xlu0 %v2896, 64
      %v3925 = vpop.permute.xlu0 %3924
      %3926 = vrot.lane.b32.xlu0 %v2897, 64
      %v3927 = vpop.permute.xlu0 %3926
      %3928 = vrot.lane.b32.xlu0 %v2898, 64
      %v3929 = vpop.permute.xlu0 %3928
      %3930 = vrot.lane.b32.xlu0 %v2899, 64
      %v3931 = vpop.permute.xlu0 %3930
      %3932 = vrot.lane.b32.xlu0 %v2900, 64
      %v3933 = vpop.permute.xlu0 %3932
      %3934 = vrot.lane.b32.xlu0 %v2901, 64
      %v3935 = vpop.permute.xlu0 %3934
      %3936 = vrot.lane.b32.xlu0 %v2902, 64
      %v3937 = vpop.permute.xlu0 %3936
      %3938 = vrot.lane.b32.xlu0 %v2903, 64
      %v3939 = vpop.permute.xlu0 %3938
      %3940 = vrot.lane.b32.xlu0 %v2904, 64
      %v3941 = vpop.permute.xlu0 %3940
      %3942 = vrot.lane.b32.xlu0 %v2905, 64
      %v3943 = vpop.permute.xlu0 %3942
      %3944 = vrot.lane.b32.xlu0 %v2906, 64
      %v3945 = vpop.permute.xlu0 %3944
      %3946 = vrot.lane.b32.xlu0 %v2907, 64
      %v3947 = vpop.permute.xlu0 %3946
      %3948 = vrot.lane.b32.xlu0 %v2908, 64
      %v3949 = vpop.permute.xlu0 %3948
      %3950 = vrot.lane.b32.xlu0 %v2909, 64
      %v3951 = vpop.permute.xlu0 %3950
      %3952 = vrot.lane.b32.xlu0 %v2910, 64
      %v3953 = vpop.permute.xlu0 %3952
      %3954 = vrot.lane.b32.xlu0 %v2911, 64
      %v3955 = vpop.permute.xlu0 %3954
      %3956 = vrot.lane.b32.xlu0 %v2912, 64
      %v3957 = vpop.permute.xlu0 %3956
      %3958 = vrot.lane.b32.xlu0 %v2913, 64
      %v3959 = vpop.permute.xlu0 %3958
      %3960 = vrot.lane.b32.xlu0 %v2914, 64
      %v3961 = vpop.permute.xlu0 %3960
      %3962 = vrot.lane.b32.xlu0 %v2915, 64
      %v3963 = vpop.permute.xlu0 %3962
      %3964 = vrot.lane.b32.xlu0 %v2916, 64
      %v3965 = vpop.permute.xlu0 %3964
      %3966 = vrot.lane.b32.xlu0 %v2917, 64
      %v3967 = vpop.permute.xlu0 %3966
      %3968 = vrot.lane.b32.xlu0 %v2918, 64
      %v3969 = vpop.permute.xlu0 %3968
      %3970 = vrot.lane.b32.xlu0 %v2919, 64
      %v3971 = vpop.permute.xlu0 %3970
      %3972 = vrot.lane.b32.xlu0 %v2920, 64
      %v3973 = vpop.permute.xlu0 %3972
      %3974 = vrot.lane.b32.xlu0 %v2921, 64
      %v3975 = vpop.permute.xlu0 %3974
      %3976 = vrot.lane.b32.xlu0 %v2922, 64
      %v3977 = vpop.permute.xlu0 %3976
      %3978 = vrot.lane.b32.xlu0 %v2923, 64
      %v3979 = vpop.permute.xlu0 %3978
      %3980 = vrot.lane.b32.xlu0 %v2924, 64
      %v3981 = vpop.permute.xlu0 %3980
      %3982 = vrot.lane.b32.xlu0 %v2925, 64
      %v3983 = vpop.permute.xlu0 %3982
      %3984 = vrot.lane.b32.xlu0 %v2926, 64
      %v3985 = vpop.permute.xlu0 %3984
      %3986 = vrot.lane.b32.xlu0 %v2927, 64
      %v3987 = vpop.permute.xlu0 %3986
      %3988 = vrot.lane.b32.xlu0 %v2928, 64
      %v3989 = vpop.permute.xlu0 %3988
      %3990 = vrot.lane.b32.xlu0 %v2929, 64
      %v3991 = vpop.permute.xlu0 %3990
      %3992 = vrot.lane.b32.xlu0 %v2930, 64
      %v3993 = vpop.permute.xlu0 %3992
      %3994 = vrot.lane.b32.xlu0 %v2931, 64
      %v3995 = vpop.permute.xlu0 %3994
      %3996 = vrot.lane.b32.xlu0 %v2932, 64
      %v3997 = vpop.permute.xlu0 %3996
      %3998 = vrot.lane.b32.xlu0 %v2933, 64
      %v3999 = vpop.permute.xlu0 %3998
      %4000 = vrot.lane.b32.xlu0 %v2934, 64
      %v4001 = vpop.permute.xlu0 %4000
      %4002 = vrot.lane.b32.xlu0 %v2935, 64
      %v4003 = vpop.permute.xlu0 %4002
      %4004 = vrot.lane.b32.xlu0 %v2936, 64
      %v4005 = vpop.permute.xlu0 %4004
      %4006 = vrot.lane.b32.xlu0 %v2937, 64
      %v4007 = vpop.permute.xlu0 %4006
      %4008 = vrot.lane.b32.xlu0 %v2938, 64
      %v4009 = vpop.permute.xlu0 %4008
      %4010 = vrot.lane.b32.xlu0 %v2939, 64
      %v4011 = vpop.permute.xlu0 %4010
      %4012 = vrot.lane.b32.xlu0 %v2940, 64
      %v4013 = vpop.permute.xlu0 %4012
      %4014 = vrot.lane.b32.xlu0 %v2941, 64
      %v4015 = vpop.permute.xlu0 %4014
      %4016 = vrot.lane.b32.xlu0 %v2942, 64
      %v4017 = vpop.permute.xlu0 %4016
      %4018 = vrot.lane.b32.xlu0 %v2943, 64
      %v4019 = vpop.permute.xlu0 %4018
      %4020 = vrot.lane.b32.xlu0 %v2944, 64
      %v4021 = vpop.permute.xlu0 %4020
      %4022 = vrot.lane.b32.xlu0 %v2945, 64
      %v4023 = vpop.permute.xlu0 %4022
      %4024 = vrot.lane.b32.xlu0 %v2946, 64
      %v4025 = vpop.permute.xlu0 %4024
      %4026 = vrot.lane.b32.xlu0 %v2947, 64
      %v4027 = vpop.permute.xlu0 %4026
      %4028 = vrot.lane.b32.xlu0 %v2948, 64
      %v4029 = vpop.permute.xlu0 %4028
      %4030 = vrot.lane.b32.xlu0 %v2949, 64
      %v4031 = vpop.permute.xlu0 %4030
      %4032 = vrot.lane.b32.xlu0 %v2950, 64
      %v4033 = vpop.permute.xlu0 %4032
      %4034 = vrot.lane.b32.xlu0 %v2951, 64
      %v4035 = vpop.permute.xlu0 %4034
      %4036 = vrot.lane.b32.xlu0 %v2952, 64
      %v4037 = vpop.permute.xlu0 %4036
      %4038 = vrot.lane.b32.xlu0 %v2953, 64
      %v4039 = vpop.permute.xlu0 %4038
      %4040 = vrot.lane.b32.xlu0 %v2954, 64
      %v4041 = vpop.permute.xlu0 %4040
      %4042 = vrot.lane.b32.xlu0 %v2955, 64
      %v4043 = vpop.permute.xlu0 %4042
      %4044 = vrot.lane.b32.xlu0 %v2956, 64
      %v4045 = vpop.permute.xlu0 %4044
      %4046 = vrot.lane.b32.xlu0 %v2957, 64
      %v4047 = vpop.permute.xlu0 %4046
      %4048 = vrot.lane.b32.xlu0 %v2958, 64
      %v4049 = vpop.permute.xlu0 %4048
      %4050 = vrot.lane.b32.xlu0 %v2959, 64
      %v4051 = vpop.permute.xlu0 %4050
      %4052 = vrot.lane.b32.xlu0 %v2960, 64
      %v4053 = vpop.permute.xlu0 %4052
      %4054 = vrot.lane.b32.xlu0 %v2961, 64
      %v4055 = vpop.permute.xlu0 %4054
      %4056 = vrot.lane.b32.xlu0 %v2962, 64
      %v4057 = vpop.permute.xlu0 %4056
      %4058 = vrot.lane.b32.xlu0 %v2963, 64
      %v4059 = vpop.permute.xlu0 %4058
      %4060 = vrot.lane.b32.xlu0 %v2964, 64
      %v4061 = vpop.permute.xlu0 %4060
      %4062 = vrot.lane.b32.xlu0 %v2965, 64
      %v4063 = vpop.permute.xlu0 %4062
      %4064 = vrot.lane.b32.xlu0 %v2966, 64
      %v4065 = vpop.permute.xlu0 %4064
      %4066 = vrot.lane.b32.xlu0 %v2967, 64
      %v4067 = vpop.permute.xlu0 %4066
      %4141 = vrot.lane.b32.xlu0 %v3120, 64
      %v4142 = vpop.permute.xlu0 %4141
      %4143 = vrot.lane.b32.xlu0 %v3121, 64
      %v4144 = vpop.permute.xlu0 %4143
      %4145 = vrot.lane.b32.xlu0 %v3122, 64
      %v4146 = vpop.permute.xlu0 %4145
      %4147 = vrot.lane.b32.xlu0 %v3123, 64
      %v4148 = vpop.permute.xlu0 %4147
      %4149 = vrot.lane.b32.xlu0 %v3124, 64
      %v4150 = vpop.permute.xlu0 %4149
      %4151 = vrot.lane.b32.xlu0 %v3125, 64
      %v4152 = vpop.permute.xlu0 %4151
      %4153 = vrot.lane.b32.xlu0 %v3126, 64
      %v4154 = vpop.permute.xlu0 %4153
      %4155 = vrot.lane.b32.xlu0 %v3127, 64
      %v4156 = vpop.permute.xlu0 %4155
      %4157 = vrot.lane.b32.xlu0 %v3128, 64
      %v4158 = vpop.permute.xlu0 %4157
      %4159 = vrot.lane.b32.xlu0 %v3129, 64
      %v4160 = vpop.permute.xlu0 %4159
      %4161 = vrot.lane.b32.xlu0 %v3130, 64
      %v4162 = vpop.permute.xlu0 %4161
      %4163 = vrot.lane.b32.xlu0 %v3131, 64
      %v4164 = vpop.permute.xlu0 %4163
      %4165 = vrot.lane.b32.xlu0 %v3132, 64
      %v4166 = vpop.permute.xlu0 %4165
      %4167 = vrot.lane.b32.xlu0 %v3133, 64
      %v4168 = vpop.permute.xlu0 %4167
      %4169 = vrot.lane.b32.xlu0 %v3134, 64
      %v4170 = vpop.permute.xlu0 %4169
      %4171 = vrot.lane.b32.xlu0 %v3135, 64
      %v4172 = vpop.permute.xlu0 %4171
      %4173 = vrot.lane.b32.xlu0 %v3136, 64
      %v4174 = vpop.permute.xlu0 %4173
      %4175 = vrot.lane.b32.xlu0 %v3137, 64
      %v4176 = vpop.permute.xlu0 %4175
      %4177 = vrot.lane.b32.xlu0 %v3138, 64
      %v4178 = vpop.permute.xlu0 %4177
      %4179 = vrot.lane.b32.xlu0 %v3139, 64
      %v4180 = vpop.permute.xlu0 %4179
      %4181 = vrot.lane.b32.xlu0 %v3140, 64
      %v4182 = vpop.permute.xlu0 %4181
      %4183 = vrot.lane.b32.xlu0 %v3141, 64
      %v4184 = vpop.permute.xlu0 %4183
      %4185 = vrot.lane.b32.xlu0 %v3142, 64
      %v4186 = vpop.permute.xlu0 %4185
      %4187 = vrot.lane.b32.xlu0 %v3143, 64
      %v4188 = vpop.permute.xlu0 %4187
      %4189 = vrot.lane.b32.xlu0 %v3144, 64
      %v4190 = vpop.permute.xlu0 %4189
      %4191 = vrot.lane.b32.xlu0 %v3145, 64
      %v4192 = vpop.permute.xlu0 %4191
      %4193 = vrot.lane.b32.xlu0 %v3146, 64
      %v4194 = vpop.permute.xlu0 %4193
      %4195 = vrot.lane.b32.xlu0 %v3147, 64
      %v4196 = vpop.permute.xlu0 %4195
      %4197 = vrot.lane.b32.xlu0 %v3148, 64
      %v4198 = vpop.permute.xlu0 %4197
      %4199 = vrot.lane.b32.xlu0 %v3149, 64
      %v4200 = vpop.permute.xlu0 %4199
      %4201 = vrot.lane.b32.xlu0 %v3150, 64
      %v4202 = vpop.permute.xlu0 %4201
      %4203 = vrot.lane.b32.xlu0 %v3151, 64
      %v4204 = vpop.permute.xlu0 %4203
      %4205 = vrot.lane.b32.xlu0 %v3152, 64
      %v4206 = vpop.permute.xlu0 %4205
      %4207 = vrot.lane.b32.xlu0 %v3153, 64
      %v4208 = vpop.permute.xlu0 %4207
      %4209 = vrot.lane.b32.xlu0 %v3154, 64
      %v4210 = vpop.permute.xlu0 %4209
      %4211 = vrot.lane.b32.xlu0 %v3155, 64
      %v4212 = vpop.permute.xlu0 %4211
      %4213 = vrot.lane.b32.xlu0 %v3156, 64
      %v4214 = vpop.permute.xlu0 %4213
      %4215 = vrot.lane.b32.xlu0 %v3157, 64
      %v4216 = vpop.permute.xlu0 %4215
      %4217 = vrot.lane.b32.xlu0 %v3158, 64
      %v4218 = vpop.permute.xlu0 %4217
      %4219 = vrot.lane.b32.xlu0 %v3159, 64
      %v4220 = vpop.permute.xlu0 %4219
      %4221 = vrot.lane.b32.xlu0 %v3160, 64
      %v4222 = vpop.permute.xlu0 %4221
      %4223 = vrot.lane.b32.xlu0 %v3161, 64
      %v4224 = vpop.permute.xlu0 %4223
      %4225 = vrot.lane.b32.xlu0 %v3162, 64
      %v4226 = vpop.permute.xlu0 %4225
      %4227 = vrot.lane.b32.xlu0 %v3163, 64
      %v4228 = vpop.permute.xlu0 %4227
      %4229 = vrot.lane.b32.xlu0 %v3164, 64
      %v4230 = vpop.permute.xlu0 %4229
      %4231 = vrot.lane.b32.xlu0 %v3165, 64
      %v4232 = vpop.permute.xlu0 %4231
      %4233 = vrot.lane.b32.xlu0 %v3166, 64
      %v4234 = vpop.permute.xlu0 %4233
      %4235 = vrot.lane.b32.xlu0 %v3167, 64
      %v4236 = vpop.permute.xlu0 %4235
      %4237 = vrot.lane.b32.xlu0 %v3168, 64
      %v4238 = vpop.permute.xlu0 %4237
      %4239 = vrot.lane.b32.xlu0 %v3169, 64
      %v4240 = vpop.permute.xlu0 %4239
      %4241 = vrot.lane.b32.xlu0 %v3170, 64
      %v4242 = vpop.permute.xlu0 %4241
      %4243 = vrot.lane.b32.xlu0 %v3171, 64
      %v4244 = vpop.permute.xlu0 %4243
      %4245 = vrot.lane.b32.xlu0 %v3172, 64
      %v4246 = vpop.permute.xlu0 %4245
      %4247 = vrot.lane.b32.xlu0 %v3173, 64
      %v4248 = vpop.permute.xlu0 %4247
      %4249 = vrot.lane.b32.xlu0 %v3174, 64
      %v4250 = vpop.permute.xlu0 %4249
      %4251 = vrot.lane.b32.xlu0 %v3175, 64
      %v4252 = vpop.permute.xlu0 %4251
      %4253 = vrot.lane.b32.xlu0 %v3176, 64
      %v4254 = vpop.permute.xlu0 %4253
      %4255 = vrot.lane.b32.xlu0 %v3177, 64
      %v4256 = vpop.permute.xlu0 %4255
      %4257 = vrot.lane.b32.xlu0 %v3178, 64
      %v4258 = vpop.permute.xlu0 %4257
      %4259 = vrot.lane.b32.xlu0 %v3179, 64
      %v4260 = vpop.permute.xlu0 %4259
      %4261 = vrot.lane.b32.xlu0 %v3180, 64
      %v4262 = vpop.permute.xlu0 %4261
      %4263 = vrot.lane.b32.xlu0 %v3181, 64
      %v4264 = vpop.permute.xlu0 %4263
      %4265 = vrot.lane.b32.xlu0 %v3182, 64
      %v4266 = vpop.permute.xlu0 %4265
      %4267 = vrot.lane.b32.xlu0 %v3183, 64
      %v4268 = vpop.permute.xlu0 %4267
      %4269 = vrot.lane.b32.xlu0 %v3184, 64
      %v4270 = vpop.permute.xlu0 %4269
      %4271 = vrot.lane.b32.xlu0 %v3185, 64
      %v4272 = vpop.permute.xlu0 %4271
      %4273 = vrot.lane.b32.xlu0 %v3186, 64
      %v4274 = vpop.permute.xlu0 %4273
      %4275 = vrot.lane.b32.xlu0 %v3187, 64
      %v4276 = vpop.permute.xlu0 %4275
      %4277 = vrot.lane.b32.xlu0 %v3188, 64
      %v4278 = vpop.permute.xlu0 %4277
      %4279 = vrot.lane.b32.xlu0 %v3189, 64
      %v4280 = vpop.permute.xlu0 %4279
      %4281 = vrot.lane.b32.xlu0 %v3190, 64
      %v4282 = vpop.permute.xlu0 %4281
      %4283 = vrot.lane.b32.xlu0 %v3191, 64
      %v4284 = vpop.permute.xlu0 %4283
      %4285 = vrot.lane.b32.xlu0 %v3192, 64
      %v4286 = vpop.permute.xlu0 %4285
      %v4289 = vsel %vm1716, %v2016, %v3485
      %v4293 = vsel %vm1716, %v2017, %v3487
      %v4297 = vsel %vm1716, %v2018, %v3489
      %v4301 = vsel %vm1716, %v2019, %v3491
      %v4305 = vsel %vm1716, %v2020, %v3493
      %v4309 = vsel %vm1716, %v2021, %v3495
      %v4313 = vsel %vm1716, %v2022, %v3497
      %v4317 = vsel %vm1716, %v2023, %v3499
      %v4321 = vsel %vm1716, %v2024, %v3501
      %v4325 = vsel %vm1716, %v2025, %v3503
      %v4329 = vsel %vm1716, %v2026, %v3505
      %v4333 = vsel %vm1716, %v2027, %v3507
      %v4337 = vsel %vm1716, %v2028, %v3509
      %v4341 = vsel %vm1716, %v2029, %v3511
      %v4345 = vsel %vm1716, %v2030, %v3513
      %v4349 = vsel %vm1716, %v2031, %v3515
      %v4353 = vsel %vm1716, %v2032, %v3517
      %v4357 = vsel %vm1716, %v2033, %v3519
      %v4361 = vsel %vm1716, %v2034, %v3521
      %v4365 = vsel %vm1716, %v2035, %v3523
      %v4369 = vsel %vm1716, %v2036, %v3525
      %v4373 = vsel %vm1716, %v2037, %v3527
      %v4377 = vsel %vm1716, %v2038, %v3529
      %v4381 = vsel %vm1716, %v2039, %v3531
      %v4385 = vsel %vm1716, %v2040, %v3533
      %v4389 = vsel %vm1716, %v2041, %v3535
      %v4393 = vsel %vm1716, %v2042, %v3537
      %v4397 = vsel %vm1716, %v2043, %v3539
      %v4401 = vsel %vm1716, %v2044, %v3541
      %v4405 = vsel %vm1716, %v2045, %v3543
      %v4409 = vsel %vm1716, %v2046, %v3545
      %v4413 = vsel %vm1716, %v2047, %v3547
      %v4417 = vsel %vm1716, %v2048, %v3549
      %v4421 = vsel %vm1716, %v2049, %v3551
      %v4425 = vsel %vm1716, %v2050, %v3553
      %v4429 = vsel %vm1716, %v2051, %v3555
      %v4433 = vsel %vm1716, %v2052, %v3557
      %v4437 = vsel %vm1716, %v2053, %v3559
      %v4441 = vsel %vm1716, %v2054, %v3561
      %v4445 = vsel %vm1716, %v2055, %v3563
      %v4449 = vsel %vm1716, %v2056, %v3565
      %v4453 = vsel %vm1716, %v2057, %v3567
      %v4457 = vsel %vm1716, %v2058, %v3569
      %v4461 = vsel %vm1716, %v2059, %v3571
      %v4465 = vsel %vm1716, %v2060, %v3573
      %v4469 = vsel %vm1716, %v2061, %v3575
      %v4473 = vsel %vm1716, %v2062, %v3577
      %v4477 = vsel %vm1716, %v2063, %v3579
      %v4481 = vsel %vm1716, %v2064, %v3581
      %v4485 = vsel %vm1716, %v2065, %v3583
      %v4489 = vsel %vm1716, %v2066, %v3585
      %v4493 = vsel %vm1716, %v2067, %v3587
      %v4497 = vsel %vm1716, %v2068, %v3589
      %v4501 = vsel %vm1716, %v2069, %v3591
      %v4505 = vsel %vm1716, %v2070, %v3593
      %v4509 = vsel %vm1716, %v2071, %v3595
      %v4513 = vsel %vm1716, %v2072, %v3597
      %v4517 = vsel %vm1716, %v2073, %v3599
      %v4521 = vsel %vm1716, %v2074, %v3601
      %v4525 = vsel %vm1716, %v2075, %v3603
      %v4529 = vsel %vm1716, %v2076, %v3605
      %v4533 = vsel %vm1716, %v2077, %v3607
      %v4537 = vsel %vm1716, %v2078, %v3609
      %v4541 = vsel %vm1716, %v2079, %v3611
      %v4545 = vsel %vm1716, %v2080, %v3613
      %v4549 = vsel %vm1716, %v2081, %v3615
      %v4553 = vsel %vm1716, %v2082, %v3617
      %v4557 = vsel %vm1716, %v2083, %v3619
      %v4561 = vsel %vm1716, %v2084, %v3621
      %v4565 = vsel %vm1716, %v2085, %v3623
      %v4569 = vsel %vm1716, %v2086, %v3625
      %v4573 = vsel %vm1716, %v2087, %v3627
      %v4577 = vsel %vm1716, %v2088, %v3629
      %v4581 = vsel %vm1716, %v2452, %v3704
      %v4585 = vsel %vm1716, %v2453, %v3706
      %v4589 = vsel %vm1716, %v2454, %v3708
      %v4593 = vsel %vm1716, %v2455, %v3710
      %v4597 = vsel %vm1716, %v2456, %v3712
      %v4601 = vsel %vm1716, %v2457, %v3714
      %v4605 = vsel %vm1716, %v2458, %v3716
      %v4609 = vsel %vm1716, %v2459, %v3718
      %v4613 = vsel %vm1716, %v2460, %v3720
      %v4617 = vsel %vm1716, %v2461, %v3722
      %v4621 = vsel %vm1716, %v2462, %v3724
      %v4625 = vsel %vm1716, %v2463, %v3726
      %v4629 = vsel %vm1716, %v2464, %v3728
      %v4633 = vsel %vm1716, %v2465, %v3730
      %v4637 = vsel %vm1716, %v2466, %v3732
      %v4641 = vsel %vm1716, %v2467, %v3734
      %v4645 = vsel %vm1716, %v2468, %v3736
      %v4649 = vsel %vm1716, %v2469, %v3738
      %v4653 = vsel %vm1716, %v2470, %v3740
      %v4657 = vsel %vm1716, %v2471, %v3742
      %v4661 = vsel %vm1716, %v2472, %v3744
      %v4665 = vsel %vm1716, %v2473, %v3746
      %v4669 = vsel %vm1716, %v2474, %v3748
      %v4673 = vsel %vm1716, %v2475, %v3750
      %v4677 = vsel %vm1716, %v2476, %v3752
      %v4681 = vsel %vm1716, %v2477, %v3754
      %v4685 = vsel %vm1716, %v2478, %v3756
      %v4689 = vsel %vm1716, %v2479, %v3758
      %v4693 = vsel %vm1716, %v2480, %v3760
      %v4697 = vsel %vm1716, %v2481, %v3762
      %v4701 = vsel %vm1716, %v2482, %v3764
      %v4705 = vsel %vm1716, %v2483, %v3766
      %v4709 = vsel %vm1716, %v2484, %v3768
      %v4713 = vsel %vm1716, %v2485, %v3770
      %v4717 = vsel %vm1716, %v2486, %v3772
      %v4721 = vsel %vm1716, %v2487, %v3774
      %v4725 = vsel %vm1716, %v2488, %v3776
      %v4729 = vsel %vm1716, %v2489, %v3778
      %v4733 = vsel %vm1716, %v2490, %v3780
      %v4737 = vsel %vm1716, %v2491, %v3782
      %v4741 = vsel %vm1716, %v2492, %v3784
      %v4745 = vsel %vm1716, %v2493, %v3786
      %v4749 = vsel %vm1716, %v2494, %v3788
      %v4753 = vsel %vm1716, %v2495, %v3790
      %v4757 = vsel %vm1716, %v2496, %v3792
      %v4761 = vsel %vm1716, %v2497, %v3794
      %v4765 = vsel %vm1716, %v2498, %v3796
      %v4769 = vsel %vm1716, %v2499, %v3798
      %v4773 = vsel %vm1716, %v2500, %v3800
      %v4777 = vsel %vm1716, %v2501, %v3802
      %v4781 = vsel %vm1716, %v2502, %v3804
      %v4785 = vsel %vm1716, %v2503, %v3806
      %v4789 = vsel %vm1716, %v2504, %v3808
      %v4793 = vsel %vm1716, %v2505, %v3810
      %v4797 = vsel %vm1716, %v2506, %v3812
      %v4801 = vsel %vm1716, %v2507, %v3814
      %v4805 = vsel %vm1716, %v2508, %v3816
      %v4809 = vsel %vm1716, %v2509, %v3818
      %v4813 = vsel %vm1716, %v2510, %v3820
      %v4817 = vsel %vm1716, %v2511, %v3822
      %v4821 = vsel %vm1716, %v2512, %v3824
      %v4825 = vsel %vm1716, %v2513, %v3826
      %v4829 = vsel %vm1716, %v2514, %v3828
      %v4833 = vsel %vm1716, %v2515, %v3830
      %v4837 = vsel %vm1716, %v2516, %v3832
      %v4841 = vsel %vm1716, %v2517, %v3834
      %v4845 = vsel %vm1716, %v2518, %v3836
      %v4849 = vsel %vm1716, %v2519, %v3838
      %v4853 = vsel %vm1716, %v2520, %v3840
      %v4857 = vsel %vm1716, %v2521, %v3842
      %v4861 = vsel %vm1716, %v2522, %v3844
      %v4865 = vsel %vm1716, %v2523, %v3846
      %v4869 = vsel %vm1716, %v2524, %v3848
      %v4873 = vsel %vm1716, %v2677, %v3923
      %v4877 = vsel %vm1716, %v2678, %v3925
      %v4881 = vsel %vm1716, %v2679, %v3927
      %v4885 = vsel %vm1716, %v2680, %v3929
      %v4889 = vsel %vm1716, %v2681, %v3931
      %v4893 = vsel %vm1716, %v2682, %v3933
      %v4897 = vsel %vm1716, %v2683, %v3935
      %v4901 = vsel %vm1716, %v2684, %v3937
      %v4905 = vsel %vm1716, %v2685, %v3939
      %v4909 = vsel %vm1716, %v2686, %v3941
      %v4913 = vsel %vm1716, %v2687, %v3943
      %v4917 = vsel %vm1716, %v2688, %v3945
      %v4921 = vsel %vm1716, %v2689, %v3947
      %v4925 = vsel %vm1716, %v2690, %v3949
      %v4929 = vsel %vm1716, %v2691, %v3951
      %v4933 = vsel %vm1716, %v2692, %v3953
      %v4937 = vsel %vm1716, %v2693, %v3955
      %v4941 = vsel %vm1716, %v2694, %v3957
      %v4945 = vsel %vm1716, %v2695, %v3959
      %v4949 = vsel %vm1716, %v2696, %v3961
      %v4953 = vsel %vm1716, %v2697, %v3963
      %v4957 = vsel %vm1716, %v2698, %v3965
      %v4961 = vsel %vm1716, %v2699, %v3967
      %v4965 = vsel %vm1716, %v2700, %v3969
      %v4969 = vsel %vm1716, %v2701, %v3971
      %v4973 = vsel %vm1716, %v2702, %v3973
      %v4977 = vsel %vm1716, %v2703, %v3975
      %v4981 = vsel %vm1716, %v2704, %v3977
      %v4985 = vsel %vm1716, %v2705, %v3979
      %v4989 = vsel %vm1716, %v2706, %v3981
      %v4993 = vsel %vm1716, %v2707, %v3983
      %v4997 = vsel %vm1716, %v2708, %v3985
      %v5001 = vsel %vm1716, %v2709, %v3987
      %v5005 = vsel %vm1716, %v2710, %v3989
      %v5009 = vsel %vm1716, %v2711, %v3991
      %v5013 = vsel %vm1716, %v2712, %v3993
      %v5017 = vsel %vm1716, %v2713, %v3995
      %v5021 = vsel %vm1716, %v2714, %v3997
      %v5025 = vsel %vm1716, %v2715, %v3999
      %v5029 = vsel %vm1716, %v2716, %v4001
      %v5033 = vsel %vm1716, %v2717, %v4003
      %v5037 = vsel %vm1716, %v2718, %v4005
      %v5041 = vsel %vm1716, %v2719, %v4007
      %v5045 = vsel %vm1716, %v2720, %v4009
      %v5049 = vsel %vm1716, %v2721, %v4011
      %v5053 = vsel %vm1716, %v2722, %v4013
      %v5057 = vsel %vm1716, %v2723, %v4015
      %v5061 = vsel %vm1716, %v2724, %v4017
      %v5065 = vsel %vm1716, %v2725, %v4019
      %v5069 = vsel %vm1716, %v2726, %v4021
      %v5073 = vsel %vm1716, %v2727, %v4023
      %v5077 = vsel %vm1716, %v2728, %v4025
      %v5081 = vsel %vm1716, %v2729, %v4027
      %v5085 = vsel %vm1716, %v2730, %v4029
      %v5089 = vsel %vm1716, %v2731, %v4031
      %v5093 = vsel %vm1716, %v2732, %v4033
      %v5097 = vsel %vm1716, %v2733, %v4035
      %v5101 = vsel %vm1716, %v2734, %v4037
      %v5105 = vsel %vm1716, %v2735, %v4039
      %v5109 = vsel %vm1716, %v2736, %v4041
      %v5113 = vsel %vm1716, %v2737, %v4043
      %v5117 = vsel %vm1716, %v2738, %v4045
      %v5121 = vsel %vm1716, %v2739, %v4047
      %v5125 = vsel %vm1716, %v2740, %v4049
      %v5129 = vsel %vm1716, %v2741, %v4051
      %v5133 = vsel %vm1716, %v2742, %v4053
      %v5137 = vsel %vm1716, %v2743, %v4055
      %v5141 = vsel %vm1716, %v2744, %v4057
      %v5145 = vsel %vm1716, %v2745, %v4059
      %v5149 = vsel %vm1716, %v2746, %v4061
      %v5153 = vsel %vm1716, %v2747, %v4063
      %v5157 = vsel %vm1716, %v2748, %v4065
      %v5161 = vsel %vm1716, %v2749, %v4067
      %v5165 = vsel %vm1716, %v2897, %v4142
      %v5169 = vsel %vm1716, %v2898, %v4144
      %v5173 = vsel %vm1716, %v2899, %v4146
      %v5177 = vsel %vm1716, %v2900, %v4148
      %v5181 = vsel %vm1716, %v2901, %v4150
      %v5185 = vsel %vm1716, %v2902, %v4152
      %v5189 = vsel %vm1716, %v2903, %v4154
      %v5193 = vsel %vm1716, %v2904, %v4156
      %v5197 = vsel %vm1716, %v2905, %v4158
      %v5201 = vsel %vm1716, %v2906, %v4160
      %v5205 = vsel %vm1716, %v2907, %v4162
      %v5209 = vsel %vm1716, %v2908, %v4164
      %v5213 = vsel %vm1716, %v2909, %v4166
      %v5217 = vsel %vm1716, %v2910, %v4168
      %v5221 = vsel %vm1716, %v2911, %v4170
      %v5225 = vsel %vm1716, %v2912, %v4172
      %v5229 = vsel %vm1716, %v2913, %v4174
      %v5233 = vsel %vm1716, %v2914, %v4176
      %v5237 = vsel %vm1716, %v2915, %v4178
      %v5241 = vsel %vm1716, %v2916, %v4180
      %v5245 = vsel %vm1716, %v2917, %v4182
      %v5249 = vsel %vm1716, %v2918, %v4184
      %v5253 = vsel %vm1716, %v2919, %v4186
      %v5257 = vsel %vm1716, %v2920, %v4188
      %v5261 = vsel %vm1716, %v2921, %v4190
      %v5265 = vsel %vm1716, %v2922, %v4192
      %v5269 = vsel %vm1716, %v2923, %v4194
      %v5273 = vsel %vm1716, %v2924, %v4196
      %v5277 = vsel %vm1716, %v2925, %v4198
      %v5281 = vsel %vm1716, %v2926, %v4200
      %v5285 = vsel %vm1716, %v2927, %v4202
      %v5289 = vsel %vm1716, %v2928, %v4204
      %v5293 = vsel %vm1716, %v2929, %v4206
      %v5297 = vsel %vm1716, %v2930, %v4208
      %v5301 = vsel %vm1716, %v2931, %v4210
      %v5305 = vsel %vm1716, %v2932, %v4212
      %v5309 = vsel %vm1716, %v2933, %v4214
      %v5313 = vsel %vm1716, %v2934, %v4216
      %v5317 = vsel %vm1716, %v2935, %v4218
      %v5321 = vsel %vm1716, %v2936, %v4220
      %v5325 = vsel %vm1716, %v2937, %v4222
      %v5329 = vsel %vm1716, %v2938, %v4224
      %v5333 = vsel %vm1716, %v2939, %v4226
      %v5337 = vsel %vm1716, %v2940, %v4228
      %v5341 = vsel %vm1716, %v2941, %v4230
      %v5345 = vsel %vm1716, %v2942, %v4232
      %v5349 = vsel %vm1716, %v2943, %v4234
      %v5353 = vsel %vm1716, %v2944, %v4236
      %v5357 = vsel %vm1716, %v2945, %v4238
      %v5361 = vsel %vm1716, %v2946, %v4240
      %v5365 = vsel %vm1716, %v2947, %v4242
      %v5369 = vsel %vm1716, %v2948, %v4244
      %v5373 = vsel %vm1716, %v2949, %v4246
      %v5377 = vsel %vm1716, %v2950, %v4248
      %v5381 = vsel %vm1716, %v2951, %v4250
      %v5385 = vsel %vm1716, %v2952, %v4252
      %v5389 = vsel %vm1716, %v2953, %v4254
      %v5393 = vsel %vm1716, %v2954, %v4256
      %v5397 = vsel %vm1716, %v2955, %v4258
      %v5401 = vsel %vm1716, %v2956, %v4260
      %v5405 = vsel %vm1716, %v2957, %v4262
      %v5409 = vsel %vm1716, %v2958, %v4264
      %v5413 = vsel %vm1716, %v2959, %v4266
      %v5417 = vsel %vm1716, %v2960, %v4268
      %v5421 = vsel %vm1716, %v2961, %v4270
      %v5425 = vsel %vm1716, %v2962, %v4272
      %v5429 = vsel %vm1716, %v2963, %v4274
      %v5433 = vsel %vm1716, %v2964, %v4276
      %v5437 = vsel %vm1716, %v2965, %v4278
      %v5441 = vsel %vm1716, %v2966, %v4280
      %v5445 = vsel %vm1716, %v2972, %v4282
      %v5449 = vsel %vm1716, %v2973, %v4284
      %v5453 = vsel %vm1716, %v2974, %v4286
      %v5455 = vld [vmem:[%s3] sm:$0xf]
      %v5456 = vld [vmem:[%s3 + $0x4] sm:$0xf]
      %v5457 = vld [vmem:[%s3 + $0x8] sm:$0xf]
      %v5458 = vld [vmem:[%s3 + $0xc] sm:$0xf]
      %v5459 = vld [vmem:[%s3 + $0x10] sm:$0xf]
      %v5460 = vld [vmem:[%s3 + $0x14] sm:$0xf]
      %v5461 = vld [vmem:[%s3 + $0x18] sm:$0xf]
      %v5462 = vld [vmem:[%s3 + $0x1c] sm:$0xf]
      %v5463 = vld [vmem:[%s3 + $0x20] sm:$0xf]
      %v5464 = vld [vmem:[%s3 + $0x24] sm:$0xf]
      %v5465 = vld [vmem:[%s3 + $0x28] sm:$0xf]
      %v5466 = vld [vmem:[%s3 + $0x2c] sm:$0xf]
      %v5467 = vld [vmem:[%s3 + $0x30] sm:$0xf]
      %v5468 = vld [vmem:[%s3 + $0x34] sm:$0xf]
      %v5469 = vld [vmem:[%s3 + $0x38] sm:$0xf]
      %v5470 = vld [vmem:[%s3 + $0x3c] sm:$0xf]
      %v5471 = vld [vmem:[%s3 + $0x40] sm:$0xf]
      %v5472 = vld [vmem:[%s3 + $0x44] sm:$0xf]
      %v5473 = vld [vmem:[%s3 + $0x48] sm:$0xf]
      %v5474 = vld [vmem:[%s3 + $0x4c] sm:$0xf]
      %v5475 = vld [vmem:[%s3 + $0x50] sm:$0xf]
      %v5476 = vld [vmem:[%s3 + $0x54] sm:$0xf]
      %v5477 = vld [vmem:[%s3 + $0x58] sm:$0xf]
      %v5478 = vld [vmem:[%s3 + $0x5c] sm:$0xf]
      %v5479 = vld [vmem:[%s3 + $0x60] sm:$0xf]
      %v5480 = vld [vmem:[%s3 + $0x64] sm:$0xf]
      %v5481 = vld [vmem:[%s3 + $0x68] sm:$0xf]
      %v5482 = vld [vmem:[%s3 + $0x6c] sm:$0xf]
      %v5483 = vld [vmem:[%s3 + $0x70] sm:$0xf]
      %v5484 = vld [vmem:[%s3 + $0x74] sm:$0xf]
      %v5485 = vld [vmem:[%s3 + $0x78] sm:$0xf]
      %v5486 = vld [vmem:[%s3 + $0x7c] sm:$0xf]
      %v5487 = vld [vmem:[%s3 + $0x80] sm:$0xf]
      %v5488 = vld [vmem:[%s3 + $0x84] sm:$0xf]
      %v5489 = vld [vmem:[%s3 + $0x88] sm:$0xf]
      %v5490 = vld [vmem:[%s3 + $0x8c] sm:$0xf]
      %v5491 = vld [vmem:[%s3 + $0x90] sm:$0xf]
      %v5492 = vld [vmem:[%s3 + $0x94] sm:$0xf]
      %v5493 = vld [vmem:[%s3 + $0x98] sm:$0xf]
      %v5494 = vld [vmem:[%s3 + $0x9c] sm:$0xf]
      %v5495 = vld [vmem:[%s3 + $0xa0] sm:$0xf]
      %v5496 = vld [vmem:[%s3 + $0xa4] sm:$0xf]
      %v5497 = vld [vmem:[%s3 + $0xa8] sm:$0xf]
      %v5498 = vld [vmem:[%s3 + $0xac] sm:$0xf]
      %v5499 = vld [vmem:[%s3 + $0xb0] sm:$0xf]
      %v5500 = vld [vmem:[%s3 + $0xb4] sm:$0xf]
      %v5501 = vld [vmem:[%s3 + $0xb8] sm:$0xf]
      %v5502 = vld [vmem:[%s3 + $0xbc] sm:$0xf]
      %v5503 = vld [vmem:[%s3 + $0xc0] sm:$0xf]
      %v5504 = vld [vmem:[%s3 + $0xc4] sm:$0xf]
      %v5505 = vld [vmem:[%s3 + $0xc8] sm:$0xf]
      %v5506 = vld [vmem:[%s3 + $0xcc] sm:$0xf]
      %v5507 = vld [vmem:[%s3 + $0xd0] sm:$0xf]
      %v5508 = vld [vmem:[%s3 + $0xd4] sm:$0xf]
      %v5509 = vld [vmem:[%s3 + $0xd8] sm:$0xf]
      %v5510 = vld [vmem:[%s3 + $0xdc] sm:$0xf]
      %v5511 = vld [vmem:[%s3 + $0xe0] sm:$0xf]
      %v5512 = vld [vmem:[%s3 + $0xe4] sm:$0xf]
      %v5513 = vld [vmem:[%s3 + $0xe8] sm:$0xf]
      %v5514 = vld [vmem:[%s3 + $0xec] sm:$0xf]
      %v5515 = vld [vmem:[%s3 + $0xf0] sm:$0xf]
      %v5516 = vld [vmem:[%s3 + $0xf4] sm:$0xf]
      %v5517 = vld [vmem:[%s3 + $0xf8] sm:$0xf]
      %v5518 = vld [vmem:[%s3 + $0xfc] sm:$0xf]
      %v5519 = vld [vmem:[%s3 + $0x100] sm:$0xf]
      %v5520 = vld [vmem:[%s3 + $0x104] sm:$0xf]
      %v5521 = vld [vmem:[%s3 + $0x108] sm:$0xf]
      %v5522 = vld [vmem:[%s3 + $0x10c] sm:$0xf]
      %v5523 = vld [vmem:[%s3 + $0x110] sm:$0xf]
      %v5524 = vld [vmem:[%s3 + $0x114] sm:$0xf]
      %v5525 = vld [vmem:[%s3 + $0x118] sm:$0xf]
      %v5526 = vld [vmem:[%s3 + $0x11c] sm:$0xf]
      %v5527 = vld [vmem:[%s4] sm:$0x1]
      %v5529 = vlaneseq
      %v5530 = vshrl.u32 %v5529, 7
      %v5531 = vsub.s32 0, %v5530
      %v5532 = vrot.slane %v5527, %v5531
      %v5606 = vunpack.c.l.b16 %v5455
      %v5607 = vunpack.c.l.b16 %v5456
      %v5608 = vunpack.c.l.b16 %v5457
      %v5609 = vunpack.c.l.b16 %v5458
      %v5610 = vunpack.c.l.b16 %v5459
      %v5611 = vunpack.c.l.b16 %v5460
      %v5612 = vunpack.c.l.b16 %v5461
      %v5613 = vunpack.c.l.b16 %v5462
      %v5614 = vunpack.c.l.b16 %v5463
      %v5615 = vunpack.c.l.b16 %v5464
      %v5616 = vunpack.c.l.b16 %v5465
      %v5617 = vunpack.c.l.b16 %v5466
      %v5618 = vunpack.c.l.b16 %v5467
      %v5619 = vunpack.c.l.b16 %v5468
      %v5620 = vunpack.c.l.b16 %v5469
      %v5621 = vunpack.c.l.b16 %v5470
      %v5622 = vunpack.c.l.b16 %v5471
      %v5623 = vunpack.c.l.b16 %v5472
      %v5624 = vunpack.c.l.b16 %v5473
      %v5625 = vunpack.c.l.b16 %v5474
      %v5626 = vunpack.c.l.b16 %v5475
      %v5627 = vunpack.c.l.b16 %v5476
      %v5628 = vunpack.c.l.b16 %v5477
      %v5629 = vunpack.c.l.b16 %v5478
      %v5630 = vunpack.c.l.b16 %v5479
      %v5631 = vunpack.c.l.b16 %v5480
      %v5632 = vunpack.c.l.b16 %v5481
      %v5633 = vunpack.c.l.b16 %v5482
      %v5634 = vunpack.c.l.b16 %v5483
      %v5635 = vunpack.c.l.b16 %v5484
      %v5636 = vunpack.c.l.b16 %v5485
      %v5637 = vunpack.c.l.b16 %v5486
      %v5638 = vunpack.c.l.b16 %v5487
      %v5639 = vunpack.c.l.b16 %v5488
      %v5640 = vunpack.c.l.b16 %v5489
      %v5641 = vunpack.c.l.b16 %v5490
      %v5642 = vunpack.c.l.b16 %v5491
      %v5643 = vunpack.c.l.b16 %v5492
      %v5644 = vunpack.c.l.b16 %v5493
      %v5645 = vunpack.c.l.b16 %v5494
      %v5646 = vunpack.c.l.b16 %v5495
      %v5647 = vunpack.c.l.b16 %v5496
      %v5648 = vunpack.c.l.b16 %v5497
      %v5649 = vunpack.c.l.b16 %v5498
      %v5650 = vunpack.c.l.b16 %v5499
      %v5651 = vunpack.c.l.b16 %v5500
      %v5652 = vunpack.c.l.b16 %v5501
      %v5653 = vunpack.c.l.b16 %v5502
      %v5654 = vunpack.c.l.b16 %v5503
      %v5655 = vunpack.c.l.b16 %v5504
      %v5656 = vunpack.c.l.b16 %v5505
      %v5657 = vunpack.c.l.b16 %v5506
      %v5658 = vunpack.c.l.b16 %v5507
      %v5659 = vunpack.c.l.b16 %v5508
      %v5660 = vunpack.c.l.b16 %v5509
      %v5661 = vunpack.c.l.b16 %v5510
      %v5662 = vunpack.c.l.b16 %v5511
      %v5663 = vunpack.c.l.b16 %v5512
      %v5664 = vunpack.c.l.b16 %v5513
      %v5665 = vunpack.c.l.b16 %v5514
      %v5666 = vunpack.c.l.b16 %v5515
      %v5667 = vunpack.c.l.b16 %v5516
      %v5668 = vunpack.c.l.b16 %v5517
      %v5669 = vunpack.c.l.b16 %v5518
      %v5670 = vunpack.c.l.b16 %v5519
      %v5671 = vunpack.c.l.b16 %v5520
      %v5672 = vunpack.c.l.b16 %v5521
      %v5673 = vunpack.c.l.b16 %v5522
      %v5674 = vunpack.c.l.b16 %v5523
      %v5675 = vunpack.c.l.b16 %v5524
      %v5676 = vunpack.c.l.b16 %v5525
      %v5677 = vunpack.c.l.b16 %v5526
      %v5678 = vpack.c.b16 %v5607, %v5606
      %v5679 = vpack.c.b16 %v5609, %v5608
      %v5680 = vpack.c.b16 %v5611, %v5610
      %v5681 = vpack.c.b16 %v5613, %v5612
      %v5682 = vpack.c.b16 %v5615, %v5614
      %v5683 = vpack.c.b16 %v5617, %v5616
      %v5684 = vpack.c.b16 %v5619, %v5618
      %v5685 = vpack.c.b16 %v5621, %v5620
      %v5686 = vpack.c.b16 %v5623, %v5622
      %v5687 = vpack.c.b16 %v5625, %v5624
      %v5688 = vpack.c.b16 %v5627, %v5626
      %v5689 = vpack.c.b16 %v5629, %v5628
      %v5690 = vpack.c.b16 %v5631, %v5630
      %v5691 = vpack.c.b16 %v5633, %v5632
      %v5692 = vpack.c.b16 %v5635, %v5634
      %v5693 = vpack.c.b16 %v5637, %v5636
      %v5694 = vpack.c.b16 %v5639, %v5638
      %v5695 = vpack.c.b16 %v5641, %v5640
      %v5696 = vpack.c.b16 %v5643, %v5642
      %v5697 = vpack.c.b16 %v5645, %v5644
      %v5698 = vpack.c.b16 %v5647, %v5646
      %v5699 = vpack.c.b16 %v5649, %v5648
      %v5700 = vpack.c.b16 %v5651, %v5650
      %v5701 = vpack.c.b16 %v5653, %v5652
      %v5702 = vpack.c.b16 %v5655, %v5654
      %v5703 = vpack.c.b16 %v5657, %v5656
      %v5704 = vpack.c.b16 %v5659, %v5658
      %v5705 = vpack.c.b16 %v5661, %v5660
      %v5706 = vpack.c.b16 %v5663, %v5662
      %v5707 = vpack.c.b16 %v5665, %v5664
      %v5708 = vpack.c.b16 %v5667, %v5666
      %v5709 = vpack.c.b16 %v5669, %v5668
      %v5710 = vpack.c.b16 %v5671, %v5670
      %v5711 = vpack.c.b16 %v5673, %v5672
      %v5712 = vpack.c.b16 %v5675, %v5674
      %v5713 = vpack.c.b16 %v5677, %v5676
      %v5751 = vsel %vm1716, %v3338, 0
      %v5754 = vsel %vm1716, %v3339, 0
      %v5757 = vsel %vm1716, %v3340, 0
      %v5760 = vsel %vm1716, %v3341, 0
      %v5763 = vsel %vm1716, %v3342, 0
      %v5766 = vsel %vm1716, %v3343, 0
      %v5769 = vsel %vm1716, %v3344, 0
      %v5772 = vsel %vm1716, %v3345, 0
      %v5775 = vsel %vm1716, %v3346, 0
      %v5778 = vsel %vm1716, %v3347, 0
      %v5781 = vsel %vm1716, %v3348, 0
      %v5784 = vsel %vm1716, %v3349, 0
      %v5787 = vsel %vm1716, %v3350, 0
      %v5790 = vsel %vm1716, %v3351, 0
      %v5793 = vsel %vm1716, %v3352, 0
      %v5796 = vsel %vm1716, %v3353, 0
      %v5799 = vsel %vm1716, %v3354, 0
      %v5802 = vsel %vm1716, %v3355, 0
      %v5805 = vsel %vm1716, %v3356, 0
      %v5808 = vsel %vm1716, %v3357, 0
      %v5811 = vsel %vm1716, %v3358, 0
      %v5814 = vsel %vm1716, %v3359, 0
      %v5817 = vsel %vm1716, %v3360, 0
      %v5820 = vsel %vm1716, %v3361, 0
      %v5823 = vsel %vm1716, %v3362, 0
      %v5826 = vsel %vm1716, %v3363, 0
      %v5829 = vsel %vm1716, %v3364, 0
      %v5832 = vsel %vm1716, %v3365, 0
      %v5835 = vsel %vm1716, %v3366, 0
      %v5838 = vsel %vm1716, %v3367, 0
      %v5841 = vsel %vm1716, %v3368, 0
      %v5844 = vsel %vm1716, %v3369, 0
      %v5847 = vsel %vm1716, %v3370, 0
      %v5850 = vsel %vm1716, %v3371, 0
      %v5853 = vsel %vm1716, %v3372, 0
      %v5856 = vsel %vm1716, %v3373, 0
      %v5859 = vsel %vm1716, %v3374, 0
      %v5862 = vsel %vm1716, %v3375, 0
      %v5865 = vsel %vm1716, %v3376, 0
      %v5868 = vsel %vm1716, %v3377, 0
      %v5871 = vsel %vm1716, %v3378, 0
      %v5874 = vsel %vm1716, %v3379, 0
      %v5877 = vsel %vm1716, %v3380, 0
      %v5880 = vsel %vm1716, %v3381, 0
      %v5883 = vsel %vm1716, %v3382, 0
      %v5886 = vsel %vm1716, %v3383, 0
      %v5889 = vsel %vm1716, %v3384, 0
      %v5892 = vsel %vm1716, %v3385, 0
      %v5895 = vsel %vm1716, %v3386, 0
      %v5898 = vsel %vm1716, %v3387, 0
      %v5901 = vsel %vm1716, %v3388, 0
      %v5904 = vsel %vm1716, %v3389, 0
      %v5907 = vsel %vm1716, %v3390, 0
      %v5910 = vsel %vm1716, %v3391, 0
      %v5913 = vsel %vm1716, %v3392, 0
      %v5916 = vsel %vm1716, %v3393, 0
      %v5919 = vsel %vm1716, %v3394, 0
      %v5922 = vsel %vm1716, %v3395, 0
      %v5925 = vsel %vm1716, %v3396, 0
      %v5928 = vsel %vm1716, %v3397, 0
      %v5931 = vsel %vm1716, %v3398, 0
      %v5934 = vsel %vm1716, %v3399, 0
      %v5937 = vsel %vm1716, %v3400, 0
      %v5940 = vsel %vm1716, %v3401, 0
      %v5943 = vsel %vm1716, %v3402, 0
      %v5946 = vsel %vm1716, %v3403, 0
      %v5949 = vsel %vm1716, %v3404, 0
      %v5952 = vsel %vm1716, %v3405, 0
      %v5955 = vsel %vm1716, %v3406, 0
      %v5958 = vsel %vm1716, %v3407, 0
      %v5961 = vsel %vm1716, %v3408, 0
      %v5964 = vsel %vm1716, %v3409, 0
      %v5967 = vsel %vm1716, %v3410, 0
      %5969 = vmatprep.subr.bf16.mxu0 0
      %5970 = vmatpush1.bf16.msra.mxu0 %v5678
      %5971 = vmatprep.subr.bf16.mxu0 0
      %5972 = vmatpush1.bf16.msra.mxu0 %v5679
      %5973 = vmatprep.subr.bf16.mxu0 0
      %5974 = vmatpush1.bf16.msra.mxu0 %v5680
      %5975 = vmatprep.subr.bf16.mxu0 0
      %5976 = vmatpush1.bf16.msra.mxu0 %v5681
      %5977 = vmatprep.subr.bf16.mxu0 0
      %5978 = vmatpush1.bf16.msra.mxu0 %v5682
      %5979 = vmatprep.subr.bf16.mxu0 0
      %5980 = vmatpush1.bf16.msra.mxu0 %v5683
      %5981 = vmatprep.subr.bf16.mxu0 0
      %5982 = vmatpush1.bf16.msra.mxu0 %v5684
      %5983 = vmatprep.subr.bf16.mxu0 0
      %5984 = vmatpush1.bf16.msra.mxu0 %v5685
      %5985 = vmatprep.subr.bf16.mxu0 0
      %5986 = vmatpush1.bf16.msra.mxu0 %v5686
      %5987 = vmatprep.subr.bf16.mxu0 0
      %5988 = vmatpush1.bf16.msra.mxu0 %v5687
      %5989 = vmatprep.subr.bf16.mxu0 0
      %5990 = vmatpush1.bf16.msra.mxu0 %v5688
      %5991 = vmatprep.subr.bf16.mxu0 0
      %5992 = vmatpush1.bf16.msra.mxu0 %v5689
      %5993 = vmatprep.subr.bf16.mxu0 0
      %5994 = vmatpush1.bf16.msra.mxu0 %v5690
      %5995 = vmatprep.subr.bf16.mxu0 0
      %5996 = vmatpush1.bf16.msra.mxu0 %v5691
      %5997 = vmatprep.subr.bf16.mxu0 0
      %5998 = vmatpush1.bf16.msra.mxu0 %v5692
      %5999 = vmatprep.subr.bf16.mxu0 0
      %6000 = vmatpush1.bf16.msra.mxu0 %v5693
      %6001 = vmatprep.mubr.bf16.mxu0 %v4581
      %6002 = vmatmul.mubr.bf16.gmra.mrb[0].mxu0 %v4289
      %v6003 = vpop.f32.mrb[0].mxu0
      %v6004 = vadd.f32 %v5532, %v6003
      %v6005 = vpop.f32.mrb[0].mxu0
      %v6006 = vpop.f32.mrb[0].mxu0
      %v6007 = vadd.f32 %v5532, %v6006
      %v6008 = vpop.f32.mrb[0].mxu0
      %6009 = vmatprep.mubr.bf16.mxu0 %v4585
      %6010 = vmatmul.mubr.bf16.gmra.mrb[0].mxu0 %v4293
      %v6011 = vpop.f32.mrb[0].mxu0
      %v6012 = vadd.f32 %v5532, %v6011
      %v6013 = vpop.f32.mrb[0].mxu0
      %v6014 = vpop.f32.mrb[0].mxu0
      %v6015 = vadd.f32 %v5532, %v6014
      %v6016 = vpop.f32.mrb[0].mxu0
      %6017 = vmatprep.mubr.bf16.mxu0 %v4589
      %6018 = vmatmul.mubr.bf16.gmra.mrb[0].mxu0 %v4297
      %v6019 = vpop.f32.mrb[0].mxu0
      %v6020 = vadd.f32 %v5532, %v6019
      %v6021 = vpop.f32.mrb[0].mxu0
      %v6022 = vpop.f32.mrb[0].mxu0
      %v6023 = vadd.f32 %v5532, %v6022
      %v6024 = vpop.f32.mrb[0].mxu0
      %6025 = vmatprep.mubr.bf16.mxu0 %v4593
      %6026 = vmatmul.mubr.bf16.gmra.mrb[0].mxu0 %v4301
      %v6027 = vpop.f32.mrb[0].mxu0
      %v6028 = vadd.f32 %v5532, %v6027
      %v6029 = vpop.f32.mrb[0].mxu0
      %v6030 = vpop.f32.mrb[0].mxu0
      %v6031 = vadd.f32 %v5532, %v6030
      %v6032 = vpop.f32.mrb[0].mxu0
      %6033 = vmatprep.mubr.bf16.mxu0 %v4597
      %6034 = vmatmul.mubr.bf16.gmra.mrb[0].mxu0 %v4305
      %v6035 = vpop.f32.mrb[0].mxu0
      %v6036 = vadd.f32 %v5532, %v6035
      %v6037 = vpop.f32.mrb[0].mxu0
      %v6038 = vpop.f32.mrb[0].mxu0
      %v6039 = vadd.f32 %v5532, %v6038
      %v6040 = vpop.f32.mrb[0].mxu0
      %6041 = vmatprep.mubr.bf16.mxu0 %v4601
      %6042 = vmatmul.mubr.bf16.gmra.mrb[0].mxu0 %v4309
      %v6043 = vpop.f32.mrb[0].mxu0
      %v6044 = vadd.f32 %v5532, %v6043
      %v6045 = vpop.f32.mrb[0].mxu0
      %v6046 = vpop.f32.mrb[0].mxu0
      %v6047 = vadd.f32 %v5532, %v6046
      %v6048 = vpop.f32.mrb[0].mxu0
      %6049 = vmatprep.mubr.bf16.mxu0 %v4605
      %6050 = vmatmul.mubr.bf16.gmra.mrb[0].mxu0 %v4313
      %v6051 = vpop.f32.mrb[0].mxu0
      %v6052 = vadd.f32 %v5532, %v6051
      %v6053 = vpop.f32.mrb[0].mxu0
      %v6054 = vpop.f32.mrb[0].mxu0
      %v6055 = vadd.f32 %v5532, %v6054
      %v6056 = vpop.f32.mrb[0].mxu0
      %6057 = vmatprep.mubr.bf16.mxu0 %v4609
      %6058 = vmatmul.mubr.bf16.gmra.mrb[0].mxu0 %v4317
      %v6059 = vpop.f32.mrb[0].mxu0
      %v6060 = vadd.f32 %v5532, %v6059
      %v6061 = vpop.f32.mrb[0].mxu0
      %v6062 = vpop.f32.mrb[0].mxu0
      %v6063 = vadd.f32 %v5532, %v6062
      %v6064 = vpop.f32.mrb[0].mxu0
      %6065 = vmatprep.mubr.bf16.mxu0 %v4613
      %6066 = vmatmul.mubr.bf16.gmra.mrb[0].mxu0 %v4321
      %v6067 = vpop.f32.mrb[0].mxu0
      %v6068 = vadd.f32 %v5532, %v6067
      %v6069 = vpop.f32.mrb[0].mxu0
      %v6070 = vpop.f32.mrb[0].mxu0
      %v6071 = vadd.f32 %v5532, %v6070
      %v6072 = vpop.f32.mrb[0].mxu0
      %6073 = vmatprep.mubr.bf16.mxu0 %v4617
      %6074 = vmatmul.mubr.bf16.gmra.mrb[0].mxu0 %v4325
      %v6075 = vpop.f32.mrb[0].mxu0
      %v6076 = vadd.f32 %v5532, %v6075
      %v6077 = vpop.f32.mrb[0].mxu0
      %v6078 = vpop.f32.mrb[0].mxu0
      %v6079 = vadd.f32 %v5532, %v6078
      %v6080 = vpop.f32.mrb[0].mxu0
      %6081 = vmatprep.mubr.bf16.mxu0 %v4621
      %6082 = vmatmul.mubr.bf16.gmra.mrb[0].mxu0 %v4329
      %v6083 = vpop.f32.mrb[0].mxu0
      %v6084 = vadd.f32 %v5532, %v6083
      %v6085 = vpop.f32.mrb[0].mxu0
      %v6086 = vpop.f32.mrb[0].mxu0
      %v6087 = vadd.f32 %v5532, %v6086
      %v6088 = vpop.f32.mrb[0].mxu0
      %6089 = vmatprep.mubr.bf16.mxu0 %v4625
      %6090 = vmatmul.mubr.bf16.gmra.mrb[0].mxu0 %v4333
      %v6091 = vpop.f32.mrb[0].mxu0
      %v6092 = vadd.f32 %v5532, %v6091
      %v6093 = vpop.f32.mrb[0].mxu0
      %v6094 = vpop.f32.mrb[0].mxu0
      %v6095 = vadd.f32 %v5532, %v6094
      %v6096 = vpop.f32.mrb[0].mxu0
      %6097 = vmatprep.mubr.bf16.mxu0 %v4629
      %6098 = vmatmul.mubr.bf16.gmra.mrb[0].mxu0 %v4337
      %v6099 = vpop.f32.mrb[0].mxu0
      %v6100 = vadd.f32 %v5532, %v6099
      %v6101 = vpop.f32.mrb[0].mxu0
      %v6102 = vpop.f32.mrb[0].mxu0
      %v6103 = vadd.f32 %v5532, %v6102
      %v6104 = vpop.f32.mrb[0].mxu0
      %6105 = vmatprep.mubr.bf16.mxu0 %v4633
      %6106 = vmatmul.mubr.bf16.gmra.mrb[0].mxu0 %v4341
      %v6107 = vpop.f32.mrb[0].mxu0
      %v6108 = vadd.f32 %v5532, %v6107
      %v6109 = vpop.f32.mrb[0].mxu0
      %v6110 = vpop.f32.mrb[0].mxu0
      %v6111 = vadd.f32 %v5532, %v6110
      %v6112 = vpop.f32.mrb[0].mxu0
      %6113 = vmatprep.mubr.bf16.mxu0 %v4637
      %6114 = vmatmul.mubr.bf16.gmra.mrb[0].mxu0 %v4345
      %v6115 = vpop.f32.mrb[0].mxu0
      %v6116 = vadd.f32 %v5532, %v6115
      %v6117 = vpop.f32.mrb[0].mxu0
      %v6118 = vpop.f32.mrb[0].mxu0
      %v6119 = vadd.f32 %v5532, %v6118
      %v6120 = vpop.f32.mrb[0].mxu0
      %6121 = vmatprep.mubr.bf16.mxu0 %v4641
      %6122 = vmatmul.mubr.bf16.gmra.mrb[0].mxu0 %v4349
      %v6123 = vpop.f32.mrb[0].mxu0
      %v6124 = vadd.f32 %v5532, %v6123
      %v6125 = vpop.f32.mrb[0].mxu0
      %v6126 = vpop.f32.mrb[0].mxu0
      %v6127 = vadd.f32 %v5532, %v6126
      %v6128 = vpop.f32.mrb[0].mxu0
      %6129 = vmatprep.mubr.bf16.mxu0 %v4645
      %6130 = vmatmul.mubr.bf16.gmra.mrb[0].mxu0 %v4353
      %v6131 = vpop.f32.mrb[0].mxu0
      %v6132 = vadd.f32 %v5532, %v6131
      %v6133 = vpop.f32.mrb[0].mxu0
      %v6134 = vpop.f32.mrb[0].mxu0
      %v6135 = vadd.f32 %v5532, %v6134
      %v6136 = vpop.f32.mrb[0].mxu0
      %6137 = vmatprep.mubr.bf16.mxu0 %v4649
      %6138 = vmatmul.mubr.bf16.gmra.mrb[0].mxu0 %v4357
      %v6139 = vpop.f32.mrb[0].mxu0
      %v6140 = vadd.f32 %v5532, %v6139
      %v6141 = vpop.f32.mrb[0].mxu0
      %v6142 = vpop.f32.mrb[0].mxu0
      %v6143 = vadd.f32 %v5532, %v6142
      %v6144 = vpop.f32.mrb[0].mxu0
      %6145 = vmatprep.mubr.bf16.mxu0 %v4653
      %6146 = vmatmul.mubr.bf16.gmra.mrb[0].mxu0 %v4361
      %v6147 = vpop.f32.mrb[0].mxu0
      %v6148 = vadd.f32 %v5532, %v6147
      %v6149 = vpop.f32.mrb[0].mxu0
      %v6150 = vpop.f32.mrb[0].mxu0
      %v6151 = vadd.f32 %v5532, %v6150
      %v6152 = vpop.f32.mrb[0].mxu0
      %6153 = vmatprep.mubr.bf16.mxu0 %v4657
      %6154 = vmatmul.mubr.bf16.gmra.mrb[0].mxu0 %v4365
      %v6155 = vpop.f32.mrb[0].mxu0
      %v6156 = vadd.f32 %v5532, %v6155
      %v6157 = vpop.f32.mrb[0].mxu0
      %v6158 = vpop.f32.mrb[0].mxu0
      %v6159 = vadd.f32 %v5532, %v6158
      %v6160 = vpop.f32.mrb[0].mxu0
      %6161 = vmatprep.mubr.bf16.mxu0 %v4661
      %6162 = vmatmul.mubr.bf16.gmra.mrb[0].mxu0 %v4369
      %v6163 = vpop.f32.mrb[0].mxu0
      %v6164 = vadd.f32 %v5532, %v6163
      %v6165 = vpop.f32.mrb[0].mxu0
      %v6166 = vpop.f32.mrb[0].mxu0
      %v6167 = vadd.f32 %v5532, %v6166
      %v6168 = vpop.f32.mrb[0].mxu0
      %6169 = vmatprep.mubr.bf16.mxu0 %v4665
      %6170 = vmatmul.mubr.bf16.gmra.mrb[0].mxu0 %v4373
      %v6171 = vpop.f32.mrb[0].mxu0
      %v6172 = vadd.f32 %v5532, %v6171
      %v6173 = vpop.f32.mrb[0].mxu0
      %v6174 = vpop.f32.mrb[0].mxu0
      %v6175 = vadd.f32 %v5532, %v6174
      %v6176 = vpop.f32.mrb[0].mxu0
      %6177 = vmatprep.mubr.bf16.mxu0 %v4669
      %6178 = vmatmul.mubr.bf16.gmra.mrb[0].mxu0 %v4377
      %v6179 = vpop.f32.mrb[0].mxu0
      %v6180 = vadd.f32 %v5532, %v6179
      %v6181 = vpop.f32.mrb[0].mxu0
      %v6182 = vpop.f32.mrb[0].mxu0
      %v6183 = vadd.f32 %v5532, %v6182
      %v6184 = vpop.f32.mrb[0].mxu0
      %6185 = vmatprep.mubr.bf16.mxu0 %v4673
      %6186 = vmatmul.mubr.bf16.gmra.mrb[0].mxu0 %v4381
      %v6187 = vpop.f32.mrb[0].mxu0
      %v6188 = vadd.f32 %v5532, %v6187
      %v6189 = vpop.f32.mrb[0].mxu0
      %v6190 = vpop.f32.mrb[0].mxu0
      %v6191 = vadd.f32 %v5532, %v6190
      %v6192 = vpop.f32.mrb[0].mxu0
      %6193 = vmatprep.mubr.bf16.mxu0 %v4677
      %6194 = vmatmul.mubr.bf16.gmra.mrb[0].mxu0 %v4385
      %v6195 = vpop.f32.mrb[0].mxu0
      %v6196 = vadd.f32 %v5532, %v6195
      %v6197 = vpop.f32.mrb[0].mxu0
      %v6198 = vpop.f32.mrb[0].mxu0
      %v6199 = vadd.f32 %v5532, %v6198
      %v6200 = vpop.f32.mrb[0].mxu0
      %6201 = vmatprep.mubr.bf16.mxu0 %v4681
      %6202 = vmatmul.mubr.bf16.gmra.mrb[0].mxu0 %v4389
      %v6203 = vpop.f32.mrb[0].mxu0
      %v6204 = vadd.f32 %v5532, %v6203
      %v6205 = vpop.f32.mrb[0].mxu0
      %v6206 = vpop.f32.mrb[0].mxu0
      %v6207 = vadd.f32 %v5532, %v6206
      %v6208 = vpop.f32.mrb[0].mxu0
      %6209 = vmatprep.mubr.bf16.mxu0 %v4685
      %6210 = vmatmul.mubr.bf16.gmra.mrb[0].mxu0 %v4393
      %v6211 = vpop.f32.mrb[0].mxu0
      %v6212 = vadd.f32 %v5532, %v6211
      %v6213 = vpop.f32.mrb[0].mxu0
      %v6214 = vpop.f32.mrb[0].mxu0
      %v6215 = vadd.f32 %v5532, %v6214
      %v6216 = vpop.f32.mrb[0].mxu0
      %6217 = vmatprep.mubr.bf16.mxu0 %v4689
      %6218 = vmatmul.mubr.bf16.gmra.mrb[0].mxu0 %v4397
      %v6219 = vpop.f32.mrb[0].mxu0
      %v6220 = vadd.f32 %v5532, %v6219
      %v6221 = vpop.f32.mrb[0].mxu0
      %v6222 = vpop.f32.mrb[0].mxu0
      %v6223 = vadd.f32 %v5532, %v6222
      %v6224 = vpop.f32.mrb[0].mxu0
      %6225 = vmatprep.mubr.bf16.mxu0 %v4693
      %6226 = vmatmul.mubr.bf16.gmra.mrb[0].mxu0 %v4401
      %v6227 = vpop.f32.mrb[0].mxu0
      %v6228 = vadd.f32 %v5532, %v6227
      %v6229 = vpop.f32.mrb[0].mxu0
      %v6230 = vpop.f32.mrb[0].mxu0
      %v6231 = vadd.f32 %v5532, %v6230
      %v6232 = vpop.f32.mrb[0].mxu0
      %6233 = vmatprep.mubr.bf16.mxu0 %v4697
      %6234 = vmatmul.mubr.bf16.gmra.mrb[0].mxu0 %v4405
      %v6235 = vpop.f32.mrb[0].mxu0
      %v6236 = vadd.f32 %v5532, %v6235
      %v6237 = vpop.f32.mrb[0].mxu0
      %v6238 = vpop.f32.mrb[0].mxu0
      %v6239 = vadd.f32 %v5532, %v6238
      %v6240 = vpop.f32.mrb[0].mxu0
      %6241 = vmatprep.mubr.bf16.mxu0 %v4701
      %6242 = vmatmul.mubr.bf16.gmra.mrb[0].mxu0 %v4409
      %v6243 = vpop.f32.mrb[0].mxu0
      %v6244 = vadd.f32 %v5532, %v6243
      %v6245 = vpop.f32.mrb[0].mxu0
      %v6246 = vpop.f32.mrb[0].mxu0
      %v6247 = vadd.f32 %v5532, %v6246
      %v6248 = vpop.f32.mrb[0].mxu0
      %6249 = vmatprep.mubr.bf16.mxu0 %v4705
      %6250 = vmatmul.mubr.bf16.gmra.mrb[0].mxu0 %v4413
      %v6251 = vpop.f32.mrb[0].mxu0
      %v6252 = vadd.f32 %v5532, %v6251
      %v6253 = vpop.f32.mrb[0].mxu0
      %v6254 = vpop.f32.mrb[0].mxu0
      %v6255 = vadd.f32 %v5532, %v6254
      %v6256 = vpop.f32.mrb[0].mxu0
      %6257 = vmatprep.mubr.bf16.mxu0 %v4709
      %6258 = vmatmul.mubr.bf16.gmra.mrb[0].mxu0 %v4417
      %v6259 = vpop.f32.mrb[0].mxu0
      %v6260 = vadd.f32 %v5532, %v6259
      %v6261 = vpop.f32.mrb[0].mxu0
      %v6262 = vpop.f32.mrb[0].mxu0
      %v6263 = vadd.f32 %v5532, %v6262
      %v6264 = vpop.f32.mrb[0].mxu0
      %6265 = vmatprep.mubr.bf16.mxu0 %v4713
      %6266 = vmatmul.mubr.bf16.gmra.mrb[0].mxu0 %v4421
      %v6267 = vpop.f32.mrb[0].mxu0
      %v6268 = vadd.f32 %v5532, %v6267
      %v6269 = vpop.f32.mrb[0].mxu0
      %v6270 = vpop.f32.mrb[0].mxu0
      %v6271 = vadd.f32 %v5532, %v6270
      %v6272 = vpop.f32.mrb[0].mxu0
      %6273 = vmatprep.mubr.bf16.mxu0 %v4717
      %6274 = vmatmul.mubr.bf16.gmra.mrb[0].mxu0 %v4425
      %v6275 = vpop.f32.mrb[0].mxu0
      %v6276 = vadd.f32 %v5532, %v6275
      %v6277 = vpop.f32.mrb[0].mxu0
      %v6278 = vpop.f32.mrb[0].mxu0
      %v6279 = vadd.f32 %v5532, %v6278
      %v6280 = vpop.f32.mrb[0].mxu0
      %6281 = vmatprep.mubr.bf16.mxu0 %v4721
      %6282 = vmatmul.mubr.bf16.gmra.mrb[0].mxu0 %v4429
      %v6283 = vpop.f32.mrb[0].mxu0
      %v6284 = vadd.f32 %v5532, %v6283
      %v6285 = vpop.f32.mrb[0].mxu0
      %v6286 = vpop.f32.mrb[0].mxu0
      %v6287 = vadd.f32 %v5532, %v6286
      %v6288 = vpop.f32.mrb[0].mxu0
      %6289 = vmatprep.mubr.bf16.mxu0 %v4725
      %6290 = vmatmul.mubr.bf16.gmra.mrb[0].mxu0 %v4433
      %v6291 = vpop.f32.mrb[0].mxu0
      %v6292 = vadd.f32 %v5532, %v6291
      %v6293 = vpop.f32.mrb[0].mxu0
      %v6294 = vpop.f32.mrb[0].mxu0
      %v6295 = vadd.f32 %v5532, %v6294
      %v6296 = vpop.f32.mrb[0].mxu0
      %6297 = vmatprep.mubr.bf16.mxu0 %v4729
      %6298 = vmatmul.mubr.bf16.gmra.mrb[0].mxu0 %v4437
      %v6299 = vpop.f32.mrb[0].mxu0
      %v6300 = vadd.f32 %v5532, %v6299
      %v6301 = vpop.f32.mrb[0].mxu0
      %v6302 = vpop.f32.mrb[0].mxu0
      %v6303 = vadd.f32 %v5532, %v6302
      %v6304 = vpop.f32.mrb[0].mxu0
      %6305 = vmatprep.mubr.bf16.mxu0 %v4733
      %6306 = vmatmul.mubr.bf16.gmra.mrb[0].mxu0 %v4441
      %v6307 = vpop.f32.mrb[0].mxu0
      %v6308 = vadd.f32 %v5532, %v6307
      %v6309 = vpop.f32.mrb[0].mxu0
      %v6310 = vpop.f32.mrb[0].mxu0
      %v6311 = vadd.f32 %v5532, %v6310
      %v6312 = vpop.f32.mrb[0].mxu0
      %6313 = vmatprep.mubr.bf16.mxu0 %v4737
      %6314 = vmatmul.mubr.bf16.gmra.mrb[0].mxu0 %v4445
      %v6315 = vpop.f32.mrb[0].mxu0
      %v6316 = vadd.f32 %v5532, %v6315
      %v6317 = vpop.f32.mrb[0].mxu0
      %v6318 = vpop.f32.mrb[0].mxu0
      %v6319 = vadd.f32 %v5532, %v6318
      %v6320 = vpop.f32.mrb[0].mxu0
      %6321 = vmatprep.mubr.bf16.mxu0 %v4741
      %6322 = vmatmul.mubr.bf16.gmra.mrb[0].mxu0 %v4449
      %v6323 = vpop.f32.mrb[0].mxu0
      %v6324 = vadd.f32 %v5532, %v6323
      %v6325 = vpop.f32.mrb[0].mxu0
      %v6326 = vpop.f32.mrb[0].mxu0
      %v6327 = vadd.f32 %v5532, %v6326
      %v6328 = vpop.f32.mrb[0].mxu0
      %6329 = vmatprep.mubr.bf16.mxu0 %v4745
      %6330 = vmatmul.mubr.bf16.gmra.mrb[0].mxu0 %v4453
      %v6331 = vpop.f32.mrb[0].mxu0
      %v6332 = vadd.f32 %v5532, %v6331
      %v6333 = vpop.f32.mrb[0].mxu0
      %v6334 = vpop.f32.mrb[0].mxu0
      %v6335 = vadd.f32 %v5532, %v6334
      %v6336 = vpop.f32.mrb[0].mxu0
      %6337 = vmatprep.mubr.bf16.mxu0 %v4749
      %6338 = vmatmul.mubr.bf16.gmra.mrb[0].mxu0 %v4457
      %v6339 = vpop.f32.mrb[0].mxu0
      %v6340 = vadd.f32 %v5532, %v6339
      %v6341 = vpop.f32.mrb[0].mxu0
      %v6342 = vpop.f32.mrb[0].mxu0
      %v6343 = vadd.f32 %v5532, %v6342
      %v6344 = vpop.f32.mrb[0].mxu0
      %6345 = vmatprep.mubr.bf16.mxu0 %v4753
      %6346 = vmatmul.mubr.bf16.gmra.mrb[0].mxu0 %v4461
      %v6347 = vpop.f32.mrb[0].mxu0
      %v6348 = vadd.f32 %v5532, %v6347
      %v6349 = vpop.f32.mrb[0].mxu0
      %v6350 = vpop.f32.mrb[0].mxu0
      %v6351 = vadd.f32 %v5532, %v6350
      %v6352 = vpop.f32.mrb[0].mxu0
      %6353 = vmatprep.mubr.bf16.mxu0 %v4757
      %6354 = vmatmul.mubr.bf16.gmra.mrb[0].mxu0 %v4465
      %v6355 = vpop.f32.mrb[0].mxu0
      %v6356 = vadd.f32 %v5532, %v6355
      %v6357 = vpop.f32.mrb[0].mxu0
      %v6358 = vpop.f32.mrb[0].mxu0
      %v6359 = vadd.f32 %v5532, %v6358
      %v6360 = vpop.f32.mrb[0].mxu0
      %6361 = vmatprep.mubr.bf16.mxu0 %v4761
      %6362 = vmatmul.mubr.bf16.gmra.mrb[0].mxu0 %v4469
      %v6363 = vpop.f32.mrb[0].mxu0
      %v6364 = vadd.f32 %v5532, %v6363
      %v6365 = vpop.f32.mrb[0].mxu0
      %v6366 = vpop.f32.mrb[0].mxu0
      %v6367 = vadd.f32 %v5532, %v6366
      %v6368 = vpop.f32.mrb[0].mxu0
      %6369 = vmatprep.mubr.bf16.mxu0 %v4765
      %6370 = vmatmul.mubr.bf16.gmra.mrb[0].mxu0 %v4473
      %v6371 = vpop.f32.mrb[0].mxu0
      %v6372 = vadd.f32 %v5532, %v6371
      %v6373 = vpop.f32.mrb[0].mxu0
      %v6374 = vpop.f32.mrb[0].mxu0
      %v6375 = vadd.f32 %v5532, %v6374
      %v6376 = vpop.f32.mrb[0].mxu0
      %6377 = vmatprep.mubr.bf16.mxu0 %v4769
      %6378 = vmatmul.mubr.bf16.gmra.mrb[0].mxu0 %v4477
      %v6379 = vpop.f32.mrb[0].mxu0
      %v6380 = vadd.f32 %v5532, %v6379
      %v6381 = vpop.f32.mrb[0].mxu0
      %v6382 = vpop.f32.mrb[0].mxu0
      %v6383 = vadd.f32 %v5532, %v6382
      %v6384 = vpop.f32.mrb[0].mxu0
      %6385 = vmatprep.mubr.bf16.mxu0 %v4773
      %6386 = vmatmul.mubr.bf16.gmra.mrb[0].mxu0 %v4481
      %v6387 = vpop.f32.mrb[0].mxu0
      %v6388 = vadd.f32 %v5532, %v6387
      %v6389 = vpop.f32.mrb[0].mxu0
      %v6390 = vpop.f32.mrb[0].mxu0
      %v6391 = vadd.f32 %v5532, %v6390
      %v6392 = vpop.f32.mrb[0].mxu0
      %6393 = vmatprep.mubr.bf16.mxu0 %v4777
      %6394 = vmatmul.mubr.bf16.gmra.mrb[0].mxu0 %v4485
      %v6395 = vpop.f32.mrb[0].mxu0
      %v6396 = vadd.f32 %v5532, %v6395
      %v6397 = vpop.f32.mrb[0].mxu0
      %v6398 = vpop.f32.mrb[0].mxu0
      %v6399 = vadd.f32 %v5532, %v6398
      %v6400 = vpop.f32.mrb[0].mxu0
      %6401 = vmatprep.mubr.bf16.mxu0 %v4781
      %6402 = vmatmul.mubr.bf16.gmra.mrb[0].mxu0 %v4489
      %v6403 = vpop.f32.mrb[0].mxu0
      %v6404 = vadd.f32 %v5532, %v6403
      %v6405 = vpop.f32.mrb[0].mxu0
      %v6406 = vpop.f32.mrb[0].mxu0
      %v6407 = vadd.f32 %v5532, %v6406
      %v6408 = vpop.f32.mrb[0].mxu0
      %6409 = vmatprep.mubr.bf16.mxu0 %v4785
      %6410 = vmatmul.mubr.bf16.gmra.mrb[0].mxu0 %v4493
      %v6411 = vpop.f32.mrb[0].mxu0
      %v6412 = vadd.f32 %v5532, %v6411
      %v6413 = vpop.f32.mrb[0].mxu0
      %v6414 = vpop.f32.mrb[0].mxu0
      %v6415 = vadd.f32 %v5532, %v6414
      %v6416 = vpop.f32.mrb[0].mxu0
      %6417 = vmatprep.mubr.bf16.mxu0 %v4789
      %6418 = vmatmul.mubr.bf16.gmra.mrb[0].mxu0 %v4497
      %v6419 = vpop.f32.mrb[0].mxu0
      %v6420 = vadd.f32 %v5532, %v6419
      %v6421 = vpop.f32.mrb[0].mxu0
      %v6422 = vpop.f32.mrb[0].mxu0
      %v6423 = vadd.f32 %v5532, %v6422
      %v6424 = vpop.f32.mrb[0].mxu0
      %6425 = vmatprep.mubr.bf16.mxu0 %v4793
      %6426 = vmatmul.mubr.bf16.gmra.mrb[0].mxu0 %v4501
      %v6427 = vpop.f32.mrb[0].mxu0
      %v6428 = vadd.f32 %v5532, %v6427
      %v6429 = vpop.f32.mrb[0].mxu0
      %v6430 = vpop.f32.mrb[0].mxu0
      %v6431 = vadd.f32 %v5532, %v6430
      %v6432 = vpop.f32.mrb[0].mxu0
      %6433 = vmatprep.mubr.bf16.mxu0 %v4797
      %6434 = vmatmul.mubr.bf16.gmra.mrb[0].mxu0 %v4505
      %v6435 = vpop.f32.mrb[0].mxu0
      %v6436 = vadd.f32 %v5532, %v6435
      %v6437 = vpop.f32.mrb[0].mxu0
      %v6438 = vpop.f32.mrb[0].mxu0
      %v6439 = vadd.f32 %v5532, %v6438
      %v6440 = vpop.f32.mrb[0].mxu0
      %6441 = vmatprep.mubr.bf16.mxu0 %v4801
      %6442 = vmatmul.mubr.bf16.gmra.mrb[0].mxu0 %v4509
      %v6443 = vpop.f32.mrb[0].mxu0
      %v6444 = vadd.f32 %v5532, %v6443
      %v6445 = vpop.f32.mrb[0].mxu0
      %v6446 = vpop.f32.mrb[0].mxu0
      %v6447 = vadd.f32 %v5532, %v6446
      %v6448 = vpop.f32.mrb[0].mxu0
      %6449 = vmatprep.mubr.bf16.mxu0 %v4805
      %6450 = vmatmul.mubr.bf16.gmra.mrb[0].mxu0 %v4513
      %v6451 = vpop.f32.mrb[0].mxu0
      %v6452 = vadd.f32 %v5532, %v6451
      %v6453 = vpop.f32.mrb[0].mxu0
      %v6454 = vpop.f32.mrb[0].mxu0
      %v6455 = vadd.f32 %v5532, %v6454
      %v6456 = vpop.f32.mrb[0].mxu0
      %6457 = vmatprep.mubr.bf16.mxu0 %v4809
      %6458 = vmatmul.mubr.bf16.gmra.mrb[0].mxu0 %v4517
      %v6459 = vpop.f32.mrb[0].mxu0
      %v6460 = vadd.f32 %v5532, %v6459
      %v6461 = vpop.f32.mrb[0].mxu0
      %v6462 = vpop.f32.mrb[0].mxu0
      %v6463 = vadd.f32 %v5532, %v6462
      %v6464 = vpop.f32.mrb[0].mxu0
      %6465 = vmatprep.mubr.bf16.mxu0 %v4813
      %6466 = vmatmul.mubr.bf16.gmra.mrb[0].mxu0 %v4521
      %v6467 = vpop.f32.mrb[0].mxu0
      %v6468 = vadd.f32 %v5532, %v6467
      %v6469 = vpop.f32.mrb[0].mxu0
      %v6470 = vpop.f32.mrb[0].mxu0
      %v6471 = vadd.f32 %v5532, %v6470
      %v6472 = vpop.f32.mrb[0].mxu0
      %6473 = vmatprep.mubr.bf16.mxu0 %v4817
      %6474 = vmatmul.mubr.bf16.gmra.mrb[0].mxu0 %v4525
      %v6475 = vpop.f32.mrb[0].mxu0
      %v6476 = vadd.f32 %v5532, %v6475
      %v6477 = vpop.f32.mrb[0].mxu0
      %v6478 = vpop.f32.mrb[0].mxu0
      %v6479 = vadd.f32 %v5532, %v6478
      %v6480 = vpop.f32.mrb[0].mxu0
      %6481 = vmatprep.mubr.bf16.mxu0 %v4821
      %6482 = vmatmul.mubr.bf16.gmra.mrb[0].mxu0 %v4529
      %v6483 = vpop.f32.mrb[0].mxu0
      %v6484 = vadd.f32 %v5532, %v6483
      %v6485 = vpop.f32.mrb[0].mxu0
      %v6486 = vpop.f32.mrb[0].mxu0
      %v6487 = vadd.f32 %v5532, %v6486
      %v6488 = vpop.f32.mrb[0].mxu0
      %6489 = vmatprep.mubr.bf16.mxu0 %v4825
      %6490 = vmatmul.mubr.bf16.gmra.mrb[0].mxu0 %v4533
      %v6491 = vpop.f32.mrb[0].mxu0
      %v6492 = vadd.f32 %v5532, %v6491
      %v6493 = vpop.f32.mrb[0].mxu0
      %v6494 = vpop.f32.mrb[0].mxu0
      %v6495 = vadd.f32 %v5532, %v6494
      %v6496 = vpop.f32.mrb[0].mxu0
      %6497 = vmatprep.mubr.bf16.mxu0 %v4829
      %6498 = vmatmul.mubr.bf16.gmra.mrb[0].mxu0 %v4537
      %v6499 = vpop.f32.mrb[0].mxu0
      %v6500 = vadd.f32 %v5532, %v6499
      %v6501 = vpop.f32.mrb[0].mxu0
      %v6502 = vpop.f32.mrb[0].mxu0
      %v6503 = vadd.f32 %v5532, %v6502
      %v6504 = vpop.f32.mrb[0].mxu0
      %6505 = vmatprep.mubr.bf16.mxu0 %v4833
      %6506 = vmatmul.mubr.bf16.gmra.mrb[0].mxu0 %v4541
      %v6507 = vpop.f32.mrb[0].mxu0
      %v6508 = vadd.f32 %v5532, %v6507
      %v6509 = vpop.f32.mrb[0].mxu0
      %v6510 = vpop.f32.mrb[0].mxu0
      %v6511 = vadd.f32 %v5532, %v6510
      %v6512 = vpop.f32.mrb[0].mxu0
      %6513 = vmatprep.mubr.bf16.mxu0 %v4837
      %6514 = vmatmul.mubr.bf16.gmra.mrb[0].mxu0 %v4545
      %v6515 = vpop.f32.mrb[0].mxu0
      %v6516 = vadd.f32 %v5532, %v6515
      %v6517 = vpop.f32.mrb[0].mxu0
      %v6518 = vpop.f32.mrb[0].mxu0
      %v6519 = vadd.f32 %v5532, %v6518
      %v6520 = vpop.f32.mrb[0].mxu0
      %6521 = vmatprep.mubr.bf16.mxu0 %v4841
      %6522 = vmatmul.mubr.bf16.gmra.mrb[0].mxu0 %v4549
      %v6523 = vpop.f32.mrb[0].mxu0
      %v6524 = vadd.f32 %v5532, %v6523
      %v6525 = vpop.f32.mrb[0].mxu0
      %v6526 = vpop.f32.mrb[0].mxu0
      %v6527 = vadd.f32 %v5532, %v6526
      %v6528 = vpop.f32.mrb[0].mxu0
      %6529 = vmatprep.mubr.bf16.mxu0 %v4845
      %6530 = vmatmul.mubr.bf16.gmra.mrb[0].mxu0 %v4553
      %v6531 = vpop.f32.mrb[0].mxu0
      %v6532 = vadd.f32 %v5532, %v6531
      %v6533 = vpop.f32.mrb[0].mxu0
      %v6534 = vpop.f32.mrb[0].mxu0
      %v6535 = vadd.f32 %v5532, %v6534
      %v6536 = vpop.f32.mrb[0].mxu0
      %6537 = vmatprep.mubr.bf16.mxu0 %v4849
      %6538 = vmatmul.mubr.bf16.gmra.mrb[0].mxu0 %v4557
      %v6539 = vpop.f32.mrb[0].mxu0
      %v6540 = vadd.f32 %v5532, %v6539
      %v6541 = vpop.f32.mrb[0].mxu0
      %v6542 = vpop.f32.mrb[0].mxu0
      %v6543 = vadd.f32 %v5532, %v6542
      %v6544 = vpop.f32.mrb[0].mxu0
      %6545 = vmatprep.mubr.bf16.mxu0 %v4853
      %6546 = vmatmul.mubr.bf16.gmra.mrb[0].mxu0 %v4561
      %v6547 = vpop.f32.mrb[0].mxu0
      %v6548 = vadd.f32 %v5532, %v6547
      %v6549 = vpop.f32.mrb[0].mxu0
      %v6550 = vpop.f32.mrb[0].mxu0
      %v6551 = vadd.f32 %v5532, %v6550
      %v6552 = vpop.f32.mrb[0].mxu0
      %6553 = vmatprep.mubr.bf16.mxu0 %v4857
      %6554 = vmatmul.mubr.bf16.gmra.mrb[0].mxu0 %v4565
      %v6555 = vpop.f32.mrb[0].mxu0
      %v6556 = vadd.f32 %v5532, %v6555
      %v6557 = vpop.f32.mrb[0].mxu0
      %v6558 = vpop.f32.mrb[0].mxu0
      %v6559 = vadd.f32 %v5532, %v6558
      %v6560 = vpop.f32.mrb[0].mxu0
      %6561 = vmatprep.mubr.bf16.mxu0 %v4861
      %6562 = vmatmul.mubr.bf16.gmra.mrb[0].mxu0 %v4569
      %v6563 = vpop.f32.mrb[0].mxu0
      %v6564 = vadd.f32 %v5532, %v6563
      %v6565 = vpop.f32.mrb[0].mxu0
      %v6566 = vpop.f32.mrb[0].mxu0
      %v6567 = vadd.f32 %v5532, %v6566
      %v6568 = vpop.f32.mrb[0].mxu0
      %6569 = vmatprep.mubr.bf16.mxu0 %v4865
      %6570 = vmatmul.mubr.bf16.gmra.mrb[0].mxu0 %v4573
      %v6571 = vpop.f32.mrb[0].mxu0
      %v6572 = vadd.f32 %v5532, %v6571
      %v6573 = vpop.f32.mrb[0].mxu0
      %v6574 = vpop.f32.mrb[0].mxu0
      %v6575 = vadd.f32 %v5532, %v6574
      %v6576 = vpop.f32.mrb[0].mxu0
      %6577 = vmatprep.mubr.bf16.mxu0 %v4869
      %6578 = vmatmul.mubr.bf16.gmra.mrb[0].mxu0 %v4577
      %v6579 = vpop.f32.mrb[0].mxu0
      %v6580 = vadd.f32 %v5532, %v6579
      %v6581 = vpop.f32.mrb[0].mxu0
      %v6582 = vpop.f32.mrb[0].mxu0
      %v6583 = vpop.f32.mrb[0].mxu0
      %6584 = vdwg.mxu0
      %6585 = vmatprep.subr.bf16.mxu0 0
      %6586 = vmatpush1.bf16.msra.mxu0 %v5694
      %6587 = vmatprep.subr.bf16.mxu0 0
      %6588 = vmatpush1.bf16.msra.mxu0 %v5695
      %6589 = vmatprep.subr.bf16.mxu0 0
      %6590 = vmatpush1.bf16.msra.mxu0 %v5696
      %6591 = vmatprep.subr.bf16.mxu0 0
      %6592 = vmatpush1.bf16.msra.mxu0 %v5697
      %6593 = vmatprep.subr.bf16.mxu0 0
      %6594 = vmatpush1.bf16.msra.mxu0 %v5698
      %6595 = vmatprep.subr.bf16.mxu0 0
      %6596 = vmatpush1.bf16.msra.mxu0 %v5699
      %6597 = vmatprep.subr.bf16.mxu0 0
      %6598 = vmatpush1.bf16.msra.mxu0 %v5700
      %6599 = vmatprep.subr.bf16.mxu0 0
      %6600 = vmatpush1.bf16.msra.mxu0 %v5701
      %6601 = vmatprep.subr.bf16.mxu0 0
      %6602 = vmatpush1.bf16.msra.mxu0 %v5702
      %6603 = vmatprep.subr.bf16.mxu0 0
      %6604 = vmatpush1.bf16.msra.mxu0 %v5703
      %6605 = vmatprep.subr.bf16.mxu0 0
      %6606 = vmatpush1.bf16.msra.mxu0 %v5704
      %6607 = vmatprep.subr.bf16.mxu0 0
      %6608 = vmatpush1.bf16.msra.mxu0 %v5705
      %6609 = vmatprep.subr.bf16.mxu0 0
      %6610 = vmatpush1.bf16.msra.mxu0 %v5706
      %6611 = vmatprep.subr.bf16.mxu0 0
      %6612 = vmatpush1.bf16.msra.mxu0 %v5707
      %6613 = vmatprep.subr.bf16.mxu0 0
      %6614 = vmatpush1.bf16.msra.mxu0 %v5708
      %6615 = vmatprep.subr.bf16.mxu0 0
      %6616 = vmatpush1.bf16.msra.mxu0 %v5709
      %6617 = vmatprep.mubr.bf16.mxu0 %v5165
      %6618 = vmatmul.mubr.bf16.gmra.mrb[0].mxu0 %v4873
      %v6619 = vpop.f32.mrb[0].mxu0
      %v6620 = vadd.f32 %v6004, %v6619
      %v6621 = vpop.f32.mrb[0].mxu0
      %v6622 = vpop.f32.mrb[0].mxu0
      %v6623 = vadd.f32 %v6007, %v6622
      %v6624 = vpop.f32.mrb[0].mxu0
      %6625 = vmatprep.mubr.bf16.mxu0 %v5169
      %6626 = vmatmul.mubr.bf16.gmra.mrb[0].mxu0 %v4877
      %v6627 = vpop.f32.mrb[0].mxu0
      %v6628 = vadd.f32 %v6012, %v6627
      %v6629 = vpop.f32.mrb[0].mxu0
      %v6630 = vpop.f32.mrb[0].mxu0
      %v6631 = vadd.f32 %v6015, %v6630
      %v6632 = vpop.f32.mrb[0].mxu0
      %6633 = vmatprep.mubr.bf16.mxu0 %v5173
      %6634 = vmatmul.mubr.bf16.gmra.mrb[0].mxu0 %v4881
      %v6635 = vpop.f32.mrb[0].mxu0
      %v6636 = vadd.f32 %v6020, %v6635
      %v6637 = vpop.f32.mrb[0].mxu0
      %v6638 = vpop.f32.mrb[0].mxu0
      %v6639 = vadd.f32 %v6023, %v6638
      %v6640 = vpop.f32.mrb[0].mxu0
      %6641 = vmatprep.mubr.bf16.mxu0 %v5177
      %6642 = vmatmul.mubr.bf16.gmra.mrb[0].mxu0 %v4885
      %v6643 = vpop.f32.mrb[0].mxu0
      %v6644 = vadd.f32 %v6028, %v6643
      %v6645 = vpop.f32.mrb[0].mxu0
      %v6646 = vpop.f32.mrb[0].mxu0
      %v6647 = vadd.f32 %v6031, %v6646
      %v6648 = vpop.f32.mrb[0].mxu0
      %6649 = vmatprep.mubr.bf16.mxu0 %v5181
      %6650 = vmatmul.mubr.bf16.gmra.mrb[0].mxu0 %v4889
      %v6651 = vpop.f32.mrb[0].mxu0
      %v6652 = vadd.f32 %v6036, %v6651
      %v6653 = vpop.f32.mrb[0].mxu0
      %v6654 = vpop.f32.mrb[0].mxu0
      %v6655 = vadd.f32 %v6039, %v6654
      %v6656 = vpop.f32.mrb[0].mxu0
      %6657 = vmatprep.mubr.bf16.mxu0 %v5185
      %6658 = vmatmul.mubr.bf16.gmra.mrb[0].mxu0 %v4893
      %v6659 = vpop.f32.mrb[0].mxu0
      %v6660 = vadd.f32 %v6044, %v6659
      %v6661 = vpop.f32.mrb[0].mxu0
      %v6662 = vpop.f32.mrb[0].mxu0
      %v6663 = vadd.f32 %v6047, %v6662
      %v6664 = vpop.f32.mrb[0].mxu0
      %6665 = vmatprep.mubr.bf16.mxu0 %v5189
      %6666 = vmatmul.mubr.bf16.gmra.mrb[0].mxu0 %v4897
      %v6667 = vpop.f32.mrb[0].mxu0
      %v6668 = vadd.f32 %v6052, %v6667
      %v6669 = vpop.f32.mrb[0].mxu0
      %v6670 = vpop.f32.mrb[0].mxu0
      %v6671 = vadd.f32 %v6055, %v6670
      %v6672 = vpop.f32.mrb[0].mxu0
      %6673 = vmatprep.mubr.bf16.mxu0 %v5193
      %6674 = vmatmul.mubr.bf16.gmra.mrb[0].mxu0 %v4901
      %v6675 = vpop.f32.mrb[0].mxu0
      %v6676 = vadd.f32 %v6060, %v6675
      %v6677 = vpop.f32.mrb[0].mxu0
      %v6678 = vpop.f32.mrb[0].mxu0
      %v6679 = vadd.f32 %v6063, %v6678
      %v6680 = vpop.f32.mrb[0].mxu0
      %6681 = vmatprep.mubr.bf16.mxu0 %v5197
      %6682 = vmatmul.mubr.bf16.gmra.mrb[0].mxu0 %v4905
      %v6683 = vpop.f32.mrb[0].mxu0
      %v6684 = vadd.f32 %v6068, %v6683
      %v6685 = vpop.f32.mrb[0].mxu0
      %v6686 = vpop.f32.mrb[0].mxu0
      %v6687 = vadd.f32 %v6071, %v6686
      %v6688 = vpop.f32.mrb[0].mxu0
      %6689 = vmatprep.mubr.bf16.mxu0 %v5201
      %6690 = vmatmul.mubr.bf16.gmra.mrb[0].mxu0 %v4909
      %v6691 = vpop.f32.mrb[0].mxu0
      %v6692 = vadd.f32 %v6076, %v6691
      %v6693 = vpop.f32.mrb[0].mxu0
      %v6694 = vpop.f32.mrb[0].mxu0
      %v6695 = vadd.f32 %v6079, %v6694
      %v6696 = vpop.f32.mrb[0].mxu0
      %6697 = vmatprep.mubr.bf16.mxu0 %v5205
      %6698 = vmatmul.mubr.bf16.gmra.mrb[0].mxu0 %v4913
      %v6699 = vpop.f32.mrb[0].mxu0
      %v6700 = vadd.f32 %v6084, %v6699
      %v6701 = vpop.f32.mrb[0].mxu0
      %v6702 = vpop.f32.mrb[0].mxu0
      %v6703 = vadd.f32 %v6087, %v6702
      %v6704 = vpop.f32.mrb[0].mxu0
      %6705 = vmatprep.mubr.bf16.mxu0 %v5209
      %6706 = vmatmul.mubr.bf16.gmra.mrb[0].mxu0 %v4917
      %v6707 = vpop.f32.mrb[0].mxu0
      %v6708 = vadd.f32 %v6092, %v6707
      %v6709 = vpop.f32.mrb[0].mxu0
      %v6710 = vpop.f32.mrb[0].mxu0
      %v6711 = vadd.f32 %v6095, %v6710
      %v6712 = vpop.f32.mrb[0].mxu0
      %6713 = vmatprep.mubr.bf16.mxu0 %v5213
      %6714 = vmatmul.mubr.bf16.gmra.mrb[0].mxu0 %v4921
      %v6715 = vpop.f32.mrb[0].mxu0
      %v6716 = vadd.f32 %v6100, %v6715
      %v6717 = vpop.f32.mrb[0].mxu0
      %v6718 = vpop.f32.mrb[0].mxu0
      %v6719 = vadd.f32 %v6103, %v6718
      %v6720 = vpop.f32.mrb[0].mxu0
      %6721 = vmatprep.mubr.bf16.mxu0 %v5217
      %6722 = vmatmul.mubr.bf16.gmra.mrb[0].mxu0 %v4925
      %v6723 = vpop.f32.mrb[0].mxu0
      %v6724 = vadd.f32 %v6108, %v6723
      %v6725 = vpop.f32.mrb[0].mxu0
      %v6726 = vpop.f32.mrb[0].mxu0
      %v6727 = vadd.f32 %v6111, %v6726
      %v6728 = vpop.f32.mrb[0].mxu0
      %6729 = vmatprep.mubr.bf16.mxu0 %v5221
      %6730 = vmatmul.mubr.bf16.gmra.mrb[0].mxu0 %v4929
      %v6731 = vpop.f32.mrb[0].mxu0
      %v6732 = vadd.f32 %v6116, %v6731
      %v6733 = vpop.f32.mrb[0].mxu0
      %v6734 = vpop.f32.mrb[0].mxu0
      %v6735 = vadd.f32 %v6119, %v6734
      %v6736 = vpop.f32.mrb[0].mxu0
      %6737 = vmatprep.mubr.bf16.mxu0 %v5225
      %6738 = vmatmul.mubr.bf16.gmra.mrb[0].mxu0 %v4933
      %v6739 = vpop.f32.mrb[0].mxu0
      %v6740 = vadd.f32 %v6124, %v6739
      %v6741 = vpop.f32.mrb[0].mxu0
      %v6742 = vpop.f32.mrb[0].mxu0
      %v6743 = vadd.f32 %v6127, %v6742
      %v6744 = vpop.f32.mrb[0].mxu0
      %6745 = vmatprep.mubr.bf16.mxu0 %v5229
      %6746 = vmatmul.mubr.bf16.gmra.mrb[0].mxu0 %v4937
      %v6747 = vpop.f32.mrb[0].mxu0
      %v6748 = vadd.f32 %v6132, %v6747
      %v6749 = vpop.f32.mrb[0].mxu0
      %v6750 = vpop.f32.mrb[0].mxu0
      %v6751 = vadd.f32 %v6135, %v6750
      %v6752 = vpop.f32.mrb[0].mxu0
      %6753 = vmatprep.mubr.bf16.mxu0 %v5233
      %6754 = vmatmul.mubr.bf16.gmra.mrb[0].mxu0 %v4941
      %v6755 = vpop.f32.mrb[0].mxu0
      %v6756 = vadd.f32 %v6140, %v6755
      %v6757 = vpop.f32.mrb[0].mxu0
      %v6758 = vpop.f32.mrb[0].mxu0
      %v6759 = vadd.f32 %v6143, %v6758
      %v6760 = vpop.f32.mrb[0].mxu0
      %6761 = vmatprep.mubr.bf16.mxu0 %v5237
      %6762 = vmatmul.mubr.bf16.gmra.mrb[0].mxu0 %v4945
      %v6763 = vpop.f32.mrb[0].mxu0
      %v6764 = vadd.f32 %v6148, %v6763
      %v6765 = vpop.f32.mrb[0].mxu0
      %v6766 = vpop.f32.mrb[0].mxu0
      %v6767 = vadd.f32 %v6151, %v6766
      %v6768 = vpop.f32.mrb[0].mxu0
      %6769 = vmatprep.mubr.bf16.mxu0 %v5241
      %6770 = vmatmul.mubr.bf16.gmra.mrb[0].mxu0 %v4949
      %v6771 = vpop.f32.mrb[0].mxu0
      %v6772 = vadd.f32 %v6156, %v6771
      %v6773 = vpop.f32.mrb[0].mxu0
      %v6774 = vpop.f32.mrb[0].mxu0
      %v6775 = vadd.f32 %v6159, %v6774
      %v6776 = vpop.f32.mrb[0].mxu0
      %6777 = vmatprep.mubr.bf16.mxu0 %v5245
      %6778 = vmatmul.mubr.bf16.gmra.mrb[0].mxu0 %v4953
      %v6779 = vpop.f32.mrb[0].mxu0
      %v6780 = vadd.f32 %v6164, %v6779
      %v6781 = vpop.f32.mrb[0].mxu0
      %v6782 = vpop.f32.mrb[0].mxu0
      %v6783 = vadd.f32 %v6167, %v6782
      %v6784 = vpop.f32.mrb[0].mxu0
      %6785 = vmatprep.mubr.bf16.mxu0 %v5249
      %6786 = vmatmul.mubr.bf16.gmra.mrb[0].mxu0 %v4957
      %v6787 = vpop.f32.mrb[0].mxu0
      %v6788 = vadd.f32 %v6172, %v6787
      %v6789 = vpop.f32.mrb[0].mxu0
      %v6790 = vpop.f32.mrb[0].mxu0
      %v6791 = vadd.f32 %v6175, %v6790
      %v6792 = vpop.f32.mrb[0].mxu0
      %6793 = vmatprep.mubr.bf16.mxu0 %v5253
      %6794 = vmatmul.mubr.bf16.gmra.mrb[0].mxu0 %v4961
      %v6795 = vpop.f32.mrb[0].mxu0
      %v6796 = vadd.f32 %v6180, %v6795
      %v6797 = vpop.f32.mrb[0].mxu0
      %v6798 = vpop.f32.mrb[0].mxu0
      %v6799 = vadd.f32 %v6183, %v6798
      %v6800 = vpop.f32.mrb[0].mxu0
      %6801 = vmatprep.mubr.bf16.mxu0 %v5257
      %6802 = vmatmul.mubr.bf16.gmra.mrb[0].mxu0 %v4965
      %v6803 = vpop.f32.mrb[0].mxu0
      %v6804 = vadd.f32 %v6188, %v6803
      %v6805 = vpop.f32.mrb[0].mxu0
      %v6806 = vpop.f32.mrb[0].mxu0
      %v6807 = vadd.f32 %v6191, %v6806
      %v6808 = vpop.f32.mrb[0].mxu0
      %6809 = vmatprep.mubr.bf16.mxu0 %v5261
      %6810 = vmatmul.mubr.bf16.gmra.mrb[0].mxu0 %v4969
      %v6811 = vpop.f32.mrb[0].mxu0
      %v6812 = vadd.f32 %v6196, %v6811
      %v6813 = vpop.f32.mrb[0].mxu0
      %v6814 = vpop.f32.mrb[0].mxu0
      %v6815 = vadd.f32 %v6199, %v6814
      %v6816 = vpop.f32.mrb[0].mxu0
      %6817 = vmatprep.mubr.bf16.mxu0 %v5265
      %6818 = vmatmul.mubr.bf16.gmra.mrb[0].mxu0 %v4973
      %v6819 = vpop.f32.mrb[0].mxu0
      %v6820 = vadd.f32 %v6204, %v6819
      %v6821 = vpop.f32.mrb[0].mxu0
      %v6822 = vpop.f32.mrb[0].mxu0
      %v6823 = vadd.f32 %v6207, %v6822
      %v6824 = vpop.f32.mrb[0].mxu0
      %6825 = vmatprep.mubr.bf16.mxu0 %v5269
      %6826 = vmatmul.mubr.bf16.gmra.mrb[0].mxu0 %v4977
      %v6827 = vpop.f32.mrb[0].mxu0
      %v6828 = vadd.f32 %v6212, %v6827
      %v6829 = vpop.f32.mrb[0].mxu0
      %v6830 = vpop.f32.mrb[0].mxu0
      %v6831 = vadd.f32 %v6215, %v6830
      %v6832 = vpop.f32.mrb[0].mxu0
      %6833 = vmatprep.mubr.bf16.mxu0 %v5273
      %6834 = vmatmul.mubr.bf16.gmra.mrb[0].mxu0 %v4981
      %v6835 = vpop.f32.mrb[0].mxu0
      %v6836 = vadd.f32 %v6220, %v6835
      %v6837 = vpop.f32.mrb[0].mxu0
      %v6838 = vpop.f32.mrb[0].mxu0
      %v6839 = vadd.f32 %v6223, %v6838
      %v6840 = vpop.f32.mrb[0].mxu0
      %6841 = vmatprep.mubr.bf16.mxu0 %v5277
      %6842 = vmatmul.mubr.bf16.gmra.mrb[0].mxu0 %v4985
      %v6843 = vpop.f32.mrb[0].mxu0
      %v6844 = vadd.f32 %v6228, %v6843
      %v6845 = vpop.f32.mrb[0].mxu0
      %v6846 = vpop.f32.mrb[0].mxu0
      %v6847 = vadd.f32 %v6231, %v6846
      %v6848 = vpop.f32.mrb[0].mxu0
      %6849 = vmatprep.mubr.bf16.mxu0 %v5281
      %6850 = vmatmul.mubr.bf16.gmra.mrb[0].mxu0 %v4989
      %v6851 = vpop.f32.mrb[0].mxu0
      %v6852 = vadd.f32 %v6236, %v6851
      %v6853 = vpop.f32.mrb[0].mxu0
      %v6854 = vpop.f32.mrb[0].mxu0
      %v6855 = vadd.f32 %v6239, %v6854
      %v6856 = vpop.f32.mrb[0].mxu0
      %6857 = vmatprep.mubr.bf16.mxu0 %v5285
      %6858 = vmatmul.mubr.bf16.gmra.mrb[0].mxu0 %v4993
      %v6859 = vpop.f32.mrb[0].mxu0
      %v6860 = vadd.f32 %v6244, %v6859
      %v6861 = vpop.f32.mrb[0].mxu0
      %v6862 = vpop.f32.mrb[0].mxu0
      %v6863 = vadd.f32 %v6247, %v6862
      %v6864 = vpop.f32.mrb[0].mxu0
      %6865 = vmatprep.mubr.bf16.mxu0 %v5289
      %6866 = vmatmul.mubr.bf16.gmra.mrb[0].mxu0 %v4997
      %v6867 = vpop.f32.mrb[0].mxu0
      %v6868 = vadd.f32 %v6252, %v6867
      %v6869 = vpop.f32.mrb[0].mxu0
      %v6870 = vpop.f32.mrb[0].mxu0
      %v6871 = vadd.f32 %v6255, %v6870
      %v6872 = vpop.f32.mrb[0].mxu0
      %6873 = vmatprep.mubr.bf16.mxu0 %v5293
      %6874 = vmatmul.mubr.bf16.gmra.mrb[0].mxu0 %v5001
      %v6875 = vpop.f32.mrb[0].mxu0
      %v6876 = vadd.f32 %v6260, %v6875
      %v6877 = vpop.f32.mrb[0].mxu0
      %v6878 = vpop.f32.mrb[0].mxu0
      %v6879 = vadd.f32 %v6263, %v6878
      %v6880 = vpop.f32.mrb[0].mxu0
      %6881 = vmatprep.mubr.bf16.mxu0 %v5297
      %6882 = vmatmul.mubr.bf16.gmra.mrb[0].mxu0 %v5005
      %v6883 = vpop.f32.mrb[0].mxu0
      %v6884 = vadd.f32 %v6268, %v6883
      %v6885 = vpop.f32.mrb[0].mxu0
      %v6886 = vpop.f32.mrb[0].mxu0
      %v6887 = vadd.f32 %v6271, %v6886
      %v6888 = vpop.f32.mrb[0].mxu0
      %6889 = vmatprep.mubr.bf16.mxu0 %v5301
      %6890 = vmatmul.mubr.bf16.gmra.mrb[0].mxu0 %v5009
      %v6891 = vpop.f32.mrb[0].mxu0
      %v6892 = vadd.f32 %v6276, %v6891
      %v6893 = vpop.f32.mrb[0].mxu0
      %v6894 = vpop.f32.mrb[0].mxu0
      %v6895 = vadd.f32 %v6279, %v6894
      %v6896 = vpop.f32.mrb[0].mxu0
      %6897 = vmatprep.mubr.bf16.mxu0 %v5305
      %6898 = vmatmul.mubr.bf16.gmra.mrb[0].mxu0 %v5013
      %v6899 = vpop.f32.mrb[0].mxu0
      %v6900 = vadd.f32 %v6284, %v6899
      %v6901 = vpop.f32.mrb[0].mxu0
      %v6902 = vpop.f32.mrb[0].mxu0
      %v6903 = vadd.f32 %v6287, %v6902
      %v6904 = vpop.f32.mrb[0].mxu0
      %6905 = vmatprep.mubr.bf16.mxu0 %v5309
      %6906 = vmatmul.mubr.bf16.gmra.mrb[0].mxu0 %v5017
      %v6907 = vpop.f32.mrb[0].mxu0
      %v6908 = vadd.f32 %v6292, %v6907
      %v6909 = vpop.f32.mrb[0].mxu0
      %v6910 = vpop.f32.mrb[0].mxu0
      %v6911 = vadd.f32 %v6295, %v6910
      %v6912 = vpop.f32.mrb[0].mxu0
      %6913 = vmatprep.mubr.bf16.mxu0 %v5313
      %6914 = vmatmul.mubr.bf16.gmra.mrb[0].mxu0 %v5021
      %v6915 = vpop.f32.mrb[0].mxu0
      %v6916 = vadd.f32 %v6300, %v6915
      %v6917 = vpop.f32.mrb[0].mxu0
      %v6918 = vpop.f32.mrb[0].mxu0
      %v6919 = vadd.f32 %v6303, %v6918
      %v6920 = vpop.f32.mrb[0].mxu0
      %6921 = vmatprep.mubr.bf16.mxu0 %v5317
      %6922 = vmatmul.mubr.bf16.gmra.mrb[0].mxu0 %v5025
      %v6923 = vpop.f32.mrb[0].mxu0
      %v6924 = vadd.f32 %v6308, %v6923
      %v6925 = vpop.f32.mrb[0].mxu0
      %v6926 = vpop.f32.mrb[0].mxu0
      %v6927 = vadd.f32 %v6311, %v6926
      %v6928 = vpop.f32.mrb[0].mxu0
      %6929 = vmatprep.mubr.bf16.mxu0 %v5321
      %6930 = vmatmul.mubr.bf16.gmra.mrb[0].mxu0 %v5029
      %v6931 = vpop.f32.mrb[0].mxu0
      %v6932 = vadd.f32 %v6316, %v6931
      %v6933 = vpop.f32.mrb[0].mxu0
      %v6934 = vpop.f32.mrb[0].mxu0
      %v6935 = vadd.f32 %v6319, %v6934
      %v6936 = vpop.f32.mrb[0].mxu0
      %6937 = vmatprep.mubr.bf16.mxu0 %v5325
      %6938 = vmatmul.mubr.bf16.gmra.mrb[0].mxu0 %v5033
      %v6939 = vpop.f32.mrb[0].mxu0
      %v6940 = vadd.f32 %v6324, %v6939
      %v6941 = vpop.f32.mrb[0].mxu0
      %v6942 = vpop.f32.mrb[0].mxu0
      %v6943 = vadd.f32 %v6327, %v6942
      %v6944 = vpop.f32.mrb[0].mxu0
      %6945 = vmatprep.mubr.bf16.mxu0 %v5329
      %6946 = vmatmul.mubr.bf16.gmra.mrb[0].mxu0 %v5037
      %v6947 = vpop.f32.mrb[0].mxu0
      %v6948 = vadd.f32 %v6332, %v6947
      %v6949 = vpop.f32.mrb[0].mxu0
      %v6950 = vpop.f32.mrb[0].mxu0
      %v6951 = vadd.f32 %v6335, %v6950
      %v6952 = vpop.f32.mrb[0].mxu0
      %6953 = vmatprep.mubr.bf16.mxu0 %v5333
      %6954 = vmatmul.mubr.bf16.gmra.mrb[0].mxu0 %v5041
      %v6955 = vpop.f32.mrb[0].mxu0
      %v6956 = vadd.f32 %v6340, %v6955
      %v6957 = vpop.f32.mrb[0].mxu0
      %v6958 = vpop.f32.mrb[0].mxu0
      %v6959 = vadd.f32 %v6343, %v6958
      %v6960 = vpop.f32.mrb[0].mxu0
      %6961 = vmatprep.mubr.bf16.mxu0 %v5337
      %6962 = vmatmul.mubr.bf16.gmra.mrb[0].mxu0 %v5045
      %v6963 = vpop.f32.mrb[0].mxu0
      %v6964 = vadd.f32 %v6348, %v6963
      %v6965 = vpop.f32.mrb[0].mxu0
      %v6966 = vpop.f32.mrb[0].mxu0
      %v6967 = vadd.f32 %v6351, %v6966
      %v6968 = vpop.f32.mrb[0].mxu0
      %6969 = vmatprep.mubr.bf16.mxu0 %v5341
      %6970 = vmatmul.mubr.bf16.gmra.mrb[0].mxu0 %v5049
      %v6971 = vpop.f32.mrb[0].mxu0
      %v6972 = vadd.f32 %v6356, %v6971
      %v6973 = vpop.f32.mrb[0].mxu0
      %v6974 = vpop.f32.mrb[0].mxu0
      %v6975 = vadd.f32 %v6359, %v6974
      %v6976 = vpop.f32.mrb[0].mxu0
      %6977 = vmatprep.mubr.bf16.mxu0 %v5345
      %6978 = vmatmul.mubr.bf16.gmra.mrb[0].mxu0 %v5053
      %v6979 = vpop.f32.mrb[0].mxu0
      %v6980 = vadd.f32 %v6364, %v6979
      %v6981 = vpop.f32.mrb[0].mxu0
      %v6982 = vpop.f32.mrb[0].mxu0
      %v6983 = vadd.f32 %v6367, %v6982
      %v6984 = vpop.f32.mrb[0].mxu0
      %6985 = vmatprep.mubr.bf16.mxu0 %v5349
      %6986 = vmatmul.mubr.bf16.gmra.mrb[0].mxu0 %v5057
      %v6987 = vpop.f32.mrb[0].mxu0
      %v6988 = vadd.f32 %v6372, %v6987
      %v6989 = vpop.f32.mrb[0].mxu0
      %v6990 = vpop.f32.mrb[0].mxu0
      %v6991 = vadd.f32 %v6375, %v6990
      %v6992 = vpop.f32.mrb[0].mxu0
      %6993 = vmatprep.mubr.bf16.mxu0 %v5353
      %6994 = vmatmul.mubr.bf16.gmra.mrb[0].mxu0 %v5061
      %v6995 = vpop.f32.mrb[0].mxu0
      %v6996 = vadd.f32 %v6380, %v6995
      %v6997 = vpop.f32.mrb[0].mxu0
      %v6998 = vpop.f32.mrb[0].mxu0
      %v6999 = vadd.f32 %v6383, %v6998
      %v7000 = vpop.f32.mrb[0].mxu0
      %7001 = vmatprep.mubr.bf16.mxu0 %v5357
      %7002 = vmatmul.mubr.bf16.gmra.mrb[0].mxu0 %v5065
      %v7003 = vpop.f32.mrb[0].mxu0
      %v7004 = vadd.f32 %v6388, %v7003
      %v7005 = vpop.f32.mrb[0].mxu0
      %v7006 = vpop.f32.mrb[0].mxu0
      %v7007 = vadd.f32 %v6391, %v7006
      %v7008 = vpop.f32.mrb[0].mxu0
      %7009 = vmatprep.mubr.bf16.mxu0 %v5361
      %7010 = vmatmul.mubr.bf16.gmra.mrb[0].mxu0 %v5069
      %v7011 = vpop.f32.mrb[0].mxu0
      %v7012 = vadd.f32 %v6396, %v7011
      %v7013 = vpop.f32.mrb[0].mxu0
      %v7014 = vpop.f32.mrb[0].mxu0
      %v7015 = vadd.f32 %v6399, %v7014
      %v7016 = vpop.f32.mrb[0].mxu0
      %7017 = vmatprep.mubr.bf16.mxu0 %v5365
      %7018 = vmatmul.mubr.bf16.gmra.mrb[0].mxu0 %v5073
      %v7019 = vpop.f32.mrb[0].mxu0
      %v7020 = vadd.f32 %v6404, %v7019
      %v7021 = vpop.f32.mrb[0].mxu0
      %v7022 = vpop.f32.mrb[0].mxu0
      %v7023 = vadd.f32 %v6407, %v7022
      %v7024 = vpop.f32.mrb[0].mxu0
      %7025 = vmatprep.mubr.bf16.mxu0 %v5369
      %7026 = vmatmul.mubr.bf16.gmra.mrb[0].mxu0 %v5077
      %v7027 = vpop.f32.mrb[0].mxu0
      %v7028 = vadd.f32 %v6412, %v7027
      %v7029 = vpop.f32.mrb[0].mxu0
      %v7030 = vpop.f32.mrb[0].mxu0
      %v7031 = vadd.f32 %v6415, %v7030
      %v7032 = vpop.f32.mrb[0].mxu0
      %7033 = vmatprep.mubr.bf16.mxu0 %v5373
      %7034 = vmatmul.mubr.bf16.gmra.mrb[0].mxu0 %v5081
      %v7035 = vpop.f32.mrb[0].mxu0
      %v7036 = vadd.f32 %v6420, %v7035
      %v7037 = vpop.f32.mrb[0].mxu0
      %v7038 = vpop.f32.mrb[0].mxu0
      %v7039 = vadd.f32 %v6423, %v7038
      %v7040 = vpop.f32.mrb[0].mxu0
      %7041 = vmatprep.mubr.bf16.mxu0 %v5377
      %7042 = vmatmul.mubr.bf16.gmra.mrb[0].mxu0 %v5085
      %v7043 = vpop.f32.mrb[0].mxu0
      %v7044 = vadd.f32 %v6428, %v7043
      %v7045 = vpop.f32.mrb[0].mxu0
      %v7046 = vpop.f32.mrb[0].mxu0
      %v7047 = vadd.f32 %v6431, %v7046
      %v7048 = vpop.f32.mrb[0].mxu0
      %7049 = vmatprep.mubr.bf16.mxu0 %v5381
      %7050 = vmatmul.mubr.bf16.gmra.mrb[0].mxu0 %v5089
      %v7051 = vpop.f32.mrb[0].mxu0
      %v7052 = vadd.f32 %v6436, %v7051
      %v7053 = vpop.f32.mrb[0].mxu0
      %v7054 = vpop.f32.mrb[0].mxu0
      %v7055 = vadd.f32 %v6439, %v7054
      %v7056 = vpop.f32.mrb[0].mxu0
      %7057 = vmatprep.mubr.bf16.mxu0 %v5385
      %7058 = vmatmul.mubr.bf16.gmra.mrb[0].mxu0 %v5093
      %v7059 = vpop.f32.mrb[0].mxu0
      %v7060 = vadd.f32 %v6444, %v7059
      %v7061 = vpop.f32.mrb[0].mxu0
      %v7062 = vpop.f32.mrb[0].mxu0
      %v7063 = vadd.f32 %v6447, %v7062
      %v7064 = vpop.f32.mrb[0].mxu0
      %7065 = vmatprep.mubr.bf16.mxu0 %v5389
      %7066 = vmatmul.mubr.bf16.gmra.mrb[0].mxu0 %v5097
      %v7067 = vpop.f32.mrb[0].mxu0
      %v7068 = vadd.f32 %v6452, %v7067
      %v7069 = vpop.f32.mrb[0].mxu0
      %v7070 = vpop.f32.mrb[0].mxu0
      %v7071 = vadd.f32 %v6455, %v7070
      %v7072 = vpop.f32.mrb[0].mxu0
      %7073 = vmatprep.mubr.bf16.mxu0 %v5393
      %7074 = vmatmul.mubr.bf16.gmra.mrb[0].mxu0 %v5101
      %v7075 = vpop.f32.mrb[0].mxu0
      %v7076 = vadd.f32 %v6460, %v7075
      %v7077 = vpop.f32.mrb[0].mxu0
      %v7078 = vpop.f32.mrb[0].mxu0
      %v7079 = vadd.f32 %v6463, %v7078
      %v7080 = vpop.f32.mrb[0].mxu0
      %7081 = vmatprep.mubr.bf16.mxu0 %v5397
      %7082 = vmatmul.mubr.bf16.gmra.mrb[0].mxu0 %v5105
      %v7083 = vpop.f32.mrb[0].mxu0
      %v7084 = vadd.f32 %v6468, %v7083
      %v7085 = vpop.f32.mrb[0].mxu0
      %v7086 = vpop.f32.mrb[0].mxu0
      %v7087 = vadd.f32 %v6471, %v7086
      %v7088 = vpop.f32.mrb[0].mxu0
      %7089 = vmatprep.mubr.bf16.mxu0 %v5401
      %7090 = vmatmul.mubr.bf16.gmra.mrb[0].mxu0 %v5109
      %v7091 = vpop.f32.mrb[0].mxu0
      %v7092 = vadd.f32 %v6476, %v7091
      %v7093 = vpop.f32.mrb[0].mxu0
      %v7094 = vpop.f32.mrb[0].mxu0
      %v7095 = vadd.f32 %v6479, %v7094
      %v7096 = vpop.f32.mrb[0].mxu0
      %7097 = vmatprep.mubr.bf16.mxu0 %v5405
      %7098 = vmatmul.mubr.bf16.gmra.mrb[0].mxu0 %v5113
      %v7099 = vpop.f32.mrb[0].mxu0
      %v7100 = vadd.f32 %v6484, %v7099
      %v7101 = vpop.f32.mrb[0].mxu0
      %v7102 = vpop.f32.mrb[0].mxu0
      %v7103 = vadd.f32 %v6487, %v7102
      %v7104 = vpop.f32.mrb[0].mxu0
      %7105 = vmatprep.mubr.bf16.mxu0 %v5409
      %7106 = vmatmul.mubr.bf16.gmra.mrb[0].mxu0 %v5117
      %v7107 = vpop.f32.mrb[0].mxu0
      %v7108 = vadd.f32 %v6492, %v7107
      %v7109 = vpop.f32.mrb[0].mxu0
      %v7110 = vpop.f32.mrb[0].mxu0
      %v7111 = vadd.f32 %v6495, %v7110
      %v7112 = vpop.f32.mrb[0].mxu0
      %7113 = vmatprep.mubr.bf16.mxu0 %v5413
      %7114 = vmatmul.mubr.bf16.gmra.mrb[0].mxu0 %v5121
      %v7115 = vpop.f32.mrb[0].mxu0
      %v7116 = vadd.f32 %v6500, %v7115
      %v7117 = vpop.f32.mrb[0].mxu0
      %v7118 = vpop.f32.mrb[0].mxu0
      %v7119 = vadd.f32 %v6503, %v7118
      %v7120 = vpop.f32.mrb[0].mxu0
      %7121 = vmatprep.mubr.bf16.mxu0 %v5417
      %7122 = vmatmul.mubr.bf16.gmra.mrb[0].mxu0 %v5125
      %v7123 = vpop.f32.mrb[0].mxu0
      %v7124 = vadd.f32 %v6508, %v7123
      %v7125 = vpop.f32.mrb[0].mxu0
      %v7126 = vpop.f32.mrb[0].mxu0
      %v7127 = vadd.f32 %v6511, %v7126
      %v7128 = vpop.f32.mrb[0].mxu0
      %7129 = vmatprep.mubr.bf16.mxu0 %v5421
      %7130 = vmatmul.mubr.bf16.gmra.mrb[0].mxu0 %v5129
      %v7131 = vpop.f32.mrb[0].mxu0
      %v7132 = vadd.f32 %v6516, %v7131
      %v7133 = vpop.f32.mrb[0].mxu0
      %v7134 = vpop.f32.mrb[0].mxu0
      %v7135 = vadd.f32 %v6519, %v7134
      %v7136 = vpop.f32.mrb[0].mxu0
      %7137 = vmatprep.mubr.bf16.mxu0 %v5425
      %7138 = vmatmul.mubr.bf16.gmra.mrb[0].mxu0 %v5133
      %v7139 = vpop.f32.mrb[0].mxu0
      %v7140 = vadd.f32 %v6524, %v7139
      %v7141 = vpop.f32.mrb[0].mxu0
      %v7142 = vpop.f32.mrb[0].mxu0
      %v7143 = vadd.f32 %v6527, %v7142
      %v7144 = vpop.f32.mrb[0].mxu0
      %7145 = vmatprep.mubr.bf16.mxu0 %v5429
      %7146 = vmatmul.mubr.bf16.gmra.mrb[0].mxu0 %v5137
      %v7147 = vpop.f32.mrb[0].mxu0
      %v7148 = vadd.f32 %v6532, %v7147
      %v7149 = vpop.f32.mrb[0].mxu0
      %v7150 = vpop.f32.mrb[0].mxu0
      %v7151 = vadd.f32 %v6535, %v7150
      %v7152 = vpop.f32.mrb[0].mxu0
      %7153 = vmatprep.mubr.bf16.mxu0 %v5433
      %7154 = vmatmul.mubr.bf16.gmra.mrb[0].mxu0 %v5141
      %v7155 = vpop.f32.mrb[0].mxu0
      %v7156 = vadd.f32 %v6540, %v7155
      %v7157 = vpop.f32.mrb[0].mxu0
      %v7158 = vpop.f32.mrb[0].mxu0
      %v7159 = vadd.f32 %v6543, %v7158
      %v7160 = vpop.f32.mrb[0].mxu0
      %7161 = vmatprep.mubr.bf16.mxu0 %v5437
      %7162 = vmatmul.mubr.bf16.gmra.mrb[0].mxu0 %v5145
      %v7163 = vpop.f32.mrb[0].mxu0
      %v7164 = vadd.f32 %v6548, %v7163
      %v7165 = vpop.f32.mrb[0].mxu0
      %v7166 = vpop.f32.mrb[0].mxu0
      %v7167 = vadd.f32 %v6551, %v7166
      %v7168 = vpop.f32.mrb[0].mxu0
      %7169 = vmatprep.mubr.bf16.mxu0 %v5441
      %7170 = vmatmul.mubr.bf16.gmra.mrb[0].mxu0 %v5149
      %v7171 = vpop.f32.mrb[0].mxu0
      %v7172 = vadd.f32 %v6556, %v7171
      %v7173 = vpop.f32.mrb[0].mxu0
      %v7174 = vpop.f32.mrb[0].mxu0
      %v7175 = vadd.f32 %v6559, %v7174
      %v7176 = vpop.f32.mrb[0].mxu0
      %7177 = vmatprep.mubr.bf16.mxu0 %v5445
      %7178 = vmatmul.mubr.bf16.gmra.mrb[0].mxu0 %v5153
      %v7179 = vpop.f32.mrb[0].mxu0
      %v7180 = vadd.f32 %v6564, %v7179
      %v7181 = vpop.f32.mrb[0].mxu0
      %v7182 = vpop.f32.mrb[0].mxu0
      %v7183 = vadd.f32 %v6567, %v7182
      %v7184 = vpop.f32.mrb[0].mxu0
      %7185 = vmatprep.mubr.bf16.mxu0 %v5449
      %7186 = vmatmul.mubr.bf16.gmra.mrb[0].mxu0 %v5157
      %v7187 = vpop.f32.mrb[0].mxu0
      %v7188 = vadd.f32 %v6572, %v7187
      %v7189 = vpop.f32.mrb[0].mxu0
      %v7190 = vpop.f32.mrb[0].mxu0
      %v7191 = vadd.f32 %v6575, %v7190
      %v7192 = vpop.f32.mrb[0].mxu0
      %7193 = vmatprep.mubr.bf16.mxu0 %v5453
      %7194 = vmatmul.mubr.bf16.gmra.mrb[0].mxu0 %v5161
      %v7195 = vpop.f32.mrb[0].mxu0
      %v7196 = vadd.f32 %v6580, %v7195
      %v7197 = vpop.f32.mrb[0].mxu0
      %v7198 = vpop.f32.mrb[0].mxu0
      %v7199 = vpop.f32.mrb[0].mxu0
      %7200 = vdwg.mxu0
      %7201 = vmatprep.subr.bf16.mxu0 0
      %7202 = vmatpush1.bf16.msra.mxu0 %v5710
      %7203 = vmatprep.subr.bf16.mxu0 0
      %7204 = vmatpush1.bf16.msra.mxu0 %v5711
      %7205 = vmatprep.subr.bf16.mxu0 0
      %7206 = vmatpush1.bf16.msra.mxu0 %v5712
      %7207 = vmatprep.subr.bf16.mxu0 0
      %7208 = vmatpush1.bf16.msra.mxu0 %v5713
      %7209 = vmatprep.subr.bf16.mxu0 0
      %7210 = vmatpush1.bf16.msra.mxu0 0
      %7211 = vmatprep.subr.bf16.mxu0 0
      %7212 = vmatpush1.bf16.msra.mxu0 0
      %7213 = vmatprep.subr.bf16.mxu0 0
      %7214 = vmatpush1.bf16.msra.mxu0 0
      %7215 = vmatprep.subr.bf16.mxu0 0
      %7216 = vmatpush1.bf16.msra.mxu0 0
      %7217 = vmatprep.subr.bf16.mxu0 0
      %7218 = vmatpush1.bf16.msra.mxu0 0
      %7219 = vmatprep.subr.bf16.mxu0 0
      %7220 = vmatpush1.bf16.msra.mxu0 0
      %7221 = vmatprep.subr.bf16.mxu0 0
      %7222 = vmatpush1.bf16.msra.mxu0 0
      %7223 = vmatprep.subr.bf16.mxu0 0
      %7224 = vmatpush1.bf16.msra.mxu0 0
      %7225 = vmatprep.subr.bf16.mxu0 0
      %7226 = vmatpush1.bf16.msra.mxu0 0
      %7227 = vmatprep.subr.bf16.mxu0 0
      %7228 = vmatpush1.bf16.msra.mxu0 0
      %7229 = vmatprep.subr.bf16.mxu0 0
      %7230 = vmatpush1.bf16.msra.mxu0 0
      %7231 = vmatprep.subr.bf16.mxu0 0
      %7232 = vmatpush1.bf16.msra.mxu0 0
      %7233 = vmatprep.mubr.bf16.mxu0 0
      %7234 = vmatmul.mubr.bf16.gmra.mrb[0].mxu0 %v5751
      %v7235 = vpop.f32.mrb[0].mxu0
      %v7236 = vadd.f32 %v6620, %v7235
      %v7237 = vpop.f32.mrb[0].mxu0
      %v7238 = vpop.f32.mrb[0].mxu0
      %v7239 = vadd.f32 %v6623, %v7238
      %v7240 = vpop.f32.mrb[0].mxu0
      %7241 = vmatprep.mubr.bf16.mxu0 0
      %7242 = vmatmul.mubr.bf16.gmra.mrb[0].mxu0 %v5754
      %v7243 = vpop.f32.mrb[0].mxu0
      %v7244 = vadd.f32 %v6628, %v7243
      %v7245 = vpop.f32.mrb[0].mxu0
      %v7246 = vpop.f32.mrb[0].mxu0
      %v7247 = vadd.f32 %v6631, %v7246
      %v7248 = vpop.f32.mrb[0].mxu0
      %7249 = vmatprep.mubr.bf16.mxu0 0
      %7250 = vmatmul.mubr.bf16.gmra.mrb[0].mxu0 %v5757
      %v7251 = vpop.f32.mrb[0].mxu0
      %v7252 = vadd.f32 %v6636, %v7251
      %v7253 = vpop.f32.mrb[0].mxu0
      %v7254 = vpop.f32.mrb[0].mxu0
      %v7255 = vadd.f32 %v6639, %v7254
      %v7256 = vpop.f32.mrb[0].mxu0
      %7257 = vmatprep.mubr.bf16.mxu0 0
      %7258 = vmatmul.mubr.bf16.gmra.mrb[0].mxu0 %v5760
      %v7259 = vpop.f32.mrb[0].mxu0
      %v7260 = vadd.f32 %v6644, %v7259
      %v7261 = vpop.f32.mrb[0].mxu0
      %v7262 = vpop.f32.mrb[0].mxu0
      %v7263 = vadd.f32 %v6647, %v7262
      %v7264 = vpop.f32.mrb[0].mxu0
      %7265 = vmatprep.mubr.bf16.mxu0 0
      %7266 = vmatmul.mubr.bf16.gmra.mrb[0].mxu0 %v5763
      %v7267 = vpop.f32.mrb[0].mxu0
      %v7268 = vadd.f32 %v6652, %v7267
      %v7269 = vpop.f32.mrb[0].mxu0
      %v7270 = vpop.f32.mrb[0].mxu0
      %v7271 = vadd.f32 %v6655, %v7270
      %v7272 = vpop.f32.mrb[0].mxu0
      %7273 = vmatprep.mubr.bf16.mxu0 0
      %7274 = vmatmul.mubr.bf16.gmra.mrb[0].mxu0 %v5766
      %v7275 = vpop.f32.mrb[0].mxu0
      %v7276 = vadd.f32 %v6660, %v7275
      %v7277 = vpop.f32.mrb[0].mxu0
      %v7278 = vpop.f32.mrb[0].mxu0
      %v7279 = vadd.f32 %v6663, %v7278
      %v7280 = vpop.f32.mrb[0].mxu0
      %7281 = vmatprep.mubr.bf16.mxu0 0
      %7282 = vmatmul.mubr.bf16.gmra.mrb[0].mxu0 %v5769
      %v7283 = vpop.f32.mrb[0].mxu0
      %v7284 = vadd.f32 %v6668, %v7283
      %v7285 = vpop.f32.mrb[0].mxu0
      %v7286 = vpop.f32.mrb[0].mxu0
      %v7287 = vadd.f32 %v6671, %v7286
      %v7288 = vpop.f32.mrb[0].mxu0
      %7289 = vmatprep.mubr.bf16.mxu0 0
      %7290 = vmatmul.mubr.bf16.gmra.mrb[0].mxu0 %v5772
      %v7291 = vpop.f32.mrb[0].mxu0
      %v7292 = vadd.f32 %v6676, %v7291
      %v7293 = vpop.f32.mrb[0].mxu0
      %v7294 = vpop.f32.mrb[0].mxu0
      %v7295 = vadd.f32 %v6679, %v7294
      %v7296 = vpop.f32.mrb[0].mxu0
      %7297 = vmatprep.mubr.bf16.mxu0 0
      %7298 = vmatmul.mubr.bf16.gmra.mrb[0].mxu0 %v5775
      %v7299 = vpop.f32.mrb[0].mxu0
      %v7300 = vadd.f32 %v6684, %v7299
      %v7301 = vpop.f32.mrb[0].mxu0
      %v7302 = vpop.f32.mrb[0].mxu0
      %v7303 = vadd.f32 %v6687, %v7302
      %v7304 = vpop.f32.mrb[0].mxu0
      %7305 = vmatprep.mubr.bf16.mxu0 0
      %7306 = vmatmul.mubr.bf16.gmra.mrb[0].mxu0 %v5778
      %v7307 = vpop.f32.mrb[0].mxu0
      %v7308 = vadd.f32 %v6692, %v7307
      %v7309 = vpop.f32.mrb[0].mxu0
      %v7310 = vpop.f32.mrb[0].mxu0
      %v7311 = vadd.f32 %v6695, %v7310
      %v7312 = vpop.f32.mrb[0].mxu0
      %7313 = vmatprep.mubr.bf16.mxu0 0
      %7314 = vmatmul.mubr.bf16.gmra.mrb[0].mxu0 %v5781
      %v7315 = vpop.f32.mrb[0].mxu0
      %v7316 = vadd.f32 %v6700, %v7315
      %v7317 = vpop.f32.mrb[0].mxu0
      %v7318 = vpop.f32.mrb[0].mxu0
      %v7319 = vadd.f32 %v6703, %v7318
      %v7320 = vpop.f32.mrb[0].mxu0
      %7321 = vmatprep.mubr.bf16.mxu0 0
      %7322 = vmatmul.mubr.bf16.gmra.mrb[0].mxu0 %v5784
      %v7323 = vpop.f32.mrb[0].mxu0
      %v7324 = vadd.f32 %v6708, %v7323
      %v7325 = vpop.f32.mrb[0].mxu0
      %v7326 = vpop.f32.mrb[0].mxu0
      %v7327 = vadd.f32 %v6711, %v7326
      %v7328 = vpop.f32.mrb[0].mxu0
      %7329 = vmatprep.mubr.bf16.mxu0 0
      %7330 = vmatmul.mubr.bf16.gmra.mrb[0].mxu0 %v5787
      %v7331 = vpop.f32.mrb[0].mxu0
      %v7332 = vadd.f32 %v6716, %v7331
      %v7333 = vpop.f32.mrb[0].mxu0
      %v7334 = vpop.f32.mrb[0].mxu0
      %v7335 = vadd.f32 %v6719, %v7334
      %v7336 = vpop.f32.mrb[0].mxu0
      %7337 = vmatprep.mubr.bf16.mxu0 0
      %7338 = vmatmul.mubr.bf16.gmra.mrb[0].mxu0 %v5790
      %v7339 = vpop.f32.mrb[0].mxu0
      %v7340 = vadd.f32 %v6724, %v7339
      %v7341 = vpop.f32.mrb[0].mxu0
      %v7342 = vpop.f32.mrb[0].mxu0
      %v7343 = vadd.f32 %v6727, %v7342
      %v7344 = vpop.f32.mrb[0].mxu0
      %7345 = vmatprep.mubr.bf16.mxu0 0
      %7346 = vmatmul.mubr.bf16.gmra.mrb[0].mxu0 %v5793
      %v7347 = vpop.f32.mrb[0].mxu0
      %v7348 = vadd.f32 %v6732, %v7347
      %v7349 = vpop.f32.mrb[0].mxu0
      %v7350 = vpop.f32.mrb[0].mxu0
      %v7351 = vadd.f32 %v6735, %v7350
      %v7352 = vpop.f32.mrb[0].mxu0
      %7353 = vmatprep.mubr.bf16.mxu0 0
      %7354 = vmatmul.mubr.bf16.gmra.mrb[0].mxu0 %v5796
      %v7355 = vpop.f32.mrb[0].mxu0
      %v7356 = vadd.f32 %v6740, %v7355
      %v7357 = vpop.f32.mrb[0].mxu0
      %v7358 = vpop.f32.mrb[0].mxu0
      %v7359 = vadd.f32 %v6743, %v7358
      %v7360 = vpop.f32.mrb[0].mxu0
      %7361 = vmatprep.mubr.bf16.mxu0 0
      %7362 = vmatmul.mubr.bf16.gmra.mrb[0].mxu0 %v5799
      %v7363 = vpop.f32.mrb[0].mxu0
      %v7364 = vadd.f32 %v6748, %v7363
      %v7365 = vpop.f32.mrb[0].mxu0
      %v7366 = vpop.f32.mrb[0].mxu0
      %v7367 = vadd.f32 %v6751, %v7366
      %v7368 = vpop.f32.mrb[0].mxu0
      %7369 = vmatprep.mubr.bf16.mxu0 0
      %7370 = vmatmul.mubr.bf16.gmra.mrb[0].mxu0 %v5802
      %v7371 = vpop.f32.mrb[0].mxu0
      %v7372 = vadd.f32 %v6756, %v7371
      %v7373 = vpop.f32.mrb[0].mxu0
      %v7374 = vpop.f32.mrb[0].mxu0
      %v7375 = vadd.f32 %v6759, %v7374
      %v7376 = vpop.f32.mrb[0].mxu0
      %7377 = vmatprep.mubr.bf16.mxu0 0
      %7378 = vmatmul.mubr.bf16.gmra.mrb[0].mxu0 %v5805
      %v7379 = vpop.f32.mrb[0].mxu0
      %v7380 = vadd.f32 %v6764, %v7379
      %v7381 = vpop.f32.mrb[0].mxu0
      %v7382 = vpop.f32.mrb[0].mxu0
      %v7383 = vadd.f32 %v6767, %v7382
      %v7384 = vpop.f32.mrb[0].mxu0
      %7385 = vmatprep.mubr.bf16.mxu0 0
      %7386 = vmatmul.mubr.bf16.gmra.mrb[0].mxu0 %v5808
      %v7387 = vpop.f32.mrb[0].mxu0
      %v7388 = vadd.f32 %v6772, %v7387
      %v7389 = vpop.f32.mrb[0].mxu0
      %v7390 = vpop.f32.mrb[0].mxu0
      %v7391 = vadd.f32 %v6775, %v7390
      %v7392 = vpop.f32.mrb[0].mxu0
      %7393 = vmatprep.mubr.bf16.mxu0 0
      %7394 = vmatmul.mubr.bf16.gmra.mrb[0].mxu0 %v5811
      %v7395 = vpop.f32.mrb[0].mxu0
      %v7396 = vadd.f32 %v6780, %v7395
      %v7397 = vpop.f32.mrb[0].mxu0
      %v7398 = vpop.f32.mrb[0].mxu0
      %v7399 = vadd.f32 %v6783, %v7398
      %v7400 = vpop.f32.mrb[0].mxu0
      %7401 = vmatprep.mubr.bf16.mxu0 0
      %7402 = vmatmul.mubr.bf16.gmra.mrb[0].mxu0 %v5814
      %v7403 = vpop.f32.mrb[0].mxu0
      %v7404 = vadd.f32 %v6788, %v7403
      %v7405 = vpop.f32.mrb[0].mxu0
      %v7406 = vpop.f32.mrb[0].mxu0
      %v7407 = vadd.f32 %v6791, %v7406
      %v7408 = vpop.f32.mrb[0].mxu0
      %7409 = vmatprep.mubr.bf16.mxu0 0
      %7410 = vmatmul.mubr.bf16.gmra.mrb[0].mxu0 %v5817
      %v7411 = vpop.f32.mrb[0].mxu0
      %v7412 = vadd.f32 %v6796, %v7411
      %v7413 = vpop.f32.mrb[0].mxu0
      %v7414 = vpop.f32.mrb[0].mxu0
      %v7415 = vadd.f32 %v6799, %v7414
      %v7416 = vpop.f32.mrb[0].mxu0
      %7417 = vmatprep.mubr.bf16.mxu0 0
      %7418 = vmatmul.mubr.bf16.gmra.mrb[0].mxu0 %v5820
      %v7419 = vpop.f32.mrb[0].mxu0
      %v7420 = vadd.f32 %v6804, %v7419
      %v7421 = vpop.f32.mrb[0].mxu0
      %v7422 = vpop.f32.mrb[0].mxu0
      %v7423 = vadd.f32 %v6807, %v7422
      %v7424 = vpop.f32.mrb[0].mxu0
      %7425 = vmatprep.mubr.bf16.mxu0 0
      %7426 = vmatmul.mubr.bf16.gmra.mrb[0].mxu0 %v5823
      %v7427 = vpop.f32.mrb[0].mxu0
      %v7428 = vadd.f32 %v6812, %v7427
      %v7429 = vpop.f32.mrb[0].mxu0
      %v7430 = vpop.f32.mrb[0].mxu0
      %v7431 = vadd.f32 %v6815, %v7430
      %v7432 = vpop.f32.mrb[0].mxu0
      %7433 = vmatprep.mubr.bf16.mxu0 0
      %7434 = vmatmul.mubr.bf16.gmra.mrb[0].mxu0 %v5826
      %v7435 = vpop.f32.mrb[0].mxu0
      %v7436 = vadd.f32 %v6820, %v7435
      %v7437 = vpop.f32.mrb[0].mxu0
      %v7438 = vpop.f32.mrb[0].mxu0
      %v7439 = vadd.f32 %v6823, %v7438
      %v7440 = vpop.f32.mrb[0].mxu0
      %7441 = vmatprep.mubr.bf16.mxu0 0
      %7442 = vmatmul.mubr.bf16.gmra.mrb[0].mxu0 %v5829
      %v7443 = vpop.f32.mrb[0].mxu0
      %v7444 = vadd.f32 %v6828, %v7443
      %v7445 = vpop.f32.mrb[0].mxu0
      %v7446 = vpop.f32.mrb[0].mxu0
      %v7447 = vadd.f32 %v6831, %v7446
      %v7448 = vpop.f32.mrb[0].mxu0
      %7449 = vmatprep.mubr.bf16.mxu0 0
      %7450 = vmatmul.mubr.bf16.gmra.mrb[0].mxu0 %v5832
      %v7451 = vpop.f32.mrb[0].mxu0
      %v7452 = vadd.f32 %v6836, %v7451
      %v7453 = vpop.f32.mrb[0].mxu0
      %v7454 = vpop.f32.mrb[0].mxu0
      %v7455 = vadd.f32 %v6839, %v7454
      %v7456 = vpop.f32.mrb[0].mxu0
      %7457 = vmatprep.mubr.bf16.mxu0 0
      %7458 = vmatmul.mubr.bf16.gmra.mrb[0].mxu0 %v5835
      %v7459 = vpop.f32.mrb[0].mxu0
      %v7460 = vadd.f32 %v6844, %v7459
      %v7461 = vpop.f32.mrb[0].mxu0
      %v7462 = vpop.f32.mrb[0].mxu0
      %v7463 = vadd.f32 %v6847, %v7462
      %v7464 = vpop.f32.mrb[0].mxu0
      %7465 = vmatprep.mubr.bf16.mxu0 0
      %7466 = vmatmul.mubr.bf16.gmra.mrb[0].mxu0 %v5838
      %v7467 = vpop.f32.mrb[0].mxu0
      %v7468 = vadd.f32 %v6852, %v7467
      %v7469 = vpop.f32.mrb[0].mxu0
      %v7470 = vpop.f32.mrb[0].mxu0
      %v7471 = vadd.f32 %v6855, %v7470
      %v7472 = vpop.f32.mrb[0].mxu0
      %7473 = vmatprep.mubr.bf16.mxu0 0
      %7474 = vmatmul.mubr.bf16.gmra.mrb[0].mxu0 %v5841
      %v7475 = vpop.f32.mrb[0].mxu0
      %v7476 = vadd.f32 %v6860, %v7475
      %v7477 = vpop.f32.mrb[0].mxu0
      %v7478 = vpop.f32.mrb[0].mxu0
      %v7479 = vadd.f32 %v6863, %v7478
      %v7480 = vpop.f32.mrb[0].mxu0
      %7481 = vmatprep.mubr.bf16.mxu0 0
      %7482 = vmatmul.mubr.bf16.gmra.mrb[0].mxu0 %v5844
      %v7483 = vpop.f32.mrb[0].mxu0
      %v7484 = vadd.f32 %v6868, %v7483
      %v7485 = vpop.f32.mrb[0].mxu0
      %v7486 = vpop.f32.mrb[0].mxu0
      %v7487 = vadd.f32 %v6871, %v7486
      %v7488 = vpop.f32.mrb[0].mxu0
      %7489 = vmatprep.mubr.bf16.mxu0 0
      %7490 = vmatmul.mubr.bf16.gmra.mrb[0].mxu0 %v5847
      %v7491 = vpop.f32.mrb[0].mxu0
      %v7492 = vadd.f32 %v6876, %v7491
      %v7493 = vpop.f32.mrb[0].mxu0
      %v7494 = vpop.f32.mrb[0].mxu0
      %v7495 = vadd.f32 %v6879, %v7494
      %v7496 = vpop.f32.mrb[0].mxu0
      %7497 = vmatprep.mubr.bf16.mxu0 0
      %7498 = vmatmul.mubr.bf16.gmra.mrb[0].mxu0 %v5850
      %v7499 = vpop.f32.mrb[0].mxu0
      %v7500 = vadd.f32 %v6884, %v7499
      %v7501 = vpop.f32.mrb[0].mxu0
      %v7502 = vpop.f32.mrb[0].mxu0
      %v7503 = vadd.f32 %v6887, %v7502
      %v7504 = vpop.f32.mrb[0].mxu0
      %7505 = vmatprep.mubr.bf16.mxu0 0
      %7506 = vmatmul.mubr.bf16.gmra.mrb[0].mxu0 %v5853
      %v7507 = vpop.f32.mrb[0].mxu0
      %v7508 = vadd.f32 %v6892, %v7507
      %v7509 = vpop.f32.mrb[0].mxu0
      %v7510 = vpop.f32.mrb[0].mxu0
      %v7511 = vadd.f32 %v6895, %v7510
      %v7512 = vpop.f32.mrb[0].mxu0
      %7513 = vmatprep.mubr.bf16.mxu0 0
      %7514 = vmatmul.mubr.bf16.gmra.mrb[0].mxu0 %v5856
      %v7515 = vpop.f32.mrb[0].mxu0
      %v7516 = vadd.f32 %v6900, %v7515
      %v7517 = vpop.f32.mrb[0].mxu0
      %v7518 = vpop.f32.mrb[0].mxu0
      %v7519 = vadd.f32 %v6903, %v7518
      %v7520 = vpop.f32.mrb[0].mxu0
      %7521 = vmatprep.mubr.bf16.mxu0 0
      %7522 = vmatmul.mubr.bf16.gmra.mrb[0].mxu0 %v5859
      %v7523 = vpop.f32.mrb[0].mxu0
      %v7524 = vadd.f32 %v6908, %v7523
      %v7525 = vpop.f32.mrb[0].mxu0
      %v7526 = vpop.f32.mrb[0].mxu0
      %v7527 = vadd.f32 %v6911, %v7526
      %v7528 = vpop.f32.mrb[0].mxu0
      %7529 = vmatprep.mubr.bf16.mxu0 0
      %7530 = vmatmul.mubr.bf16.gmra.mrb[0].mxu0 %v5862
      %v7531 = vpop.f32.mrb[0].mxu0
      %v7532 = vadd.f32 %v6916, %v7531
      %v7533 = vpop.f32.mrb[0].mxu0
      %v7534 = vpop.f32.mrb[0].mxu0
      %v7535 = vadd.f32 %v6919, %v7534
      %v7536 = vpop.f32.mrb[0].mxu0
      %7537 = vmatprep.mubr.bf16.mxu0 0
      %7538 = vmatmul.mubr.bf16.gmra.mrb[0].mxu0 %v5865
      %v7539 = vpop.f32.mrb[0].mxu0
      %v7540 = vadd.f32 %v6924, %v7539
      %v7541 = vpop.f32.mrb[0].mxu0
      %v7542 = vpop.f32.mrb[0].mxu0
      %v7543 = vadd.f32 %v6927, %v7542
      %v7544 = vpop.f32.mrb[0].mxu0
      %7545 = vmatprep.mubr.bf16.mxu0 0
      %7546 = vmatmul.mubr.bf16.gmra.mrb[0].mxu0 %v5868
      %v7547 = vpop.f32.mrb[0].mxu0
      %v7548 = vadd.f32 %v6932, %v7547
      %v7549 = vpop.f32.mrb[0].mxu0
      %v7550 = vpop.f32.mrb[0].mxu0
      %v7551 = vadd.f32 %v6935, %v7550
      %v7552 = vpop.f32.mrb[0].mxu0
      %7553 = vmatprep.mubr.bf16.mxu0 0
      %7554 = vmatmul.mubr.bf16.gmra.mrb[0].mxu0 %v5871
      %v7555 = vpop.f32.mrb[0].mxu0
      %v7556 = vadd.f32 %v6940, %v7555
      %v7557 = vpop.f32.mrb[0].mxu0
      %v7558 = vpop.f32.mrb[0].mxu0
      %v7559 = vadd.f32 %v6943, %v7558
      %v7560 = vpop.f32.mrb[0].mxu0
      %7561 = vmatprep.mubr.bf16.mxu0 0
      %7562 = vmatmul.mubr.bf16.gmra.mrb[0].mxu0 %v5874
      %v7563 = vpop.f32.mrb[0].mxu0
      %v7564 = vadd.f32 %v6948, %v7563
      %v7565 = vpop.f32.mrb[0].mxu0
      %v7566 = vpop.f32.mrb[0].mxu0
      %v7567 = vadd.f32 %v6951, %v7566
      %v7568 = vpop.f32.mrb[0].mxu0
      %7569 = vmatprep.mubr.bf16.mxu0 0
      %7570 = vmatmul.mubr.bf16.gmra.mrb[0].mxu0 %v5877
      %v7571 = vpop.f32.mrb[0].mxu0
      %v7572 = vadd.f32 %v6956, %v7571
      %v7573 = vpop.f32.mrb[0].mxu0
      %v7574 = vpop.f32.mrb[0].mxu0
      %v7575 = vadd.f32 %v6959, %v7574
      %v7576 = vpop.f32.mrb[0].mxu0
      %7577 = vmatprep.mubr.bf16.mxu0 0
      %7578 = vmatmul.mubr.bf16.gmra.mrb[0].mxu0 %v5880
      %v7579 = vpop.f32.mrb[0].mxu0
      %v7580 = vadd.f32 %v6964, %v7579
      %v7581 = vpop.f32.mrb[0].mxu0
      %v7582 = vpop.f32.mrb[0].mxu0
      %v7583 = vadd.f32 %v6967, %v7582
      %v7584 = vpop.f32.mrb[0].mxu0
      %7585 = vmatprep.mubr.bf16.mxu0 0
      %7586 = vmatmul.mubr.bf16.gmra.mrb[0].mxu0 %v5883
      %v7587 = vpop.f32.mrb[0].mxu0
      %v7588 = vadd.f32 %v6972, %v7587
      %v7589 = vpop.f32.mrb[0].mxu0
      %v7590 = vpop.f32.mrb[0].mxu0
      %v7591 = vadd.f32 %v6975, %v7590
      %v7592 = vpop.f32.mrb[0].mxu0
      %7593 = vmatprep.mubr.bf16.mxu0 0
      %7594 = vmatmul.mubr.bf16.gmra.mrb[0].mxu0 %v5886
      %v7595 = vpop.f32.mrb[0].mxu0
      %v7596 = vadd.f32 %v6980, %v7595
      %v7597 = vpop.f32.mrb[0].mxu0
      %v7598 = vpop.f32.mrb[0].mxu0
      %v7599 = vadd.f32 %v6983, %v7598
      %v7600 = vpop.f32.mrb[0].mxu0
      %7601 = vmatprep.mubr.bf16.mxu0 0
      %7602 = vmatmul.mubr.bf16.gmra.mrb[0].mxu0 %v5889
      %v7603 = vpop.f32.mrb[0].mxu0
      %v7604 = vadd.f32 %v6988, %v7603
      %v7605 = vpop.f32.mrb[0].mxu0
      %v7606 = vpop.f32.mrb[0].mxu0
      %v7607 = vadd.f32 %v6991, %v7606
      %v7608 = vpop.f32.mrb[0].mxu0
      %7609 = vmatprep.mubr.bf16.mxu0 0
      %7610 = vmatmul.mubr.bf16.gmra.mrb[0].mxu0 %v5892
      %v7611 = vpop.f32.mrb[0].mxu0
      %v7612 = vadd.f32 %v6996, %v7611
      %v7613 = vpop.f32.mrb[0].mxu0
      %v7614 = vpop.f32.mrb[0].mxu0
      %v7615 = vadd.f32 %v6999, %v7614
      %v7616 = vpop.f32.mrb[0].mxu0
      %7617 = vmatprep.mubr.bf16.mxu0 0
      %7618 = vmatmul.mubr.bf16.gmra.mrb[0].mxu0 %v5895
      %v7619 = vpop.f32.mrb[0].mxu0
      %v7620 = vadd.f32 %v7004, %v7619
      %v7621 = vpop.f32.mrb[0].mxu0
      %v7622 = vpop.f32.mrb[0].mxu0
      %v7623 = vadd.f32 %v7007, %v7622
      %v7624 = vpop.f32.mrb[0].mxu0
      %7625 = vmatprep.mubr.bf16.mxu0 0
      %7626 = vmatmul.mubr.bf16.gmra.mrb[0].mxu0 %v5898
      %v7627 = vpop.f32.mrb[0].mxu0
      %v7628 = vadd.f32 %v7012, %v7627
      %v7629 = vpop.f32.mrb[0].mxu0
      %v7630 = vpop.f32.mrb[0].mxu0
      %v7631 = vadd.f32 %v7015, %v7630
      %v7632 = vpop.f32.mrb[0].mxu0
      %7633 = vmatprep.mubr.bf16.mxu0 0
      %7634 = vmatmul.mubr.bf16.gmra.mrb[0].mxu0 %v5901
      %v7635 = vpop.f32.mrb[0].mxu0
      %v7636 = vadd.f32 %v7020, %v7635
      %v7637 = vpop.f32.mrb[0].mxu0
      %v7638 = vpop.f32.mrb[0].mxu0
      %v7639 = vadd.f32 %v7023, %v7638
      %v7640 = vpop.f32.mrb[0].mxu0
      %7641 = vmatprep.mubr.bf16.mxu0 0
      %7642 = vmatmul.mubr.bf16.gmra.mrb[0].mxu0 %v5904
      %v7643 = vpop.f32.mrb[0].mxu0
      %v7644 = vadd.f32 %v7028, %v7643
      %v7645 = vpop.f32.mrb[0].mxu0
      %v7646 = vpop.f32.mrb[0].mxu0
      %v7647 = vadd.f32 %v7031, %v7646
      %v7648 = vpop.f32.mrb[0].mxu0
      %7649 = vmatprep.mubr.bf16.mxu0 0
      %7650 = vmatmul.mubr.bf16.gmra.mrb[0].mxu0 %v5907
      %v7651 = vpop.f32.mrb[0].mxu0
      %v7652 = vadd.f32 %v7036, %v7651
      %v7653 = vpop.f32.mrb[0].mxu0
      %v7654 = vpop.f32.mrb[0].mxu0
      %v7655 = vadd.f32 %v7039, %v7654
      %v7656 = vpop.f32.mrb[0].mxu0
      %7657 = vmatprep.mubr.bf16.mxu0 0
      %7658 = vmatmul.mubr.bf16.gmra.mrb[0].mxu0 %v5910
      %v7659 = vpop.f32.mrb[0].mxu0
      %v7660 = vadd.f32 %v7044, %v7659
      %v7661 = vpop.f32.mrb[0].mxu0
      %v7662 = vpop.f32.mrb[0].mxu0
      %v7663 = vadd.f32 %v7047, %v7662
      %v7664 = vpop.f32.mrb[0].mxu0
      %7665 = vmatprep.mubr.bf16.mxu0 0
      %7666 = vmatmul.mubr.bf16.gmra.mrb[0].mxu0 %v5913
      %v7667 = vpop.f32.mrb[0].mxu0
      %v7668 = vadd.f32 %v7052, %v7667
      %v7669 = vpop.f32.mrb[0].mxu0
      %v7670 = vpop.f32.mrb[0].mxu0
      %v7671 = vadd.f32 %v7055, %v7670
      %v7672 = vpop.f32.mrb[0].mxu0
      %7673 = vmatprep.mubr.bf16.mxu0 0
      %7674 = vmatmul.mubr.bf16.gmra.mrb[0].mxu0 %v5916
      %v7675 = vpop.f32.mrb[0].mxu0
      %v7676 = vadd.f32 %v7060, %v7675
      %v7677 = vpop.f32.mrb[0].mxu0
      %v7678 = vpop.f32.mrb[0].mxu0
      %v7679 = vadd.f32 %v7063, %v7678
      %v7680 = vpop.f32.mrb[0].mxu0
      %7681 = vmatprep.mubr.bf16.mxu0 0
      %7682 = vmatmul.mubr.bf16.gmra.mrb[0].mxu0 %v5919
      %v7683 = vpop.f32.mrb[0].mxu0
      %v7684 = vadd.f32 %v7068, %v7683
      %v7685 = vpop.f32.mrb[0].mxu0
      %v7686 = vpop.f32.mrb[0].mxu0
      %v7687 = vadd.f32 %v7071, %v7686
      %v7688 = vpop.f32.mrb[0].mxu0
      %7689 = vmatprep.mubr.bf16.mxu0 0
      %7690 = vmatmul.mubr.bf16.gmra.mrb[0].mxu0 %v5922
      %v7691 = vpop.f32.mrb[0].mxu0
      %v7692 = vadd.f32 %v7076, %v7691
      %v7693 = vpop.f32.mrb[0].mxu0
      %v7694 = vpop.f32.mrb[0].mxu0
      %v7695 = vadd.f32 %v7079, %v7694
      %v7696 = vpop.f32.mrb[0].mxu0
      %7697 = vmatprep.mubr.bf16.mxu0 0
      %7698 = vmatmul.mubr.bf16.gmra.mrb[0].mxu0 %v5925
      %v7699 = vpop.f32.mrb[0].mxu0
      %v7700 = vadd.f32 %v7084, %v7699
      %v7701 = vpop.f32.mrb[0].mxu0
      %v7702 = vpop.f32.mrb[0].mxu0
      %v7703 = vadd.f32 %v7087, %v7702
      %v7704 = vpop.f32.mrb[0].mxu0
      %7705 = vmatprep.mubr.bf16.mxu0 0
      %7706 = vmatmul.mubr.bf16.gmra.mrb[0].mxu0 %v5928
      %v7707 = vpop.f32.mrb[0].mxu0
      %v7708 = vadd.f32 %v7092, %v7707
      %v7709 = vpop.f32.mrb[0].mxu0
      %v7710 = vpop.f32.mrb[0].mxu0
      %v7711 = vadd.f32 %v7095, %v7710
      %v7712 = vpop.f32.mrb[0].mxu0
      %7713 = vmatprep.mubr.bf16.mxu0 0
      %7714 = vmatmul.mubr.bf16.gmra.mrb[0].mxu0 %v5931
      %v7715 = vpop.f32.mrb[0].mxu0
      %v7716 = vadd.f32 %v7100, %v7715
      %v7717 = vpop.f32.mrb[0].mxu0
      %v7718 = vpop.f32.mrb[0].mxu0
      %v7719 = vadd.f32 %v7103, %v7718
      %v7720 = vpop.f32.mrb[0].mxu0
      %7721 = vmatprep.mubr.bf16.mxu0 0
      %7722 = vmatmul.mubr.bf16.gmra.mrb[0].mxu0 %v5934
      %v7723 = vpop.f32.mrb[0].mxu0
      %v7724 = vadd.f32 %v7108, %v7723
      %v7725 = vpop.f32.mrb[0].mxu0
      %v7726 = vpop.f32.mrb[0].mxu0
      %v7727 = vadd.f32 %v7111, %v7726
      %v7728 = vpop.f32.mrb[0].mxu0
      %7729 = vmatprep.mubr.bf16.mxu0 0
      %7730 = vmatmul.mubr.bf16.gmra.mrb[0].mxu0 %v5937
      %v7731 = vpop.f32.mrb[0].mxu0
      %v7732 = vadd.f32 %v7116, %v7731
      %v7733 = vpop.f32.mrb[0].mxu0
      %v7734 = vpop.f32.mrb[0].mxu0
      %v7735 = vadd.f32 %v7119, %v7734
      %v7736 = vpop.f32.mrb[0].mxu0
      %7737 = vmatprep.mubr.bf16.mxu0 0
      %7738 = vmatmul.mubr.bf16.gmra.mrb[0].mxu0 %v5940
      %v7739 = vpop.f32.mrb[0].mxu0
      %v7740 = vadd.f32 %v7124, %v7739
      %v7741 = vpop.f32.mrb[0].mxu0
      %v7742 = vpop.f32.mrb[0].mxu0
      %v7743 = vadd.f32 %v7127, %v7742
      %v7744 = vpop.f32.mrb[0].mxu0
      %7745 = vmatprep.mubr.bf16.mxu0 0
      %7746 = vmatmul.mubr.bf16.gmra.mrb[0].mxu0 %v5943
      %v7747 = vpop.f32.mrb[0].mxu0
      %v7748 = vadd.f32 %v7132, %v7747
      %v7749 = vpop.f32.mrb[0].mxu0
      %v7750 = vpop.f32.mrb[0].mxu0
      %v7751 = vadd.f32 %v7135, %v7750
      %v7752 = vpop.f32.mrb[0].mxu0
      %7753 = vmatprep.mubr.bf16.mxu0 0
      %7754 = vmatmul.mubr.bf16.gmra.mrb[0].mxu0 %v5946
      %v7755 = vpop.f32.mrb[0].mxu0
      %v7756 = vadd.f32 %v7140, %v7755
      %v7757 = vpop.f32.mrb[0].mxu0
      %v7758 = vpop.f32.mrb[0].mxu0
      %v7759 = vadd.f32 %v7143, %v7758
      %v7760 = vpop.f32.mrb[0].mxu0
      %7761 = vmatprep.mubr.bf16.mxu0 0
      %7762 = vmatmul.mubr.bf16.gmra.mrb[0].mxu0 %v5949
      %v7763 = vpop.f32.mrb[0].mxu0
      %v7764 = vadd.f32 %v7148, %v7763
      %v7765 = vpop.f32.mrb[0].mxu0
      %v7766 = vpop.f32.mrb[0].mxu0
      %v7767 = vadd.f32 %v7151, %v7766
      %v7768 = vpop.f32.mrb[0].mxu0
      %7769 = vmatprep.mubr.bf16.mxu0 0
      %7770 = vmatmul.mubr.bf16.gmra.mrb[0].mxu0 %v5952
      %v7771 = vpop.f32.mrb[0].mxu0
      %v7772 = vadd.f32 %v7156, %v7771
      %v7773 = vpop.f32.mrb[0].mxu0
      %v7774 = vpop.f32.mrb[0].mxu0
      %v7775 = vadd.f32 %v7159, %v7774
      %v7776 = vpop.f32.mrb[0].mxu0
      %7777 = vmatprep.mubr.bf16.mxu0 0
      %7778 = vmatmul.mubr.bf16.gmra.mrb[0].mxu0 %v5955
      %v7779 = vpop.f32.mrb[0].mxu0
      %v7780 = vadd.f32 %v7164, %v7779
      %v7781 = vpop.f32.mrb[0].mxu0
      %v7782 = vpop.f32.mrb[0].mxu0
      %v7783 = vadd.f32 %v7167, %v7782
      %v7784 = vpop.f32.mrb[0].mxu0
      %7785 = vmatprep.mubr.bf16.mxu0 0
      %7786 = vmatmul.mubr.bf16.gmra.mrb[0].mxu0 %v5958
      %v7787 = vpop.f32.mrb[0].mxu0
      %v7788 = vadd.f32 %v7172, %v7787
      %v7789 = vpop.f32.mrb[0].mxu0
      %v7790 = vpop.f32.mrb[0].mxu0
      %v7791 = vadd.f32 %v7175, %v7790
      %v7792 = vpop.f32.mrb[0].mxu0
      %7793 = vmatprep.mubr.bf16.mxu0 0
      %7794 = vmatmul.mubr.bf16.gmra.mrb[0].mxu0 %v5961
      %v7795 = vpop.f32.mrb[0].mxu0
      %v7796 = vadd.f32 %v7180, %v7795
      %v7797 = vpop.f32.mrb[0].mxu0
      %v7798 = vpop.f32.mrb[0].mxu0
      %v7799 = vadd.f32 %v7183, %v7798
      %v7800 = vpop.f32.mrb[0].mxu0
      %7801 = vmatprep.mubr.bf16.mxu0 0
      %7802 = vmatmul.mubr.bf16.gmra.mrb[0].mxu0 %v5964
      %v7803 = vpop.f32.mrb[0].mxu0
      %v7804 = vadd.f32 %v7188, %v7803
      %v7805 = vpop.f32.mrb[0].mxu0
      %v7806 = vpop.f32.mrb[0].mxu0
      %v7807 = vadd.f32 %v7191, %v7806
      %v7808 = vpop.f32.mrb[0].mxu0
      %7809 = vmatprep.mubr.bf16.mxu0 0
      %7810 = vmatmul.mubr.bf16.gmra.mrb[0].mxu0 %v5967
      %v7811 = vpop.f32.mrb[0].mxu0
      %v7812 = vadd.f32 %v7196, %v7811
      %v7813 = vpop.f32.mrb[0].mxu0
      %v7814 = vpop.f32.mrb[0].mxu0
      %v7815 = vpop.f32.mrb[0].mxu0
      %7816 = vdwg.mxu0
      %vm7817 = vcmask 261120
      %7818 = vst.msk [vmem:[%s224] sm:$0xff] %vm7817, %v7236
      %7819 = vst.msk [vmem:[%s224 + $0x8] sm:$0xff] %vm7817, %v7239
      %7820 = vst.msk [vmem:[%s224 + $0x10] sm:$0xff] %vm7817, %v7244
      %7821 = vst.msk [vmem:[%s224 + $0x18] sm:$0xff] %vm7817, %v7247
      %7822 = vst.msk [vmem:[%s224 + $0x20] sm:$0xff] %vm7817, %v7252
      %7823 = vst.msk [vmem:[%s224 + $0x28] sm:$0xff] %vm7817, %v7255
      %7824 = vst.msk [vmem:[%s224 + $0x30] sm:$0xff] %vm7817, %v7260
      %7825 = vst.msk [vmem:[%s224 + $0x38] sm:$0xff] %vm7817, %v7263
      %7826 = vst.msk [vmem:[%s224 + $0x40] sm:$0xff] %vm7817, %v7268
      %7827 = vst.msk [vmem:[%s224 + $0x48] sm:$0xff] %vm7817, %v7271
      %7828 = vst.msk [vmem:[%s224 + $0x50] sm:$0xff] %vm7817, %v7276
      %7829 = vst.msk [vmem:[%s224 + $0x58] sm:$0xff] %vm7817, %v7279
      %7830 = vst.msk [vmem:[%s224 + $0x60] sm:$0xff] %vm7817, %v7284
      %7831 = vst.msk [vmem:[%s224 + $0x68] sm:$0xff] %vm7817, %v7287
      %7832 = vst.msk [vmem:[%s224 + $0x70] sm:$0xff] %vm7817, %v7292
      %7833 = vst.msk [vmem:[%s224 + $0x78] sm:$0xff] %vm7817, %v7295
      %7834 = vst.msk [vmem:[%s224 + $0x80] sm:$0xff] %vm7817, %v7300
      %7835 = vst.msk [vmem:[%s224 + $0x88] sm:$0xff] %vm7817, %v7303
      %7836 = vst.msk [vmem:[%s224 + $0x90] sm:$0xff] %vm7817, %v7308
      %7837 = vst.msk [vmem:[%s224 + $0x98] sm:$0xff] %vm7817, %v7311
      %7838 = vst.msk [vmem:[%s224 + $0xa0] sm:$0xff] %vm7817, %v7316
      %7839 = vst.msk [vmem:[%s224 + $0xa8] sm:$0xff] %vm7817, %v7319
      %7840 = vst.msk [vmem:[%s224 + $0xb0] sm:$0xff] %vm7817, %v7324
      %7841 = vst.msk [vmem:[%s224 + $0xb8] sm:$0xff] %vm7817, %v7327
      %7842 = vst.msk [vmem:[%s224 + $0xc0] sm:$0xff] %vm7817, %v7332
      %7843 = vst.msk [vmem:[%s224 + $0xc8] sm:$0xff] %vm7817, %v7335
      %7844 = vst.msk [vmem:[%s224 + $0xd0] sm:$0xff] %vm7817, %v7340
      %7845 = vst.msk [vmem:[%s224 + $0xd8] sm:$0xff] %vm7817, %v7343
      %7846 = vst.msk [vmem:[%s224 + $0xe0] sm:$0xff] %vm7817, %v7348
      %7847 = vst.msk [vmem:[%s224 + $0xe8] sm:$0xff] %vm7817, %v7351
      %7848 = vst.msk [vmem:[%s224 + $0xf0] sm:$0xff] %vm7817, %v7356
      %7849 = vst.msk [vmem:[%s224 + $0xf8] sm:$0xff] %vm7817, %v7359
      %7850 = vst.msk [vmem:[%s224 + $0x100] sm:$0xff] %vm7817, %v7364
      %7851 = vst.msk [vmem:[%s224 + $0x108] sm:$0xff] %vm7817, %v7367
      %7852 = vst.msk [vmem:[%s224 + $0x110] sm:$0xff] %vm7817, %v7372
      %7853 = vst.msk [vmem:[%s224 + $0x118] sm:$0xff] %vm7817, %v7375
      %7854 = vst.msk [vmem:[%s224 + $0x120] sm:$0xff] %vm7817, %v7380
      %7855 = vst.msk [vmem:[%s224 + $0x128] sm:$0xff] %vm7817, %v7383
      %7856 = vst.msk [vmem:[%s224 + $0x130] sm:$0xff] %vm7817, %v7388
      %7857 = vst.msk [vmem:[%s224 + $0x138] sm:$0xff] %vm7817, %v7391
      %7858 = vst.msk [vmem:[%s224 + $0x140] sm:$0xff] %vm7817, %v7396
      %7859 = vst.msk [vmem:[%s224 + $0x148] sm:$0xff] %vm7817, %v7399
      %7860 = vst.msk [vmem:[%s224 + $0x150] sm:$0xff] %vm7817, %v7404
      %7861 = vst.msk [vmem:[%s224 + $0x158] sm:$0xff] %vm7817, %v7407
      %7862 = vst.msk [vmem:[%s224 + $0x160] sm:$0xff] %vm7817, %v7412
      %7863 = vst.msk [vmem:[%s224 + $0x168] sm:$0xff] %vm7817, %v7415
      %7864 = vst.msk [vmem:[%s224 + $0x170] sm:$0xff] %vm7817, %v7420
      %7865 = vst.msk [vmem:[%s224 + $0x178] sm:$0xff] %vm7817, %v7423
      %7866 = vst.msk [vmem:[%s224 + $0x180] sm:$0xff] %vm7817, %v7428
      %7867 = vst.msk [vmem:[%s224 + $0x188] sm:$0xff] %vm7817, %v7431
      %7868 = vst.msk [vmem:[%s224 + $0x190] sm:$0xff] %vm7817, %v7436
      %7869 = vst.msk [vmem:[%s224 + $0x198] sm:$0xff] %vm7817, %v7439
      %7870 = vst.msk [vmem:[%s224 + $0x1a0] sm:$0xff] %vm7817, %v7444
      %7871 = vst.msk [vmem:[%s224 + $0x1a8] sm:$0xff] %vm7817, %v7447
      %7872 = vst.msk [vmem:[%s224 + $0x1b0] sm:$0xff] %vm7817, %v7452
      %7873 = vst.msk [vmem:[%s224 + $0x1b8] sm:$0xff] %vm7817, %v7455
      %7874 = vst.msk [vmem:[%s224 + $0x1c0] sm:$0xff] %vm7817, %v7460
      %7875 = vst.msk [vmem:[%s224 + $0x1c8] sm:$0xff] %vm7817, %v7463
      %7876 = vst.msk [vmem:[%s224 + $0x1d0] sm:$0xff] %vm7817, %v7468
      %7877 = vst.msk [vmem:[%s224 + $0x1d8] sm:$0xff] %vm7817, %v7471
      %7878 = vst.msk [vmem:[%s224 + $0x1e0] sm:$0xff] %vm7817, %v7476
      %7879 = vst.msk [vmem:[%s224 + $0x1e8] sm:$0xff] %vm7817, %v7479
      %7880 = vst.msk [vmem:[%s224 + $0x1f0] sm:$0xff] %vm7817, %v7484
      %7881 = vst.msk [vmem:[%s224 + $0x1f8] sm:$0xff] %vm7817, %v7487
      %7882 = vst.msk [vmem:[%s224 + $0x200] sm:$0xff] %vm7817, %v7492
      %7883 = vst.msk [vmem:[%s224 + $0x208] sm:$0xff] %vm7817, %v7495
      %7884 = vst.msk [vmem:[%s224 + $0x210] sm:$0xff] %vm7817, %v7500
      %7885 = vst.msk [vmem:[%s224 + $0x218] sm:$0xff] %vm7817, %v7503
      %7886 = vst.msk [vmem:[%s224 + $0x220] sm:$0xff] %vm7817, %v7508
      %7887 = vst.msk [vmem:[%s224 + $0x228] sm:$0xff] %vm7817, %v7511
      %7888 = vst.msk [vmem:[%s224 + $0x230] sm:$0xff] %vm7817, %v7516
      %7889 = vst.msk [vmem:[%s224 + $0x238] sm:$0xff] %vm7817, %v7519
      %7890 = vst.msk [vmem:[%s224 + $0x240] sm:$0xff] %vm7817, %v7524
      %7891 = vst.msk [vmem:[%s224 + $0x248] sm:$0xff] %vm7817, %v7527
      %7892 = vst.msk [vmem:[%s224 + $0x250] sm:$0xff] %vm7817, %v7532
      %7893 = vst.msk [vmem:[%s224 + $0x258] sm:$0xff] %vm7817, %v7535
      %7894 = vst.msk [vmem:[%s224 + $0x260] sm:$0xff] %vm7817, %v7540
      %7895 = vst.msk [vmem:[%s224 + $0x268] sm:$0xff] %vm7817, %v7543
      %7896 = vst.msk [vmem:[%s224 + $0x270] sm:$0xff] %vm7817, %v7548
      %7897 = vst.msk [vmem:[%s224 + $0x278] sm:$0xff] %vm7817, %v7551
      %7898 = vst.msk [vmem:[%s224 + $0x280] sm:$0xff] %vm7817, %v7556
      %7899 = vst.msk [vmem:[%s224 + $0x288] sm:$0xff] %vm7817, %v7559
      %7900 = vst.msk [vmem:[%s224 + $0x290] sm:$0xff] %vm7817, %v7564
      %7901 = vst.msk [vmem:[%s224 + $0x298] sm:$0xff] %vm7817, %v7567
      %7902 = vst.msk [vmem:[%s224 + $0x2a0] sm:$0xff] %vm7817, %v7572
      %7903 = vst.msk [vmem:[%s224 + $0x2a8] sm:$0xff] %vm7817, %v7575
      %7904 = vst.msk [vmem:[%s224 + $0x2b0] sm:$0xff] %vm7817, %v7580
      %7905 = vst.msk [vmem:[%s224 + $0x2b8] sm:$0xff] %vm7817, %v7583
      %7906 = vst.msk [vmem:[%s224 + $0x2c0] sm:$0xff] %vm7817, %v7588
      %7907 = vst.msk [vmem:[%s224 + $0x2c8] sm:$0xff] %vm7817, %v7591
      %7908 = vst.msk [vmem:[%s224 + $0x2d0] sm:$0xff] %vm7817, %v7596
      %7909 = vst.msk [vmem:[%s224 + $0x2d8] sm:$0xff] %vm7817, %v7599
      %7910 = vst.msk [vmem:[%s224 + $0x2e0] sm:$0xff] %vm7817, %v7604
      %7911 = vst.msk [vmem:[%s224 + $0x2e8] sm:$0xff] %vm7817, %v7607
      %7912 = vst.msk [vmem:[%s224 + $0x2f0] sm:$0xff] %vm7817, %v7612
      %7913 = vst.msk [vmem:[%s224 + $0x2f8] sm:$0xff] %vm7817, %v7615
      %7914 = vst.msk [vmem:[%s224 + $0x300] sm:$0xff] %vm7817, %v7620
      %7915 = vst.msk [vmem:[%s224 + $0x308] sm:$0xff] %vm7817, %v7623
      %7916 = vst.msk [vmem:[%s224 + $0x310] sm:$0xff] %vm7817, %v7628
      %7917 = vst.msk [vmem:[%s224 + $0x318] sm:$0xff] %vm7817, %v7631
      %7918 = vst.msk [vmem:[%s224 + $0x320] sm:$0xff] %vm7817, %v7636
      %7919 = vst.msk [vmem:[%s224 + $0x328] sm:$0xff] %vm7817, %v7639
      %7920 = vst.msk [vmem:[%s224 + $0x330] sm:$0xff] %vm7817, %v7644
      %7921 = vst.msk [vmem:[%s224 + $0x338] sm:$0xff] %vm7817, %v7647
      %7922 = vst.msk [vmem:[%s224 + $0x340] sm:$0xff] %vm7817, %v7652
      %7923 = vst.msk [vmem:[%s224 + $0x348] sm:$0xff] %vm7817, %v7655
      %7924 = vst.msk [vmem:[%s224 + $0x350] sm:$0xff] %vm7817, %v7660
      %7925 = vst.msk [vmem:[%s224 + $0x358] sm:$0xff] %vm7817, %v7663
      %7926 = vst.msk [vmem:[%s224 + $0x360] sm:$0xff] %vm7817, %v7668
      %7927 = vst.msk [vmem:[%s224 + $0x368] sm:$0xff] %vm7817, %v7671
      %7928 = vst.msk [vmem:[%s224 + $0x370] sm:$0xff] %vm7817, %v7676
      %7929 = vst.msk [vmem:[%s224 + $0x378] sm:$0xff] %vm7817, %v7679
      %7930 = vst.msk [vmem:[%s224 + $0x380] sm:$0xff] %vm7817, %v7684
      %7931 = vst.msk [vmem:[%s224 + $0x388] sm:$0xff] %vm7817, %v7687
      %7932 = vst.msk [vmem:[%s224 + $0x390] sm:$0xff] %vm7817, %v7692
      %7933 = vst.msk [vmem:[%s224 + $0x398] sm:$0xff] %vm7817, %v7695
      %7934 = vst.msk [vmem:[%s224 + $0x3a0] sm:$0xff] %vm7817, %v7700
      %7935 = vst.msk [vmem:[%s224 + $0x3a8] sm:$0xff] %vm7817, %v7703
      %7936 = vst.msk [vmem:[%s224 + $0x3b0] sm:$0xff] %vm7817, %v7708
      %7937 = vst.msk [vmem:[%s224 + $0x3b8] sm:$0xff] %vm7817, %v7711
      %7938 = vst.msk [vmem:[%s224 + $0x3c0] sm:$0xff] %vm7817, %v7716
      %7939 = vst.msk [vmem:[%s224 + $0x3c8] sm:$0xff] %vm7817, %v7719
      %7940 = vst.msk [vmem:[%s224 + $0x3d0] sm:$0xff] %vm7817, %v7724
      %7941 = vst.msk [vmem:[%s224 + $0x3d8] sm:$0xff] %vm7817, %v7727
      %7942 = vst.msk [vmem:[%s224 + $0x3e0] sm:$0xff] %vm7817, %v7732
      %7943 = vst.msk [vmem:[%s224 + $0x3e8] sm:$0xff] %vm7817, %v7735
      %7944 = vst.msk [vmem:[%s224 + $0x3f0] sm:$0xff] %vm7817, %v7740
      %7945 = vst.msk [vmem:[%s224 + $0x3f8] sm:$0xff] %vm7817, %v7743
      %7946 = vst.msk [vmem:[%s224 + $0x400] sm:$0xff] %vm7817, %v7748
      %7947 = vst.msk [vmem:[%s224 + $0x408] sm:$0xff] %vm7817, %v7751
      %7948 = vst.msk [vmem:[%s224 + $0x410] sm:$0xff] %vm7817, %v7756
      %7949 = vst.msk [vmem:[%s224 + $0x418] sm:$0xff] %vm7817, %v7759
      %7950 = vst.msk [vmem:[%s224 + $0x420] sm:$0xff] %vm7817, %v7764
      %7951 = vst.msk [vmem:[%s224 + $0x428] sm:$0xff] %vm7817, %v7767
      %7952 = vst.msk [vmem:[%s224 + $0x430] sm:$0xff] %vm7817, %v7772
      %7953 = vst.msk [vmem:[%s224 + $0x438] sm:$0xff] %vm7817, %v7775
      %7954 = vst.msk [vmem:[%s224 + $0x440] sm:$0xff] %vm7817, %v7780
      %7955 = vst.msk [vmem:[%s224 + $0x448] sm:$0xff] %vm7817, %v7783
      %7956 = vst.msk [vmem:[%s224 + $0x450] sm:$0xff] %vm7817, %v7788
      %7957 = vst.msk [vmem:[%s224 + $0x458] sm:$0xff] %vm7817, %v7791
      %7958 = vst.msk [vmem:[%s224 + $0x460] sm:$0xff] %vm7817, %v7796
      %7959 = vst.msk [vmem:[%s224 + $0x468] sm:$0xff] %vm7817, %v7799
      %7960 = vst.msk [vmem:[%s224 + $0x470] sm:$0xff] %vm7817, %v7804
      %7961 = vst.msk [vmem:[%s224 + $0x478] sm:$0xff] %vm7817, %v7807
      %7962 = vst.msk [vmem:[%s224 + $0x480] sm:$0xff] %vm7817, %v7812
      %p7963 = scmp.lt.s32.totalorder %s16, 1
      %s7964 = scalar_select %p7963, %s16, 1
      %s7965 = smul.addr %s7964, 145
      %s7966 = smul.addr %s7965, 8
      %s7967 = scalar_lea.vmem %s5, %s7966
      // Predicated region
      $region41: #{global_discriminator_forward.2} parent=39 // pred_check
        %p7968 = pneg %p144
      $region42: #{global_discriminator_forward.2} parent=39 // pred_check_branch
        %7970 = sbr.rel (%p7968) target = $region44
      $region43: #{global_discriminator_forward.2} parent=39 // pred_region
        _
      $region44: #{global_discriminator_forward.2} parent=39 // pred_fallthru
        _
    $region40: #{global_discriminator_forward.2} parent=5 // pred_fallthru
      _
    %p7971 = scmp.le.s32.totalorder 2, %s11
    // Predicated region
    $region45: #{global_discriminator_forward.2} parent=5 // pred_check
      %p7972 = pneg %p7971
    $region46: #{global_discriminator_forward.2} parent=5 // pred_check_branch
      %7974 = sbr.rel (%p7972) target = $region48
    $region47: #{global_discriminator_forward.2} parent=5 // pred_region
      %s7975 = ssub.s32 %s11, 2
      // Predicated region
      $region49: #{global_discriminator_forward.2} parent=47 // pred_check
        %p7976 = pneg %p150
      $region50: #{global_discriminator_forward.2} parent=47 // pred_check_branch
        %7978 = sbr.rel (%p7976) target = $region52
      $region51: #{global_discriminator_forward.2} parent=47 // pred_region
        %p7979 = scmp.lt.s32.totalorder %s17, 1
        %s7980 = scalar_select %p7979, %s17, 1
        %s7981 = smul.addr %s7980, 145
        %s7982 = smul.addr %s7981, 8
        %s7983 = scalar_lea.vmem %s5, %s7982
      $region52: #{global_discriminator_forward.2} parent=47 // pred_fallthru
        _
    $region48: #{global_discriminator_forward.2} parent=5 // pred_fallthru
      _
  $region6: #{global_discriminator_forward.2} parent=0 // loop_footer
    %s15 = sadd.s32 1, %s11
  $region7: #{global_discriminator_forward.2} parent=0 // loop_footer_branch
    %10 = sbr.rel target = $region3
  $region8: #{global_discriminator_forward.2} parent=0 // loop_exit
    _

// kernel: global_discriminator_forward.3
$region0: #{global_discriminator_forward.3}
  #allocation0 [shape = 'u32[]', space=smem, size = 0x4, offset = 0x4, fixed_abs, tag = 'smem constant byte address 0x4 - core index']
  #allocation1 [shape = 'u32[144,128]{1,0:T(1,128)}', space=vmem, size = 0x12000, scoped, tag = 'internal scratch']
  #allocation2 [shape = 'f32[8,256]{1,0:T(8,128)}', space=vmem, size = 0x2000, scoped, tag = 'scratch operand']
  %s0 = inlined_call_operand.vmem [shape: bf16[8,8448], index: 0, kind: input, shape index: {}]
  %s1 = inlined_call_operand.vmem [shape: s8[8448,256], index: 1, kind: input, shape index: {}]
  %s2 = inlined_call_operand.vmem [shape: f32[1,256], index: 2, kind: input, shape index: {}]
  %s3 = inlined_call_operand.vmem [shape: f32[1,256], index: 3, kind: input, shape index: {}]
  %s4 = inlined_call_operand.vmem [shape: bf16[256,256], index: 4, kind: input, shape index: {}]
  %s5 = inlined_call_operand.vmem [shape: f32[1,256], index: 5, kind: input, shape index: {}]
  %s6 = inlined_call_operand.vmem [shape: bf16[256,128], index: 6, kind: input, shape index: {}]
  %s7 = inlined_call_operand.vmem [shape: f32[1,128], index: 7, kind: input, shape index: {}]
  %s8 = inlined_call_operand.vmem [shape: f32[2,1], index: 8, kind: output, shape index: {}]
  %s9 = sld [smem:[#allocation0]]
  $region73: #{global_discriminator_forward.3} parent=0
    _
  %s11 = ssub.s32 1, %s9
  %s12 = scalar_select 0, %s11, %s9
  loop: start=0, step=1, limit=5
  $region2: #{global_discriminator_forward.3} parent=0 // loop_pre_header
    _
  $region3: #{global_discriminator_forward.3} parent=0 // loop_header
    %s14 = sphi 0, %s18
    %p15 = scmp.ge.s32.totalorder %s14, 5
    %s24 = sphi 0, %s26
    %s27 = sphi 0, %s24
    %s28 = sphi 0, %s27
    %s44 = sphi 0, %s28
    %s50 = sphi 0, %s52
    %s53 = sphi 0, %s50
    %s54 = sphi 0, %s53
    %s70 = sphi 0, %s54
    %s74 = sphi 0, %s74
    %s76 = sphi 0, %s74
    %s77 = sphi 0, %s76
    %s91 = sphi 0, %s77
    %s95 = sphi 0, %s95
    %s97 = sphi 0, %s95
    %s98 = sphi 0, %s97
    %s112 = sphi 0, %s98
    %s116 = sphi 0, %s116
    %s118 = sphi 0, %s116
    %s119 = sphi 0, %s118
    %s133 = sphi 0, %s119
    %s137 = sphi 0, %s137
    %s139 = sphi 0, %s137
    %s140 = sphi 0, %s139
    %s154 = sphi 0, %s140
    %s158 = sphi 0, %s158
    %s160 = sphi 0, %s158
    %s161 = sphi 0, %s160
    %s175 = sphi 0, %s161
    %s179 = sphi 0, %s179
    %s181 = sphi 0, %s179
    %s182 = sphi 0, %s181
    %s196 = sphi 0, %s182
    %s200 = sphi 0, %s200
    %s202 = sphi 0, %s200
    %s203 = sphi 0, %s202
    %s217 = sphi 0, %s203
  $region4: #{global_discriminator_forward.3} parent=0 // loop_header_branch
    %17 = sbr.rel (%p15) target = $region8
  $region5: #{global_discriminator_forward.3} parent=0 // loop_body
    %s19 = ssub.s32 %s14, 1
    %s20 = ssub.s32 %s14, 2
    %s21 = sadd.s32 %s14, 1
    %s22 = ssub.s32 %s14, %s21
    %p23 = scmp.eq.s32.totalorder %s22, 0
    %s25 = sadd.s32 %s24, 1
    %s26 = scalar_select %p23, %s24, %s25
    %p29 = pneg %p23
    %p30 = scmp.eq.s32.totalorder %s14, 2
    %p31 = por %p29, %p30
    %p32 = scmp.ne.s32.totalorder %s24, %s27
    %p33 = scmp.eq.s32.totalorder %s14, 0
    %p34 = por %p32, %p33
    %p35 = scmp.ne.s32.totalorder %s24, %s27
    %p36 = scmp.eq.s32.totalorder %s19, 2
    %p37 = por %p35, %p36
    %p38 = scmp.ne.s32.totalorder %s27, %s28
    %p39 = scmp.eq.s32.totalorder %s19, 0
    %p40 = por %p38, %p39
    %p41 = scmp.ne.s32.totalorder %s27, %s28
    %p42 = scmp.eq.s32.totalorder %s20, 2
    %p43 = por %p41, %p42
    %p45 = scmp.ne.s32.totalorder %s28, %s44
    %p46 = scmp.eq.s32.totalorder %s20, 0
    %p47 = por %p45, %p46
    %s48 = ssub.s32 %s14, %s21
    %p49 = scmp.eq.s32.totalorder %s48, 0
    %s51 = sadd.s32 %s50, 1
    %s52 = scalar_select %p49, %s50, %s51
    %p55 = pneg %p49
    %p56 = scmp.eq.s32.totalorder %s14, 2
    %p57 = por %p55, %p56
    %p58 = scmp.ne.s32.totalorder %s50, %s53
    %p59 = scmp.eq.s32.totalorder %s14, 0
    %p60 = por %p58, %p59
    %p61 = scmp.ne.s32.totalorder %s50, %s53
    %p62 = scmp.eq.s32.totalorder %s19, 2
    %p63 = por %p61, %p62
    %p64 = scmp.ne.s32.totalorder %s53, %s54
    %p65 = scmp.eq.s32.totalorder %s19, 0
    %p66 = por %p64, %p65
    %p67 = scmp.ne.s32.totalorder %s53, %s54
    %p68 = scmp.eq.s32.totalorder %s20, 2
    %p69 = por %p67, %p68
    %p71 = scmp.ne.s32.totalorder %s54, %s70
    %p72 = scmp.eq.s32.totalorder %s20, 0
    %p73 = por %p71, %p72
    %s75 = sadd.s32 %s74, 1
    %p78 = scmp.eq.s32.totalorder %s14, 2
    %p79 = scmp.ne.s32.totalorder %s74, %s76
    %p80 = scmp.eq.s32.totalorder %s14, 0
    %p81 = por %p79, %p80
    %p82 = scmp.ne.s32.totalorder %s74, %s76
    %p83 = scmp.eq.s32.totalorder %s19, 2
    %p84 = por %p82, %p83
    %p85 = scmp.ne.s32.totalorder %s76, %s77
    %p86 = scmp.eq.s32.totalorder %s19, 0
    %p87 = por %p85, %p86
    %p88 = scmp.ne.s32.totalorder %s76, %s77
    %p89 = scmp.eq.s32.totalorder %s20, 2
    %p90 = por %p88, %p89
    %p92 = scmp.ne.s32.totalorder %s77, %s91
    %p93 = scmp.eq.s32.totalorder %s20, 0
    %p94 = por %p92, %p93
    %s96 = sadd.s32 %s95, 1
    %p99 = scmp.eq.s32.totalorder %s14, 2
    %p100 = scmp.ne.s32.totalorder %s95, %s97
    %p101 = scmp.eq.s32.totalorder %s14, 0
    %p102 = por %p100, %p101
    %p103 = scmp.ne.s32.totalorder %s95, %s97
    %p104 = scmp.eq.s32.totalorder %s19, 2
    %p105 = por %p103, %p104
    %p106 = scmp.ne.s32.totalorder %s97, %s98
    %p107 = scmp.eq.s32.totalorder %s19, 0
    %p108 = por %p106, %p107
    %p109 = scmp.ne.s32.totalorder %s97, %s98
    %p110 = scmp.eq.s32.totalorder %s20, 2
    %p111 = por %p109, %p110
    %p113 = scmp.ne.s32.totalorder %s98, %s112
    %p114 = scmp.eq.s32.totalorder %s20, 0
    %p115 = por %p113, %p114
    %s117 = sadd.s32 %s116, 1
    %p120 = scmp.eq.s32.totalorder %s14, 2
    %p121 = scmp.ne.s32.totalorder %s116, %s118
    %p122 = scmp.eq.s32.totalorder %s14, 0
    %p123 = por %p121, %p122
    %p124 = scmp.ne.s32.totalorder %s116, %s118
    %p125 = scmp.eq.s32.totalorder %s19, 2
    %p126 = por %p124, %p125
    %p127 = scmp.ne.s32.totalorder %s118, %s119
    %p128 = scmp.eq.s32.totalorder %s19, 0
    %p129 = por %p127, %p128
    %p130 = scmp.ne.s32.totalorder %s118, %s119
    %p131 = scmp.eq.s32.totalorder %s20, 2
    %p132 = por %p130, %p131
    %p134 = scmp.ne.s32.totalorder %s119, %s133
    %p135 = scmp.eq.s32.totalorder %s20, 0
    %p136 = por %p134, %p135
    %s138 = sadd.s32 %s137, 1
    %p141 = scmp.eq.s32.totalorder %s14, 2
    %p142 = scmp.ne.s32.totalorder %s137, %s139
    %p143 = scmp.eq.s32.totalorder %s14, 0
    %p144 = por %p142, %p143
    %p145 = scmp.ne.s32.totalorder %s137, %s139
    %p146 = scmp.eq.s32.totalorder %s19, 2
    %p147 = por %p145, %p146
    %p148 = scmp.ne.s32.totalorder %s139, %s140
    %p149 = scmp.eq.s32.totalorder %s19, 0
    %p150 = por %p148, %p149
    %p151 = scmp.ne.s32.totalorder %s139, %s140
    %p152 = scmp.eq.s32.totalorder %s20, 2
    %p153 = por %p151, %p152
    %p155 = scmp.ne.s32.totalorder %s140, %s154
    %p156 = scmp.eq.s32.totalorder %s20, 0
    %p157 = por %p155, %p156
    %s159 = sadd.s32 %s158, 1
    %p162 = scmp.eq.s32.totalorder %s14, 2
    %p163 = scmp.ne.s32.totalorder %s158, %s160
    %p164 = scmp.eq.s32.totalorder %s14, 0
    %p165 = por %p163, %p164
    %p166 = scmp.ne.s32.totalorder %s158, %s160
    %p167 = scmp.eq.s32.totalorder %s19, 2
    %p168 = por %p166, %p167
    %p169 = scmp.ne.s32.totalorder %s160, %s161
    %p170 = scmp.eq.s32.totalorder %s19, 0
    %p171 = por %p169, %p170
    %p172 = scmp.ne.s32.totalorder %s160, %s161
    %p173 = scmp.eq.s32.totalorder %s20, 2
    %p174 = por %p172, %p173
    %p176 = scmp.ne.s32.totalorder %s161, %s175
    %p177 = scmp.eq.s32.totalorder %s20, 0
    %p178 = por %p176, %p177
    %s180 = sadd.s32 %s179, 1
    %p183 = scmp.eq.s32.totalorder %s14, 2
    %p184 = scmp.ne.s32.totalorder %s179, %s181
    %p185 = scmp.eq.s32.totalorder %s14, 0
    %p186 = por %p184, %p185
    %p187 = scmp.ne.s32.totalorder %s179, %s181
    %p188 = scmp.eq.s32.totalorder %s19, 2
    %p189 = por %p187, %p188
    %p190 = scmp.ne.s32.totalorder %s181, %s182
    %p191 = scmp.eq.s32.totalorder %s19, 0
    %p192 = por %p190, %p191
    %p193 = scmp.ne.s32.totalorder %s181, %s182
    %p194 = scmp.eq.s32.totalorder %s20, 2
    %p195 = por %p193, %p194
    %p197 = scmp.ne.s32.totalorder %s182, %s196
    %p198 = scmp.eq.s32.totalorder %s20, 0
    %p199 = por %p197, %p198
    %s201 = sadd.s32 %s200, 1
    %p204 = scmp.eq.s32.totalorder %s14, 2
    %p205 = scmp.ne.s32.totalorder %s200, %s202
    %p206 = scmp.eq.s32.totalorder %s14, 0
    %p207 = por %p205, %p206
    %p208 = scmp.ne.s32.totalorder %s200, %s202
    %p209 = scmp.eq.s32.totalorder %s19, 2
    %p210 = por %p208, %p209
    %p211 = scmp.ne.s32.totalorder %s202, %s203
    %p212 = scmp.eq.s32.totalorder %s19, 0
    %p213 = por %p211, %p212
    %p214 = scmp.ne.s32.totalorder %s202, %s203
    %p215 = scmp.eq.s32.totalorder %s20, 2
    %p216 = por %p214, %p215
    %p218 = scmp.ne.s32.totalorder %s203, %s217
    %p219 = scmp.eq.s32.totalorder %s20, 0
    %p220 = por %p218, %p219
    %p221 = scmp.le.s32.totalorder 1, %s14
    %p222 = scmp.lt.s32.totalorder %s14, 4
    %p223 = pnand %p221, %p222
    %p224 = pneg %p223
    // Predicated region
    $region9: #{global_discriminator_forward.3} parent=5 // pred_check
      _
    $region10: #{global_discriminator_forward.3} parent=5 // pred_check_branch
      %226 = sbr.rel (%p223) target = $region12
    $region11: #{global_discriminator_forward.3} parent=5 // pred_region
      %s227 = ssub.s32 %s14, 1
      // Predicated region
      $region13: #{global_discriminator_forward.3} parent=11 // pred_check
        %p228 = pneg %p87
      $region14: #{global_discriminator_forward.3} parent=11 // pred_check_branch
        %230 = sbr.rel (%p228) target = $region16
      $region15: #{global_discriminator_forward.3} parent=11 // pred_region
        _
      $region16: #{global_discriminator_forward.3} parent=11 // pred_fallthru
        _
      // Predicated region
      $region17: #{global_discriminator_forward.3} parent=11 // pred_check
        %p231 = pneg %p108
      $region18: #{global_discriminator_forward.3} parent=11 // pred_check_branch
        %233 = sbr.rel (%p231) target = $region20
      $region19: #{global_discriminator_forward.3} parent=11 // pred_region
        _
      $region20: #{global_discriminator_forward.3} parent=11 // pred_fallthru
        _
      // Predicated region
      $region21: #{global_discriminator_forward.3} parent=11 // pred_check
        %p234 = pneg %p129
      $region22: #{global_discriminator_forward.3} parent=11 // pred_check_branch
        %236 = sbr.rel (%p234) target = $region24
      $region23: #{global_discriminator_forward.3} parent=11 // pred_region
        _
      $region24: #{global_discriminator_forward.3} parent=11 // pred_fallthru
        _
      // Predicated region
      $region25: #{global_discriminator_forward.3} parent=11 // pred_check
        %p237 = pneg %p150
      $region26: #{global_discriminator_forward.3} parent=11 // pred_check_branch
        %239 = sbr.rel (%p237) target = $region28
      $region27: #{global_discriminator_forward.3} parent=11 // pred_region
        _
      $region28: #{global_discriminator_forward.3} parent=11 // pred_fallthru
        _
      // Predicated region
      $region29: #{global_discriminator_forward.3} parent=11 // pred_check
        %p240 = pneg %p171
      $region30: #{global_discriminator_forward.3} parent=11 // pred_check_branch
        %242 = sbr.rel (%p240) target = $region32
      $region31: #{global_discriminator_forward.3} parent=11 // pred_region
        _
      $region32: #{global_discriminator_forward.3} parent=11 // pred_fallthru
        _
      // Predicated region
      $region33: #{global_discriminator_forward.3} parent=11 // pred_check
        %p243 = pneg %p192
      $region34: #{global_discriminator_forward.3} parent=11 // pred_check_branch
        %245 = sbr.rel (%p243) target = $region36
      $region35: #{global_discriminator_forward.3} parent=11 // pred_region
        _
      $region36: #{global_discriminator_forward.3} parent=11 // pred_fallthru
        _
    $region12: #{global_discriminator_forward.3} parent=5 // pred_fallthru
      _
    %p246 = scmp.lt.s32.totalorder %s14, 3
    // Predicated region
    $region37: #{global_discriminator_forward.3} parent=5 // pred_check
      %p247 = pneg %p246
    $region38: #{global_discriminator_forward.3} parent=5 // pred_check_branch
      %249 = sbr.rel (%p247) target = $region40
    $region39: #{global_discriminator_forward.3} parent=5 // pred_region
      // Predicated region
      $region41: #{global_discriminator_forward.3} parent=39 // pred_check
        %p250 = pneg %p34
      $region42: #{global_discriminator_forward.3} parent=39 // pred_check_branch
        %252 = sbr.rel (%p250) target = $region44
      $region43: #{global_discriminator_forward.3} parent=39 // pred_region
        %s253 = smul.u32 22, %s14
        %p254 = scmp.lt.s32.totalorder %s253, 65
        %s255 = scalar_select %p254, %s253, 65
        %s256 = smul.addr %s255, 4
        %s257 = scalar_lea.vmem %s0, %s256
        %s258 = smul.u32 22, %s14
      $region44: #{global_discriminator_forward.3} parent=39 // pred_fallthru
        _
      // Predicated region
      $region45: #{global_discriminator_forward.3} parent=39 // pred_check
        %p259 = pneg %p60
      $region46: #{global_discriminator_forward.3} parent=39 // pred_check_branch
        %261 = sbr.rel (%p259) target = $region48
      $region47: #{global_discriminator_forward.3} parent=39 // pred_region
        %s262 = smul.u32 88, %s14
        %p263 = scmp.lt.s32.totalorder %s262, 263
        %s264 = scalar_select %p263, %s262, 263
        %s265 = smul.addr %s264, 2
        %s266 = smul.addr %s265, 8
        %s267 = scalar_lea.vmem %s1, %s266
        %s268 = smul.u32 88, %s14
      $region48: #{global_discriminator_forward.3} parent=39 // pred_fallthru
        _
    $region40: #{global_discriminator_forward.3} parent=5 // pred_fallthru
      _
    %p269 = scmp.le.s32.totalorder 1, %s14
    %p270 = scmp.lt.s32.totalorder %s14, 4
    %p271 = pnand %p269, %p270
    %p272 = pneg %p271
    // Predicated region
    $region49: #{global_discriminator_forward.3} parent=5 // pred_check
      _
    $region50: #{global_discriminator_forward.3} parent=5 // pred_check_branch
      %274 = sbr.rel (%p271) target = $region52
    $region51: #{global_discriminator_forward.3} parent=5 // pred_region
      %s275 = ssub.s32 %s14, 1
      %s276 = smul.u32 22, %s19
      %p277 = scmp.lt.s32.totalorder %s276, 65
      %s278 = scalar_select %p277, %s276, 65
      %s279 = smul.addr %s278, 4
      %s280 = scalar_lea.vmem %s0, %s279
      %p281 = pneg %p40
      %p282 = pneg %p37
      %s283 = smul.u32 88, %s19
      %p284 = scmp.lt.s32.totalorder %s283, 263
      %s285 = scalar_select %p284, %s283, 263
      %s286 = smul.addr %s285, 2
      %s287 = smul.addr %s286, 8
      %s288 = scalar_lea.vmem %s1, %s287
      %p289 = pneg %p66
      %p290 = pneg %p63
      %p291 = pneg %p87
      %p292 = pneg %p84
      %p293 = pneg %p108
      %p294 = pneg %p105
      %p295 = pneg %p129
      %p296 = pneg %p126
      %p297 = pneg %p150
      %p298 = pneg %p147
      %p299 = pneg %p171
      %p300 = pneg %p168
      %p301 = pneg %p192
      %p302 = pneg %p189
      %p303 = pneg %p213
      %p304 = pneg %p210
      %s305 = smul.u32 22, %s19
      %p306 = scmp.lt.s32.totalorder %s305, 65
      %s307 = scalar_select %p306, %s305, 65
      %s308 = smul.addr %s307, 4
      %s309 = scalar_lea.vmem %s0, %s308
      %s310 = smul.u32 22, %s19
      %s311 = smul.u32 88, %s19
      %p312 = scmp.lt.s32.totalorder %s311, 263
      %s313 = scalar_select %p312, %s311, 263
      %s314 = smul.addr %s313, 2
      %s315 = smul.addr %s314, 8
      %s316 = scalar_lea.vmem %s1, %s315
      %s317 = smul.u32 88, %s19
      %p319 = scmp.eq.s32.totalorder %s19, 0
      // Predicated region
      $region53: #{global_discriminator_forward.3} parent=51 // pred_check
        %p320 = pneg %p319
      $region54: #{global_discriminator_forward.3} parent=51 // pred_check_branch
        %322 = sbr.rel (%p320) target = $region56
      $region55: #{global_discriminator_forward.3} parent=51 // pred_region
        %323 = vst [vmem:[#allocation2] sm:$0xff] 0.0
        %324 = vst [vmem:[#allocation2 + $0x8] sm:$0xff] 0.0
      $region56: #{global_discriminator_forward.3} parent=51 // pred_fallthru
        _
      %v325 = vld [vmem:[%s316] sm:$0xff]
      %v326 = vld [vmem:[%s316 + $0x8] sm:$0xff]
      %v327 = vld [vmem:[%s316 + $0x10] sm:$0xff]
      %v328 = vld [vmem:[%s316 + $0x18] sm:$0xff]
      %v329 = vld [vmem:[%s316 + $0x20] sm:$0xff]
      %v330 = vld [vmem:[%s316 + $0x28] sm:$0xff]
      %v331 = vld [vmem:[%s316 + $0x30] sm:$0xff]
      %v332 = vld [vmem:[%s316 + $0x38] sm:$0xff]
      %v333 = vld [vmem:[%s316 + $0x40] sm:$0xff]
      %v334 = vld [vmem:[%s316 + $0x48] sm:$0xff]
      %v335 = vld [vmem:[%s316 + $0x50] sm:$0xff]
      %v336 = vld [vmem:[%s316 + $0x58] sm:$0xff]
      %v337 = vld [vmem:[%s316 + $0x60] sm:$0xff]
      %v338 = vld [vmem:[%s316 + $0x68] sm:$0xff]
      %v339 = vld [vmem:[%s316 + $0x70] sm:$0xff]
      %v340 = vld [vmem:[%s316 + $0x78] sm:$0xff]
      %v341 = vld [vmem:[%s316 + $0x80] sm:$0xff]
      %v342 = vld [vmem:[%s316 + $0x88] sm:$0xff]
      %v343 = vld [vmem:[%s316 + $0x90] sm:$0xff]
      %v344 = vld [vmem:[%s316 + $0x98] sm:$0xff]
      %v345 = vld [vmem:[%s316 + $0xa0] sm:$0xff]
      %v346 = vld [vmem:[%s316 + $0xa8] sm:$0xff]
      %v347 = vld [vmem:[%s316 + $0xb0] sm:$0xff]
      %v348 = vld [vmem:[%s316 + $0xb8] sm:$0xff]
      %v349 = vld [vmem:[%s316 + $0xc0] sm:$0xff]
      %v350 = vld [vmem:[%s316 + $0xc8] sm:$0xff]
      %v351 = vld [vmem:[%s316 + $0xd0] sm:$0xff]
      %v352 = vld [vmem:[%s316 + $0xd8] sm:$0xff]
      %v353 = vld [vmem:[%s316 + $0xe0] sm:$0xff]
      %v354 = vld [vmem:[%s316 + $0xe8] sm:$0xff]
      %v355 = vld [vmem:[%s316 + $0xf0] sm:$0xff]
      %v356 = vld [vmem:[%s316 + $0xf8] sm:$0xff]
      %v357 = vld [vmem:[%s316 + $0x100] sm:$0xff]
      %v358 = vld [vmem:[%s316 + $0x108] sm:$0xff]
      %v359 = vld [vmem:[%s316 + $0x110] sm:$0xff]
      %v360 = vld [vmem:[%s316 + $0x118] sm:$0xff]
      %v361 = vld [vmem:[%s316 + $0x120] sm:$0xff]
      %v362 = vld [vmem:[%s316 + $0x128] sm:$0xff]
      %v363 = vld [vmem:[%s316 + $0x130] sm:$0xff]
      %v364 = vld [vmem:[%s316 + $0x138] sm:$0xff]
      %v365 = vld [vmem:[%s316 + $0x140] sm:$0xff]
      %v366 = vld [vmem:[%s316 + $0x148] sm:$0xff]
      %v367 = vld [vmem:[%s316 + $0x150] sm:$0xff]
      %v368 = vld [vmem:[%s316 + $0x158] sm:$0xff]
      %v369 = vld [vmem:[%s316 + $0x160] sm:$0xff]
      %v370 = vld [vmem:[%s316 + $0x168] sm:$0xff]
      %v371 = vld [vmem:[%s316 + $0x170] sm:$0xff]
      %v372 = vld [vmem:[%s316 + $0x178] sm:$0xff]
      %v373 = vld [vmem:[%s316 + $0x180] sm:$0xff]
      %v374 = vld [vmem:[%s316 + $0x188] sm:$0xff]
      %v375 = vld [vmem:[%s316 + $0x190] sm:$0xff]
      %v376 = vld [vmem:[%s316 + $0x198] sm:$0xff]
      %v377 = vld [vmem:[%s316 + $0x1a0] sm:$0xff]
      %v378 = vld [vmem:[%s316 + $0x1a8] sm:$0xff]
      %v379 = vld [vmem:[%s316 + $0x1b0] sm:$0xff]
      %v380 = vld [vmem:[%s316 + $0x1b8] sm:$0xff]
      %v381 = vld [vmem:[%s316 + $0x1c0] sm:$0xff]
      %v382 = vld [vmem:[%s316 + $0x1c8] sm:$0xff]
      %v383 = vld [vmem:[%s316 + $0x1d0] sm:$0xff]
      %v384 = vld [vmem:[%s316 + $0x1d8] sm:$0xff]
      %v385 = vld [vmem:[%s316 + $0x1e0] sm:$0xff]
      %v386 = vld [vmem:[%s316 + $0x1e8] sm:$0xff]
      %v387 = vld [vmem:[%s316 + $0x1f0] sm:$0xff]
      %v388 = vld [vmem:[%s316 + $0x1f8] sm:$0xff]
      %v389 = vld [vmem:[%s316 + $0x200] sm:$0xff]
      %v390 = vld [vmem:[%s316 + $0x208] sm:$0xff]
      %v391 = vld [vmem:[%s316 + $0x210] sm:$0xff]
      %v392 = vld [vmem:[%s316 + $0x218] sm:$0xff]
      %v393 = vld [vmem:[%s316 + $0x220] sm:$0xff]
      %v394 = vld [vmem:[%s316 + $0x228] sm:$0xff]
      %v395 = vld [vmem:[%s316 + $0x230] sm:$0xff]
      %v396 = vld [vmem:[%s316 + $0x238] sm:$0xff]
      %v397 = vld [vmem:[%s316 + $0x240] sm:$0xff]
      %v398 = vld [vmem:[%s316 + $0x248] sm:$0xff]
      %v399 = vld [vmem:[%s316 + $0x250] sm:$0xff]
      %v400 = vld [vmem:[%s316 + $0x258] sm:$0xff]
      %v401 = vld [vmem:[%s316 + $0x260] sm:$0xff]
      %v402 = vld [vmem:[%s316 + $0x268] sm:$0xff]
      %v403 = vld [vmem:[%s316 + $0x270] sm:$0xff]
      %v404 = vld [vmem:[%s316 + $0x278] sm:$0xff]
      %v405 = vld [vmem:[%s316 + $0x280] sm:$0xff]
      %v406 = vld [vmem:[%s316 + $0x288] sm:$0xff]
      %v407 = vld [vmem:[%s316 + $0x290] sm:$0xff]
      %v408 = vld [vmem:[%s316 + $0x298] sm:$0xff]
      %v409 = vld [vmem:[%s316 + $0x2a0] sm:$0xff]
      %v410 = vld [vmem:[%s316 + $0x2a8] sm:$0xff]
      %v411 = vld [vmem:[%s316 + $0x2b0] sm:$0xff]
      %v412 = vld [vmem:[%s316 + $0x2b8] sm:$0xff]
      %v413 = vld [vmem:[%s316 + $0x2c0] sm:$0xff]
      %v414 = vld [vmem:[%s316 + $0x2c8] sm:$0xff]
      %v415 = vld [vmem:[%s316 + $0x2d0] sm:$0xff]
      %v416 = vld [vmem:[%s316 + $0x2d8] sm:$0xff]
      %v417 = vld [vmem:[%s316 + $0x2e0] sm:$0xff]
      %v418 = vld [vmem:[%s316 + $0x2e8] sm:$0xff]
      %v419 = vld [vmem:[%s316 + $0x2f0] sm:$0xff]
      %v420 = vld [vmem:[%s316 + $0x2f8] sm:$0xff]
      %v421 = vld [vmem:[%s316 + $0x300] sm:$0xff]
      %v422 = vld [vmem:[%s316 + $0x308] sm:$0xff]
      %v423 = vld [vmem:[%s316 + $0x310] sm:$0xff]
      %v424 = vld [vmem:[%s316 + $0x318] sm:$0xff]
      %v425 = vld [vmem:[%s316 + $0x320] sm:$0xff]
      %v426 = vld [vmem:[%s316 + $0x328] sm:$0xff]
      %v427 = vld [vmem:[%s316 + $0x330] sm:$0xff]
      %v428 = vld [vmem:[%s316 + $0x338] sm:$0xff]
      %v429 = vld [vmem:[%s316 + $0x340] sm:$0xff]
      %v430 = vld [vmem:[%s316 + $0x348] sm:$0xff]
      %v431 = vld [vmem:[%s316 + $0x350] sm:$0xff]
      %v432 = vld [vmem:[%s316 + $0x358] sm:$0xff]
      %v433 = vld [vmem:[%s316 + $0x360] sm:$0xff]
      %v434 = vld [vmem:[%s316 + $0x368] sm:$0xff]
      %v435 = vld [vmem:[%s316 + $0x370] sm:$0xff]
      %v436 = vld [vmem:[%s316 + $0x378] sm:$0xff]
      %v437 = vld [vmem:[%s316 + $0x380] sm:$0xff]
      %v438 = vld [vmem:[%s316 + $0x388] sm:$0xff]
      %v439 = vld [vmem:[%s316 + $0x390] sm:$0xff]
      %v440 = vld [vmem:[%s316 + $0x398] sm:$0xff]
      %v441 = vld [vmem:[%s316 + $0x3a0] sm:$0xff]
      %v442 = vld [vmem:[%s316 + $0x3a8] sm:$0xff]
      %v443 = vld [vmem:[%s316 + $0x3b0] sm:$0xff]
      %v444 = vld [vmem:[%s316 + $0x3b8] sm:$0xff]
      %v445 = vld [vmem:[%s316 + $0x3c0] sm:$0xff]
      %v446 = vld [vmem:[%s316 + $0x3c8] sm:$0xff]
      %v447 = vld [vmem:[%s316 + $0x3d0] sm:$0xff]
      %v448 = vld [vmem:[%s316 + $0x3d8] sm:$0xff]
      %v449 = vld [vmem:[%s316 + $0x3e0] sm:$0xff]
      %v450 = vld [vmem:[%s316 + $0x3e8] sm:$0xff]
      %v451 = vld [vmem:[%s316 + $0x3f0] sm:$0xff]
      %v452 = vld [vmem:[%s316 + $0x3f8] sm:$0xff]
      %v453 = vld [vmem:[%s316 + $0x400] sm:$0xff]
      %v454 = vld [vmem:[%s316 + $0x408] sm:$0xff]
      %v455 = vld [vmem:[%s316 + $0x410] sm:$0xff]
      %v456 = vld [vmem:[%s316 + $0x418] sm:$0xff]
      %v457 = vld [vmem:[%s316 + $0x420] sm:$0xff]
      %v458 = vld [vmem:[%s316 + $0x428] sm:$0xff]
      %v459 = vld [vmem:[%s316 + $0x430] sm:$0xff]
      %v460 = vld [vmem:[%s316 + $0x438] sm:$0xff]
      %v461 = vld [vmem:[%s316 + $0x440] sm:$0xff]
      %v462 = vld [vmem:[%s316 + $0x448] sm:$0xff]
      %v463 = vld [vmem:[%s316 + $0x450] sm:$0xff]
      %v464 = vld [vmem:[%s316 + $0x458] sm:$0xff]
      %v465 = vld [vmem:[%s316 + $0x460] sm:$0xff]
      %v466 = vld [vmem:[%s316 + $0x468] sm:$0xff]
      %v467 = vld [vmem:[%s316 + $0x470] sm:$0xff]
      %v468 = vld [vmem:[%s316 + $0x478] sm:$0xff]
      %v469 = vld [vmem:[%s316 + $0x480] sm:$0xff]
      %v470 = vld [vmem:[%s316 + $0x488] sm:$0xff]
      %v471 = vld [vmem:[%s316 + $0x490] sm:$0xff]
      %v472 = vld [vmem:[%s316 + $0x498] sm:$0xff]
      %v473 = vld [vmem:[%s316 + $0x4a0] sm:$0xff]
      %v474 = vld [vmem:[%s316 + $0x4a8] sm:$0xff]
      %v475 = vld [vmem:[%s316 + $0x4b0] sm:$0xff]
      %v476 = vld [vmem:[%s316 + $0x4b8] sm:$0xff]
      %v477 = vld [vmem:[%s316 + $0x4c0] sm:$0xff]
      %v478 = vld [vmem:[%s316 + $0x4c8] sm:$0xff]
      %v479 = vld [vmem:[%s316 + $0x4d0] sm:$0xff]
      %v480 = vld [vmem:[%s316 + $0x4d8] sm:$0xff]
      %v481 = vld [vmem:[%s316 + $0x4e0] sm:$0xff]
      %v482 = vld [vmem:[%s316 + $0x4e8] sm:$0xff]
      %v483 = vld [vmem:[%s316 + $0x4f0] sm:$0xff]
      %v484 = vld [vmem:[%s316 + $0x4f8] sm:$0xff]
      %v485 = vld [vmem:[%s316 + $0x500] sm:$0xff]
      %v486 = vld [vmem:[%s316 + $0x508] sm:$0xff]
      %v487 = vld [vmem:[%s316 + $0x510] sm:$0xff]
      %v488 = vld [vmem:[%s316 + $0x518] sm:$0xff]
      %v489 = vld [vmem:[%s316 + $0x520] sm:$0xff]
      %v490 = vld [vmem:[%s316 + $0x528] sm:$0xff]
      %v491 = vld [vmem:[%s316 + $0x530] sm:$0xff]
      %v492 = vld [vmem:[%s316 + $0x538] sm:$0xff]
      %v493 = vld [vmem:[%s316 + $0x540] sm:$0xff]
      %v494 = vld [vmem:[%s316 + $0x548] sm:$0xff]
      %v495 = vld [vmem:[%s316 + $0x550] sm:$0xff]
      %v496 = vld [vmem:[%s316 + $0x558] sm:$0xff]
      %v497 = vld [vmem:[%s316 + $0x560] sm:$0xff]
      %v498 = vld [vmem:[%s316 + $0x568] sm:$0xff]
      %v499 = vld [vmem:[%s316 + $0x570] sm:$0xff]
      %v500 = vld [vmem:[%s316 + $0x578] sm:$0xff]
      %v501 = vunpack.c.0.s8 %v325
      %v502 = vunpack.c.0.s8 %v326
      %v503 = vunpack.c.1.s8 %v325
      %v504 = vunpack.c.1.s8 %v326
      %v505 = vunpack.c.2.s8 %v325
      %v506 = vunpack.c.2.s8 %v326
      %v507 = vunpack.c.3.s8 %v325
      %v508 = vunpack.c.3.s8 %v326
      %v509 = vunpack.c.0.s8 %v327
      %v510 = vunpack.c.0.s8 %v328
      %v511 = vunpack.c.1.s8 %v327
      %v512 = vunpack.c.1.s8 %v328
      %v513 = vunpack.c.2.s8 %v327
      %v514 = vunpack.c.2.s8 %v328
      %v515 = vunpack.c.3.s8 %v327
      %v516 = vunpack.c.3.s8 %v328
      %v517 = vunpack.c.0.s8 %v329
      %v518 = vunpack.c.0.s8 %v330
      %v519 = vunpack.c.1.s8 %v329
      %v520 = vunpack.c.1.s8 %v330
      %v521 = vunpack.c.2.s8 %v329
      %v522 = vunpack.c.2.s8 %v330
      %v523 = vunpack.c.3.s8 %v329
      %v524 = vunpack.c.3.s8 %v330
      %v525 = vunpack.c.0.s8 %v331
      %v526 = vunpack.c.0.s8 %v332
      %v527 = vunpack.c.1.s8 %v331
      %v528 = vunpack.c.1.s8 %v332
      %v529 = vunpack.c.2.s8 %v331
      %v530 = vunpack.c.2.s8 %v332
      %v531 = vunpack.c.3.s8 %v331
      %v532 = vunpack.c.3.s8 %v332
      %v533 = vunpack.c.0.s8 %v333
      %v534 = vunpack.c.0.s8 %v334
      %v535 = vunpack.c.1.s8 %v333
      %v536 = vunpack.c.1.s8 %v334
      %v537 = vunpack.c.2.s8 %v333
      %v538 = vunpack.c.2.s8 %v334
      %v539 = vunpack.c.3.s8 %v333
      %v540 = vunpack.c.3.s8 %v334
      %v541 = vunpack.c.0.s8 %v335
      %v542 = vunpack.c.0.s8 %v336
      %v543 = vunpack.c.1.s8 %v335
      %v544 = vunpack.c.1.s8 %v336
      %v545 = vunpack.c.2.s8 %v335
      %v546 = vunpack.c.2.s8 %v336
      %v547 = vunpack.c.3.s8 %v335
      %v548 = vunpack.c.3.s8 %v336
      %v549 = vunpack.c.0.s8 %v337
      %v550 = vunpack.c.0.s8 %v338
      %v551 = vunpack.c.1.s8 %v337
      %v552 = vunpack.c.1.s8 %v338
      %v553 = vunpack.c.2.s8 %v337
      %v554 = vunpack.c.2.s8 %v338
      %v555 = vunpack.c.3.s8 %v337
      %v556 = vunpack.c.3.s8 %v338
      %v557 = vunpack.c.0.s8 %v339
      %v558 = vunpack.c.0.s8 %v340
      %v559 = vunpack.c.1.s8 %v339
      %v560 = vunpack.c.1.s8 %v340
      %v561 = vunpack.c.2.s8 %v339
      %v562 = vunpack.c.2.s8 %v340
      %v563 = vunpack.c.3.s8 %v339
      %v564 = vunpack.c.3.s8 %v340
      %v565 = vunpack.c.0.s8 %v341
      %v566 = vunpack.c.0.s8 %v342
      %v567 = vunpack.c.1.s8 %v341
      %v568 = vunpack.c.1.s8 %v342
      %v569 = vunpack.c.2.s8 %v341
      %v570 = vunpack.c.2.s8 %v342
      %v571 = vunpack.c.3.s8 %v341
      %v572 = vunpack.c.3.s8 %v342
      %v573 = vunpack.c.0.s8 %v343
      %v574 = vunpack.c.0.s8 %v344
      %v575 = vunpack.c.1.s8 %v343
      %v576 = vunpack.c.1.s8 %v344
      %v577 = vunpack.c.2.s8 %v343
      %v578 = vunpack.c.2.s8 %v344
      %v579 = vunpack.c.3.s8 %v343
      %v580 = vunpack.c.3.s8 %v344
      %v581 = vunpack.c.0.s8 %v345
      %v582 = vunpack.c.0.s8 %v346
      %v583 = vunpack.c.1.s8 %v345
      %v584 = vunpack.c.1.s8 %v346
      %v585 = vunpack.c.2.s8 %v345
      %v586 = vunpack.c.2.s8 %v346
      %v587 = vunpack.c.3.s8 %v345
      %v588 = vunpack.c.3.s8 %v346
      %v589 = vunpack.c.0.s8 %v347
      %v590 = vunpack.c.0.s8 %v348
      %v591 = vunpack.c.1.s8 %v347
      %v592 = vunpack.c.1.s8 %v348
      %v593 = vunpack.c.2.s8 %v347
      %v594 = vunpack.c.2.s8 %v348
      %v595 = vunpack.c.3.s8 %v347
      %v596 = vunpack.c.3.s8 %v348
      %v597 = vunpack.c.0.s8 %v349
      %v598 = vunpack.c.0.s8 %v350
      %v599 = vunpack.c.1.s8 %v349
      %v600 = vunpack.c.1.s8 %v350
      %v601 = vunpack.c.2.s8 %v349
      %v602 = vunpack.c.2.s8 %v350
      %v603 = vunpack.c.3.s8 %v349
      %v604 = vunpack.c.3.s8 %v350
      %v605 = vunpack.c.0.s8 %v351
      %v606 = vunpack.c.0.s8 %v352
      %v607 = vunpack.c.1.s8 %v351
      %v608 = vunpack.c.1.s8 %v352
      %v609 = vunpack.c.2.s8 %v351
      %v610 = vunpack.c.2.s8 %v352
      %v611 = vunpack.c.3.s8 %v351
      %v612 = vunpack.c.3.s8 %v352
      %v613 = vunpack.c.0.s8 %v353
      %v614 = vunpack.c.0.s8 %v354
      %v615 = vunpack.c.1.s8 %v353
      %v616 = vunpack.c.1.s8 %v354
      %v617 = vunpack.c.2.s8 %v353
      %v618 = vunpack.c.2.s8 %v354
      %v619 = vunpack.c.3.s8 %v353
      %v620 = vunpack.c.3.s8 %v354
      %v621 = vunpack.c.0.s8 %v355
      %v622 = vunpack.c.0.s8 %v356
      %v623 = vunpack.c.1.s8 %v355
      %v624 = vunpack.c.1.s8 %v356
      %v625 = vunpack.c.2.s8 %v355
      %v626 = vunpack.c.2.s8 %v356
      %v627 = vunpack.c.3.s8 %v355
      %v628 = vunpack.c.3.s8 %v356
      %v629 = vunpack.c.0.s8 %v357
      %v630 = vunpack.c.0.s8 %v358
      %v631 = vunpack.c.1.s8 %v357
      %v632 = vunpack.c.1.s8 %v358
      %v633 = vunpack.c.2.s8 %v357
      %v634 = vunpack.c.2.s8 %v358
      %v635 = vunpack.c.3.s8 %v357
      %v636 = vunpack.c.3.s8 %v358
      %v637 = vunpack.c.0.s8 %v359
      %v638 = vunpack.c.0.s8 %v360
      %v639 = vunpack.c.1.s8 %v359
      %v640 = vunpack.c.1.s8 %v360
      %v641 = vunpack.c.2.s8 %v359
      %v642 = vunpack.c.2.s8 %v360
      %v643 = vunpack.c.3.s8 %v359
      %v644 = vunpack.c.3.s8 %v360
      %v645 = vunpack.c.0.s8 %v361
      %v646 = vunpack.c.0.s8 %v362
      %v647 = vunpack.c.1.s8 %v361
      %v648 = vunpack.c.1.s8 %v362
      %v649 = vunpack.c.2.s8 %v361
      %v650 = vunpack.c.2.s8 %v362
      %v651 = vunpack.c.3.s8 %v361
      %v652 = vunpack.c.3.s8 %v362
      %v653 = vunpack.c.0.s8 %v363
      %v654 = vunpack.c.0.s8 %v364
      %v655 = vunpack.c.1.s8 %v363
      %v656 = vunpack.c.1.s8 %v364
      %v657 = vunpack.c.2.s8 %v363
      %v658 = vunpack.c.2.s8 %v364
      %v659 = vunpack.c.3.s8 %v363
      %v660 = vunpack.c.3.s8 %v364
      %v661 = vunpack.c.0.s8 %v365
      %v662 = vunpack.c.0.s8 %v366
      %v663 = vunpack.c.1.s8 %v365
      %v664 = vunpack.c.1.s8 %v366
      %v665 = vunpack.c.2.s8 %v365
      %v666 = vunpack.c.2.s8 %v366
      %v667 = vunpack.c.3.s8 %v365
      %v668 = vunpack.c.3.s8 %v366
      %v669 = vunpack.c.0.s8 %v367
      %v670 = vunpack.c.0.s8 %v368
      %v671 = vunpack.c.1.s8 %v367
      %v672 = vunpack.c.1.s8 %v368
      %v673 = vunpack.c.2.s8 %v367
      %v674 = vunpack.c.2.s8 %v368
      %v675 = vunpack.c.3.s8 %v367
      %v676 = vunpack.c.3.s8 %v368
      %v677 = vunpack.c.0.s8 %v369
      %v678 = vunpack.c.0.s8 %v370
      %v679 = vunpack.c.1.s8 %v369
      %v680 = vunpack.c.1.s8 %v370
      %v681 = vunpack.c.2.s8 %v369
      %v682 = vunpack.c.2.s8 %v370
      %v683 = vunpack.c.3.s8 %v369
      %v684 = vunpack.c.3.s8 %v370
      %v685 = vunpack.c.0.s8 %v371
      %v686 = vunpack.c.0.s8 %v372
      %v687 = vunpack.c.1.s8 %v371
      %v688 = vunpack.c.1.s8 %v372
      %v689 = vunpack.c.2.s8 %v371
      %v690 = vunpack.c.2.s8 %v372
      %v691 = vunpack.c.3.s8 %v371
      %v692 = vunpack.c.3.s8 %v372
      %v693 = vunpack.c.0.s8 %v373
      %v694 = vunpack.c.0.s8 %v374
      %v695 = vunpack.c.1.s8 %v373
      %v696 = vunpack.c.1.s8 %v374
      %v697 = vunpack.c.2.s8 %v373
      %v698 = vunpack.c.2.s8 %v374
      %v699 = vunpack.c.3.s8 %v373
      %v700 = vunpack.c.3.s8 %v374
      %v701 = vunpack.c.0.s8 %v375
      %v702 = vunpack.c.0.s8 %v376
      %v703 = vunpack.c.1.s8 %v375
      %v704 = vunpack.c.1.s8 %v376
      %v705 = vunpack.c.2.s8 %v375
      %v706 = vunpack.c.2.s8 %v376
      %v707 = vunpack.c.3.s8 %v375
      %v708 = vunpack.c.3.s8 %v376
      %v709 = vunpack.c.0.s8 %v377
      %v710 = vunpack.c.0.s8 %v378
      %v711 = vunpack.c.1.s8 %v377
      %v712 = vunpack.c.1.s8 %v378
      %v713 = vunpack.c.2.s8 %v377
      %v714 = vunpack.c.2.s8 %v378
      %v715 = vunpack.c.3.s8 %v377
      %v716 = vunpack.c.3.s8 %v378
      %v717 = vunpack.c.0.s8 %v379
      %v718 = vunpack.c.0.s8 %v380
      %v719 = vunpack.c.1.s8 %v379
      %v720 = vunpack.c.1.s8 %v380
      %v721 = vunpack.c.2.s8 %v379
      %v722 = vunpack.c.2.s8 %v380
      %v723 = vunpack.c.3.s8 %v379
      %v724 = vunpack.c.3.s8 %v380
      %v725 = vunpack.c.0.s8 %v381
      %v726 = vunpack.c.0.s8 %v382
      %v727 = vunpack.c.1.s8 %v381
      %v728 = vunpack.c.1.s8 %v382
      %v729 = vunpack.c.2.s8 %v381
      %v730 = vunpack.c.2.s8 %v382
      %v731 = vunpack.c.3.s8 %v381
      %v732 = vunpack.c.3.s8 %v382
      %v733 = vunpack.c.0.s8 %v383
      %v734 = vunpack.c.0.s8 %v384
      %v735 = vunpack.c.1.s8 %v383
      %v736 = vunpack.c.1.s8 %v384
      %v737 = vunpack.c.2.s8 %v383
      %v738 = vunpack.c.2.s8 %v384
      %v739 = vunpack.c.3.s8 %v383
      %v740 = vunpack.c.3.s8 %v384
      %v741 = vunpack.c.0.s8 %v385
      %v742 = vunpack.c.0.s8 %v386
      %v743 = vunpack.c.1.s8 %v385
      %v744 = vunpack.c.1.s8 %v386
      %v745 = vunpack.c.2.s8 %v385
      %v746 = vunpack.c.2.s8 %v386
      %v747 = vunpack.c.3.s8 %v385
      %v748 = vunpack.c.3.s8 %v386
      %v749 = vunpack.c.0.s8 %v387
      %v750 = vunpack.c.0.s8 %v388
      %v751 = vunpack.c.1.s8 %v387
      %v752 = vunpack.c.1.s8 %v388
      %v753 = vunpack.c.2.s8 %v387
      %v754 = vunpack.c.2.s8 %v388
      %v755 = vunpack.c.3.s8 %v387
      %v756 = vunpack.c.3.s8 %v388
      %v757 = vunpack.c.0.s8 %v389
      %v758 = vunpack.c.0.s8 %v390
      %v759 = vunpack.c.1.s8 %v389
      %v760 = vunpack.c.1.s8 %v390
      %v761 = vunpack.c.2.s8 %v389
      %v762 = vunpack.c.2.s8 %v390
      %v763 = vunpack.c.3.s8 %v389
      %v764 = vunpack.c.3.s8 %v390
      %v765 = vunpack.c.0.s8 %v391
      %v766 = vunpack.c.0.s8 %v392
      %v767 = vunpack.c.1.s8 %v391
      %v768 = vunpack.c.1.s8 %v392
      %v769 = vunpack.c.2.s8 %v391
      %v770 = vunpack.c.2.s8 %v392
      %v771 = vunpack.c.3.s8 %v391
      %v772 = vunpack.c.3.s8 %v392
      %v773 = vunpack.c.0.s8 %v393
      %v774 = vunpack.c.0.s8 %v394
      %v775 = vunpack.c.1.s8 %v393
      %v776 = vunpack.c.1.s8 %v394
      %v777 = vunpack.c.2.s8 %v393
      %v778 = vunpack.c.2.s8 %v394
      %v779 = vunpack.c.3.s8 %v393
      %v780 = vunpack.c.3.s8 %v394
      %v781 = vunpack.c.0.s8 %v395
      %v782 = vunpack.c.0.s8 %v396
      %v783 = vunpack.c.1.s8 %v395
      %v784 = vunpack.c.1.s8 %v396
      %v785 = vunpack.c.2.s8 %v395
      %v786 = vunpack.c.2.s8 %v396
      %v787 = vunpack.c.3.s8 %v395
      %v788 = vunpack.c.3.s8 %v396
      %v789 = vunpack.c.0.s8 %v397
      %v790 = vunpack.c.0.s8 %v398
      %v791 = vunpack.c.1.s8 %v397
      %v792 = vunpack.c.1.s8 %v398
      %v793 = vunpack.c.2.s8 %v397
      %v794 = vunpack.c.2.s8 %v398
      %v795 = vunpack.c.3.s8 %v397
      %v796 = vunpack.c.3.s8 %v398
      %v797 = vunpack.c.0.s8 %v399
      %v798 = vunpack.c.0.s8 %v400
      %v799 = vunpack.c.1.s8 %v399
      %v800 = vunpack.c.1.s8 %v400
      %v801 = vunpack.c.2.s8 %v399
      %v802 = vunpack.c.2.s8 %v400
      %v803 = vunpack.c.3.s8 %v399
      %v804 = vunpack.c.3.s8 %v400
      %v805 = vunpack.c.0.s8 %v401
      %v806 = vunpack.c.0.s8 %v402
      %v807 = vunpack.c.1.s8 %v401
      %v808 = vunpack.c.1.s8 %v402
      %v809 = vunpack.c.2.s8 %v401
      %v810 = vunpack.c.2.s8 %v402
      %v811 = vunpack.c.3.s8 %v401
      %v812 = vunpack.c.3.s8 %v402
      %v813 = vunpack.c.0.s8 %v403
      %v814 = vunpack.c.0.s8 %v404
      %v815 = vunpack.c.1.s8 %v403
      %v816 = vunpack.c.1.s8 %v404
      %v817 = vunpack.c.2.s8 %v403
      %v818 = vunpack.c.2.s8 %v404
      %v819 = vunpack.c.3.s8 %v403
      %v820 = vunpack.c.3.s8 %v404
      %v821 = vunpack.c.0.s8 %v405
      %v822 = vunpack.c.0.s8 %v406
      %v823 = vunpack.c.1.s8 %v405
      %v824 = vunpack.c.1.s8 %v406
      %v825 = vunpack.c.2.s8 %v405
      %v826 = vunpack.c.2.s8 %v406
      %v827 = vunpack.c.3.s8 %v405
      %v828 = vunpack.c.3.s8 %v406
      %v829 = vunpack.c.0.s8 %v407
      %v830 = vunpack.c.0.s8 %v408
      %v831 = vunpack.c.1.s8 %v407
      %v832 = vunpack.c.1.s8 %v408
      %v833 = vunpack.c.2.s8 %v407
      %v834 = vunpack.c.2.s8 %v408
      %v835 = vunpack.c.3.s8 %v407
      %v836 = vunpack.c.3.s8 %v408
      %v837 = vunpack.c.0.s8 %v409
      %v838 = vunpack.c.0.s8 %v410
      %v839 = vunpack.c.1.s8 %v409
      %v840 = vunpack.c.1.s8 %v410
      %v841 = vunpack.c.2.s8 %v409
      %v842 = vunpack.c.2.s8 %v410
      %v843 = vunpack.c.3.s8 %v409
      %v844 = vunpack.c.3.s8 %v410
      %v845 = vunpack.c.0.s8 %v411
      %v846 = vunpack.c.0.s8 %v412
      %v847 = vunpack.c.1.s8 %v411
      %v848 = vunpack.c.1.s8 %v412
      %v849 = vunpack.c.2.s8 %v411
      %v850 = vunpack.c.2.s8 %v412
      %v851 = vunpack.c.3.s8 %v411
      %v852 = vunpack.c.3.s8 %v412
      %v853 = vunpack.c.0.s8 %v413
      %v854 = vunpack.c.0.s8 %v414
      %v855 = vunpack.c.1.s8 %v413
      %v856 = vunpack.c.1.s8 %v414
      %v857 = vunpack.c.2.s8 %v413
      %v858 = vunpack.c.2.s8 %v414
      %v859 = vunpack.c.3.s8 %v413
      %v860 = vunpack.c.3.s8 %v414
      %v861 = vunpack.c.0.s8 %v415
      %v862 = vunpack.c.0.s8 %v416
      %v863 = vunpack.c.1.s8 %v415
      %v864 = vunpack.c.1.s8 %v416
      %v865 = vunpack.c.2.s8 %v415
      %v866 = vunpack.c.2.s8 %v416
      %v867 = vunpack.c.3.s8 %v415
      %v868 = vunpack.c.3.s8 %v416
      %v869 = vunpack.c.0.s8 %v417
      %v870 = vunpack.c.0.s8 %v418
      %v871 = vunpack.c.1.s8 %v417
      %v872 = vunpack.c.1.s8 %v418
      %v873 = vunpack.c.2.s8 %v417
      %v874 = vunpack.c.2.s8 %v418
      %v875 = vunpack.c.3.s8 %v417
      %v876 = vunpack.c.3.s8 %v418
      %v877 = vunpack.c.0.s8 %v419
      %v878 = vunpack.c.0.s8 %v420
      %v879 = vunpack.c.1.s8 %v419
      %v880 = vunpack.c.1.s8 %v420
      %v881 = vunpack.c.2.s8 %v419
      %v882 = vunpack.c.2.s8 %v420
      %v883 = vunpack.c.3.s8 %v419
      %v884 = vunpack.c.3.s8 %v420
      %v885 = vunpack.c.0.s8 %v421
      %v886 = vunpack.c.0.s8 %v422
      %v887 = vunpack.c.1.s8 %v421
      %v888 = vunpack.c.1.s8 %v422
      %v889 = vunpack.c.2.s8 %v421
      %v890 = vunpack.c.2.s8 %v422
      %v891 = vunpack.c.3.s8 %v421
      %v892 = vunpack.c.3.s8 %v422
      %v893 = vunpack.c.0.s8 %v423
      %v894 = vunpack.c.0.s8 %v424
      %v895 = vunpack.c.1.s8 %v423
      %v896 = vunpack.c.1.s8 %v424
      %v897 = vunpack.c.2.s8 %v423
      %v898 = vunpack.c.2.s8 %v424
      %v899 = vunpack.c.3.s8 %v423
      %v900 = vunpack.c.3.s8 %v424
      %v901 = vunpack.c.0.s8 %v425
      %v902 = vunpack.c.0.s8 %v426
      %v903 = vunpack.c.1.s8 %v425
      %v904 = vunpack.c.1.s8 %v426
      %v905 = vunpack.c.2.s8 %v425
      %v906 = vunpack.c.2.s8 %v426
      %v907 = vunpack.c.3.s8 %v425
      %v908 = vunpack.c.3.s8 %v426
      %v909 = vunpack.c.0.s8 %v427
      %v910 = vunpack.c.0.s8 %v428
      %v911 = vunpack.c.1.s8 %v427
      %v912 = vunpack.c.1.s8 %v428
      %v913 = vunpack.c.2.s8 %v427
      %v914 = vunpack.c.2.s8 %v428
      %v915 = vunpack.c.3.s8 %v427
      %v916 = vunpack.c.3.s8 %v428
      %v917 = vunpack.c.0.s8 %v429
      %v918 = vunpack.c.0.s8 %v430
      %v919 = vunpack.c.1.s8 %v429
      %v920 = vunpack.c.1.s8 %v430
      %v921 = vunpack.c.2.s8 %v429
      %v922 = vunpack.c.2.s8 %v430
      %v923 = vunpack.c.3.s8 %v429
      %v924 = vunpack.c.3.s8 %v430
      %v925 = vunpack.c.0.s8 %v431
      %v926 = vunpack.c.0.s8 %v432
      %v927 = vunpack.c.1.s8 %v431
      %v928 = vunpack.c.1.s8 %v432
      %v929 = vunpack.c.2.s8 %v431
      %v930 = vunpack.c.2.s8 %v432
      %v931 = vunpack.c.3.s8 %v431
      %v932 = vunpack.c.3.s8 %v432
      %v933 = vunpack.c.0.s8 %v433
      %v934 = vunpack.c.0.s8 %v434
      %v935 = vunpack.c.1.s8 %v433
      %v936 = vunpack.c.1.s8 %v434
      %v937 = vunpack.c.2.s8 %v433
      %v938 = vunpack.c.2.s8 %v434
      %v939 = vunpack.c.3.s8 %v433
      %v940 = vunpack.c.3.s8 %v434
      %v941 = vunpack.c.0.s8 %v435
      %v942 = vunpack.c.0.s8 %v436
      %v943 = vunpack.c.1.s8 %v435
      %v944 = vunpack.c.1.s8 %v436
      %v945 = vunpack.c.2.s8 %v435
      %v946 = vunpack.c.2.s8 %v436
      %v947 = vunpack.c.3.s8 %v435
      %v948 = vunpack.c.3.s8 %v436
      %v949 = vunpack.c.0.s8 %v437
      %v950 = vunpack.c.0.s8 %v438
      %v951 = vunpack.c.1.s8 %v437
      %v952 = vunpack.c.1.s8 %v438
      %v953 = vunpack.c.2.s8 %v437
      %v954 = vunpack.c.2.s8 %v438
      %v955 = vunpack.c.3.s8 %v437
      %v956 = vunpack.c.3.s8 %v438
      %v957 = vunpack.c.0.s8 %v439
      %v958 = vunpack.c.0.s8 %v440
      %v959 = vunpack.c.1.s8 %v439
      %v960 = vunpack.c.1.s8 %v440
      %v961 = vunpack.c.2.s8 %v439
      %v962 = vunpack.c.2.s8 %v440
      %v963 = vunpack.c.3.s8 %v439
      %v964 = vunpack.c.3.s8 %v440
      %v965 = vunpack.c.0.s8 %v441
      %v966 = vunpack.c.0.s8 %v442
      %v967 = vunpack.c.1.s8 %v441
      %v968 = vunpack.c.1.s8 %v442
      %v969 = vunpack.c.2.s8 %v441
      %v970 = vunpack.c.2.s8 %v442
      %v971 = vunpack.c.3.s8 %v441
      %v972 = vunpack.c.3.s8 %v442
      %v973 = vunpack.c.0.s8 %v443
      %v974 = vunpack.c.0.s8 %v444
      %v975 = vunpack.c.1.s8 %v443
      %v976 = vunpack.c.1.s8 %v444
      %v977 = vunpack.c.2.s8 %v443
      %v978 = vunpack.c.2.s8 %v444
      %v979 = vunpack.c.3.s8 %v443
      %v980 = vunpack.c.3.s8 %v444
      %v981 = vunpack.c.0.s8 %v445
      %v982 = vunpack.c.0.s8 %v446
      %v983 = vunpack.c.1.s8 %v445
      %v984 = vunpack.c.1.s8 %v446
      %v985 = vunpack.c.2.s8 %v445
      %v986 = vunpack.c.2.s8 %v446
      %v987 = vunpack.c.3.s8 %v445
      %v988 = vunpack.c.3.s8 %v446
      %v989 = vunpack.c.0.s8 %v447
      %v990 = vunpack.c.0.s8 %v448
      %v991 = vunpack.c.1.s8 %v447
      %v992 = vunpack.c.1.s8 %v448
      %v993 = vunpack.c.2.s8 %v447
      %v994 = vunpack.c.2.s8 %v448
      %v995 = vunpack.c.3.s8 %v447
      %v996 = vunpack.c.3.s8 %v448
      %v997 = vunpack.c.0.s8 %v449
      %v998 = vunpack.c.0.s8 %v450
      %v999 = vunpack.c.1.s8 %v449
      %v1000 = vunpack.c.1.s8 %v450
      %v1001 = vunpack.c.2.s8 %v449
      %v1002 = vunpack.c.2.s8 %v450
      %v1003 = vunpack.c.3.s8 %v449
      %v1004 = vunpack.c.3.s8 %v450
      %v1005 = vunpack.c.0.s8 %v451
      %v1006 = vunpack.c.0.s8 %v452
      %v1007 = vunpack.c.1.s8 %v451
      %v1008 = vunpack.c.1.s8 %v452
      %v1009 = vunpack.c.2.s8 %v451
      %v1010 = vunpack.c.2.s8 %v452
      %v1011 = vunpack.c.3.s8 %v451
      %v1012 = vunpack.c.3.s8 %v452
      %v1013 = vunpack.c.0.s8 %v453
      %v1014 = vunpack.c.0.s8 %v454
      %v1015 = vunpack.c.1.s8 %v453
      %v1016 = vunpack.c.1.s8 %v454
      %v1017 = vunpack.c.2.s8 %v453
      %v1018 = vunpack.c.2.s8 %v454
      %v1019 = vunpack.c.3.s8 %v453
      %v1020 = vunpack.c.3.s8 %v454
      %v1021 = vunpack.c.0.s8 %v455
      %v1022 = vunpack.c.0.s8 %v456
      %v1023 = vunpack.c.1.s8 %v455
      %v1024 = vunpack.c.1.s8 %v456
      %v1025 = vunpack.c.2.s8 %v455
      %v1026 = vunpack.c.2.s8 %v456
      %v1027 = vunpack.c.3.s8 %v455
      %v1028 = vunpack.c.3.s8 %v456
      %v1029 = vunpack.c.0.s8 %v457
      %v1030 = vunpack.c.0.s8 %v458
      %v1031 = vunpack.c.1.s8 %v457
      %v1032 = vunpack.c.1.s8 %v458
      %v1033 = vunpack.c.2.s8 %v457
      %v1034 = vunpack.c.2.s8 %v458
      %v1035 = vunpack.c.3.s8 %v457
      %v1036 = vunpack.c.3.s8 %v458
      %v1037 = vunpack.c.0.s8 %v459
      %v1038 = vunpack.c.0.s8 %v460
      %v1039 = vunpack.c.1.s8 %v459
      %v1040 = vunpack.c.1.s8 %v460
      %v1041 = vunpack.c.2.s8 %v459
      %v1042 = vunpack.c.2.s8 %v460
      %v1043 = vunpack.c.3.s8 %v459
      %v1044 = vunpack.c.3.s8 %v460
      %v1045 = vunpack.c.0.s8 %v461
      %v1046 = vunpack.c.0.s8 %v462
      %v1047 = vunpack.c.1.s8 %v461
      %v1048 = vunpack.c.1.s8 %v462
      %v1049 = vunpack.c.2.s8 %v461
      %v1050 = vunpack.c.2.s8 %v462
      %v1051 = vunpack.c.3.s8 %v461
      %v1052 = vunpack.c.3.s8 %v462
      %v1053 = vunpack.c.0.s8 %v463
      %v1054 = vunpack.c.0.s8 %v464
      %v1055 = vunpack.c.1.s8 %v463
      %v1056 = vunpack.c.1.s8 %v464
      %v1057 = vunpack.c.2.s8 %v463
      %v1058 = vunpack.c.2.s8 %v464
      %v1059 = vunpack.c.3.s8 %v463
      %v1060 = vunpack.c.3.s8 %v464
      %v1061 = vunpack.c.0.s8 %v465
      %v1062 = vunpack.c.0.s8 %v466
      %v1063 = vunpack.c.1.s8 %v465
      %v1064 = vunpack.c.1.s8 %v466
      %v1065 = vunpack.c.2.s8 %v465
      %v1066 = vunpack.c.2.s8 %v466
      %v1067 = vunpack.c.3.s8 %v465
      %v1068 = vunpack.c.3.s8 %v466
      %v1069 = vunpack.c.0.s8 %v467
      %v1070 = vunpack.c.0.s8 %v468
      %v1071 = vunpack.c.1.s8 %v467
      %v1072 = vunpack.c.1.s8 %v468
      %v1073 = vunpack.c.2.s8 %v467
      %v1074 = vunpack.c.2.s8 %v468
      %v1075 = vunpack.c.3.s8 %v467
      %v1076 = vunpack.c.3.s8 %v468
      %v1077 = vunpack.c.0.s8 %v469
      %v1078 = vunpack.c.0.s8 %v470
      %v1079 = vunpack.c.1.s8 %v469
      %v1080 = vunpack.c.1.s8 %v470
      %v1081 = vunpack.c.2.s8 %v469
      %v1082 = vunpack.c.2.s8 %v470
      %v1083 = vunpack.c.3.s8 %v469
      %v1084 = vunpack.c.3.s8 %v470
      %v1085 = vunpack.c.0.s8 %v471
      %v1086 = vunpack.c.0.s8 %v472
      %v1087 = vunpack.c.1.s8 %v471
      %v1088 = vunpack.c.1.s8 %v472
      %v1089 = vunpack.c.2.s8 %v471
      %v1090 = vunpack.c.2.s8 %v472
      %v1091 = vunpack.c.3.s8 %v471
      %v1092 = vunpack.c.3.s8 %v472
      %v1093 = vunpack.c.0.s8 %v473
      %v1094 = vunpack.c.0.s8 %v474
      %v1095 = vunpack.c.1.s8 %v473
      %v1096 = vunpack.c.1.s8 %v474
      %v1097 = vunpack.c.2.s8 %v473
      %v1098 = vunpack.c.2.s8 %v474
      %v1099 = vunpack.c.3.s8 %v473
      %v1100 = vunpack.c.3.s8 %v474
      %v1101 = vunpack.c.0.s8 %v475
      %v1102 = vunpack.c.0.s8 %v476
      %v1103 = vunpack.c.1.s8 %v475
      %v1104 = vunpack.c.1.s8 %v476
      %v1105 = vunpack.c.2.s8 %v475
      %v1106 = vunpack.c.2.s8 %v476
      %v1107 = vunpack.c.3.s8 %v475
      %v1108 = vunpack.c.3.s8 %v476
      %v1109 = vunpack.c.0.s8 %v477
      %v1110 = vunpack.c.0.s8 %v478
      %v1111 = vunpack.c.1.s8 %v477
      %v1112 = vunpack.c.1.s8 %v478
      %v1113 = vunpack.c.2.s8 %v477
      %v1114 = vunpack.c.2.s8 %v478
      %v1115 = vunpack.c.3.s8 %v477
      %v1116 = vunpack.c.3.s8 %v478
      %v1117 = vunpack.c.0.s8 %v479
      %v1118 = vunpack.c.0.s8 %v480
      %v1119 = vunpack.c.1.s8 %v479
      %v1120 = vunpack.c.1.s8 %v480
      %v1121 = vunpack.c.2.s8 %v479
      %v1122 = vunpack.c.2.s8 %v480
      %v1123 = vunpack.c.3.s8 %v479
      %v1124 = vunpack.c.3.s8 %v480
      %v1125 = vunpack.c.0.s8 %v481
      %v1126 = vunpack.c.0.s8 %v482
      %v1127 = vunpack.c.1.s8 %v481
      %v1128 = vunpack.c.1.s8 %v482
      %v1129 = vunpack.c.2.s8 %v481
      %v1130 = vunpack.c.2.s8 %v482
      %v1131 = vunpack.c.3.s8 %v481
      %v1132 = vunpack.c.3.s8 %v482
      %v1133 = vunpack.c.0.s8 %v483
      %v1134 = vunpack.c.0.s8 %v484
      %v1135 = vunpack.c.1.s8 %v483
      %v1136 = vunpack.c.1.s8 %v484
      %v1137 = vunpack.c.2.s8 %v483
      %v1138 = vunpack.c.2.s8 %v484
      %v1139 = vunpack.c.3.s8 %v483
      %v1140 = vunpack.c.3.s8 %v484
      %v1141 = vunpack.c.0.s8 %v485
      %v1142 = vunpack.c.0.s8 %v486
      %v1143 = vunpack.c.1.s8 %v485
      %v1144 = vunpack.c.1.s8 %v486
      %v1145 = vunpack.c.2.s8 %v485
      %v1146 = vunpack.c.2.s8 %v486
      %v1147 = vunpack.c.3.s8 %v485
      %v1148 = vunpack.c.3.s8 %v486
      %v1149 = vunpack.c.0.s8 %v487
      %v1150 = vunpack.c.0.s8 %v488
      %v1151 = vunpack.c.1.s8 %v487
      %v1152 = vunpack.c.1.s8 %v488
      %v1153 = vunpack.c.2.s8 %v487
      %v1154 = vunpack.c.2.s8 %v488
      %v1155 = vunpack.c.3.s8 %v487
      %v1156 = vunpack.c.3.s8 %v488
      %v1157 = vunpack.c.0.s8 %v489
      %v1158 = vunpack.c.0.s8 %v490
      %v1159 = vunpack.c.1.s8 %v489
      %v1160 = vunpack.c.1.s8 %v490
      %v1161 = vunpack.c.2.s8 %v489
      %v1162 = vunpack.c.2.s8 %v490
      %v1163 = vunpack.c.3.s8 %v489
      %v1164 = vunpack.c.3.s8 %v490
      %v1165 = vunpack.c.0.s8 %v491
      %v1166 = vunpack.c.0.s8 %v492
      %v1167 = vunpack.c.1.s8 %v491
      %v1168 = vunpack.c.1.s8 %v492
      %v1169 = vunpack.c.2.s8 %v491
      %v1170 = vunpack.c.2.s8 %v492
      %v1171 = vunpack.c.3.s8 %v491
      %v1172 = vunpack.c.3.s8 %v492
      %v1173 = vunpack.c.0.s8 %v493
      %v1174 = vunpack.c.0.s8 %v494
      %v1175 = vunpack.c.1.s8 %v493
      %v1176 = vunpack.c.1.s8 %v494
      %v1177 = vunpack.c.2.s8 %v493
      %v1178 = vunpack.c.2.s8 %v494
      %v1179 = vunpack.c.3.s8 %v493
      %v1180 = vunpack.c.3.s8 %v494
      %v1181 = vunpack.c.0.s8 %v495
      %v1182 = vunpack.c.0.s8 %v496
      %v1183 = vunpack.c.1.s8 %v495
      %v1184 = vunpack.c.1.s8 %v496
      %v1185 = vunpack.c.2.s8 %v495
      %v1186 = vunpack.c.2.s8 %v496
      %v1187 = vunpack.c.3.s8 %v495
      %v1188 = vunpack.c.3.s8 %v496
      %v1189 = vunpack.c.0.s8 %v497
      %v1190 = vunpack.c.0.s8 %v498
      %v1191 = vunpack.c.1.s8 %v497
      %v1192 = vunpack.c.1.s8 %v498
      %v1193 = vunpack.c.2.s8 %v497
      %v1194 = vunpack.c.2.s8 %v498
      %v1195 = vunpack.c.3.s8 %v497
      %v1196 = vunpack.c.3.s8 %v498
      %v1197 = vunpack.c.0.s8 %v499
      %v1198 = vunpack.c.0.s8 %v500
      %v1199 = vunpack.c.1.s8 %v499
      %v1200 = vunpack.c.1.s8 %v500
      %v1201 = vunpack.c.2.s8 %v499
      %v1202 = vunpack.c.2.s8 %v500
      %v1203 = vunpack.c.3.s8 %v499
      %v1204 = vunpack.c.3.s8 %v500
      %v1205 = vcvt.s32.f32 %v501
      %v1206 = vcvt.s32.f32 %v502
      %v1207 = vcvt.s32.f32 %v503
      %v1208 = vcvt.s32.f32 %v504
      %v1209 = vcvt.s32.f32 %v505
      %v1210 = vcvt.s32.f32 %v506
      %v1211 = vcvt.s32.f32 %v507
      %v1212 = vcvt.s32.f32 %v508
      %v1213 = vcvt.s32.f32 %v509
      %v1214 = vcvt.s32.f32 %v510
      %v1215 = vcvt.s32.f32 %v511
      %v1216 = vcvt.s32.f32 %v512
      %v1217 = vcvt.s32.f32 %v513
      %v1218 = vcvt.s32.f32 %v514
      %v1219 = vcvt.s32.f32 %v515
      %v1220 = vcvt.s32.f32 %v516
      %v1221 = vcvt.s32.f32 %v517
      %v1222 = vcvt.s32.f32 %v518
      %v1223 = vcvt.s32.f32 %v519
      %v1224 = vcvt.s32.f32 %v520
      %v1225 = vcvt.s32.f32 %v521
      %v1226 = vcvt.s32.f32 %v522
      %v1227 = vcvt.s32.f32 %v523
      %v1228 = vcvt.s32.f32 %v524
      %v1229 = vcvt.s32.f32 %v525
      %v1230 = vcvt.s32.f32 %v526
      %v1231 = vcvt.s32.f32 %v527
      %v1232 = vcvt.s32.f32 %v528
      %v1233 = vcvt.s32.f32 %v529
      %v1234 = vcvt.s32.f32 %v530
      %v1235 = vcvt.s32.f32 %v531
      %v1236 = vcvt.s32.f32 %v532
      %v1237 = vcvt.s32.f32 %v533
      %v1238 = vcvt.s32.f32 %v534
      %v1239 = vcvt.s32.f32 %v535
      %v1240 = vcvt.s32.f32 %v536
      %v1241 = vcvt.s32.f32 %v537
      %v1242 = vcvt.s32.f32 %v538
      %v1243 = vcvt.s32.f32 %v539
      %v1244 = vcvt.s32.f32 %v540
      %v1245 = vcvt.s32.f32 %v541
      %v1246 = vcvt.s32.f32 %v542
      %v1247 = vcvt.s32.f32 %v543
      %v1248 = vcvt.s32.f32 %v544
      %v1249 = vcvt.s32.f32 %v545
      %v1250 = vcvt.s32.f32 %v546
      %v1251 = vcvt.s32.f32 %v547
      %v1252 = vcvt.s32.f32 %v548
      %v1253 = vcvt.s32.f32 %v549
      %v1254 = vcvt.s32.f32 %v550
      %v1255 = vcvt.s32.f32 %v551
      %v1256 = vcvt.s32.f32 %v552
      %v1257 = vcvt.s32.f32 %v553
      %v1258 = vcvt.s32.f32 %v554
      %v1259 = vcvt.s32.f32 %v555
      %v1260 = vcvt.s32.f32 %v556
      %v1261 = vcvt.s32.f32 %v557
      %v1262 = vcvt.s32.f32 %v558
      %v1263 = vcvt.s32.f32 %v559
      %v1264 = vcvt.s32.f32 %v560
      %v1265 = vcvt.s32.f32 %v561
      %v1266 = vcvt.s32.f32 %v562
      %v1267 = vcvt.s32.f32 %v563
      %v1268 = vcvt.s32.f32 %v564
      %v1269 = vcvt.s32.f32 %v565
      %v1270 = vcvt.s32.f32 %v566
      %v1271 = vcvt.s32.f32 %v567
      %v1272 = vcvt.s32.f32 %v568
      %v1273 = vcvt.s32.f32 %v569
      %v1274 = vcvt.s32.f32 %v570
      %v1275 = vcvt.s32.f32 %v571
      %v1276 = vcvt.s32.f32 %v572
      %v1277 = vcvt.s32.f32 %v573
      %v1278 = vcvt.s32.f32 %v574
      %v1279 = vcvt.s32.f32 %v575
      %v1280 = vcvt.s32.f32 %v576
      %v1281 = vcvt.s32.f32 %v577
      %v1282 = vcvt.s32.f32 %v578
      %v1283 = vcvt.s32.f32 %v579
      %v1284 = vcvt.s32.f32 %v580
      %v1285 = vcvt.s32.f32 %v581
      %v1286 = vcvt.s32.f32 %v582
      %v1287 = vcvt.s32.f32 %v583
      %v1288 = vcvt.s32.f32 %v584
      %v1289 = vcvt.s32.f32 %v585
      %v1290 = vcvt.s32.f32 %v586
      %v1291 = vcvt.s32.f32 %v587
      %v1292 = vcvt.s32.f32 %v588
      %v1293 = vcvt.s32.f32 %v589
      %v1294 = vcvt.s32.f32 %v590
      %v1295 = vcvt.s32.f32 %v591
      %v1296 = vcvt.s32.f32 %v592
      %v1297 = vcvt.s32.f32 %v593
      %v1298 = vcvt.s32.f32 %v594
      %v1299 = vcvt.s32.f32 %v595
      %v1300 = vcvt.s32.f32 %v596
      %v1301 = vcvt.s32.f32 %v597
      %v1302 = vcvt.s32.f32 %v598
      %v1303 = vcvt.s32.f32 %v599
      %v1304 = vcvt.s32.f32 %v600
      %v1305 = vcvt.s32.f32 %v601
      %v1306 = vcvt.s32.f32 %v602
      %v1307 = vcvt.s32.f32 %v603
      %v1308 = vcvt.s32.f32 %v604
      %v1309 = vcvt.s32.f32 %v605
      %v1310 = vcvt.s32.f32 %v606
      %v1311 = vcvt.s32.f32 %v607
      %v1312 = vcvt.s32.f32 %v608
      %v1313 = vcvt.s32.f32 %v609
      %v1314 = vcvt.s32.f32 %v610
      %v1315 = vcvt.s32.f32 %v611
      %v1316 = vcvt.s32.f32 %v612
      %v1317 = vcvt.s32.f32 %v613
      %v1318 = vcvt.s32.f32 %v614
      %v1319 = vcvt.s32.f32 %v615
      %v1320 = vcvt.s32.f32 %v616
      %v1321 = vcvt.s32.f32 %v617
      %v1322 = vcvt.s32.f32 %v618
      %v1323 = vcvt.s32.f32 %v619
      %v1324 = vcvt.s32.f32 %v620
      %v1325 = vcvt.s32.f32 %v621
      %v1326 = vcvt.s32.f32 %v622
      %v1327 = vcvt.s32.f32 %v623
      %v1328 = vcvt.s32.f32 %v624
      %v1329 = vcvt.s32.f32 %v625
      %v1330 = vcvt.s32.f32 %v626
      %v1331 = vcvt.s32.f32 %v627
      %v1332 = vcvt.s32.f32 %v628
      %v1333 = vcvt.s32.f32 %v629
      %v1334 = vcvt.s32.f32 %v630
      %v1335 = vcvt.s32.f32 %v631
      %v1336 = vcvt.s32.f32 %v632
      %v1337 = vcvt.s32.f32 %v633
      %v1338 = vcvt.s32.f32 %v634
      %v1339 = vcvt.s32.f32 %v635
      %v1340 = vcvt.s32.f32 %v636
      %v1341 = vcvt.s32.f32 %v637
      %v1342 = vcvt.s32.f32 %v638
      %v1343 = vcvt.s32.f32 %v639
      %v1344 = vcvt.s32.f32 %v640
      %v1345 = vcvt.s32.f32 %v641
      %v1346 = vcvt.s32.f32 %v642
      %v1347 = vcvt.s32.f32 %v643
      %v1348 = vcvt.s32.f32 %v644
      %v1349 = vcvt.s32.f32 %v645
      %v1350 = vcvt.s32.f32 %v646
      %v1351 = vcvt.s32.f32 %v647
      %v1352 = vcvt.s32.f32 %v648
      %v1353 = vcvt.s32.f32 %v649
      %v1354 = vcvt.s32.f32 %v650
      %v1355 = vcvt.s32.f32 %v651
      %v1356 = vcvt.s32.f32 %v652
      %v1357 = vcvt.s32.f32 %v653
      %v1358 = vcvt.s32.f32 %v654
      %v1359 = vcvt.s32.f32 %v655
      %v1360 = vcvt.s32.f32 %v656
      %v1361 = vcvt.s32.f32 %v657
      %v1362 = vcvt.s32.f32 %v658
      %v1363 = vcvt.s32.f32 %v659
      %v1364 = vcvt.s32.f32 %v660
      %v1365 = vcvt.s32.f32 %v661
      %v1366 = vcvt.s32.f32 %v662
      %v1367 = vcvt.s32.f32 %v663
      %v1368 = vcvt.s32.f32 %v664
      %v1369 = vcvt.s32.f32 %v665
      %v1370 = vcvt.s32.f32 %v666
      %v1371 = vcvt.s32.f32 %v667
      %v1372 = vcvt.s32.f32 %v668
      %v1373 = vcvt.s32.f32 %v669
      %v1374 = vcvt.s32.f32 %v670
      %v1375 = vcvt.s32.f32 %v671
      %v1376 = vcvt.s32.f32 %v672
      %v1377 = vcvt.s32.f32 %v673
      %v1378 = vcvt.s32.f32 %v674
      %v1379 = vcvt.s32.f32 %v675
      %v1380 = vcvt.s32.f32 %v676
      %v1381 = vcvt.s32.f32 %v677
      %v1382 = vcvt.s32.f32 %v678
      %v1383 = vcvt.s32.f32 %v679
      %v1384 = vcvt.s32.f32 %v680
      %v1385 = vcvt.s32.f32 %v681
      %v1386 = vcvt.s32.f32 %v682
      %v1387 = vcvt.s32.f32 %v683
      %v1388 = vcvt.s32.f32 %v684
      %v1389 = vcvt.s32.f32 %v685
      %v1390 = vcvt.s32.f32 %v686
      %v1391 = vcvt.s32.f32 %v687
      %v1392 = vcvt.s32.f32 %v688
      %v1393 = vcvt.s32.f32 %v689
      %v1394 = vcvt.s32.f32 %v690
      %v1395 = vcvt.s32.f32 %v691
      %v1396 = vcvt.s32.f32 %v692
      %v1397 = vcvt.s32.f32 %v693
      %v1398 = vcvt.s32.f32 %v694
      %v1399 = vcvt.s32.f32 %v695
      %v1400 = vcvt.s32.f32 %v696
      %v1401 = vcvt.s32.f32 %v697
      %v1402 = vcvt.s32.f32 %v698
      %v1403 = vcvt.s32.f32 %v699
      %v1404 = vcvt.s32.f32 %v700
      %v1405 = vcvt.s32.f32 %v701
      %v1406 = vcvt.s32.f32 %v702
      %v1407 = vcvt.s32.f32 %v703
      %v1408 = vcvt.s32.f32 %v704
      %v1409 = vcvt.s32.f32 %v705
      %v1410 = vcvt.s32.f32 %v706
      %v1411 = vcvt.s32.f32 %v707
      %v1412 = vcvt.s32.f32 %v708
      %v1413 = vcvt.s32.f32 %v709
      %v1414 = vcvt.s32.f32 %v710
      %v1415 = vcvt.s32.f32 %v711
      %v1416 = vcvt.s32.f32 %v712
      %v1417 = vcvt.s32.f32 %v713
      %v1418 = vcvt.s32.f32 %v714
      %v1419 = vcvt.s32.f32 %v715
      %v1420 = vcvt.s32.f32 %v716
      %v1421 = vcvt.s32.f32 %v717
      %v1422 = vcvt.s32.f32 %v718
      %v1423 = vcvt.s32.f32 %v719
      %v1424 = vcvt.s32.f32 %v720
      %v1425 = vcvt.s32.f32 %v721
      %v1426 = vcvt.s32.f32 %v722
      %v1427 = vcvt.s32.f32 %v723
      %v1428 = vcvt.s32.f32 %v724
      %v1429 = vcvt.s32.f32 %v725
      %v1430 = vcvt.s32.f32 %v726
      %v1431 = vcvt.s32.f32 %v727
      %v1432 = vcvt.s32.f32 %v728
      %v1433 = vcvt.s32.f32 %v729
      %v1434 = vcvt.s32.f32 %v730
      %v1435 = vcvt.s32.f32 %v731
      %v1436 = vcvt.s32.f32 %v732
      %v1437 = vcvt.s32.f32 %v733
      %v1438 = vcvt.s32.f32 %v734
      %v1439 = vcvt.s32.f32 %v735
      %v1440 = vcvt.s32.f32 %v736
      %v1441 = vcvt.s32.f32 %v737
      %v1442 = vcvt.s32.f32 %v738
      %v1443 = vcvt.s32.f32 %v739
      %v1444 = vcvt.s32.f32 %v740
      %v1445 = vcvt.s32.f32 %v741
      %v1446 = vcvt.s32.f32 %v742
      %v1447 = vcvt.s32.f32 %v743
      %v1448 = vcvt.s32.f32 %v744
      %v1449 = vcvt.s32.f32 %v745
      %v1450 = vcvt.s32.f32 %v746
      %v1451 = vcvt.s32.f32 %v747
      %v1452 = vcvt.s32.f32 %v748
      %v1453 = vcvt.s32.f32 %v749
      %v1454 = vcvt.s32.f32 %v750
      %v1455 = vcvt.s32.f32 %v751
      %v1456 = vcvt.s32.f32 %v752
      %v1457 = vcvt.s32.f32 %v753
      %v1458 = vcvt.s32.f32 %v754
      %v1459 = vcvt.s32.f32 %v755
      %v1460 = vcvt.s32.f32 %v756
      %v1461 = vcvt.s32.f32 %v757
      %v1462 = vcvt.s32.f32 %v758
      %v1463 = vcvt.s32.f32 %v759
      %v1464 = vcvt.s32.f32 %v760
      %v1465 = vcvt.s32.f32 %v761
      %v1466 = vcvt.s32.f32 %v762
      %v1467 = vcvt.s32.f32 %v763
      %v1468 = vcvt.s32.f32 %v764
      %v1469 = vcvt.s32.f32 %v765
      %v1470 = vcvt.s32.f32 %v766
      %v1471 = vcvt.s32.f32 %v767
      %v1472 = vcvt.s32.f32 %v768
      %v1473 = vcvt.s32.f32 %v769
      %v1474 = vcvt.s32.f32 %v770
      %v1475 = vcvt.s32.f32 %v771
      %v1476 = vcvt.s32.f32 %v772
      %v1477 = vcvt.s32.f32 %v773
      %v1478 = vcvt.s32.f32 %v774
      %v1479 = vcvt.s32.f32 %v775
      %v1480 = vcvt.s32.f32 %v776
      %v1481 = vcvt.s32.f32 %v777
      %v1482 = vcvt.s32.f32 %v778
      %v1483 = vcvt.s32.f32 %v779
      %v1484 = vcvt.s32.f32 %v780
      %v1485 = vcvt.s32.f32 %v781
      %v1486 = vcvt.s32.f32 %v782
      %v1487 = vcvt.s32.f32 %v783
      %v1488 = vcvt.s32.f32 %v784
      %v1489 = vcvt.s32.f32 %v785
      %v1490 = vcvt.s32.f32 %v786
      %v1491 = vcvt.s32.f32 %v787
      %v1492 = vcvt.s32.f32 %v788
      %v1493 = vcvt.s32.f32 %v789
      %v1494 = vcvt.s32.f32 %v790
      %v1495 = vcvt.s32.f32 %v791
      %v1496 = vcvt.s32.f32 %v792
      %v1497 = vcvt.s32.f32 %v793
      %v1498 = vcvt.s32.f32 %v794
      %v1499 = vcvt.s32.f32 %v795
      %v1500 = vcvt.s32.f32 %v796
      %v1501 = vcvt.s32.f32 %v797
      %v1502 = vcvt.s32.f32 %v798
      %v1503 = vcvt.s32.f32 %v799
      %v1504 = vcvt.s32.f32 %v800
      %v1505 = vcvt.s32.f32 %v801
      %v1506 = vcvt.s32.f32 %v802
      %v1507 = vcvt.s32.f32 %v803
      %v1508 = vcvt.s32.f32 %v804
      %v1509 = vcvt.s32.f32 %v805
      %v1510 = vcvt.s32.f32 %v806
      %v1511 = vcvt.s32.f32 %v807
      %v1512 = vcvt.s32.f32 %v808
      %v1513 = vcvt.s32.f32 %v809
      %v1514 = vcvt.s32.f32 %v810
      %v1515 = vcvt.s32.f32 %v811
      %v1516 = vcvt.s32.f32 %v812
      %v1517 = vcvt.s32.f32 %v813
      %v1518 = vcvt.s32.f32 %v814
      %v1519 = vcvt.s32.f32 %v815
      %v1520 = vcvt.s32.f32 %v816
      %v1521 = vcvt.s32.f32 %v817
      %v1522 = vcvt.s32.f32 %v818
      %v1523 = vcvt.s32.f32 %v819
      %v1524 = vcvt.s32.f32 %v820
      %v1525 = vcvt.s32.f32 %v821
      %v1526 = vcvt.s32.f32 %v822
      %v1527 = vcvt.s32.f32 %v823
      %v1528 = vcvt.s32.f32 %v824
      %v1529 = vcvt.s32.f32 %v825
      %v1530 = vcvt.s32.f32 %v826
      %v1531 = vcvt.s32.f32 %v827
      %v1532 = vcvt.s32.f32 %v828
      %v1533 = vcvt.s32.f32 %v829
      %v1534 = vcvt.s32.f32 %v830
      %v1535 = vcvt.s32.f32 %v831
      %v1536 = vcvt.s32.f32 %v832
      %v1537 = vcvt.s32.f32 %v833
      %v1538 = vcvt.s32.f32 %v834
      %v1539 = vcvt.s32.f32 %v835
      %v1540 = vcvt.s32.f32 %v836
      %v1541 = vcvt.s32.f32 %v837
      %v1542 = vcvt.s32.f32 %v838
      %v1543 = vcvt.s32.f32 %v839
      %v1544 = vcvt.s32.f32 %v840
      %v1545 = vcvt.s32.f32 %v841
      %v1546 = vcvt.s32.f32 %v842
      %v1547 = vcvt.s32.f32 %v843
      %v1548 = vcvt.s32.f32 %v844
      %v1549 = vcvt.s32.f32 %v845
      %v1550 = vcvt.s32.f32 %v846
      %v1551 = vcvt.s32.f32 %v847
      %v1552 = vcvt.s32.f32 %v848
      %v1553 = vcvt.s32.f32 %v849
      %v1554 = vcvt.s32.f32 %v850
      %v1555 = vcvt.s32.f32 %v851
      %v1556 = vcvt.s32.f32 %v852
      %v1557 = vcvt.s32.f32 %v853
      %v1558 = vcvt.s32.f32 %v854
      %v1559 = vcvt.s32.f32 %v855
      %v1560 = vcvt.s32.f32 %v856
      %v1561 = vcvt.s32.f32 %v857
      %v1562 = vcvt.s32.f32 %v858
      %v1563 = vcvt.s32.f32 %v859
      %v1564 = vcvt.s32.f32 %v860
      %v1565 = vcvt.s32.f32 %v861
      %v1566 = vcvt.s32.f32 %v862
      %v1567 = vcvt.s32.f32 %v863
      %v1568 = vcvt.s32.f32 %v864
      %v1569 = vcvt.s32.f32 %v865
      %v1570 = vcvt.s32.f32 %v866
      %v1571 = vcvt.s32.f32 %v867
      %v1572 = vcvt.s32.f32 %v868
      %v1573 = vcvt.s32.f32 %v869
      %v1574 = vcvt.s32.f32 %v870
      %v1575 = vcvt.s32.f32 %v871
      %v1576 = vcvt.s32.f32 %v872
      %v1577 = vcvt.s32.f32 %v873
      %v1578 = vcvt.s32.f32 %v874
      %v1579 = vcvt.s32.f32 %v875
      %v1580 = vcvt.s32.f32 %v876
      %v1581 = vcvt.s32.f32 %v877
      %v1582 = vcvt.s32.f32 %v878
      %v1583 = vcvt.s32.f32 %v879
      %v1584 = vcvt.s32.f32 %v880
      %v1585 = vcvt.s32.f32 %v881
      %v1586 = vcvt.s32.f32 %v882
      %v1587 = vcvt.s32.f32 %v883
      %v1588 = vcvt.s32.f32 %v884
      %v1589 = vcvt.s32.f32 %v885
      %v1590 = vcvt.s32.f32 %v886
      %v1591 = vcvt.s32.f32 %v887
      %v1592 = vcvt.s32.f32 %v888
      %v1593 = vcvt.s32.f32 %v889
      %v1594 = vcvt.s32.f32 %v890
      %v1595 = vcvt.s32.f32 %v891
      %v1596 = vcvt.s32.f32 %v892
      %v1597 = vcvt.s32.f32 %v893
      %v1598 = vcvt.s32.f32 %v894
      %v1599 = vcvt.s32.f32 %v895
      %v1600 = vcvt.s32.f32 %v896
      %v1601 = vcvt.s32.f32 %v897
      %v1602 = vcvt.s32.f32 %v898
      %v1603 = vcvt.s32.f32 %v899
      %v1604 = vcvt.s32.f32 %v900
      %v1605 = vcvt.s32.f32 %v901
      %v1606 = vcvt.s32.f32 %v902
      %v1607 = vcvt.s32.f32 %v903
      %v1608 = vcvt.s32.f32 %v904
      %v1609 = vcvt.s32.f32 %v905
      %v1610 = vcvt.s32.f32 %v906
      %v1611 = vcvt.s32.f32 %v907
      %v1612 = vcvt.s32.f32 %v908
      %v1613 = vcvt.s32.f32 %v909
      %v1614 = vcvt.s32.f32 %v910
      %v1615 = vcvt.s32.f32 %v911
      %v1616 = vcvt.s32.f32 %v912
      %v1617 = vcvt.s32.f32 %v913
      %v1618 = vcvt.s32.f32 %v914
      %v1619 = vcvt.s32.f32 %v915
      %v1620 = vcvt.s32.f32 %v916
      %v1621 = vcvt.s32.f32 %v917
      %v1622 = vcvt.s32.f32 %v918
      %v1623 = vcvt.s32.f32 %v919
      %v1624 = vcvt.s32.f32 %v920
      %v1625 = vcvt.s32.f32 %v921
      %v1626 = vcvt.s32.f32 %v922
      %v1627 = vcvt.s32.f32 %v923
      %v1628 = vcvt.s32.f32 %v924
      %v1629 = vcvt.s32.f32 %v925
      %v1630 = vcvt.s32.f32 %v926
      %v1631 = vcvt.s32.f32 %v927
      %v1632 = vcvt.s32.f32 %v928
      %v1633 = vcvt.s32.f32 %v929
      %v1634 = vcvt.s32.f32 %v930
      %v1635 = vcvt.s32.f32 %v931
      %v1636 = vcvt.s32.f32 %v932
      %v1637 = vcvt.s32.f32 %v933
      %v1638 = vcvt.s32.f32 %v934
      %v1639 = vcvt.s32.f32 %v935
      %v1640 = vcvt.s32.f32 %v936
      %v1641 = vcvt.s32.f32 %v937
      %v1642 = vcvt.s32.f32 %v938
      %v1643 = vcvt.s32.f32 %v939
      %v1644 = vcvt.s32.f32 %v940
      %v1645 = vcvt.s32.f32 %v941
      %v1646 = vcvt.s32.f32 %v942
      %v1647 = vcvt.s32.f32 %v943
      %v1648 = vcvt.s32.f32 %v944
      %v1649 = vcvt.s32.f32 %v945
      %v1650 = vcvt.s32.f32 %v946
      %v1651 = vcvt.s32.f32 %v947
      %v1652 = vcvt.s32.f32 %v948
      %v1653 = vcvt.s32.f32 %v949
      %v1654 = vcvt.s32.f32 %v950
      %v1655 = vcvt.s32.f32 %v951
      %v1656 = vcvt.s32.f32 %v952
      %v1657 = vcvt.s32.f32 %v953
      %v1658 = vcvt.s32.f32 %v954
      %v1659 = vcvt.s32.f32 %v955
      %v1660 = vcvt.s32.f32 %v956
      %v1661 = vcvt.s32.f32 %v957
      %v1662 = vcvt.s32.f32 %v958
      %v1663 = vcvt.s32.f32 %v959
      %v1664 = vcvt.s32.f32 %v960
      %v1665 = vcvt.s32.f32 %v961
      %v1666 = vcvt.s32.f32 %v962
      %v1667 = vcvt.s32.f32 %v963
      %v1668 = vcvt.s32.f32 %v964
      %v1669 = vcvt.s32.f32 %v965
      %v1670 = vcvt.s32.f32 %v966
      %v1671 = vcvt.s32.f32 %v967
      %v1672 = vcvt.s32.f32 %v968
      %v1673 = vcvt.s32.f32 %v969
      %v1674 = vcvt.s32.f32 %v970
      %v1675 = vcvt.s32.f32 %v971
      %v1676 = vcvt.s32.f32 %v972
      %v1677 = vcvt.s32.f32 %v973
      %v1678 = vcvt.s32.f32 %v974
      %v1679 = vcvt.s32.f32 %v975
      %v1680 = vcvt.s32.f32 %v976
      %v1681 = vcvt.s32.f32 %v977
      %v1682 = vcvt.s32.f32 %v978
      %v1683 = vcvt.s32.f32 %v979
      %v1684 = vcvt.s32.f32 %v980
      %v1685 = vcvt.s32.f32 %v981
      %v1686 = vcvt.s32.f32 %v982
      %v1687 = vcvt.s32.f32 %v983
      %v1688 = vcvt.s32.f32 %v984
      %v1689 = vcvt.s32.f32 %v985
      %v1690 = vcvt.s32.f32 %v986
      %v1691 = vcvt.s32.f32 %v987
      %v1692 = vcvt.s32.f32 %v988
      %v1693 = vcvt.s32.f32 %v989
      %v1694 = vcvt.s32.f32 %v990
      %v1695 = vcvt.s32.f32 %v991
      %v1696 = vcvt.s32.f32 %v992
      %v1697 = vcvt.s32.f32 %v993
      %v1698 = vcvt.s32.f32 %v994
      %v1699 = vcvt.s32.f32 %v995
      %v1700 = vcvt.s32.f32 %v996
      %v1701 = vcvt.s32.f32 %v997
      %v1702 = vcvt.s32.f32 %v998
      %v1703 = vcvt.s32.f32 %v999
      %v1704 = vcvt.s32.f32 %v1000
      %v1705 = vcvt.s32.f32 %v1001
      %v1706 = vcvt.s32.f32 %v1002
      %v1707 = vcvt.s32.f32 %v1003
      %v1708 = vcvt.s32.f32 %v1004
      %v1709 = vcvt.s32.f32 %v1005
      %v1710 = vcvt.s32.f32 %v1006
      %v1711 = vcvt.s32.f32 %v1007
      %v1712 = vcvt.s32.f32 %v1008
      %v1713 = vcvt.s32.f32 %v1009
      %v1714 = vcvt.s32.f32 %v1010
      %v1715 = vcvt.s32.f32 %v1011
      %v1716 = vcvt.s32.f32 %v1012
      %v1717 = vcvt.s32.f32 %v1013
      %v1718 = vcvt.s32.f32 %v1014
      %v1719 = vcvt.s32.f32 %v1015
      %v1720 = vcvt.s32.f32 %v1016
      %v1721 = vcvt.s32.f32 %v1017
      %v1722 = vcvt.s32.f32 %v1018
      %v1723 = vcvt.s32.f32 %v1019
      %v1724 = vcvt.s32.f32 %v1020
      %v1725 = vcvt.s32.f32 %v1021
      %v1726 = vcvt.s32.f32 %v1022
      %v1727 = vcvt.s32.f32 %v1023
      %v1728 = vcvt.s32.f32 %v1024
      %v1729 = vcvt.s32.f32 %v1025
      %v1730 = vcvt.s32.f32 %v1026
      %v1731 = vcvt.s32.f32 %v1027
      %v1732 = vcvt.s32.f32 %v1028
      %v1733 = vcvt.s32.f32 %v1029
      %v1734 = vcvt.s32.f32 %v1030
      %v1735 = vcvt.s32.f32 %v1031
      %v1736 = vcvt.s32.f32 %v1032
      %v1737 = vcvt.s32.f32 %v1033
      %v1738 = vcvt.s32.f32 %v1034
      %v1739 = vcvt.s32.f32 %v1035
      %v1740 = vcvt.s32.f32 %v1036
      %v1741 = vcvt.s32.f32 %v1037
      %v1742 = vcvt.s32.f32 %v1038
      %v1743 = vcvt.s32.f32 %v1039
      %v1744 = vcvt.s32.f32 %v1040
      %v1745 = vcvt.s32.f32 %v1041
      %v1746 = vcvt.s32.f32 %v1042
      %v1747 = vcvt.s32.f32 %v1043
      %v1748 = vcvt.s32.f32 %v1044
      %v1749 = vcvt.s32.f32 %v1045
      %v1750 = vcvt.s32.f32 %v1046
      %v1751 = vcvt.s32.f32 %v1047
      %v1752 = vcvt.s32.f32 %v1048
      %v1753 = vcvt.s32.f32 %v1049
      %v1754 = vcvt.s32.f32 %v1050
      %v1755 = vcvt.s32.f32 %v1051
      %v1756 = vcvt.s32.f32 %v1052
      %v1757 = vcvt.s32.f32 %v1053
      %v1758 = vcvt.s32.f32 %v1054
      %v1759 = vcvt.s32.f32 %v1055
      %v1760 = vcvt.s32.f32 %v1056
      %v1761 = vcvt.s32.f32 %v1057
      %v1762 = vcvt.s32.f32 %v1058
      %v1763 = vcvt.s32.f32 %v1059
      %v1764 = vcvt.s32.f32 %v1060
      %v1765 = vcvt.s32.f32 %v1061
      %v1766 = vcvt.s32.f32 %v1062
      %v1767 = vcvt.s32.f32 %v1063
      %v1768 = vcvt.s32.f32 %v1064
      %v1769 = vcvt.s32.f32 %v1065
      %v1770 = vcvt.s32.f32 %v1066
      %v1771 = vcvt.s32.f32 %v1067
      %v1772 = vcvt.s32.f32 %v1068
      %v1773 = vcvt.s32.f32 %v1069
      %v1774 = vcvt.s32.f32 %v1070
      %v1775 = vcvt.s32.f32 %v1071
      %v1776 = vcvt.s32.f32 %v1072
      %v1777 = vcvt.s32.f32 %v1073
      %v1778 = vcvt.s32.f32 %v1074
      %v1779 = vcvt.s32.f32 %v1075
      %v1780 = vcvt.s32.f32 %v1076
      %v1781 = vcvt.s32.f32 %v1077
      %v1782 = vcvt.s32.f32 %v1078
      %v1783 = vcvt.s32.f32 %v1079
      %v1784 = vcvt.s32.f32 %v1080
      %v1785 = vcvt.s32.f32 %v1081
      %v1786 = vcvt.s32.f32 %v1082
      %v1787 = vcvt.s32.f32 %v1083
      %v1788 = vcvt.s32.f32 %v1084
      %v1789 = vcvt.s32.f32 %v1085
      %v1790 = vcvt.s32.f32 %v1086
      %v1791 = vcvt.s32.f32 %v1087
      %v1792 = vcvt.s32.f32 %v1088
      %v1793 = vcvt.s32.f32 %v1089
      %v1794 = vcvt.s32.f32 %v1090
      %v1795 = vcvt.s32.f32 %v1091
      %v1796 = vcvt.s32.f32 %v1092
      %v1797 = vcvt.s32.f32 %v1093
      %v1798 = vcvt.s32.f32 %v1094
      %v1799 = vcvt.s32.f32 %v1095
      %v1800 = vcvt.s32.f32 %v1096
      %v1801 = vcvt.s32.f32 %v1097
      %v1802 = vcvt.s32.f32 %v1098
      %v1803 = vcvt.s32.f32 %v1099
      %v1804 = vcvt.s32.f32 %v1100
      %v1805 = vcvt.s32.f32 %v1101
      %v1806 = vcvt.s32.f32 %v1102
      %v1807 = vcvt.s32.f32 %v1103
      %v1808 = vcvt.s32.f32 %v1104
      %v1809 = vcvt.s32.f32 %v1105
      %v1810 = vcvt.s32.f32 %v1106
      %v1811 = vcvt.s32.f32 %v1107
      %v1812 = vcvt.s32.f32 %v1108
      %v1813 = vcvt.s32.f32 %v1109
      %v1814 = vcvt.s32.f32 %v1110
      %v1815 = vcvt.s32.f32 %v1111
      %v1816 = vcvt.s32.f32 %v1112
      %v1817 = vcvt.s32.f32 %v1113
      %v1818 = vcvt.s32.f32 %v1114
      %v1819 = vcvt.s32.f32 %v1115
      %v1820 = vcvt.s32.f32 %v1116
      %v1821 = vcvt.s32.f32 %v1117
      %v1822 = vcvt.s32.f32 %v1118
      %v1823 = vcvt.s32.f32 %v1119
      %v1824 = vcvt.s32.f32 %v1120
      %v1825 = vcvt.s32.f32 %v1121
      %v1826 = vcvt.s32.f32 %v1122
      %v1827 = vcvt.s32.f32 %v1123
      %v1828 = vcvt.s32.f32 %v1124
      %v1829 = vcvt.s32.f32 %v1125
      %v1830 = vcvt.s32.f32 %v1126
      %v1831 = vcvt.s32.f32 %v1127
      %v1832 = vcvt.s32.f32 %v1128
      %v1833 = vcvt.s32.f32 %v1129
      %v1834 = vcvt.s32.f32 %v1130
      %v1835 = vcvt.s32.f32 %v1131
      %v1836 = vcvt.s32.f32 %v1132
      %v1837 = vcvt.s32.f32 %v1133
      %v1838 = vcvt.s32.f32 %v1134
      %v1839 = vcvt.s32.f32 %v1135
      %v1840 = vcvt.s32.f32 %v1136
      %v1841 = vcvt.s32.f32 %v1137
      %v1842 = vcvt.s32.f32 %v1138
      %v1843 = vcvt.s32.f32 %v1139
      %v1844 = vcvt.s32.f32 %v1140
      %v1845 = vcvt.s32.f32 %v1141
      %v1846 = vcvt.s32.f32 %v1142
      %v1847 = vcvt.s32.f32 %v1143
      %v1848 = vcvt.s32.f32 %v1144
      %v1849 = vcvt.s32.f32 %v1145
      %v1850 = vcvt.s32.f32 %v1146
      %v1851 = vcvt.s32.f32 %v1147
      %v1852 = vcvt.s32.f32 %v1148
      %v1853 = vcvt.s32.f32 %v1149
      %v1854 = vcvt.s32.f32 %v1150
      %v1855 = vcvt.s32.f32 %v1151
      %v1856 = vcvt.s32.f32 %v1152
      %v1857 = vcvt.s32.f32 %v1153
      %v1858 = vcvt.s32.f32 %v1154
      %v1859 = vcvt.s32.f32 %v1155
      %v1860 = vcvt.s32.f32 %v1156
      %v1861 = vcvt.s32.f32 %v1157
      %v1862 = vcvt.s32.f32 %v1158
      %v1863 = vcvt.s32.f32 %v1159
      %v1864 = vcvt.s32.f32 %v1160
      %v1865 = vcvt.s32.f32 %v1161
      %v1866 = vcvt.s32.f32 %v1162
      %v1867 = vcvt.s32.f32 %v1163
      %v1868 = vcvt.s32.f32 %v1164
      %v1869 = vcvt.s32.f32 %v1165
      %v1870 = vcvt.s32.f32 %v1166
      %v1871 = vcvt.s32.f32 %v1167
      %v1872 = vcvt.s32.f32 %v1168
      %v1873 = vcvt.s32.f32 %v1169
      %v1874 = vcvt.s32.f32 %v1170
      %v1875 = vcvt.s32.f32 %v1171
      %v1876 = vcvt.s32.f32 %v1172
      %v1877 = vcvt.s32.f32 %v1173
      %v1878 = vcvt.s32.f32 %v1174
      %v1879 = vcvt.s32.f32 %v1175
      %v1880 = vcvt.s32.f32 %v1176
      %v1881 = vcvt.s32.f32 %v1177
      %v1882 = vcvt.s32.f32 %v1178
      %v1883 = vcvt.s32.f32 %v1179
      %v1884 = vcvt.s32.f32 %v1180
      %v1885 = vcvt.s32.f32 %v1181
      %v1886 = vcvt.s32.f32 %v1182
      %v1887 = vcvt.s32.f32 %v1183
      %v1888 = vcvt.s32.f32 %v1184
      %v1889 = vcvt.s32.f32 %v1185
      %v1890 = vcvt.s32.f32 %v1186
      %v1891 = vcvt.s32.f32 %v1187
      %v1892 = vcvt.s32.f32 %v1188
      %v1893 = vcvt.s32.f32 %v1189
      %v1894 = vcvt.s32.f32 %v1190
      %v1895 = vcvt.s32.f32 %v1191
      %v1896 = vcvt.s32.f32 %v1192
      %v1897 = vcvt.s32.f32 %v1193
      %v1898 = vcvt.s32.f32 %v1194
      %v1899 = vcvt.s32.f32 %v1195
      %v1900 = vcvt.s32.f32 %v1196
      %v1901 = vcvt.s32.f32 %v1197
      %v1902 = vcvt.s32.f32 %v1198
      %v1903 = vcvt.s32.f32 %v1199
      %v1904 = vcvt.s32.f32 %v1200
      %v1905 = vcvt.s32.f32 %v1201
      %v1906 = vcvt.s32.f32 %v1202
      %v1907 = vcvt.s32.f32 %v1203
      %v1908 = vcvt.s32.f32 %v1204
      %v1909 = vld [vmem:[%s2] sm:$0x3]
      %v1911 = vlaneseq
      %v1912 = vshrl.u32 %v1911, 7
      %v1913 = vsub.s32 0, %v1912
      %v1914 = vrot.slane %v1909, %v1913
      %v1915 = vlaneseq
      %v1916 = vshrl.u32 %v1915, 7
      %v1917 = vsub.s32 1, %v1916
      %v1918 = vrot.slane %v1909, %v1917
      %v1921 = vmul.f32 %v1205, %v1914
      %v1922 = vmul.f32 %v1206, %v1918
      %v1923 = vmul.f32 %v1207, %v1914
      %v1924 = vmul.f32 %v1208, %v1918
      %v1925 = vmul.f32 %v1209, %v1914
      %v1926 = vmul.f32 %v1210, %v1918
      %v1927 = vmul.f32 %v1211, %v1914
      %v1928 = vmul.f32 %v1212, %v1918
      %v1929 = vmul.f32 %v1213, %v1914
      %v1930 = vmul.f32 %v1214, %v1918
      %v1931 = vmul.f32 %v1215, %v1914
      %v1932 = vmul.f32 %v1216, %v1918
      %v1933 = vmul.f32 %v1217, %v1914
      %v1934 = vmul.f32 %v1218, %v1918
      %v1935 = vmul.f32 %v1219, %v1914
      %v1936 = vmul.f32 %v1220, %v1918
      %v1937 = vmul.f32 %v1221, %v1914
      %v1938 = vmul.f32 %v1222, %v1918
      %v1939 = vmul.f32 %v1223, %v1914
      %v1940 = vmul.f32 %v1224, %v1918
      %v1941 = vmul.f32 %v1225, %v1914
      %v1942 = vmul.f32 %v1226, %v1918
      %v1943 = vmul.f32 %v1227, %v1914
      %v1944 = vmul.f32 %v1228, %v1918
      %v1945 = vmul.f32 %v1229, %v1914
      %v1946 = vmul.f32 %v1230, %v1918
      %v1947 = vmul.f32 %v1231, %v1914
      %v1948 = vmul.f32 %v1232, %v1918
      %v1949 = vmul.f32 %v1233, %v1914
      %v1950 = vmul.f32 %v1234, %v1918
      %v1951 = vmul.f32 %v1235, %v1914
      %v1952 = vmul.f32 %v1236, %v1918
      %v1953 = vmul.f32 %v1237, %v1914
      %v1954 = vmul.f32 %v1238, %v1918
      %v1955 = vmul.f32 %v1239, %v1914
      %v1956 = vmul.f32 %v1240, %v1918
      %v1957 = vmul.f32 %v1241, %v1914
      %v1958 = vmul.f32 %v1242, %v1918
      %v1959 = vmul.f32 %v1243, %v1914
      %v1960 = vmul.f32 %v1244, %v1918
      %v1961 = vmul.f32 %v1245, %v1914
      %v1962 = vmul.f32 %v1246, %v1918
      %v1963 = vmul.f32 %v1247, %v1914
      %v1964 = vmul.f32 %v1248, %v1918
      %v1965 = vmul.f32 %v1249, %v1914
      %v1966 = vmul.f32 %v1250, %v1918
      %v1967 = vmul.f32 %v1251, %v1914
      %v1968 = vmul.f32 %v1252, %v1918
      %v1969 = vmul.f32 %v1253, %v1914
      %v1970 = vmul.f32 %v1254, %v1918
      %v1971 = vmul.f32 %v1255, %v1914
      %v1972 = vmul.f32 %v1256, %v1918
      %v1973 = vmul.f32 %v1257, %v1914
      %v1974 = vmul.f32 %v1258, %v1918
      %v1975 = vmul.f32 %v1259, %v1914
      %v1976 = vmul.f32 %v1260, %v1918
      %v1977 = vmul.f32 %v1261, %v1914
      %v1978 = vmul.f32 %v1262, %v1918
      %v1979 = vmul.f32 %v1263, %v1914
      %v1980 = vmul.f32 %v1264, %v1918
      %v1981 = vmul.f32 %v1265, %v1914
      %v1982 = vmul.f32 %v1266, %v1918
      %v1983 = vmul.f32 %v1267, %v1914
      %v1984 = vmul.f32 %v1268, %v1918
      %v1985 = vmul.f32 %v1269, %v1914
      %v1986 = vmul.f32 %v1270, %v1918
      %v1987 = vmul.f32 %v1271, %v1914
      %v1988 = vmul.f32 %v1272, %v1918
      %v1989 = vmul.f32 %v1273, %v1914
      %v1990 = vmul.f32 %v1274, %v1918
      %v1991 = vmul.f32 %v1275, %v1914
      %v1992 = vmul.f32 %v1276, %v1918
      %v1993 = vmul.f32 %v1277, %v1914
      %v1994 = vmul.f32 %v1278, %v1918
      %v1995 = vmul.f32 %v1279, %v1914
      %v1996 = vmul.f32 %v1280, %v1918
      %v1997 = vmul.f32 %v1281, %v1914
      %v1998 = vmul.f32 %v1282, %v1918
      %v1999 = vmul.f32 %v1283, %v1914
      %v2000 = vmul.f32 %v1284, %v1918
      %v2001 = vmul.f32 %v1285, %v1914
      %v2002 = vmul.f32 %v1286, %v1918
      %v2003 = vmul.f32 %v1287, %v1914
      %v2004 = vmul.f32 %v1288, %v1918
      %v2005 = vmul.f32 %v1289, %v1914
      %v2006 = vmul.f32 %v1290, %v1918
      %v2007 = vmul.f32 %v1291, %v1914
      %v2008 = vmul.f32 %v1292, %v1918
      %v2009 = vmul.f32 %v1293, %v1914
      %v2010 = vmul.f32 %v1294, %v1918
      %v2011 = vmul.f32 %v1295, %v1914
      %v2012 = vmul.f32 %v1296, %v1918
      %v2013 = vmul.f32 %v1297, %v1914
      %v2014 = vmul.f32 %v1298, %v1918
      %v2015 = vmul.f32 %v1299, %v1914
      %v2016 = vmul.f32 %v1300, %v1918
      %v2017 = vmul.f32 %v1301, %v1914
      %v2018 = vmul.f32 %v1302, %v1918
      %v2019 = vmul.f32 %v1303, %v1914
      %v2020 = vmul.f32 %v1304, %v1918
      %v2021 = vmul.f32 %v1305, %v1914
      %v2022 = vmul.f32 %v1306, %v1918
      %v2023 = vmul.f32 %v1307, %v1914
      %v2024 = vmul.f32 %v1308, %v1918
      %v2025 = vmul.f32 %v1309, %v1914
      %v2026 = vmul.f32 %v1310, %v1918
      %v2027 = vmul.f32 %v1311, %v1914
      %v2028 = vmul.f32 %v1312, %v1918
      %v2029 = vmul.f32 %v1313, %v1914
      %v2030 = vmul.f32 %v1314, %v1918
      %v2031 = vmul.f32 %v1315, %v1914
      %v2032 = vmul.f32 %v1316, %v1918
      %v2033 = vmul.f32 %v1317, %v1914
      %v2034 = vmul.f32 %v1318, %v1918
      %v2035 = vmul.f32 %v1319, %v1914
      %v2036 = vmul.f32 %v1320, %v1918
      %v2037 = vmul.f32 %v1321, %v1914
      %v2038 = vmul.f32 %v1322, %v1918
      %v2039 = vmul.f32 %v1323, %v1914
      %v2040 = vmul.f32 %v1324, %v1918
      %v2041 = vmul.f32 %v1325, %v1914
      %v2042 = vmul.f32 %v1326, %v1918
      %v2043 = vmul.f32 %v1327, %v1914
      %v2044 = vmul.f32 %v1328, %v1918
      %v2045 = vmul.f32 %v1329, %v1914
      %v2046 = vmul.f32 %v1330, %v1918
      %v2047 = vmul.f32 %v1331, %v1914
      %v2048 = vmul.f32 %v1332, %v1918
      %v2049 = vmul.f32 %v1333, %v1914
      %v2050 = vmul.f32 %v1334, %v1918
      %v2051 = vmul.f32 %v1335, %v1914
      %v2052 = vmul.f32 %v1336, %v1918
      %v2053 = vmul.f32 %v1337, %v1914
      %v2054 = vmul.f32 %v1338, %v1918
      %v2055 = vmul.f32 %v1339, %v1914
      %v2056 = vmul.f32 %v1340, %v1918
      %v2057 = vmul.f32 %v1341, %v1914
      %v2058 = vmul.f32 %v1342, %v1918
      %v2059 = vmul.f32 %v1343, %v1914
      %v2060 = vmul.f32 %v1344, %v1918
      %v2061 = vmul.f32 %v1345, %v1914
      %v2062 = vmul.f32 %v1346, %v1918
      %v2063 = vmul.f32 %v1347, %v1914
      %v2064 = vmul.f32 %v1348, %v1918
      %v2065 = vmul.f32 %v1349, %v1914
      %v2066 = vmul.f32 %v1350, %v1918
      %v2067 = vmul.f32 %v1351, %v1914
      %v2068 = vmul.f32 %v1352, %v1918
      %v2069 = vmul.f32 %v1353, %v1914
      %v2070 = vmul.f32 %v1354, %v1918
      %v2071 = vmul.f32 %v1355, %v1914
      %v2072 = vmul.f32 %v1356, %v1918
      %v2073 = vmul.f32 %v1357, %v1914
      %v2074 = vmul.f32 %v1358, %v1918
      %v2075 = vmul.f32 %v1359, %v1914
      %v2076 = vmul.f32 %v1360, %v1918
      %v2077 = vmul.f32 %v1361, %v1914
      %v2078 = vmul.f32 %v1362, %v1918
      %v2079 = vmul.f32 %v1363, %v1914
      %v2080 = vmul.f32 %v1364, %v1918
      %v2081 = vmul.f32 %v1365, %v1914
      %v2082 = vmul.f32 %v1366, %v1918
      %v2083 = vmul.f32 %v1367, %v1914
      %v2084 = vmul.f32 %v1368, %v1918
      %v2085 = vmul.f32 %v1369, %v1914
      %v2086 = vmul.f32 %v1370, %v1918
      %v2087 = vmul.f32 %v1371, %v1914
      %v2088 = vmul.f32 %v1372, %v1918
      %v2089 = vmul.f32 %v1373, %v1914
      %v2090 = vmul.f32 %v1374, %v1918
      %v2091 = vmul.f32 %v1375, %v1914
      %v2092 = vmul.f32 %v1376, %v1918
      %v2093 = vmul.f32 %v1377, %v1914
      %v2094 = vmul.f32 %v1378, %v1918
      %v2095 = vmul.f32 %v1379, %v1914
      %v2096 = vmul.f32 %v1380, %v1918
      %v2097 = vmul.f32 %v1381, %v1914
      %v2098 = vmul.f32 %v1382, %v1918
      %v2099 = vmul.f32 %v1383, %v1914
      %v2100 = vmul.f32 %v1384, %v1918
      %v2101 = vmul.f32 %v1385, %v1914
      %v2102 = vmul.f32 %v1386, %v1918
      %v2103 = vmul.f32 %v1387, %v1914
      %v2104 = vmul.f32 %v1388, %v1918
      %v2105 = vmul.f32 %v1389, %v1914
      %v2106 = vmul.f32 %v1390, %v1918
      %v2107 = vmul.f32 %v1391, %v1914
      %v2108 = vmul.f32 %v1392, %v1918
      %v2109 = vmul.f32 %v1393, %v1914
      %v2110 = vmul.f32 %v1394, %v1918
      %v2111 = vmul.f32 %v1395, %v1914
      %v2112 = vmul.f32 %v1396, %v1918
      %v2113 = vmul.f32 %v1397, %v1914
      %v2114 = vmul.f32 %v1398, %v1918
      %v2115 = vmul.f32 %v1399, %v1914
      %v2116 = vmul.f32 %v1400, %v1918
      %v2117 = vmul.f32 %v1401, %v1914
      %v2118 = vmul.f32 %v1402, %v1918
      %v2119 = vmul.f32 %v1403, %v1914
      %v2120 = vmul.f32 %v1404, %v1918
      %v2121 = vmul.f32 %v1405, %v1914
      %v2122 = vmul.f32 %v1406, %v1918
      %v2123 = vmul.f32 %v1407, %v1914
      %v2124 = vmul.f32 %v1408, %v1918
      %v2125 = vmul.f32 %v1409, %v1914
      %v2126 = vmul.f32 %v1410, %v1918
      %v2127 = vmul.f32 %v1411, %v1914
      %v2128 = vmul.f32 %v1412, %v1918
      %v2129 = vmul.f32 %v1413, %v1914
      %v2130 = vmul.f32 %v1414, %v1918
      %v2131 = vmul.f32 %v1415, %v1914
      %v2132 = vmul.f32 %v1416, %v1918
      %v2133 = vmul.f32 %v1417, %v1914
      %v2134 = vmul.f32 %v1418, %v1918
      %v2135 = vmul.f32 %v1419, %v1914
      %v2136 = vmul.f32 %v1420, %v1918
      %v2137 = vmul.f32 %v1421, %v1914
      %v2138 = vmul.f32 %v1422, %v1918
      %v2139 = vmul.f32 %v1423, %v1914
      %v2140 = vmul.f32 %v1424, %v1918
      %v2141 = vmul.f32 %v1425, %v1914
      %v2142 = vmul.f32 %v1426, %v1918
      %v2143 = vmul.f32 %v1427, %v1914
      %v2144 = vmul.f32 %v1428, %v1918
      %v2145 = vmul.f32 %v1429, %v1914
      %v2146 = vmul.f32 %v1430, %v1918
      %v2147 = vmul.f32 %v1431, %v1914
      %v2148 = vmul.f32 %v1432, %v1918
      %v2149 = vmul.f32 %v1433, %v1914
      %v2150 = vmul.f32 %v1434, %v1918
      %v2151 = vmul.f32 %v1435, %v1914
      %v2152 = vmul.f32 %v1436, %v1918
      %v2153 = vmul.f32 %v1437, %v1914
      %v2154 = vmul.f32 %v1438, %v1918
      %v2155 = vmul.f32 %v1439, %v1914
      %v2156 = vmul.f32 %v1440, %v1918
      %v2157 = vmul.f32 %v1441, %v1914
      %v2158 = vmul.f32 %v1442, %v1918
      %v2159 = vmul.f32 %v1443, %v1914
      %v2160 = vmul.f32 %v1444, %v1918
      %v2161 = vmul.f32 %v1445, %v1914
      %v2162 = vmul.f32 %v1446, %v1918
      %v2163 = vmul.f32 %v1447, %v1914
      %v2164 = vmul.f32 %v1448, %v1918
      %v2165 = vmul.f32 %v1449, %v1914
      %v2166 = vmul.f32 %v1450, %v1918
      %v2167 = vmul.f32 %v1451, %v1914
      %v2168 = vmul.f32 %v1452, %v1918
      %v2169 = vmul.f32 %v1453, %v1914
      %v2170 = vmul.f32 %v1454, %v1918
      %v2171 = vmul.f32 %v1455, %v1914
      %v2172 = vmul.f32 %v1456, %v1918
      %v2173 = vmul.f32 %v1457, %v1914
      %v2174 = vmul.f32 %v1458, %v1918
      %v2175 = vmul.f32 %v1459, %v1914
      %v2176 = vmul.f32 %v1460, %v1918
      %v2177 = vmul.f32 %v1461, %v1914
      %v2178 = vmul.f32 %v1462, %v1918
      %v2179 = vmul.f32 %v1463, %v1914
      %v2180 = vmul.f32 %v1464, %v1918
      %v2181 = vmul.f32 %v1465, %v1914
      %v2182 = vmul.f32 %v1466, %v1918
      %v2183 = vmul.f32 %v1467, %v1914
      %v2184 = vmul.f32 %v1468, %v1918
      %v2185 = vmul.f32 %v1469, %v1914
      %v2186 = vmul.f32 %v1470, %v1918
      %v2187 = vmul.f32 %v1471, %v1914
      %v2188 = vmul.f32 %v1472, %v1918
      %v2189 = vmul.f32 %v1473, %v1914
      %v2190 = vmul.f32 %v1474, %v1918
      %v2191 = vmul.f32 %v1475, %v1914
      %v2192 = vmul.f32 %v1476, %v1918
      %v2193 = vmul.f32 %v1477, %v1914
      %v2194 = vmul.f32 %v1478, %v1918
      %v2195 = vmul.f32 %v1479, %v1914
      %v2196 = vmul.f32 %v1480, %v1918
      %v2197 = vmul.f32 %v1481, %v1914
      %v2198 = vmul.f32 %v1482, %v1918
      %v2199 = vmul.f32 %v1483, %v1914
      %v2200 = vmul.f32 %v1484, %v1918
      %v2201 = vmul.f32 %v1485, %v1914
      %v2202 = vmul.f32 %v1486, %v1918
      %v2203 = vmul.f32 %v1487, %v1914
      %v2204 = vmul.f32 %v1488, %v1918
      %v2205 = vmul.f32 %v1489, %v1914
      %v2206 = vmul.f32 %v1490, %v1918
      %v2207 = vmul.f32 %v1491, %v1914
      %v2208 = vmul.f32 %v1492, %v1918
      %v2209 = vmul.f32 %v1493, %v1914
      %v2210 = vmul.f32 %v1494, %v1918
      %v2211 = vmul.f32 %v1495, %v1914
      %v2212 = vmul.f32 %v1496, %v1918
      %v2213 = vmul.f32 %v1497, %v1914
      %v2214 = vmul.f32 %v1498, %v1918
      %v2215 = vmul.f32 %v1499, %v1914
      %v2216 = vmul.f32 %v1500, %v1918
      %v2217 = vmul.f32 %v1501, %v1914
      %v2218 = vmul.f32 %v1502, %v1918
      %v2219 = vmul.f32 %v1503, %v1914
      %v2220 = vmul.f32 %v1504, %v1918
      %v2221 = vmul.f32 %v1505, %v1914
      %v2222 = vmul.f32 %v1506, %v1918
      %v2223 = vmul.f32 %v1507, %v1914
      %v2224 = vmul.f32 %v1508, %v1918
      %v2225 = vmul.f32 %v1509, %v1914
      %v2226 = vmul.f32 %v1510, %v1918
      %v2227 = vmul.f32 %v1511, %v1914
      %v2228 = vmul.f32 %v1512, %v1918
      %v2229 = vmul.f32 %v1513, %v1914
      %v2230 = vmul.f32 %v1514, %v1918
      %v2231 = vmul.f32 %v1515, %v1914
      %v2232 = vmul.f32 %v1516, %v1918
      %v2233 = vmul.f32 %v1517, %v1914
      %v2234 = vmul.f32 %v1518, %v1918
      %v2235 = vmul.f32 %v1519, %v1914
      %v2236 = vmul.f32 %v1520, %v1918
      %v2237 = vmul.f32 %v1521, %v1914
      %v2238 = vmul.f32 %v1522, %v1918
      %v2239 = vmul.f32 %v1523, %v1914
      %v2240 = vmul.f32 %v1524, %v1918
      %v2241 = vmul.f32 %v1525, %v1914
      %v2242 = vmul.f32 %v1526, %v1918
      %v2243 = vmul.f32 %v1527, %v1914
      %v2244 = vmul.f32 %v1528, %v1918
      %v2245 = vmul.f32 %v1529, %v1914
      %v2246 = vmul.f32 %v1530, %v1918
      %v2247 = vmul.f32 %v1531, %v1914
      %v2248 = vmul.f32 %v1532, %v1918
      %v2249 = vmul.f32 %v1533, %v1914
      %v2250 = vmul.f32 %v1534, %v1918
      %v2251 = vmul.f32 %v1535, %v1914
      %v2252 = vmul.f32 %v1536, %v1918
      %v2253 = vmul.f32 %v1537, %v1914
      %v2254 = vmul.f32 %v1538, %v1918
      %v2255 = vmul.f32 %v1539, %v1914
      %v2256 = vmul.f32 %v1540, %v1918
      %v2257 = vmul.f32 %v1541, %v1914
      %v2258 = vmul.f32 %v1542, %v1918
      %v2259 = vmul.f32 %v1543, %v1914
      %v2260 = vmul.f32 %v1544, %v1918
      %v2261 = vmul.f32 %v1545, %v1914
      %v2262 = vmul.f32 %v1546, %v1918
      %v2263 = vmul.f32 %v1547, %v1914
      %v2264 = vmul.f32 %v1548, %v1918
      %v2265 = vmul.f32 %v1549, %v1914
      %v2266 = vmul.f32 %v1550, %v1918
      %v2267 = vmul.f32 %v1551, %v1914
      %v2268 = vmul.f32 %v1552, %v1918
      %v2269 = vmul.f32 %v1553, %v1914
      %v2270 = vmul.f32 %v1554, %v1918
      %v2271 = vmul.f32 %v1555, %v1914
      %v2272 = vmul.f32 %v1556, %v1918
      %v2273 = vmul.f32 %v1557, %v1914
      %v2274 = vmul.f32 %v1558, %v1918
      %v2275 = vmul.f32 %v1559, %v1914
      %v2276 = vmul.f32 %v1560, %v1918
      %v2277 = vmul.f32 %v1561, %v1914
      %v2278 = vmul.f32 %v1562, %v1918
      %v2279 = vmul.f32 %v1563, %v1914
      %v2280 = vmul.f32 %v1564, %v1918
      %v2281 = vmul.f32 %v1565, %v1914
      %v2282 = vmul.f32 %v1566, %v1918
      %v2283 = vmul.f32 %v1567, %v1914
      %v2284 = vmul.f32 %v1568, %v1918
      %v2285 = vmul.f32 %v1569, %v1914
      %v2286 = vmul.f32 %v1570, %v1918
      %v2287 = vmul.f32 %v1571, %v1914
      %v2288 = vmul.f32 %v1572, %v1918
      %v2289 = vmul.f32 %v1573, %v1914
      %v2290 = vmul.f32 %v1574, %v1918
      %v2291 = vmul.f32 %v1575, %v1914
      %v2292 = vmul.f32 %v1576, %v1918
      %v2293 = vmul.f32 %v1577, %v1914
      %v2294 = vmul.f32 %v1578, %v1918
      %v2295 = vmul.f32 %v1579, %v1914
      %v2296 = vmul.f32 %v1580, %v1918
      %v2297 = vmul.f32 %v1581, %v1914
      %v2298 = vmul.f32 %v1582, %v1918
      %v2299 = vmul.f32 %v1583, %v1914
      %v2300 = vmul.f32 %v1584, %v1918
      %v2301 = vmul.f32 %v1585, %v1914
      %v2302 = vmul.f32 %v1586, %v1918
      %v2303 = vmul.f32 %v1587, %v1914
      %v2304 = vmul.f32 %v1588, %v1918
      %v2305 = vmul.f32 %v1589, %v1914
      %v2306 = vmul.f32 %v1590, %v1918
      %v2307 = vmul.f32 %v1591, %v1914
      %v2308 = vmul.f32 %v1592, %v1918
      %v2309 = vmul.f32 %v1593, %v1914
      %v2310 = vmul.f32 %v1594, %v1918
      %v2311 = vmul.f32 %v1595, %v1914
      %v2312 = vmul.f32 %v1596, %v1918
      %v2313 = vmul.f32 %v1597, %v1914
      %v2314 = vmul.f32 %v1598, %v1918
      %v2315 = vmul.f32 %v1599, %v1914
      %v2316 = vmul.f32 %v1600, %v1918
      %v2317 = vmul.f32 %v1601, %v1914
      %v2318 = vmul.f32 %v1602, %v1918
      %v2319 = vmul.f32 %v1603, %v1914
      %v2320 = vmul.f32 %v1604, %v1918
      %v2321 = vmul.f32 %v1605, %v1914
      %v2322 = vmul.f32 %v1606, %v1918
      %v2323 = vmul.f32 %v1607, %v1914
      %v2324 = vmul.f32 %v1608, %v1918
      %v2325 = vmul.f32 %v1609, %v1914
      %v2326 = vmul.f32 %v1610, %v1918
      %v2327 = vmul.f32 %v1611, %v1914
      %v2328 = vmul.f32 %v1612, %v1918
      %v2329 = vmul.f32 %v1613, %v1914
      %v2330 = vmul.f32 %v1614, %v1918
      %v2331 = vmul.f32 %v1615, %v1914
      %v2332 = vmul.f32 %v1616, %v1918
      %v2333 = vmul.f32 %v1617, %v1914
      %v2334 = vmul.f32 %v1618, %v1918
      %v2335 = vmul.f32 %v1619, %v1914
      %v2336 = vmul.f32 %v1620, %v1918
      %v2337 = vmul.f32 %v1621, %v1914
      %v2338 = vmul.f32 %v1622, %v1918
      %v2339 = vmul.f32 %v1623, %v1914
      %v2340 = vmul.f32 %v1624, %v1918
      %v2341 = vmul.f32 %v1625, %v1914
      %v2342 = vmul.f32 %v1626, %v1918
      %v2343 = vmul.f32 %v1627, %v1914
      %v2344 = vmul.f32 %v1628, %v1918
      %v2345 = vmul.f32 %v1629, %v1914
      %v2346 = vmul.f32 %v1630, %v1918
      %v2347 = vmul.f32 %v1631, %v1914
      %v2348 = vmul.f32 %v1632, %v1918
      %v2349 = vmul.f32 %v1633, %v1914
      %v2350 = vmul.f32 %v1634, %v1918
      %v2351 = vmul.f32 %v1635, %v1914
      %v2352 = vmul.f32 %v1636, %v1918
      %v2353 = vmul.f32 %v1637, %v1914
      %v2354 = vmul.f32 %v1638, %v1918
      %v2355 = vmul.f32 %v1639, %v1914
      %v2356 = vmul.f32 %v1640, %v1918
      %v2357 = vmul.f32 %v1641, %v1914
      %v2358 = vmul.f32 %v1642, %v1918
      %v2359 = vmul.f32 %v1643, %v1914
      %v2360 = vmul.f32 %v1644, %v1918
      %v2361 = vmul.f32 %v1645, %v1914
      %v2362 = vmul.f32 %v1646, %v1918
      %v2363 = vmul.f32 %v1647, %v1914
      %v2364 = vmul.f32 %v1648, %v1918
      %v2365 = vmul.f32 %v1649, %v1914
      %v2366 = vmul.f32 %v1650, %v1918
      %v2367 = vmul.f32 %v1651, %v1914
      %v2368 = vmul.f32 %v1652, %v1918
      %v2369 = vmul.f32 %v1653, %v1914
      %v2370 = vmul.f32 %v1654, %v1918
      %v2371 = vmul.f32 %v1655, %v1914
      %v2372 = vmul.f32 %v1656, %v1918
      %v2373 = vmul.f32 %v1657, %v1914
      %v2374 = vmul.f32 %v1658, %v1918
      %v2375 = vmul.f32 %v1659, %v1914
      %v2376 = vmul.f32 %v1660, %v1918
      %v2377 = vmul.f32 %v1661, %v1914
      %v2378 = vmul.f32 %v1662, %v1918
      %v2379 = vmul.f32 %v1663, %v1914
      %v2380 = vmul.f32 %v1664, %v1918
      %v2381 = vmul.f32 %v1665, %v1914
      %v2382 = vmul.f32 %v1666, %v1918
      %v2383 = vmul.f32 %v1667, %v1914
      %v2384 = vmul.f32 %v1668, %v1918
      %v2385 = vmul.f32 %v1669, %v1914
      %v2386 = vmul.f32 %v1670, %v1918
      %v2387 = vmul.f32 %v1671, %v1914
      %v2388 = vmul.f32 %v1672, %v1918
      %v2389 = vmul.f32 %v1673, %v1914
      %v2390 = vmul.f32 %v1674, %v1918
      %v2391 = vmul.f32 %v1675, %v1914
      %v2392 = vmul.f32 %v1676, %v1918
      %v2393 = vmul.f32 %v1677, %v1914
      %v2394 = vmul.f32 %v1678, %v1918
      %v2395 = vmul.f32 %v1679, %v1914
      %v2396 = vmul.f32 %v1680, %v1918
      %v2397 = vmul.f32 %v1681, %v1914
      %v2398 = vmul.f32 %v1682, %v1918
      %v2399 = vmul.f32 %v1683, %v1914
      %v2400 = vmul.f32 %v1684, %v1918
      %v2401 = vmul.f32 %v1685, %v1914
      %v2402 = vmul.f32 %v1686, %v1918
      %v2403 = vmul.f32 %v1687, %v1914
      %v2404 = vmul.f32 %v1688, %v1918
      %v2405 = vmul.f32 %v1689, %v1914
      %v2406 = vmul.f32 %v1690, %v1918
      %v2407 = vmul.f32 %v1691, %v1914
      %v2408 = vmul.f32 %v1692, %v1918
      %v2409 = vmul.f32 %v1693, %v1914
      %v2410 = vmul.f32 %v1694, %v1918
      %v2411 = vmul.f32 %v1695, %v1914
      %v2412 = vmul.f32 %v1696, %v1918
      %v2413 = vmul.f32 %v1697, %v1914
      %v2414 = vmul.f32 %v1698, %v1918
      %v2415 = vmul.f32 %v1699, %v1914
      %v2416 = vmul.f32 %v1700, %v1918
      %v2417 = vmul.f32 %v1701, %v1914
      %v2418 = vmul.f32 %v1702, %v1918
      %v2419 = vmul.f32 %v1703, %v1914
      %v2420 = vmul.f32 %v1704, %v1918
      %v2421 = vmul.f32 %v1705, %v1914
      %v2422 = vmul.f32 %v1706, %v1918
      %v2423 = vmul.f32 %v1707, %v1914
      %v2424 = vmul.f32 %v1708, %v1918
      %v2425 = vmul.f32 %v1709, %v1914
      %v2426 = vmul.f32 %v1710, %v1918
      %v2427 = vmul.f32 %v1711, %v1914
      %v2428 = vmul.f32 %v1712, %v1918
      %v2429 = vmul.f32 %v1713, %v1914
      %v2430 = vmul.f32 %v1714, %v1918
      %v2431 = vmul.f32 %v1715, %v1914
      %v2432 = vmul.f32 %v1716, %v1918
      %v2433 = vmul.f32 %v1717, %v1914
      %v2434 = vmul.f32 %v1718, %v1918
      %v2435 = vmul.f32 %v1719, %v1914
      %v2436 = vmul.f32 %v1720, %v1918
      %v2437 = vmul.f32 %v1721, %v1914
      %v2438 = vmul.f32 %v1722, %v1918
      %v2439 = vmul.f32 %v1723, %v1914
      %v2440 = vmul.f32 %v1724, %v1918
      %v2441 = vmul.f32 %v1725, %v1914
      %v2442 = vmul.f32 %v1726, %v1918
      %v2443 = vmul.f32 %v1727, %v1914
      %v2444 = vmul.f32 %v1728, %v1918
      %v2445 = vmul.f32 %v1729, %v1914
      %v2446 = vmul.f32 %v1730, %v1918
      %v2447 = vmul.f32 %v1731, %v1914
      %v2448 = vmul.f32 %v1732, %v1918
      %v2449 = vmul.f32 %v1733, %v1914
      %v2450 = vmul.f32 %v1734, %v1918
      %v2451 = vmul.f32 %v1735, %v1914
      %v2452 = vmul.f32 %v1736, %v1918
      %v2453 = vmul.f32 %v1737, %v1914
      %v2454 = vmul.f32 %v1738, %v1918
      %v2455 = vmul.f32 %v1739, %v1914
      %v2456 = vmul.f32 %v1740, %v1918
      %v2457 = vmul.f32 %v1741, %v1914
      %v2458 = vmul.f32 %v1742, %v1918
      %v2459 = vmul.f32 %v1743, %v1914
      %v2460 = vmul.f32 %v1744, %v1918
      %v2461 = vmul.f32 %v1745, %v1914
      %v2462 = vmul.f32 %v1746, %v1918
      %v2463 = vmul.f32 %v1747, %v1914
      %v2464 = vmul.f32 %v1748, %v1918
      %v2465 = vmul.f32 %v1749, %v1914
      %v2466 = vmul.f32 %v1750, %v1918
      %v2467 = vmul.f32 %v1751, %v1914
      %v2468 = vmul.f32 %v1752, %v1918
      %v2469 = vmul.f32 %v1753, %v1914
      %v2470 = vmul.f32 %v1754, %v1918
      %v2471 = vmul.f32 %v1755, %v1914
      %v2472 = vmul.f32 %v1756, %v1918
      %v2473 = vmul.f32 %v1757, %v1914
      %v2474 = vmul.f32 %v1758, %v1918
      %v2475 = vmul.f32 %v1759, %v1914
      %v2476 = vmul.f32 %v1760, %v1918
      %v2477 = vmul.f32 %v1761, %v1914
      %v2478 = vmul.f32 %v1762, %v1918
      %v2479 = vmul.f32 %v1763, %v1914
      %v2480 = vmul.f32 %v1764, %v1918
      %v2481 = vmul.f32 %v1765, %v1914
      %v2482 = vmul.f32 %v1766, %v1918
      %v2483 = vmul.f32 %v1767, %v1914
      %v2484 = vmul.f32 %v1768, %v1918
      %v2485 = vmul.f32 %v1769, %v1914
      %v2486 = vmul.f32 %v1770, %v1918
      %v2487 = vmul.f32 %v1771, %v1914
      %v2488 = vmul.f32 %v1772, %v1918
      %v2489 = vmul.f32 %v1773, %v1914
      %v2490 = vmul.f32 %v1774, %v1918
      %v2491 = vmul.f32 %v1775, %v1914
      %v2492 = vmul.f32 %v1776, %v1918
      %v2493 = vmul.f32 %v1777, %v1914
      %v2494 = vmul.f32 %v1778, %v1918
      %v2495 = vmul.f32 %v1779, %v1914
      %v2496 = vmul.f32 %v1780, %v1918
      %v2497 = vmul.f32 %v1781, %v1914
      %v2498 = vmul.f32 %v1782, %v1918
      %v2499 = vmul.f32 %v1783, %v1914
      %v2500 = vmul.f32 %v1784, %v1918
      %v2501 = vmul.f32 %v1785, %v1914
      %v2502 = vmul.f32 %v1786, %v1918
      %v2503 = vmul.f32 %v1787, %v1914
      %v2504 = vmul.f32 %v1788, %v1918
      %v2505 = vmul.f32 %v1789, %v1914
      %v2506 = vmul.f32 %v1790, %v1918
      %v2507 = vmul.f32 %v1791, %v1914
      %v2508 = vmul.f32 %v1792, %v1918
      %v2509 = vmul.f32 %v1793, %v1914
      %v2510 = vmul.f32 %v1794, %v1918
      %v2511 = vmul.f32 %v1795, %v1914
      %v2512 = vmul.f32 %v1796, %v1918
      %v2513 = vmul.f32 %v1797, %v1914
      %v2514 = vmul.f32 %v1798, %v1918
      %v2515 = vmul.f32 %v1799, %v1914
      %v2516 = vmul.f32 %v1800, %v1918
      %v2517 = vmul.f32 %v1801, %v1914
      %v2518 = vmul.f32 %v1802, %v1918
      %v2519 = vmul.f32 %v1803, %v1914
      %v2520 = vmul.f32 %v1804, %v1918
      %v2521 = vmul.f32 %v1805, %v1914
      %v2522 = vmul.f32 %v1806, %v1918
      %v2523 = vmul.f32 %v1807, %v1914
      %v2524 = vmul.f32 %v1808, %v1918
      %v2525 = vmul.f32 %v1809, %v1914
      %v2526 = vmul.f32 %v1810, %v1918
      %v2527 = vmul.f32 %v1811, %v1914
      %v2528 = vmul.f32 %v1812, %v1918
      %v2529 = vmul.f32 %v1813, %v1914
      %v2530 = vmul.f32 %v1814, %v1918
      %v2531 = vmul.f32 %v1815, %v1914
      %v2532 = vmul.f32 %v1816, %v1918
      %v2533 = vmul.f32 %v1817, %v1914
      %v2534 = vmul.f32 %v1818, %v1918
      %v2535 = vmul.f32 %v1819, %v1914
      %v2536 = vmul.f32 %v1820, %v1918
      %v2537 = vmul.f32 %v1821, %v1914
      %v2538 = vmul.f32 %v1822, %v1918
      %v2539 = vmul.f32 %v1823, %v1914
      %v2540 = vmul.f32 %v1824, %v1918
      %v2541 = vmul.f32 %v1825, %v1914
      %v2542 = vmul.f32 %v1826, %v1918
      %v2543 = vmul.f32 %v1827, %v1914
      %v2544 = vmul.f32 %v1828, %v1918
      %v2545 = vmul.f32 %v1829, %v1914
      %v2546 = vmul.f32 %v1830, %v1918
      %v2547 = vmul.f32 %v1831, %v1914
      %v2548 = vmul.f32 %v1832, %v1918
      %v2549 = vmul.f32 %v1833, %v1914
      %v2550 = vmul.f32 %v1834, %v1918
      %v2551 = vmul.f32 %v1835, %v1914
      %v2552 = vmul.f32 %v1836, %v1918
      %v2553 = vmul.f32 %v1837, %v1914
      %v2554 = vmul.f32 %v1838, %v1918
      %v2555 = vmul.f32 %v1839, %v1914
      %v2556 = vmul.f32 %v1840, %v1918
      %v2557 = vmul.f32 %v1841, %v1914
      %v2558 = vmul.f32 %v1842, %v1918
      %v2559 = vmul.f32 %v1843, %v1914
      %v2560 = vmul.f32 %v1844, %v1918
      %v2561 = vmul.f32 %v1845, %v1914
      %v2562 = vmul.f32 %v1846, %v1918
      %v2563 = vmul.f32 %v1847, %v1914
      %v2564 = vmul.f32 %v1848, %v1918
      %v2565 = vmul.f32 %v1849, %v1914
      %v2566 = vmul.f32 %v1850, %v1918
      %v2567 = vmul.f32 %v1851, %v1914
      %v2568 = vmul.f32 %v1852, %v1918
      %v2569 = vmul.f32 %v1853, %v1914
      %v2570 = vmul.f32 %v1854, %v1918
      %v2571 = vmul.f32 %v1855, %v1914
      %v2572 = vmul.f32 %v1856, %v1918
      %v2573 = vmul.f32 %v1857, %v1914
      %v2574 = vmul.f32 %v1858, %v1918
      %v2575 = vmul.f32 %v1859, %v1914
      %v2576 = vmul.f32 %v1860, %v1918
      %v2577 = vmul.f32 %v1861, %v1914
      %v2578 = vmul.f32 %v1862, %v1918
      %v2579 = vmul.f32 %v1863, %v1914
      %v2580 = vmul.f32 %v1864, %v1918
      %v2581 = vmul.f32 %v1865, %v1914
      %v2582 = vmul.f32 %v1866, %v1918
      %v2583 = vmul.f32 %v1867, %v1914
      %v2584 = vmul.f32 %v1868, %v1918
      %v2585 = vmul.f32 %v1869, %v1914
      %v2586 = vmul.f32 %v1870, %v1918
      %v2587 = vmul.f32 %v1871, %v1914
      %v2588 = vmul.f32 %v1872, %v1918
      %v2589 = vmul.f32 %v1873, %v1914
      %v2590 = vmul.f32 %v1874, %v1918
      %v2591 = vmul.f32 %v1875, %v1914
      %v2592 = vmul.f32 %v1876, %v1918
      %v2593 = vmul.f32 %v1877, %v1914
      %v2594 = vmul.f32 %v1878, %v1918
      %v2595 = vmul.f32 %v1879, %v1914
      %v2596 = vmul.f32 %v1880, %v1918
      %v2597 = vmul.f32 %v1881, %v1914
      %v2598 = vmul.f32 %v1882, %v1918
      %v2599 = vmul.f32 %v1883, %v1914
      %v2600 = vmul.f32 %v1884, %v1918
      %v2601 = vmul.f32 %v1885, %v1914
      %v2602 = vmul.f32 %v1886, %v1918
      %v2603 = vmul.f32 %v1887, %v1914
      %v2604 = vmul.f32 %v1888, %v1918
      %v2605 = vmul.f32 %v1889, %v1914
      %v2606 = vmul.f32 %v1890, %v1918
      %v2607 = vmul.f32 %v1891, %v1914
      %v2608 = vmul.f32 %v1892, %v1918
      %v2609 = vmul.f32 %v1893, %v1914
      %v2610 = vmul.f32 %v1894, %v1918
      %v2611 = vmul.f32 %v1895, %v1914
      %v2612 = vmul.f32 %v1896, %v1918
      %v2613 = vmul.f32 %v1897, %v1914
      %v2614 = vmul.f32 %v1898, %v1918
      %v2615 = vmul.f32 %v1899, %v1914
      %v2616 = vmul.f32 %v1900, %v1918
      %v2617 = vmul.f32 %v1901, %v1914
      %v2618 = vmul.f32 %v1902, %v1918
      %v2619 = vmul.f32 %v1903, %v1914
      %v2620 = vmul.f32 %v1904, %v1918
      %v2621 = vmul.f32 %v1905, %v1914
      %v2622 = vmul.f32 %v1906, %v1918
      %v2623 = vmul.f32 %v1907, %v1914
      %v2624 = vmul.f32 %v1908, %v1918
      %v2625 = vpack.c.bf16 %v1923, %v1921
      %v2626 = vpack.c.bf16 %v1924, %v1922
      %v2627 = vpack.c.bf16 %v1927, %v1925
      %v2628 = vpack.c.bf16 %v1928, %v1926
      %v2629 = vpack.c.bf16 %v1931, %v1929
      %v2630 = vpack.c.bf16 %v1932, %v1930
      %v2631 = vpack.c.bf16 %v1935, %v1933
      %v2632 = vpack.c.bf16 %v1936, %v1934
      %v2633 = vpack.c.bf16 %v1939, %v1937
      %v2634 = vpack.c.bf16 %v1940, %v1938
      %v2635 = vpack.c.bf16 %v1943, %v1941
      %v2636 = vpack.c.bf16 %v1944, %v1942
      %v2637 = vpack.c.bf16 %v1947, %v1945
      %v2638 = vpack.c.bf16 %v1948, %v1946
      %v2639 = vpack.c.bf16 %v1951, %v1949
      %v2640 = vpack.c.bf16 %v1952, %v1950
      %v2641 = vpack.c.bf16 %v1955, %v1953
      %v2642 = vpack.c.bf16 %v1956, %v1954
      %v2643 = vpack.c.bf16 %v1959, %v1957
      %v2644 = vpack.c.bf16 %v1960, %v1958
      %v2645 = vpack.c.bf16 %v1963, %v1961
      %v2646 = vpack.c.bf16 %v1964, %v1962
      %v2647 = vpack.c.bf16 %v1967, %v1965
      %v2648 = vpack.c.bf16 %v1968, %v1966
      %v2649 = vpack.c.bf16 %v1971, %v1969
      %v2650 = vpack.c.bf16 %v1972, %v1970
      %v2651 = vpack.c.bf16 %v1975, %v1973
      %v2652 = vpack.c.bf16 %v1976, %v1974
      %v2653 = vpack.c.bf16 %v1979, %v1977
      %v2654 = vpack.c.bf16 %v1980, %v1978
      %v2655 = vpack.c.bf16 %v1983, %v1981
      %v2656 = vpack.c.bf16 %v1984, %v1982
      %v2657 = vpack.c.bf16 %v1987, %v1985
      %v2658 = vpack.c.bf16 %v1988, %v1986
      %v2659 = vpack.c.bf16 %v1991, %v1989
      %v2660 = vpack.c.bf16 %v1992, %v1990
      %v2661 = vpack.c.bf16 %v1995, %v1993
      %v2662 = vpack.c.bf16 %v1996, %v1994
      %v2663 = vpack.c.bf16 %v1999, %v1997
      %v2664 = vpack.c.bf16 %v2000, %v1998
      %v2665 = vpack.c.bf16 %v2003, %v2001
      %v2666 = vpack.c.bf16 %v2004, %v2002
      %v2667 = vpack.c.bf16 %v2007, %v2005
      %v2668 = vpack.c.bf16 %v2008, %v2006
      %v2669 = vpack.c.bf16 %v2011, %v2009
      %v2670 = vpack.c.bf16 %v2012, %v2010
      %v2671 = vpack.c.bf16 %v2015, %v2013
      %v2672 = vpack.c.bf16 %v2016, %v2014
      %v2673 = vpack.c.bf16 %v2019, %v2017
      %v2674 = vpack.c.bf16 %v2020, %v2018
      %v2675 = vpack.c.bf16 %v2023, %v2021
      %v2676 = vpack.c.bf16 %v2024, %v2022
      %v2677 = vpack.c.bf16 %v2027, %v2025
      %v2678 = vpack.c.bf16 %v2028, %v2026
      %v2679 = vpack.c.bf16 %v2031, %v2029
      %v2680 = vpack.c.bf16 %v2032, %v2030
      %v2681 = vpack.c.bf16 %v2035, %v2033
      %v2682 = vpack.c.bf16 %v2036, %v2034
      %v2683 = vpack.c.bf16 %v2039, %v2037
      %v2684 = vpack.c.bf16 %v2040, %v2038
      %v2685 = vpack.c.bf16 %v2043, %v2041
      %v2686 = vpack.c.bf16 %v2044, %v2042
      %v2687 = vpack.c.bf16 %v2047, %v2045
      %v2688 = vpack.c.bf16 %v2048, %v2046
      %v2689 = vpack.c.bf16 %v2051, %v2049
      %v2690 = vpack.c.bf16 %v2052, %v2050
      %v2691 = vpack.c.bf16 %v2055, %v2053
      %v2692 = vpack.c.bf16 %v2056, %v2054
      %v2693 = vpack.c.bf16 %v2059, %v2057
      %v2694 = vpack.c.bf16 %v2060, %v2058
      %v2695 = vpack.c.bf16 %v2063, %v2061
      %v2696 = vpack.c.bf16 %v2064, %v2062
      %v2697 = vpack.c.bf16 %v2067, %v2065
      %v2698 = vpack.c.bf16 %v2068, %v2066
      %v2699 = vpack.c.bf16 %v2071, %v2069
      %v2700 = vpack.c.bf16 %v2072, %v2070
      %v2701 = vpack.c.bf16 %v2075, %v2073
      %v2702 = vpack.c.bf16 %v2076, %v2074
      %v2703 = vpack.c.bf16 %v2079, %v2077
      %v2704 = vpack.c.bf16 %v2080, %v2078
      %v2705 = vpack.c.bf16 %v2083, %v2081
      %v2706 = vpack.c.bf16 %v2084, %v2082
      %v2707 = vpack.c.bf16 %v2087, %v2085
      %v2708 = vpack.c.bf16 %v2088, %v2086
      %v2709 = vpack.c.bf16 %v2091, %v2089
      %v2710 = vpack.c.bf16 %v2092, %v2090
      %v2711 = vpack.c.bf16 %v2095, %v2093
      %v2712 = vpack.c.bf16 %v2096, %v2094
      %v2713 = vpack.c.bf16 %v2099, %v2097
      %v2714 = vpack.c.bf16 %v2100, %v2098
      %v2715 = vpack.c.bf16 %v2103, %v2101
      %v2716 = vpack.c.bf16 %v2104, %v2102
      %v2717 = vpack.c.bf16 %v2107, %v2105
      %v2718 = vpack.c.bf16 %v2108, %v2106
      %v2719 = vpack.c.bf16 %v2111, %v2109
      %v2720 = vpack.c.bf16 %v2112, %v2110
      %v2721 = vpack.c.bf16 %v2115, %v2113
      %v2722 = vpack.c.bf16 %v2116, %v2114
      %v2723 = vpack.c.bf16 %v2119, %v2117
      %v2724 = vpack.c.bf16 %v2120, %v2118
      %v2725 = vpack.c.bf16 %v2123, %v2121
      %v2726 = vpack.c.bf16 %v2124, %v2122
      %v2727 = vpack.c.bf16 %v2127, %v2125
      %v2728 = vpack.c.bf16 %v2128, %v2126
      %v2729 = vpack.c.bf16 %v2131, %v2129
      %v2730 = vpack.c.bf16 %v2132, %v2130
      %v2731 = vpack.c.bf16 %v2135, %v2133
      %v2732 = vpack.c.bf16 %v2136, %v2134
      %v2733 = vpack.c.bf16 %v2139, %v2137
      %v2734 = vpack.c.bf16 %v2140, %v2138
      %v2735 = vpack.c.bf16 %v2143, %v2141
      %v2736 = vpack.c.bf16 %v2144, %v2142
      %v2737 = vpack.c.bf16 %v2147, %v2145
      %v2738 = vpack.c.bf16 %v2148, %v2146
      %v2739 = vpack.c.bf16 %v2151, %v2149
      %v2740 = vpack.c.bf16 %v2152, %v2150
      %v2741 = vpack.c.bf16 %v2155, %v2153
      %v2742 = vpack.c.bf16 %v2156, %v2154
      %v2743 = vpack.c.bf16 %v2159, %v2157
      %v2744 = vpack.c.bf16 %v2160, %v2158
      %v2745 = vpack.c.bf16 %v2163, %v2161
      %v2746 = vpack.c.bf16 %v2164, %v2162
      %v2747 = vpack.c.bf16 %v2167, %v2165
      %v2748 = vpack.c.bf16 %v2168, %v2166
      %v2749 = vpack.c.bf16 %v2171, %v2169
      %v2750 = vpack.c.bf16 %v2172, %v2170
      %v2751 = vpack.c.bf16 %v2175, %v2173
      %v2752 = vpack.c.bf16 %v2176, %v2174
      %v2753 = vpack.c.bf16 %v2179, %v2177
      %v2754 = vpack.c.bf16 %v2180, %v2178
      %v2755 = vpack.c.bf16 %v2183, %v2181
      %v2756 = vpack.c.bf16 %v2184, %v2182
      %v2757 = vpack.c.bf16 %v2187, %v2185
      %v2758 = vpack.c.bf16 %v2188, %v2186
      %v2759 = vpack.c.bf16 %v2191, %v2189
      %v2760 = vpack.c.bf16 %v2192, %v2190
      %v2761 = vpack.c.bf16 %v2195, %v2193
      %v2762 = vpack.c.bf16 %v2196, %v2194
      %v2763 = vpack.c.bf16 %v2199, %v2197
      %v2764 = vpack.c.bf16 %v2200, %v2198
      %v2765 = vpack.c.bf16 %v2203, %v2201
      %v2766 = vpack.c.bf16 %v2204, %v2202
      %v2767 = vpack.c.bf16 %v2207, %v2205
      %v2768 = vpack.c.bf16 %v2208, %v2206
      %v2769 = vpack.c.bf16 %v2211, %v2209
      %v2770 = vpack.c.bf16 %v2212, %v2210
      %v2771 = vpack.c.bf16 %v2215, %v2213
      %v2772 = vpack.c.bf16 %v2216, %v2214
      %v2773 = vpack.c.bf16 %v2219, %v2217
      %v2774 = vpack.c.bf16 %v2220, %v2218
      %v2775 = vpack.c.bf16 %v2223, %v2221
      %v2776 = vpack.c.bf16 %v2224, %v2222
      %v2777 = vpack.c.bf16 %v2227, %v2225
      %v2778 = vpack.c.bf16 %v2228, %v2226
      %v2779 = vpack.c.bf16 %v2231, %v2229
      %v2780 = vpack.c.bf16 %v2232, %v2230
      %v2781 = vpack.c.bf16 %v2235, %v2233
      %v2782 = vpack.c.bf16 %v2236, %v2234
      %v2783 = vpack.c.bf16 %v2239, %v2237
      %v2784 = vpack.c.bf16 %v2240, %v2238
      %v2785 = vpack.c.bf16 %v2243, %v2241
      %v2786 = vpack.c.bf16 %v2244, %v2242
      %v2787 = vpack.c.bf16 %v2247, %v2245
      %v2788 = vpack.c.bf16 %v2248, %v2246
      %v2789 = vpack.c.bf16 %v2251, %v2249
      %v2790 = vpack.c.bf16 %v2252, %v2250
      %v2791 = vpack.c.bf16 %v2255, %v2253
      %v2792 = vpack.c.bf16 %v2256, %v2254
      %v2793 = vpack.c.bf16 %v2259, %v2257
      %v2794 = vpack.c.bf16 %v2260, %v2258
      %v2795 = vpack.c.bf16 %v2263, %v2261
      %v2796 = vpack.c.bf16 %v2264, %v2262
      %v2797 = vpack.c.bf16 %v2267, %v2265
      %v2798 = vpack.c.bf16 %v2268, %v2266
      %v2799 = vpack.c.bf16 %v2271, %v2269
      %v2800 = vpack.c.bf16 %v2272, %v2270
      %v2801 = vpack.c.bf16 %v2275, %v2273
      %v2802 = vpack.c.bf16 %v2276, %v2274
      %v2803 = vpack.c.bf16 %v2279, %v2277
      %v2804 = vpack.c.bf16 %v2280, %v2278
      %v2805 = vpack.c.bf16 %v2283, %v2281
      %v2806 = vpack.c.bf16 %v2284, %v2282
      %v2807 = vpack.c.bf16 %v2287, %v2285
      %v2808 = vpack.c.bf16 %v2288, %v2286
      %v2809 = vpack.c.bf16 %v2291, %v2289
      %v2810 = vpack.c.bf16 %v2292, %v2290
      %v2811 = vpack.c.bf16 %v2295, %v2293
      %v2812 = vpack.c.bf16 %v2296, %v2294
      %v2813 = vpack.c.bf16 %v2299, %v2297
      %v2814 = vpack.c.bf16 %v2300, %v2298
      %v2815 = vpack.c.bf16 %v2303, %v2301
      %v2816 = vpack.c.bf16 %v2304, %v2302
      %v2817 = vpack.c.bf16 %v2307, %v2305
      %v2818 = vpack.c.bf16 %v2308, %v2306
      %v2819 = vpack.c.bf16 %v2311, %v2309
      %v2820 = vpack.c.bf16 %v2312, %v2310
      %v2821 = vpack.c.bf16 %v2315, %v2313
      %v2822 = vpack.c.bf16 %v2316, %v2314
      %v2823 = vpack.c.bf16 %v2319, %v2317
      %v2824 = vpack.c.bf16 %v2320, %v2318
      %v2825 = vpack.c.bf16 %v2323, %v2321
      %v2826 = vpack.c.bf16 %v2324, %v2322
      %v2827 = vpack.c.bf16 %v2327, %v2325
      %v2828 = vpack.c.bf16 %v2328, %v2326
      %v2829 = vpack.c.bf16 %v2331, %v2329
      %v2830 = vpack.c.bf16 %v2332, %v2330
      %v2831 = vpack.c.bf16 %v2335, %v2333
      %v2832 = vpack.c.bf16 %v2336, %v2334
      %v2833 = vpack.c.bf16 %v2339, %v2337
      %v2834 = vpack.c.bf16 %v2340, %v2338
      %v2835 = vpack.c.bf16 %v2343, %v2341
      %v2836 = vpack.c.bf16 %v2344, %v2342
      %v2837 = vpack.c.bf16 %v2347, %v2345
      %v2838 = vpack.c.bf16 %v2348, %v2346
      %v2839 = vpack.c.bf16 %v2351, %v2349
      %v2840 = vpack.c.bf16 %v2352, %v2350
      %v2841 = vpack.c.bf16 %v2355, %v2353
      %v2842 = vpack.c.bf16 %v2356, %v2354
      %v2843 = vpack.c.bf16 %v2359, %v2357
      %v2844 = vpack.c.bf16 %v2360, %v2358
      %v2845 = vpack.c.bf16 %v2363, %v2361
      %v2846 = vpack.c.bf16 %v2364, %v2362
      %v2847 = vpack.c.bf16 %v2367, %v2365
      %v2848 = vpack.c.bf16 %v2368, %v2366
      %v2849 = vpack.c.bf16 %v2371, %v2369
      %v2850 = vpack.c.bf16 %v2372, %v2370
      %v2851 = vpack.c.bf16 %v2375, %v2373
      %v2852 = vpack.c.bf16 %v2376, %v2374
      %v2853 = vpack.c.bf16 %v2379, %v2377
      %v2854 = vpack.c.bf16 %v2380, %v2378
      %v2855 = vpack.c.bf16 %v2383, %v2381
      %v2856 = vpack.c.bf16 %v2384, %v2382
      %v2857 = vpack.c.bf16 %v2387, %v2385
      %v2858 = vpack.c.bf16 %v2388, %v2386
      %v2859 = vpack.c.bf16 %v2391, %v2389
      %v2860 = vpack.c.bf16 %v2392, %v2390
      %v2861 = vpack.c.bf16 %v2395, %v2393
      %v2862 = vpack.c.bf16 %v2396, %v2394
      %v2863 = vpack.c.bf16 %v2399, %v2397
      %v2864 = vpack.c.bf16 %v2400, %v2398
      %v2865 = vpack.c.bf16 %v2403, %v2401
      %v2866 = vpack.c.bf16 %v2404, %v2402
      %v2867 = vpack.c.bf16 %v2407, %v2405
      %v2868 = vpack.c.bf16 %v2408, %v2406
      %v2869 = vpack.c.bf16 %v2411, %v2409
      %v2870 = vpack.c.bf16 %v2412, %v2410
      %v2871 = vpack.c.bf16 %v2415, %v2413
      %v2872 = vpack.c.bf16 %v2416, %v2414
      %v2873 = vpack.c.bf16 %v2419, %v2417
      %v2874 = vpack.c.bf16 %v2420, %v2418
      %v2875 = vpack.c.bf16 %v2423, %v2421
      %v2876 = vpack.c.bf16 %v2424, %v2422
      %v2877 = vpack.c.bf16 %v2427, %v2425
      %v2878 = vpack.c.bf16 %v2428, %v2426
      %v2879 = vpack.c.bf16 %v2431, %v2429
      %v2880 = vpack.c.bf16 %v2432, %v2430
      %v2881 = vpack.c.bf16 %v2435, %v2433
      %v2882 = vpack.c.bf16 %v2436, %v2434
      %v2883 = vpack.c.bf16 %v2439, %v2437
      %v2884 = vpack.c.bf16 %v2440, %v2438
      %v2885 = vpack.c.bf16 %v2443, %v2441
      %v2886 = vpack.c.bf16 %v2444, %v2442
      %v2887 = vpack.c.bf16 %v2447, %v2445
      %v2888 = vpack.c.bf16 %v2448, %v2446
      %v2889 = vpack.c.bf16 %v2451, %v2449
      %v2890 = vpack.c.bf16 %v2452, %v2450
      %v2891 = vpack.c.bf16 %v2455, %v2453
      %v2892 = vpack.c.bf16 %v2456, %v2454
      %v2893 = vpack.c.bf16 %v2459, %v2457
      %v2894 = vpack.c.bf16 %v2460, %v2458
      %v2895 = vpack.c.bf16 %v2463, %v2461
      %v2896 = vpack.c.bf16 %v2464, %v2462
      %v2897 = vpack.c.bf16 %v2467, %v2465
      %v2898 = vpack.c.bf16 %v2468, %v2466
      %v2899 = vpack.c.bf16 %v2471, %v2469
      %v2900 = vpack.c.bf16 %v2472, %v2470
      %v2901 = vpack.c.bf16 %v2475, %v2473
      %v2902 = vpack.c.bf16 %v2476, %v2474
      %v2903 = vpack.c.bf16 %v2479, %v2477
      %v2904 = vpack.c.bf16 %v2480, %v2478
      %v2905 = vpack.c.bf16 %v2483, %v2481
      %v2906 = vpack.c.bf16 %v2484, %v2482
      %v2907 = vpack.c.bf16 %v2487, %v2485
      %v2908 = vpack.c.bf16 %v2488, %v2486
      %v2909 = vpack.c.bf16 %v2491, %v2489
      %v2910 = vpack.c.bf16 %v2492, %v2490
      %v2911 = vpack.c.bf16 %v2495, %v2493
      %v2912 = vpack.c.bf16 %v2496, %v2494
      %v2913 = vpack.c.bf16 %v2499, %v2497
      %v2914 = vpack.c.bf16 %v2500, %v2498
      %v2915 = vpack.c.bf16 %v2503, %v2501
      %v2916 = vpack.c.bf16 %v2504, %v2502
      %v2917 = vpack.c.bf16 %v2507, %v2505
      %v2918 = vpack.c.bf16 %v2508, %v2506
      %v2919 = vpack.c.bf16 %v2511, %v2509
      %v2920 = vpack.c.bf16 %v2512, %v2510
      %v2921 = vpack.c.bf16 %v2515, %v2513
      %v2922 = vpack.c.bf16 %v2516, %v2514
      %v2923 = vpack.c.bf16 %v2519, %v2517
      %v2924 = vpack.c.bf16 %v2520, %v2518
      %v2925 = vpack.c.bf16 %v2523, %v2521
      %v2926 = vpack.c.bf16 %v2524, %v2522
      %v2927 = vpack.c.bf16 %v2527, %v2525
      %v2928 = vpack.c.bf16 %v2528, %v2526
      %v2929 = vpack.c.bf16 %v2531, %v2529
      %v2930 = vpack.c.bf16 %v2532, %v2530
      %v2931 = vpack.c.bf16 %v2535, %v2533
      %v2932 = vpack.c.bf16 %v2536, %v2534
      %v2933 = vpack.c.bf16 %v2539, %v2537
      %v2934 = vpack.c.bf16 %v2540, %v2538
      %v2935 = vpack.c.bf16 %v2543, %v2541
      %v2936 = vpack.c.bf16 %v2544, %v2542
      %v2937 = vpack.c.bf16 %v2547, %v2545
      %v2938 = vpack.c.bf16 %v2548, %v2546
      %v2939 = vpack.c.bf16 %v2551, %v2549
      %v2940 = vpack.c.bf16 %v2552, %v2550
      %v2941 = vpack.c.bf16 %v2555, %v2553
      %v2942 = vpack.c.bf16 %v2556, %v2554
      %v2943 = vpack.c.bf16 %v2559, %v2557
      %v2944 = vpack.c.bf16 %v2560, %v2558
      %v2945 = vpack.c.bf16 %v2563, %v2561
      %v2946 = vpack.c.bf16 %v2564, %v2562
      %v2947 = vpack.c.bf16 %v2567, %v2565
      %v2948 = vpack.c.bf16 %v2568, %v2566
      %v2949 = vpack.c.bf16 %v2571, %v2569
      %v2950 = vpack.c.bf16 %v2572, %v2570
      %v2951 = vpack.c.bf16 %v2575, %v2573
      %v2952 = vpack.c.bf16 %v2576, %v2574
      %v2953 = vpack.c.bf16 %v2579, %v2577
      %v2954 = vpack.c.bf16 %v2580, %v2578
      %v2955 = vpack.c.bf16 %v2583, %v2581
      %v2956 = vpack.c.bf16 %v2584, %v2582
      %v2957 = vpack.c.bf16 %v2587, %v2585
      %v2958 = vpack.c.bf16 %v2588, %v2586
      %v2959 = vpack.c.bf16 %v2591, %v2589
      %v2960 = vpack.c.bf16 %v2592, %v2590
      %v2961 = vpack.c.bf16 %v2595, %v2593
      %v2962 = vpack.c.bf16 %v2596, %v2594
      %v2963 = vpack.c.bf16 %v2599, %v2597
      %v2964 = vpack.c.bf16 %v2600, %v2598
      %v2965 = vpack.c.bf16 %v2603, %v2601
      %v2966 = vpack.c.bf16 %v2604, %v2602
      %v2967 = vpack.c.bf16 %v2607, %v2605
      %v2968 = vpack.c.bf16 %v2608, %v2606
      %v2969 = vpack.c.bf16 %v2611, %v2609
      %v2970 = vpack.c.bf16 %v2612, %v2610
      %v2971 = vpack.c.bf16 %v2615, %v2613
      %v2972 = vpack.c.bf16 %v2616, %v2614
      %v2973 = vpack.c.bf16 %v2619, %v2617
      %v2974 = vpack.c.bf16 %v2620, %v2618
      %v2975 = vpack.c.bf16 %v2623, %v2621
      %v2976 = vpack.c.bf16 %v2624, %v2622
      %v2977 = vld [vmem:[#allocation2] sm:$0xff]
      %v2978 = vld [vmem:[#allocation2 + $0x8] sm:$0xff]
      %v2979 = vld [vmem:[%s309] sm:$0xff]
      %v2980 = vld [vmem:[%s309 + $0x8] sm:$0xff]
      %v2981 = vld [vmem:[%s309 + $0x10] sm:$0xff]
      %v2982 = vld [vmem:[%s309 + $0x18] sm:$0xff]
      %v2983 = vld [vmem:[%s309 + $0x20] sm:$0xff]
      %v2984 = vld [vmem:[%s309 + $0x28] sm:$0xff]
      %v2985 = vld [vmem:[%s309 + $0x30] sm:$0xff]
      %v2986 = vld [vmem:[%s309 + $0x38] sm:$0xff]
      %v2987 = vld [vmem:[%s309 + $0x40] sm:$0xff]
      %v2988 = vld [vmem:[%s309 + $0x48] sm:$0xff]
      %v2989 = vld [vmem:[%s309 + $0x50] sm:$0xff]
      %v3001 = vunpack.c.l.b16 %v2979
      %v3002 = vunpack.c.h.b16 %v2979
      %v3003 = vunpack.c.l.b16 %v2980
      %v3004 = vunpack.c.h.b16 %v2980
      %v3005 = vunpack.c.l.b16 %v2981
      %v3006 = vunpack.c.h.b16 %v2981
      %v3007 = vunpack.c.l.b16 %v2982
      %v3008 = vunpack.c.h.b16 %v2982
      %v3009 = vunpack.c.l.b16 %v2983
      %v3010 = vunpack.c.h.b16 %v2983
      %v3011 = vunpack.c.l.b16 %v2984
      %v3012 = vunpack.c.h.b16 %v2984
      %v3013 = vunpack.c.l.b16 %v2985
      %v3014 = vunpack.c.h.b16 %v2985
      %v3015 = vunpack.c.l.b16 %v2986
      %v3016 = vunpack.c.h.b16 %v2986
      %v3017 = vunpack.c.l.b16 %v2987
      %v3018 = vunpack.c.h.b16 %v2987
      %v3019 = vunpack.c.l.b16 %v2988
      %v3020 = vunpack.c.h.b16 %v2988
      %v3021 = vunpack.c.l.b16 %v2989
      %v3022 = vunpack.c.h.b16 %v2989
      %v3023 = vpack.c.b16 %v3001, %v3001
      %v3024 = vpack.c.b16 %v3002, %v3002
      %v3025 = vpack.c.b16 %v3003, %v3003
      %v3026 = vpack.c.b16 %v3004, %v3004
      %v3027 = vpack.c.b16 %v3005, %v3005
      %v3028 = vpack.c.b16 %v3006, %v3006
      %v3029 = vpack.c.b16 %v3007, %v3007
      %v3030 = vpack.c.b16 %v3008, %v3008
      %v3031 = vpack.c.b16 %v3009, %v3009
      %v3032 = vpack.c.b16 %v3010, %v3010
      %v3033 = vpack.c.b16 %v3011, %v3011
      %v3034 = vpack.c.b16 %v3012, %v3012
      %v3035 = vpack.c.b16 %v3013, %v3013
      %v3036 = vpack.c.b16 %v3014, %v3014
      %v3037 = vpack.c.b16 %v3015, %v3015
      %v3038 = vpack.c.b16 %v3016, %v3016
      %v3039 = vpack.c.b16 %v3017, %v3017
      %v3040 = vpack.c.b16 %v3018, %v3018
      %v3041 = vpack.c.b16 %v3019, %v3019
      %v3042 = vpack.c.b16 %v3020, %v3020
      %v3043 = vpack.c.b16 %v3021, %v3021
      %v3044 = vpack.c.b16 %v3022, %v3022
      %3067 = vmatprep.subr.bf16.mxu0 %v2626
      %3068 = vmatpush1.bf16.msra.mxu0 %v2625
      %3069 = vmatprep.subr.bf16.mxu0 %v2628
      %3070 = vmatpush1.bf16.msra.mxu0 %v2627
      %3071 = vmatprep.subr.bf16.mxu0 %v2630
      %3072 = vmatpush1.bf16.msra.mxu0 %v2629
      %3073 = vmatprep.subr.bf16.mxu0 %v2632
      %3074 = vmatpush1.bf16.msra.mxu0 %v2631
      %3075 = vmatprep.subr.bf16.mxu0 %v2634
      %3076 = vmatpush1.bf16.msra.mxu0 %v2633
      %3077 = vmatprep.subr.bf16.mxu0 %v2636
      %3078 = vmatpush1.bf16.msra.mxu0 %v2635
      %3079 = vmatprep.subr.bf16.mxu0 %v2638
      %3080 = vmatpush1.bf16.msra.mxu0 %v2637
      %3081 = vmatprep.subr.bf16.mxu0 %v2640
      %3082 = vmatpush1.bf16.msra.mxu0 %v2639
      %3083 = vmatprep.subr.bf16.mxu0 %v2642
      %3084 = vmatpush1.bf16.msra.mxu0 %v2641
      %3085 = vmatprep.subr.bf16.mxu0 %v2644
      %3086 = vmatpush1.bf16.msra.mxu0 %v2643
      %3087 = vmatprep.subr.bf16.mxu0 %v2646
      %3088 = vmatpush1.bf16.msra.mxu0 %v2645
      %3089 = vmatprep.subr.bf16.mxu0 %v2648
      %3090 = vmatpush1.bf16.msra.mxu0 %v2647
      %3091 = vmatprep.subr.bf16.mxu0 %v2650
      %3092 = vmatpush1.bf16.msra.mxu0 %v2649
      %3093 = vmatprep.subr.bf16.mxu0 %v2652
      %3094 = vmatpush1.bf16.msra.mxu0 %v2651
      %3095 = vmatprep.subr.bf16.mxu0 %v2654
      %3096 = vmatpush1.bf16.msra.mxu0 %v2653
      %3097 = vmatprep.subr.bf16.mxu0 %v2656
      %3098 = vmatpush1.bf16.msra.mxu0 %v2655
      %3099 = vmatprep.mubr.bf16.mxu0 %v3024
      %3100 = vmatmul.mubr.bf16.gmra.mrb[0].mxu0 %v3023
      %v3101 = vpop.f32.mrb[0].mxu0
      %v3102 = vadd.f32 0.0, %v3101
      %v3103 = vpop.f32.mrb[0].mxu0
      %v3104 = vadd.f32 0.0, %v3103
      %v3105 = vpop.f32.mrb[0].mxu0
      %v3106 = vpop.f32.mrb[0].mxu0
      %3107 = vdwg.mxu0
      %3108 = vmatprep.subr.bf16.mxu0 %v2658
      %3109 = vmatpush1.bf16.msra.mxu0 %v2657
      %3110 = vmatprep.subr.bf16.mxu0 %v2660
      %3111 = vmatpush1.bf16.msra.mxu0 %v2659
      %3112 = vmatprep.subr.bf16.mxu0 %v2662
      %3113 = vmatpush1.bf16.msra.mxu0 %v2661
      %3114 = vmatprep.subr.bf16.mxu0 %v2664
      %3115 = vmatpush1.bf16.msra.mxu0 %v2663
      %3116 = vmatprep.subr.bf16.mxu0 %v2666
      %3117 = vmatpush1.bf16.msra.mxu0 %v2665
      %3118 = vmatprep.subr.bf16.mxu0 %v2668
      %3119 = vmatpush1.bf16.msra.mxu0 %v2667
      %3120 = vmatprep.subr.bf16.mxu0 %v2670
      %3121 = vmatpush1.bf16.msra.mxu0 %v2669
      %3122 = vmatprep.subr.bf16.mxu0 %v2672
      %3123 = vmatpush1.bf16.msra.mxu0 %v2671
      %3124 = vmatprep.subr.bf16.mxu0 %v2674
      %3125 = vmatpush1.bf16.msra.mxu0 %v2673
      %3126 = vmatprep.subr.bf16.mxu0 %v2676
      %3127 = vmatpush1.bf16.msra.mxu0 %v2675
      %3128 = vmatprep.subr.bf16.mxu0 %v2678
      %3129 = vmatpush1.bf16.msra.mxu0 %v2677
      %3130 = vmatprep.subr.bf16.mxu0 %v2680
      %3131 = vmatpush1.bf16.msra.mxu0 %v2679
      %3132 = vmatprep.subr.bf16.mxu0 %v2682
      %3133 = vmatpush1.bf16.msra.mxu0 %v2681
      %3134 = vmatprep.subr.bf16.mxu0 %v2684
      %3135 = vmatpush1.bf16.msra.mxu0 %v2683
      %3136 = vmatprep.subr.bf16.mxu0 %v2686
      %3137 = vmatpush1.bf16.msra.mxu0 %v2685
      %3138 = vmatprep.subr.bf16.mxu0 %v2688
      %3139 = vmatpush1.bf16.msra.mxu0 %v2687
      %3140 = vmatprep.mubr.bf16.mxu0 %v3026
      %3141 = vmatmul.mubr.bf16.gmra.mrb[0].mxu0 %v3025
      %v3142 = vpop.f32.mrb[0].mxu0
      %v3143 = vadd.f32 %v3102, %v3142
      %v3144 = vpop.f32.mrb[0].mxu0
      %v3145 = vadd.f32 %v3104, %v3144
      %v3146 = vpop.f32.mrb[0].mxu0
      %v3147 = vpop.f32.mrb[0].mxu0
      %3148 = vdwg.mxu0
      %3149 = vmatprep.subr.bf16.mxu0 %v2690
      %3150 = vmatpush1.bf16.msra.mxu0 %v2689
      %3151 = vmatprep.subr.bf16.mxu0 %v2692
      %3152 = vmatpush1.bf16.msra.mxu0 %v2691
      %3153 = vmatprep.subr.bf16.mxu0 %v2694
      %3154 = vmatpush1.bf16.msra.mxu0 %v2693
      %3155 = vmatprep.subr.bf16.mxu0 %v2696
      %3156 = vmatpush1.bf16.msra.mxu0 %v2695
      %3157 = vmatprep.subr.bf16.mxu0 %v2698
      %3158 = vmatpush1.bf16.msra.mxu0 %v2697
      %3159 = vmatprep.subr.bf16.mxu0 %v2700
      %3160 = vmatpush1.bf16.msra.mxu0 %v2699
      %3161 = vmatprep.subr.bf16.mxu0 %v2702
      %3162 = vmatpush1.bf16.msra.mxu0 %v2701
      %3163 = vmatprep.subr.bf16.mxu0 %v2704
      %3164 = vmatpush1.bf16.msra.mxu0 %v2703
      %3165 = vmatprep.subr.bf16.mxu0 %v2706
      %3166 = vmatpush1.bf16.msra.mxu0 %v2705
      %3167 = vmatprep.subr.bf16.mxu0 %v2708
      %3168 = vmatpush1.bf16.msra.mxu0 %v2707
      %3169 = vmatprep.subr.bf16.mxu0 %v2710
      %3170 = vmatpush1.bf16.msra.mxu0 %v2709
      %3171 = vmatprep.subr.bf16.mxu0 %v2712
      %3172 = vmatpush1.bf16.msra.mxu0 %v2711
      %3173 = vmatprep.subr.bf16.mxu0 %v2714
      %3174 = vmatpush1.bf16.msra.mxu0 %v2713
      %3175 = vmatprep.subr.bf16.mxu0 %v2716
      %3176 = vmatpush1.bf16.msra.mxu0 %v2715
      %3177 = vmatprep.subr.bf16.mxu0 %v2718
      %3178 = vmatpush1.bf16.msra.mxu0 %v2717
      %3179 = vmatprep.subr.bf16.mxu0 %v2720
      %3180 = vmatpush1.bf16.msra.mxu0 %v2719
      %3181 = vmatprep.mubr.bf16.mxu0 %v3028
      %3182 = vmatmul.mubr.bf16.gmra.mrb[0].mxu0 %v3027
      %v3183 = vpop.f32.mrb[0].mxu0
      %v3184 = vadd.f32 %v3143, %v3183
      %v3185 = vpop.f32.mrb[0].mxu0
      %v3186 = vadd.f32 %v3145, %v3185
      %v3187 = vpop.f32.mrb[0].mxu0
      %v3188 = vpop.f32.mrb[0].mxu0
      %3189 = vdwg.mxu0
      %3190 = vmatprep.subr.bf16.mxu0 %v2722
      %3191 = vmatpush1.bf16.msra.mxu0 %v2721
      %3192 = vmatprep.subr.bf16.mxu0 %v2724
      %3193 = vmatpush1.bf16.msra.mxu0 %v2723
      %3194 = vmatprep.subr.bf16.mxu0 %v2726
      %3195 = vmatpush1.bf16.msra.mxu0 %v2725
      %3196 = vmatprep.subr.bf16.mxu0 %v2728
      %3197 = vmatpush1.bf16.msra.mxu0 %v2727
      %3198 = vmatprep.subr.bf16.mxu0 %v2730
      %3199 = vmatpush1.bf16.msra.mxu0 %v2729
      %3200 = vmatprep.subr.bf16.mxu0 %v2732
      %3201 = vmatpush1.bf16.msra.mxu0 %v2731
      %3202 = vmatprep.subr.bf16.mxu0 %v2734
      %3203 = vmatpush1.bf16.msra.mxu0 %v2733
      %3204 = vmatprep.subr.bf16.mxu0 %v2736
      %3205 = vmatpush1.bf16.msra.mxu0 %v2735
      %3206 = vmatprep.subr.bf16.mxu0 %v2738
      %3207 = vmatpush1.bf16.msra.mxu0 %v2737
      %3208 = vmatprep.subr.bf16.mxu0 %v2740
      %3209 = vmatpush1.bf16.msra.mxu0 %v2739
      %3210 = vmatprep.subr.bf16.mxu0 %v2742
      %3211 = vmatpush1.bf16.msra.mxu0 %v2741
      %3212 = vmatprep.subr.bf16.mxu0 %v2744
      %3213 = vmatpush1.bf16.msra.mxu0 %v2743
      %3214 = vmatprep.subr.bf16.mxu0 %v2746
      %3215 = vmatpush1.bf16.msra.mxu0 %v2745
      %3216 = vmatprep.subr.bf16.mxu0 %v2748
      %3217 = vmatpush1.bf16.msra.mxu0 %v2747
      %3218 = vmatprep.subr.bf16.mxu0 %v2750
      %3219 = vmatpush1.bf16.msra.mxu0 %v2749
      %3220 = vmatprep.subr.bf16.mxu0 %v2752
      %3221 = vmatpush1.bf16.msra.mxu0 %v2751
      %3222 = vmatprep.mubr.bf16.mxu0 %v3030
      %3223 = vmatmul.mubr.bf16.gmra.mrb[0].mxu0 %v3029
      %v3224 = vpop.f32.mrb[0].mxu0
      %v3225 = vadd.f32 %v3184, %v3224
      %v3226 = vpop.f32.mrb[0].mxu0
      %v3227 = vadd.f32 %v3186, %v3226
      %v3228 = vpop.f32.mrb[0].mxu0
      %v3229 = vpop.f32.mrb[0].mxu0
      %3230 = vdwg.mxu0
      %3231 = vmatprep.subr.bf16.mxu0 %v2754
      %3232 = vmatpush1.bf16.msra.mxu0 %v2753
      %3233 = vmatprep.subr.bf16.mxu0 %v2756
      %3234 = vmatpush1.bf16.msra.mxu0 %v2755
      %3235 = vmatprep.subr.bf16.mxu0 %v2758
      %3236 = vmatpush1.bf16.msra.mxu0 %v2757
      %3237 = vmatprep.subr.bf16.mxu0 %v2760
      %3238 = vmatpush1.bf16.msra.mxu0 %v2759
      %3239 = vmatprep.subr.bf16.mxu0 %v2762
      %3240 = vmatpush1.bf16.msra.mxu0 %v2761
      %3241 = vmatprep.subr.bf16.mxu0 %v2764
      %3242 = vmatpush1.bf16.msra.mxu0 %v2763
      %3243 = vmatprep.subr.bf16.mxu0 %v2766
      %3244 = vmatpush1.bf16.msra.mxu0 %v2765
      %3245 = vmatprep.subr.bf16.mxu0 %v2768
      %3246 = vmatpush1.bf16.msra.mxu0 %v2767
      %3247 = vmatprep.subr.bf16.mxu0 %v2770
      %3248 = vmatpush1.bf16.msra.mxu0 %v2769
      %3249 = vmatprep.subr.bf16.mxu0 %v2772
      %3250 = vmatpush1.bf16.msra.mxu0 %v2771
      %3251 = vmatprep.subr.bf16.mxu0 %v2774
      %3252 = vmatpush1.bf16.msra.mxu0 %v2773
      %3253 = vmatprep.subr.bf16.mxu0 %v2776
      %3254 = vmatpush1.bf16.msra.mxu0 %v2775
      %3255 = vmatprep.subr.bf16.mxu0 %v2778
      %3256 = vmatpush1.bf16.msra.mxu0 %v2777
      %3257 = vmatprep.subr.bf16.mxu0 %v2780
      %3258 = vmatpush1.bf16.msra.mxu0 %v2779
      %3259 = vmatprep.subr.bf16.mxu0 %v2782
      %3260 = vmatpush1.bf16.msra.mxu0 %v2781
      %3261 = vmatprep.subr.bf16.mxu0 %v2784
      %3262 = vmatpush1.bf16.msra.mxu0 %v2783
      %3263 = vmatprep.mubr.bf16.mxu0 %v3032
      %3264 = vmatmul.mubr.bf16.gmra.mrb[0].mxu0 %v3031
      %v3265 = vpop.f32.mrb[0].mxu0
      %v3266 = vadd.f32 %v3225, %v3265
      %v3267 = vpop.f32.mrb[0].mxu0
      %v3268 = vadd.f32 %v3227, %v3267
      %v3269 = vpop.f32.mrb[0].mxu0
      %v3270 = vpop.f32.mrb[0].mxu0
      %3271 = vdwg.mxu0
      %3272 = vmatprep.subr.bf16.mxu0 %v2786
      %3273 = vmatpush1.bf16.msra.mxu0 %v2785
      %3274 = vmatprep.subr.bf16.mxu0 %v2788
      %3275 = vmatpush1.bf16.msra.mxu0 %v2787
      %3276 = vmatprep.subr.bf16.mxu0 %v2790
      %3277 = vmatpush1.bf16.msra.mxu0 %v2789
      %3278 = vmatprep.subr.bf16.mxu0 %v2792
      %3279 = vmatpush1.bf16.msra.mxu0 %v2791
      %3280 = vmatprep.subr.bf16.mxu0 %v2794
      %3281 = vmatpush1.bf16.msra.mxu0 %v2793
      %3282 = vmatprep.subr.bf16.mxu0 %v2796
      %3283 = vmatpush1.bf16.msra.mxu0 %v2795
      %3284 = vmatprep.subr.bf16.mxu0 %v2798
      %3285 = vmatpush1.bf16.msra.mxu0 %v2797
      %3286 = vmatprep.subr.bf16.mxu0 %v2800
      %3287 = vmatpush1.bf16.msra.mxu0 %v2799
      %3288 = vmatprep.subr.bf16.mxu0 %v2802
      %3289 = vmatpush1.bf16.msra.mxu0 %v2801
      %3290 = vmatprep.subr.bf16.mxu0 %v2804
      %3291 = vmatpush1.bf16.msra.mxu0 %v2803
      %3292 = vmatprep.subr.bf16.mxu0 %v2806
      %3293 = vmatpush1.bf16.msra.mxu0 %v2805
      %3294 = vmatprep.subr.bf16.mxu0 %v2808
      %3295 = vmatpush1.bf16.msra.mxu0 %v2807
      %3296 = vmatprep.subr.bf16.mxu0 %v2810
      %3297 = vmatpush1.bf16.msra.mxu0 %v2809
      %3298 = vmatprep.subr.bf16.mxu0 %v2812
      %3299 = vmatpush1.bf16.msra.mxu0 %v2811
      %3300 = vmatprep.subr.bf16.mxu0 %v2814
      %3301 = vmatpush1.bf16.msra.mxu0 %v2813
      %3302 = vmatprep.subr.bf16.mxu0 %v2816
      %3303 = vmatpush1.bf16.msra.mxu0 %v2815
      %3304 = vmatprep.mubr.bf16.mxu0 %v3034
      %3305 = vmatmul.mubr.bf16.gmra.mrb[0].mxu0 %v3033
      %v3306 = vpop.f32.mrb[0].mxu0
      %v3307 = vadd.f32 %v3266, %v3306
      %v3308 = vpop.f32.mrb[0].mxu0
      %v3309 = vadd.f32 %v3268, %v3308
      %v3310 = vpop.f32.mrb[0].mxu0
      %v3311 = vpop.f32.mrb[0].mxu0
      %3312 = vdwg.mxu0
      %3313 = vmatprep.subr.bf16.mxu0 %v2818
      %3314 = vmatpush1.bf16.msra.mxu0 %v2817
      %3315 = vmatprep.subr.bf16.mxu0 %v2820
      %3316 = vmatpush1.bf16.msra.mxu0 %v2819
      %3317 = vmatprep.subr.bf16.mxu0 %v2822
      %3318 = vmatpush1.bf16.msra.mxu0 %v2821
      %3319 = vmatprep.subr.bf16.mxu0 %v2824
      %3320 = vmatpush1.bf16.msra.mxu0 %v2823
      %3321 = vmatprep.subr.bf16.mxu0 %v2826
      %3322 = vmatpush1.bf16.msra.mxu0 %v2825
      %3323 = vmatprep.subr.bf16.mxu0 %v2828
      %3324 = vmatpush1.bf16.msra.mxu0 %v2827
      %3325 = vmatprep.subr.bf16.mxu0 %v2830
      %3326 = vmatpush1.bf16.msra.mxu0 %v2829
      %3327 = vmatprep.subr.bf16.mxu0 %v2832
      %3328 = vmatpush1.bf16.msra.mxu0 %v2831
      %3329 = vmatprep.subr.bf16.mxu0 %v2834
      %3330 = vmatpush1.bf16.msra.mxu0 %v2833
      %3331 = vmatprep.subr.bf16.mxu0 %v2836
      %3332 = vmatpush1.bf16.msra.mxu0 %v2835
      %3333 = vmatprep.subr.bf16.mxu0 %v2838
      %3334 = vmatpush1.bf16.msra.mxu0 %v2837
      %3335 = vmatprep.subr.bf16.mxu0 %v2840
      %3336 = vmatpush1.bf16.msra.mxu0 %v2839
      %3337 = vmatprep.subr.bf16.mxu0 %v2842
      %3338 = vmatpush1.bf16.msra.mxu0 %v2841
      %3339 = vmatprep.subr.bf16.mxu0 %v2844
      %3340 = vmatpush1.bf16.msra.mxu0 %v2843
      %3341 = vmatprep.subr.bf16.mxu0 %v2846
      %3342 = vmatpush1.bf16.msra.mxu0 %v2845
      %3343 = vmatprep.subr.bf16.mxu0 %v2848
      %3344 = vmatpush1.bf16.msra.mxu0 %v2847
      %3345 = vmatprep.mubr.bf16.mxu0 %v3036
      %3346 = vmatmul.mubr.bf16.gmra.mrb[0].mxu0 %v3035
      %v3347 = vpop.f32.mrb[0].mxu0
      %v3348 = vadd.f32 %v3307, %v3347
      %v3349 = vpop.f32.mrb[0].mxu0
      %v3350 = vadd.f32 %v3309, %v3349
      %v3351 = vpop.f32.mrb[0].mxu0
      %v3352 = vpop.f32.mrb[0].mxu0
      %3353 = vdwg.mxu0
      %3354 = vmatprep.subr.bf16.mxu0 %v2850
      %3355 = vmatpush1.bf16.msra.mxu0 %v2849
      %3356 = vmatprep.subr.bf16.mxu0 %v2852
      %3357 = vmatpush1.bf16.msra.mxu0 %v2851
      %3358 = vmatprep.subr.bf16.mxu0 %v2854
      %3359 = vmatpush1.bf16.msra.mxu0 %v2853
      %3360 = vmatprep.subr.bf16.mxu0 %v2856
      %3361 = vmatpush1.bf16.msra.mxu0 %v2855
      %3362 = vmatprep.subr.bf16.mxu0 %v2858
      %3363 = vmatpush1.bf16.msra.mxu0 %v2857
      %3364 = vmatprep.subr.bf16.mxu0 %v2860
      %3365 = vmatpush1.bf16.msra.mxu0 %v2859
      %3366 = vmatprep.subr.bf16.mxu0 %v2862
      %3367 = vmatpush1.bf16.msra.mxu0 %v2861
      %3368 = vmatprep.subr.bf16.mxu0 %v2864
      %3369 = vmatpush1.bf16.msra.mxu0 %v2863
      %3370 = vmatprep.subr.bf16.mxu0 %v2866
      %3371 = vmatpush1.bf16.msra.mxu0 %v2865
      %3372 = vmatprep.subr.bf16.mxu0 %v2868
      %3373 = vmatpush1.bf16.msra.mxu0 %v2867
      %3374 = vmatprep.subr.bf16.mxu0 %v2870
      %3375 = vmatpush1.bf16.msra.mxu0 %v2869
      %3376 = vmatprep.subr.bf16.mxu0 %v2872
      %3377 = vmatpush1.bf16.msra.mxu0 %v2871
      %3378 = vmatprep.subr.bf16.mxu0 %v2874
      %3379 = vmatpush1.bf16.msra.mxu0 %v2873
      %3380 = vmatprep.subr.bf16.mxu0 %v2876
      %3381 = vmatpush1.bf16.msra.mxu0 %v2875
      %3382 = vmatprep.subr.bf16.mxu0 %v2878
      %3383 = vmatpush1.bf16.msra.mxu0 %v2877
      %3384 = vmatprep.subr.bf16.mxu0 %v2880
      %3385 = vmatpush1.bf16.msra.mxu0 %v2879
      %3386 = vmatprep.mubr.bf16.mxu0 %v3038
      %3387 = vmatmul.mubr.bf16.gmra.mrb[0].mxu0 %v3037
      %v3388 = vpop.f32.mrb[0].mxu0
      %v3389 = vadd.f32 %v3348, %v3388
      %v3390 = vpop.f32.mrb[0].mxu0
      %v3391 = vadd.f32 %v3350, %v3390
      %v3392 = vpop.f32.mrb[0].mxu0
      %v3393 = vpop.f32.mrb[0].mxu0
      %3394 = vdwg.mxu0
      %3395 = vmatprep.subr.bf16.mxu0 %v2882
      %3396 = vmatpush1.bf16.msra.mxu0 %v2881
      %3397 = vmatprep.subr.bf16.mxu0 %v2884
      %3398 = vmatpush1.bf16.msra.mxu0 %v2883
      %3399 = vmatprep.subr.bf16.mxu0 %v2886
      %3400 = vmatpush1.bf16.msra.mxu0 %v2885
      %3401 = vmatprep.subr.bf16.mxu0 %v2888
      %3402 = vmatpush1.bf16.msra.mxu0 %v2887
      %3403 = vmatprep.subr.bf16.mxu0 %v2890
      %3404 = vmatpush1.bf16.msra.mxu0 %v2889
      %3405 = vmatprep.subr.bf16.mxu0 %v2892
      %3406 = vmatpush1.bf16.msra.mxu0 %v2891
      %3407 = vmatprep.subr.bf16.mxu0 %v2894
      %3408 = vmatpush1.bf16.msra.mxu0 %v2893
      %3409 = vmatprep.subr.bf16.mxu0 %v2896
      %3410 = vmatpush1.bf16.msra.mxu0 %v2895
      %3411 = vmatprep.subr.bf16.mxu0 %v2898
      %3412 = vmatpush1.bf16.msra.mxu0 %v2897
      %3413 = vmatprep.subr.bf16.mxu0 %v2900
      %3414 = vmatpush1.bf16.msra.mxu0 %v2899
      %3415 = vmatprep.subr.bf16.mxu0 %v2902
      %3416 = vmatpush1.bf16.msra.mxu0 %v2901
      %3417 = vmatprep.subr.bf16.mxu0 %v2904
      %3418 = vmatpush1.bf16.msra.mxu0 %v2903
      %3419 = vmatprep.subr.bf16.mxu0 %v2906
      %3420 = vmatpush1.bf16.msra.mxu0 %v2905
      %3421 = vmatprep.subr.bf16.mxu0 %v2908
      %3422 = vmatpush1.bf16.msra.mxu0 %v2907
      %3423 = vmatprep.subr.bf16.mxu0 %v2910
      %3424 = vmatpush1.bf16.msra.mxu0 %v2909
      %3425 = vmatprep.subr.bf16.mxu0 %v2912
      %3426 = vmatpush1.bf16.msra.mxu0 %v2911
      %3427 = vmatprep.mubr.bf16.mxu0 %v3040
      %3428 = vmatmul.mubr.bf16.gmra.mrb[0].mxu0 %v3039
      %v3429 = vpop.f32.mrb[0].mxu0
      %v3430 = vadd.f32 %v3389, %v3429
      %v3431 = vpop.f32.mrb[0].mxu0
      %v3432 = vadd.f32 %v3391, %v3431
      %v3433 = vpop.f32.mrb[0].mxu0
      %v3434 = vpop.f32.mrb[0].mxu0
      %3435 = vdwg.mxu0
      %3436 = vmatprep.subr.bf16.mxu0 %v2914
      %3437 = vmatpush1.bf16.msra.mxu0 %v2913
      %3438 = vmatprep.subr.bf16.mxu0 %v2916
      %3439 = vmatpush1.bf16.msra.mxu0 %v2915
      %3440 = vmatprep.subr.bf16.mxu0 %v2918
      %3441 = vmatpush1.bf16.msra.mxu0 %v2917
      %3442 = vmatprep.subr.bf16.mxu0 %v2920
      %3443 = vmatpush1.bf16.msra.mxu0 %v2919
      %3444 = vmatprep.subr.bf16.mxu0 %v2922
      %3445 = vmatpush1.bf16.msra.mxu0 %v2921
      %3446 = vmatprep.subr.bf16.mxu0 %v2924
      %3447 = vmatpush1.bf16.msra.mxu0 %v2923
      %3448 = vmatprep.subr.bf16.mxu0 %v2926
      %3449 = vmatpush1.bf16.msra.mxu0 %v2925
      %3450 = vmatprep.subr.bf16.mxu0 %v2928
      %3451 = vmatpush1.bf16.msra.mxu0 %v2927
      %3452 = vmatprep.subr.bf16.mxu0 %v2930
      %3453 = vmatpush1.bf16.msra.mxu0 %v2929
      %3454 = vmatprep.subr.bf16.mxu0 %v2932
      %3455 = vmatpush1.bf16.msra.mxu0 %v2931
      %3456 = vmatprep.subr.bf16.mxu0 %v2934
      %3457 = vmatpush1.bf16.msra.mxu0 %v2933
      %3458 = vmatprep.subr.bf16.mxu0 %v2936
      %3459 = vmatpush1.bf16.msra.mxu0 %v2935
      %3460 = vmatprep.subr.bf16.mxu0 %v2938
      %3461 = vmatpush1.bf16.msra.mxu0 %v2937
      %3462 = vmatprep.subr.bf16.mxu0 %v2940
      %3463 = vmatpush1.bf16.msra.mxu0 %v2939
      %3464 = vmatprep.subr.bf16.mxu0 %v2942
      %3465 = vmatpush1.bf16.msra.mxu0 %v2941
      %3466 = vmatprep.subr.bf16.mxu0 %v2944
      %3467 = vmatpush1.bf16.msra.mxu0 %v2943
      %3468 = vmatprep.mubr.bf16.mxu0 %v3042
      %3469 = vmatmul.mubr.bf16.gmra.mrb[0].mxu0 %v3041
      %v3470 = vpop.f32.mrb[0].mxu0
      %v3471 = vadd.f32 %v3430, %v3470
      %v3472 = vpop.f32.mrb[0].mxu0
      %v3473 = vadd.f32 %v3432, %v3472
      %v3474 = vpop.f32.mrb[0].mxu0
      %v3475 = vpop.f32.mrb[0].mxu0
      %3476 = vdwg.mxu0
      %3477 = vmatprep.subr.bf16.mxu0 %v2946
      %3478 = vmatpush1.bf16.msra.mxu0 %v2945
      %3479 = vmatprep.subr.bf16.mxu0 %v2948
      %3480 = vmatpush1.bf16.msra.mxu0 %v2947
      %3481 = vmatprep.subr.bf16.mxu0 %v2950
      %3482 = vmatpush1.bf16.msra.mxu0 %v2949
      %3483 = vmatprep.subr.bf16.mxu0 %v2952
      %3484 = vmatpush1.bf16.msra.mxu0 %v2951
      %3485 = vmatprep.subr.bf16.mxu0 %v2954
      %3486 = vmatpush1.bf16.msra.mxu0 %v2953
      %3487 = vmatprep.subr.bf16.mxu0 %v2956
      %3488 = vmatpush1.bf16.msra.mxu0 %v2955
      %3489 = vmatprep.subr.bf16.mxu0 %v2958
      %3490 = vmatpush1.bf16.msra.mxu0 %v2957
      %3491 = vmatprep.subr.bf16.mxu0 %v2960
      %3492 = vmatpush1.bf16.msra.mxu0 %v2959
      %3493 = vmatprep.subr.bf16.mxu0 %v2962
      %3494 = vmatpush1.bf16.msra.mxu0 %v2961
      %3495 = vmatprep.subr.bf16.mxu0 %v2964
      %3496 = vmatpush1.bf16.msra.mxu0 %v2963
      %3497 = vmatprep.subr.bf16.mxu0 %v2966
      %3498 = vmatpush1.bf16.msra.mxu0 %v2965
      %3499 = vmatprep.subr.bf16.mxu0 %v2968
      %3500 = vmatpush1.bf16.msra.mxu0 %v2967
      %3501 = vmatprep.subr.bf16.mxu0 %v2970
      %3502 = vmatpush1.bf16.msra.mxu0 %v2969
      %3503 = vmatprep.subr.bf16.mxu0 %v2972
      %3504 = vmatpush1.bf16.msra.mxu0 %v2971
      %3505 = vmatprep.subr.bf16.mxu0 %v2974
      %3506 = vmatpush1.bf16.msra.mxu0 %v2973
      %3507 = vmatprep.subr.bf16.mxu0 %v2976
      %3508 = vmatpush1.bf16.msra.mxu0 %v2975
      %3509 = vmatprep.mubr.bf16.mxu0 %v3044
      %3510 = vmatmul.mubr.bf16.gmra.mrb[0].mxu0 %v3043
      %v3511 = vpop.f32.mrb[0].mxu0
      %v3512 = vadd.f32 %v3471, %v3511
      %v3513 = vpop.f32.mrb[0].mxu0
      %v3514 = vadd.f32 %v3473, %v3513
      %v3515 = vpop.f32.mrb[0].mxu0
      %v3516 = vpop.f32.mrb[0].mxu0
      %3517 = vdwg.mxu0
      %v3518 = vadd.f32 %v2977, %v3512
      %v3519 = vadd.f32 %v2978, %v3514
      %3520 = vst [vmem:[#allocation2] sm:$0xff] %v3518
      %3521 = vst [vmem:[#allocation2 + $0x8] sm:$0xff] %v3519
      %p3522 = scmp.eq.s32.totalorder %s19, 2
      // Predicated region
      $region57: #{global_discriminator_forward.3} parent=51 // pred_check
        %p3523 = pneg %p3522
      $region58: #{global_discriminator_forward.3} parent=51 // pred_check_branch
        %3525 = sbr.rel (%p3523) target = $region60
      $region59: #{global_discriminator_forward.3} parent=51 // pred_region
        %v3526 = vld [vmem:[#allocation2] sm:$0xff]
        %v3527 = vld [vmem:[#allocation2 + $0x8] sm:$0xff]
        %v3528 = vld [vmem:[%s3] sm:$0x3]
        %v3530 = vlaneseq
        %v3531 = vshrl.u32 %v3530, 7
        %v3532 = vsub.s32 0, %v3531
        %v3533 = vrot.slane %v3528, %v3532
        %v3534 = vlaneseq
        %v3535 = vshrl.u32 %v3534, 7
        %v3536 = vsub.s32 1, %v3535
        %v3537 = vrot.slane %v3528, %v3536
        %v3540 = vadd.f32 %v3526, %v3533
        %v3541 = vadd.f32 %v3527, %v3537
        %v3542 = vmax.f32 %v3540, 0.0
        %v3543 = vmax.f32 %v3541, 0.0
        %v3544 = vpack.c.bf16 %v3542, %v3542
        %v3545 = vpack.c.bf16 %v3543, %v3543
        %v3546 = vld [vmem:[%s4] sm:$0xff]
        %v3547 = vld [vmem:[%s4 + $0x8] sm:$0xff]
        %v3548 = vld [vmem:[%s4 + $0x10] sm:$0xff]
        %v3549 = vld [vmem:[%s4 + $0x18] sm:$0xff]
        %v3550 = vld [vmem:[%s4 + $0x20] sm:$0xff]
        %v3551 = vld [vmem:[%s4 + $0x28] sm:$0xff]
        %v3552 = vld [vmem:[%s4 + $0x30] sm:$0xff]
        %v3553 = vld [vmem:[%s4 + $0x38] sm:$0xff]
        %v3554 = vld [vmem:[%s4 + $0x40] sm:$0xff]
        %v3555 = vld [vmem:[%s4 + $0x48] sm:$0xff]
        %v3556 = vld [vmem:[%s4 + $0x50] sm:$0xff]
        %v3557 = vld [vmem:[%s4 + $0x58] sm:$0xff]
        %v3558 = vld [vmem:[%s4 + $0x60] sm:$0xff]
        %v3559 = vld [vmem:[%s4 + $0x68] sm:$0xff]
        %v3560 = vld [vmem:[%s4 + $0x70] sm:$0xff]
        %v3561 = vld [vmem:[%s4 + $0x78] sm:$0xff]
        %v3562 = vld [vmem:[%s4 + $0x80] sm:$0xff]
        %v3563 = vld [vmem:[%s4 + $0x88] sm:$0xff]
        %v3564 = vld [vmem:[%s4 + $0x90] sm:$0xff]
        %v3565 = vld [vmem:[%s4 + $0x98] sm:$0xff]
        %v3566 = vld [vmem:[%s4 + $0xa0] sm:$0xff]
        %v3567 = vld [vmem:[%s4 + $0xa8] sm:$0xff]
        %v3568 = vld [vmem:[%s4 + $0xb0] sm:$0xff]
        %v3569 = vld [vmem:[%s4 + $0xb8] sm:$0xff]
        %v3570 = vld [vmem:[%s4 + $0xc0] sm:$0xff]
        %v3571 = vld [vmem:[%s4 + $0xc8] sm:$0xff]
        %v3572 = vld [vmem:[%s4 + $0xd0] sm:$0xff]
        %v3573 = vld [vmem:[%s4 + $0xd8] sm:$0xff]
        %v3574 = vld [vmem:[%s4 + $0xe0] sm:$0xff]
        %v3575 = vld [vmem:[%s4 + $0xe8] sm:$0xff]
        %v3576 = vld [vmem:[%s4 + $0xf0] sm:$0xff]
        %v3577 = vld [vmem:[%s4 + $0xf8] sm:$0xff]
        %v3578 = vld [vmem:[%s5] sm:$0x3]
        %v3580 = vlaneseq
        %v3581 = vshrl.u32 %v3580, 7
        %v3582 = vsub.s32 0, %v3581
        %v3583 = vrot.slane %v3578, %v3582
        %v3584 = vlaneseq
        %v3585 = vshrl.u32 %v3584, 7
        %v3586 = vsub.s32 1, %v3585
        %v3587 = vrot.slane %v3578, %v3586
        %v3622 = vunpack.c.l.b16 %v3546
        %v3623 = vunpack.c.h.b16 %v3546
        %v3624 = vunpack.c.l.b16 %v3547
        %v3625 = vunpack.c.h.b16 %v3547
        %v3626 = vunpack.c.l.b16 %v3548
        %v3627 = vunpack.c.h.b16 %v3548
        %v3628 = vunpack.c.l.b16 %v3549
        %v3629 = vunpack.c.h.b16 %v3549
        %v3630 = vunpack.c.l.b16 %v3550
        %v3631 = vunpack.c.h.b16 %v3550
        %v3632 = vunpack.c.l.b16 %v3551
        %v3633 = vunpack.c.h.b16 %v3551
        %v3634 = vunpack.c.l.b16 %v3552
        %v3635 = vunpack.c.h.b16 %v3552
        %v3636 = vunpack.c.l.b16 %v3553
        %v3637 = vunpack.c.h.b16 %v3553
        %v3638 = vunpack.c.l.b16 %v3554
        %v3639 = vunpack.c.h.b16 %v3554
        %v3640 = vunpack.c.l.b16 %v3555
        %v3641 = vunpack.c.h.b16 %v3555
        %v3642 = vunpack.c.l.b16 %v3556
        %v3643 = vunpack.c.h.b16 %v3556
        %v3644 = vunpack.c.l.b16 %v3557
        %v3645 = vunpack.c.h.b16 %v3557
        %v3646 = vunpack.c.l.b16 %v3558
        %v3647 = vunpack.c.h.b16 %v3558
        %v3648 = vunpack.c.l.b16 %v3559
        %v3649 = vunpack.c.h.b16 %v3559
        %v3650 = vunpack.c.l.b16 %v3560
        %v3651 = vunpack.c.h.b16 %v3560
        %v3652 = vunpack.c.l.b16 %v3561
        %v3653 = vunpack.c.h.b16 %v3561
        %v3654 = vunpack.c.l.b16 %v3562
        %v3655 = vunpack.c.h.b16 %v3562
        %v3656 = vunpack.c.l.b16 %v3563
        %v3657 = vunpack.c.h.b16 %v3563
        %v3658 = vunpack.c.l.b16 %v3564
        %v3659 = vunpack.c.h.b16 %v3564
        %v3660 = vunpack.c.l.b16 %v3565
        %v3661 = vunpack.c.h.b16 %v3565
        %v3662 = vunpack.c.l.b16 %v3566
        %v3663 = vunpack.c.h.b16 %v3566
        %v3664 = vunpack.c.l.b16 %v3567
        %v3665 = vunpack.c.h.b16 %v3567
        %v3666 = vunpack.c.l.b16 %v3568
        %v3667 = vunpack.c.h.b16 %v3568
        %v3668 = vunpack.c.l.b16 %v3569
        %v3669 = vunpack.c.h.b16 %v3569
        %v3670 = vunpack.c.l.b16 %v3570
        %v3671 = vunpack.c.h.b16 %v3570
        %v3672 = vunpack.c.l.b16 %v3571
        %v3673 = vunpack.c.h.b16 %v3571
        %v3674 = vunpack.c.l.b16 %v3572
        %v3675 = vunpack.c.h.b16 %v3572
        %v3676 = vunpack.c.l.b16 %v3573
        %v3677 = vunpack.c.h.b16 %v3573
        %v3678 = vunpack.c.l.b16 %v3574
        %v3679 = vunpack.c.h.b16 %v3574
        %v3680 = vunpack.c.l.b16 %v3575
        %v3681 = vunpack.c.h.b16 %v3575
        %v3682 = vunpack.c.l.b16 %v3576
        %v3683 = vunpack.c.h.b16 %v3576
        %v3684 = vunpack.c.l.b16 %v3577
        %v3685 = vunpack.c.h.b16 %v3577
        %v3686 = vpack.c.b16 %v3624, %v3622
        %v3687 = vpack.c.b16 %v3625, %v3623
        %v3688 = vpack.c.b16 %v3628, %v3626
        %v3689 = vpack.c.b16 %v3629, %v3627
        %v3690 = vpack.c.b16 %v3632, %v3630
        %v3691 = vpack.c.b16 %v3633, %v3631
        %v3692 = vpack.c.b16 %v3636, %v3634
        %v3693 = vpack.c.b16 %v3637, %v3635
        %v3694 = vpack.c.b16 %v3640, %v3638
        %v3695 = vpack.c.b16 %v3641, %v3639
        %v3696 = vpack.c.b16 %v3644, %v3642
        %v3697 = vpack.c.b16 %v3645, %v3643
        %v3698 = vpack.c.b16 %v3648, %v3646
        %v3699 = vpack.c.b16 %v3649, %v3647
        %v3700 = vpack.c.b16 %v3652, %v3650
        %v3701 = vpack.c.b16 %v3653, %v3651
        %v3702 = vpack.c.b16 %v3656, %v3654
        %v3703 = vpack.c.b16 %v3657, %v3655
        %v3704 = vpack.c.b16 %v3660, %v3658
        %v3705 = vpack.c.b16 %v3661, %v3659
        %v3706 = vpack.c.b16 %v3664, %v3662
        %v3707 = vpack.c.b16 %v3665, %v3663
        %v3708 = vpack.c.b16 %v3668, %v3666
        %v3709 = vpack.c.b16 %v3669, %v3667
        %v3710 = vpack.c.b16 %v3672, %v3670
        %v3711 = vpack.c.b16 %v3673, %v3671
        %v3712 = vpack.c.b16 %v3676, %v3674
        %v3713 = vpack.c.b16 %v3677, %v3675
        %v3714 = vpack.c.b16 %v3680, %v3678
        %v3715 = vpack.c.b16 %v3681, %v3679
        %v3716 = vpack.c.b16 %v3684, %v3682
        %v3717 = vpack.c.b16 %v3685, %v3683
        %3750 = vmatprep.subr.bf16.mxu0 %v3687
        %3751 = vmatpush1.bf16.msra.mxu0 %v3686
        %3752 = vmatprep.subr.bf16.mxu0 %v3689
        %3753 = vmatpush1.bf16.msra.mxu0 %v3688
        %3754 = vmatprep.subr.bf16.mxu0 %v3691
        %3755 = vmatpush1.bf16.msra.mxu0 %v3690
        %3756 = vmatprep.subr.bf16.mxu0 %v3693
        %3757 = vmatpush1.bf16.msra.mxu0 %v3692
        %3758 = vmatprep.subr.bf16.mxu0 %v3695
        %3759 = vmatpush1.bf16.msra.mxu0 %v3694
        %3760 = vmatprep.subr.bf16.mxu0 %v3697
        %3761 = vmatpush1.bf16.msra.mxu0 %v3696
        %3762 = vmatprep.subr.bf16.mxu0 %v3699
        %3763 = vmatpush1.bf16.msra.mxu0 %v3698
        %3764 = vmatprep.subr.bf16.mxu0 %v3701
        %3765 = vmatpush1.bf16.msra.mxu0 %v3700
        %3766 = vmatprep.subr.bf16.mxu0 %v3703
        %3767 = vmatpush1.bf16.msra.mxu0 %v3702
        %3768 = vmatprep.subr.bf16.mxu0 %v3705
        %3769 = vmatpush1.bf16.msra.mxu0 %v3704
        %3770 = vmatprep.subr.bf16.mxu0 %v3707
        %3771 = vmatpush1.bf16.msra.mxu0 %v3706
        %3772 = vmatprep.subr.bf16.mxu0 %v3709
        %3773 = vmatpush1.bf16.msra.mxu0 %v3708
        %3774 = vmatprep.subr.bf16.mxu0 %v3711
        %3775 = vmatpush1.bf16.msra.mxu0 %v3710
        %3776 = vmatprep.subr.bf16.mxu0 %v3713
        %3777 = vmatpush1.bf16.msra.mxu0 %v3712
        %3778 = vmatprep.subr.bf16.mxu0 %v3715
        %3779 = vmatpush1.bf16.msra.mxu0 %v3714
        %3780 = vmatprep.subr.bf16.mxu0 %v3717
        %3781 = vmatpush1.bf16.msra.mxu0 %v3716
        %3782 = vmatprep.mubr.bf16.mxu0 %v3545
        %3783 = vmatmul.mubr.bf16.gmra.mrb[0].mxu0 %v3544
        %v3784 = vpop.f32.mrb[0].mxu0
        %v3785 = vadd.f32 %v3583, %v3784
        %v3786 = vpop.f32.mrb[0].mxu0
        %v3787 = vadd.f32 %v3587, %v3786
        %v3788 = vpop.f32.mrb[0].mxu0
        %v3789 = vpop.f32.mrb[0].mxu0
        %3790 = vdwg.mxu0
        %v3791 = vmax.f32 %v3785, 0.0
        %v3792 = vmax.f32 %v3787, 0.0
        %v3793 = vpack.c.bf16 %v3791, %v3791
        %v3794 = vpack.c.bf16 %v3792, %v3792
        %v3795 = vld [vmem:[%s6] sm:$0xf]
        %v3796 = vld [vmem:[%s6 + $0x4] sm:$0xf]
        %v3797 = vld [vmem:[%s6 + $0x8] sm:$0xf]
        %v3798 = vld [vmem:[%s6 + $0xc] sm:$0xf]
        %v3799 = vld [vmem:[%s6 + $0x10] sm:$0xf]
        %v3800 = vld [vmem:[%s6 + $0x14] sm:$0xf]
        %v3801 = vld [vmem:[%s6 + $0x18] sm:$0xf]
        %v3802 = vld [vmem:[%s6 + $0x1c] sm:$0xf]
        %v3803 = vld [vmem:[%s6 + $0x20] sm:$0xf]
        %v3804 = vld [vmem:[%s6 + $0x24] sm:$0xf]
        %v3805 = vld [vmem:[%s6 + $0x28] sm:$0xf]
        %v3806 = vld [vmem:[%s6 + $0x2c] sm:$0xf]
        %v3807 = vld [vmem:[%s6 + $0x30] sm:$0xf]
        %v3808 = vld [vmem:[%s6 + $0x34] sm:$0xf]
        %v3809 = vld [vmem:[%s6 + $0x38] sm:$0xf]
        %v3810 = vld [vmem:[%s6 + $0x3c] sm:$0xf]
        %v3811 = vld [vmem:[%s6 + $0x40] sm:$0xf]
        %v3812 = vld [vmem:[%s6 + $0x44] sm:$0xf]
        %v3813 = vld [vmem:[%s6 + $0x48] sm:$0xf]
        %v3814 = vld [vmem:[%s6 + $0x4c] sm:$0xf]
        %v3815 = vld [vmem:[%s6 + $0x50] sm:$0xf]
        %v3816 = vld [vmem:[%s6 + $0x54] sm:$0xf]
        %v3817 = vld [vmem:[%s6 + $0x58] sm:$0xf]
        %v3818 = vld [vmem:[%s6 + $0x5c] sm:$0xf]
        %v3819 = vld [vmem:[%s6 + $0x60] sm:$0xf]
        %v3820 = vld [vmem:[%s6 + $0x64] sm:$0xf]
        %v3821 = vld [vmem:[%s6 + $0x68] sm:$0xf]
        %v3822 = vld [vmem:[%s6 + $0x6c] sm:$0xf]
        %v3823 = vld [vmem:[%s6 + $0x70] sm:$0xf]
        %v3824 = vld [vmem:[%s6 + $0x74] sm:$0xf]
        %v3825 = vld [vmem:[%s6 + $0x78] sm:$0xf]
        %v3826 = vld [vmem:[%s6 + $0x7c] sm:$0xf]
        %v3827 = vld [vmem:[%s7] sm:$0x1]
        %v3829 = vlaneseq
        %v3830 = vshrl.u32 %v3829, 7
        %v3831 = vsub.s32 0, %v3830
        %v3832 = vrot.slane %v3827, %v3831
        %v3866 = vunpack.c.l.b16 %v3795
        %v3867 = vunpack.c.l.b16 %v3796
        %v3868 = vunpack.c.l.b16 %v3797
        %v3869 = vunpack.c.l.b16 %v3798
        %v3870 = vunpack.c.l.b16 %v3799
        %v3871 = vunpack.c.l.b16 %v3800
        %v3872 = vunpack.c.l.b16 %v3801
        %v3873 = vunpack.c.l.b16 %v3802
        %v3874 = vunpack.c.l.b16 %v3803
        %v3875 = vunpack.c.l.b16 %v3804
        %v3876 = vunpack.c.l.b16 %v3805
        %v3877 = vunpack.c.l.b16 %v3806
        %v3878 = vunpack.c.l.b16 %v3807
        %v3879 = vunpack.c.l.b16 %v3808
        %v3880 = vunpack.c.l.b16 %v3809
        %v3881 = vunpack.c.l.b16 %v3810
        %v3882 = vunpack.c.l.b16 %v3811
        %v3883 = vunpack.c.l.b16 %v3812
        %v3884 = vunpack.c.l.b16 %v3813
        %v3885 = vunpack.c.l.b16 %v3814
        %v3886 = vunpack.c.l.b16 %v3815
        %v3887 = vunpack.c.l.b16 %v3816
        %v3888 = vunpack.c.l.b16 %v3817
        %v3889 = vunpack.c.l.b16 %v3818
        %v3890 = vunpack.c.l.b16 %v3819
        %v3891 = vunpack.c.l.b16 %v3820
        %v3892 = vunpack.c.l.b16 %v3821
        %v3893 = vunpack.c.l.b16 %v3822
        %v3894 = vunpack.c.l.b16 %v3823
        %v3895 = vunpack.c.l.b16 %v3824
        %v3896 = vunpack.c.l.b16 %v3825
        %v3897 = vunpack.c.l.b16 %v3826
        %v3898 = vpack.c.b16 %v3867, %v3866
        %v3899 = vpack.c.b16 %v3869, %v3868
        %v3900 = vpack.c.b16 %v3871, %v3870
        %v3901 = vpack.c.b16 %v3873, %v3872
        %v3902 = vpack.c.b16 %v3875, %v3874
        %v3903 = vpack.c.b16 %v3877, %v3876
        %v3904 = vpack.c.b16 %v3879, %v3878
        %v3905 = vpack.c.b16 %v3881, %v3880
        %v3906 = vpack.c.b16 %v3883, %v3882
        %v3907 = vpack.c.b16 %v3885, %v3884
        %v3908 = vpack.c.b16 %v3887, %v3886
        %v3909 = vpack.c.b16 %v3889, %v3888
        %v3910 = vpack.c.b16 %v3891, %v3890
        %v3911 = vpack.c.b16 %v3893, %v3892
        %v3912 = vpack.c.b16 %v3895, %v3894
        %v3913 = vpack.c.b16 %v3897, %v3896
        %3930 = vmatprep.subr.bf16.mxu0 0
        %3931 = vmatpush1.bf16.msra.mxu0 %v3898
        %3932 = vmatprep.subr.bf16.mxu0 0
        %3933 = vmatpush1.bf16.msra.mxu0 %v3899
        %3934 = vmatprep.subr.bf16.mxu0 0
        %3935 = vmatpush1.bf16.msra.mxu0 %v3900
        %3936 = vmatprep.subr.bf16.mxu0 0
        %3937 = vmatpush1.bf16.msra.mxu0 %v3901
        %3938 = vmatprep.subr.bf16.mxu0 0
        %3939 = vmatpush1.bf16.msra.mxu0 %v3902
        %3940 = vmatprep.subr.bf16.mxu0 0
        %3941 = vmatpush1.bf16.msra.mxu0 %v3903
        %3942 = vmatprep.subr.bf16.mxu0 0
        %3943 = vmatpush1.bf16.msra.mxu0 %v3904
        %3944 = vmatprep.subr.bf16.mxu0 0
        %3945 = vmatpush1.bf16.msra.mxu0 %v3905
        %3946 = vmatprep.subr.bf16.mxu0 0
        %3947 = vmatpush1.bf16.msra.mxu0 %v3906
        %3948 = vmatprep.subr.bf16.mxu0 0
        %3949 = vmatpush1.bf16.msra.mxu0 %v3907
        %3950 = vmatprep.subr.bf16.mxu0 0
        %3951 = vmatpush1.bf16.msra.mxu0 %v3908
        %3952 = vmatprep.subr.bf16.mxu0 0
        %3953 = vmatpush1.bf16.msra.mxu0 %v3909
        %3954 = vmatprep.subr.bf16.mxu0 0
        %3955 = vmatpush1.bf16.msra.mxu0 %v3910
        %3956 = vmatprep.subr.bf16.mxu0 0
        %3957 = vmatpush1.bf16.msra.mxu0 %v3911
        %3958 = vmatprep.subr.bf16.mxu0 0
        %3959 = vmatpush1.bf16.msra.mxu0 %v3912
        %3960 = vmatprep.subr.bf16.mxu0 0
        %3961 = vmatpush1.bf16.msra.mxu0 %v3913
        %3962 = vmatprep.mubr.bf16.mxu0 %v3794
        %3963 = vmatmul.mubr.bf16.gmra.mrb[0].mxu0 %v3793
        %v3964 = vpop.f32.mrb[0].mxu0
        %v3965 = vadd.f32 %v3832, %v3964
        %v3966 = vpop.f32.mrb[0].mxu0
        %v3967 = vpop.f32.mrb[0].mxu0
        %v3968 = vpop.f32.mrb[0].mxu0
        %3969 = vdwg.mxu0
        %vm3970 = vcmask 1024
        %3971 = vst.msk [vmem:[%s8] sm:$0x3] %vm3970, %v3965
      $region60: #{global_discriminator_forward.3} parent=51 // pred_fallthru
        _
      // Predicated region
      $region61: #{global_discriminator_forward.3} parent=51 // pred_check
        %p3972 = pneg %p210
      $region62: #{global_discriminator_forward.3} parent=51 // pred_check_branch
        %3974 = sbr.rel (%p3972) target = $region64
      $region63: #{global_discriminator_forward.3} parent=51 // pred_region
        _
      $region64: #{global_discriminator_forward.3} parent=51 // pred_fallthru
        _
      // Predicated region
      $region65: #{global_discriminator_forward.3} parent=51 // pred_check
        %p3975 = pneg %p210
      $region66: #{global_discriminator_forward.3} parent=51 // pred_check_branch
        %3977 = sbr.rel (%p3975) target = $region68
      $region67: #{global_discriminator_forward.3} parent=51 // pred_region
        _
      $region68: #{global_discriminator_forward.3} parent=51 // pred_fallthru
        _
    $region52: #{global_discriminator_forward.3} parent=5 // pred_fallthru
      _
    %p3978 = scmp.le.s32.totalorder 2, %s14
    // Predicated region
    $region69: #{global_discriminator_forward.3} parent=5 // pred_check
      %p3979 = pneg %p3978
    $region70: #{global_discriminator_forward.3} parent=5 // pred_check_branch
      %3981 = sbr.rel (%p3979) target = $region72
    $region71: #{global_discriminator_forward.3} parent=5 // pred_region
      %s3982 = ssub.s32 %s14, 2
    $region72: #{global_discriminator_forward.3} parent=5 // pred_fallthru
      _
  $region6: #{global_discriminator_forward.3} parent=0 // loop_footer
    %s18 = sadd.s32 1, %s14
  $region7: #{global_discriminator_forward.3} parent=0 // loop_footer_branch
    %13 = sbr.rel target = $region3
  $region8: #{global_discriminator_forward.3} parent=0 // loop_exit
    _

</llo_original>
